<compile_context>
chip_gen: v7x
topology: tpu7x:2x2x1
jax: 0.10.0
libtpu: 0.0.40
codegen_flags: <defaults>
</compile_context>

<pallas_src>
import functools

import jax
import jax.numpy as jnp
from jax.experimental import pallas as pl
from jax.experimental.pallas import tpu as pltpu

# ---------------------------------------------------------------- dimensions
B = 2                      # batch
CNN_FEAT = 512 * 7 * 7     # flattened VGG19 feature map (25088)
CLIP_FEAT = 512            # CLIP ViT-B/32 image embedding
SEMANTIC_EMBED = 32
BIT = 16                   # opt.bit
LABEL_DIM = 8              # opt.label_dim
TWO_SE = 2 * SEMANTIC_EMBED
FEA_DIM = 2 * TWO_SE       # concat(feature(base), feature1(Vit)) -> 4*SE
TK = 12544                 # K-tile over the 25088 VGG features (25088 = 2*12544)


# ------------------------------------------------------------------- kernel
def _head_kernel(base_ref, wf_ref, bf_ref,          # feature  branch (tiled K)
                 vit_ref, wf1_ref, bf1_ref,         # feature1 branch
                 wh_ref, bh_ref,                    # hash head
                 wl_ref, bl_ref,                    # label head
                 wc_ref, bc_ref,                    # cross_feature head
                 fea_ref, hsh_ref, lab_ref, cross_ref,
                 acc_ref, vit_acc_ref):
    k = pl.program_id(0)

    @pl.when(k == 0)
    def _():
        acc_ref[...] = jnp.zeros_like(acc_ref)
        # Hoisted vit branch: computed during step 0 so it overlaps with the
        # DMA of the remaining W_feat tiles instead of extending the epilogue.
        vit_acc_ref[...] = (
            jnp.dot(vit_ref[...], wf1_ref[...],
                    preferred_element_type=jnp.float32) + bf1_ref[...])

    # Accumulate the big matmul: base [B, 25088] @ W_feat [25088, 2*SE]
    # (both streamed as bf16, f32 accumulation on the MXU).
    acc_ref[...] += jnp.dot(base_ref[...], wf_ref[...],
                            preferred_element_type=jnp.float32)

    @pl.when(k == pl.num_programs(0) - 1)
    def _():
        feat_base = acc_ref[...] + bf_ref[...]                       # [B, 2*SE]
        fea = jnp.concatenate([feat_base, vit_acc_ref[...]], axis=1)  # [B, 4*SE]
        fea_ref[...] = fea

        # fea_T_pred = cross_feature(fea_I)  (computed but unused, as in source)
        cross_ref[...] = jnp.dot(fea, wc_ref[...],
                                 preferred_element_type=jnp.float32) + bc_ref[...]
        # hsh_I = tanh(Linear(fea_I))
        hsh_ref[...] = jnp.tanh(
            jnp.dot(fea, wh_ref[...], preferred_element_type=jnp.float32)
            + bh_ref[...])
        # lab_I = sigmoid(Linear(fea_I))
        lab_ref[...] = jax.nn.sigmoid(
            jnp.dot(fea, wl_ref[...], preferred_element_type=jnp.float32)
            + bl_ref[...])


# ------------------------------------------------------------------ wrapper
@functools.partial(jax.jit, static_argnames=())
def image_net_forward(base, vit, params):
    """Pallas version of ImageNet.forward given backbone features."""
    n_k = CNN_FEAT // TK
    full = lambda k: (0, 0)

    # Stream the big operands as bf16 (f32 accumulation inside the kernel).
    base_bf16 = base.astype(jnp.bfloat16)

    fea, hsh, lab, _fea_t_pred = pl.pallas_call(
        _head_kernel,
        out_shape=(
            jax.ShapeDtypeStruct((B, FEA_DIM), jnp.float32),
            jax.ShapeDtypeStruct((B, BIT), jnp.float32),
            jax.ShapeDtypeStruct((B, LABEL_DIM), jnp.float32),
            jax.ShapeDtypeStruct((B, FEA_DIM), jnp.float32),
        ),
        grid_spec=pltpu.PrefetchScalarGridSpec(
            num_scalar_prefetch=0,
            grid=(n_k,),
            in_specs=[
                pl.BlockSpec((B, TK), lambda k: (0, k)),          # base (K-tiled, bf16)
                pl.BlockSpec((TK, TWO_SE), lambda k: (k, 0)),     # W_feat (K-tiled, bf16)
                pl.BlockSpec((1, TWO_SE), full),                  # b_feat
                pl.BlockSpec((B, CLIP_FEAT), full),               # Vit
                pl.BlockSpec((CLIP_FEAT, TWO_SE), full),          # W_feat1
                pl.BlockSpec((1, TWO_SE), full),                  # b_feat1
                pl.BlockSpec((FEA_DIM, BIT), full),               # W_hash
                pl.BlockSpec((1, BIT), full),                     # b_hash
                pl.BlockSpec((FEA_DIM, LABEL_DIM), full),         # W_label
                pl.BlockSpec((1, LABEL_DIM), full),               # b_label
                pl.BlockSpec((FEA_DIM, FEA_DIM), full),           # W_cross
                pl.BlockSpec((1, FEA_DIM), full),                 # b_cross
            ],
            out_specs=[
                pl.BlockSpec((B, FEA_DIM), full),
                pl.BlockSpec((B, BIT), full),
                pl.BlockSpec((B, LABEL_DIM), full),
                pl.BlockSpec((B, FEA_DIM), full),
            ],
            scratch_shapes=[pltpu.VMEM((B, TWO_SE), jnp.float32),   # acc (feature)
                            pltpu.VMEM((B, TWO_SE), jnp.float32)],  # vit branch
        ),
        compiler_params=pltpu.CompilerParams(
            dimension_semantics=("arbitrary",),
            vmem_limit_bytes=32 * 1024 * 1024),
    )(base_bf16, params["W_feat"], params["b_feat"],
      vit, params["W_feat1"], params["b_feat1"],
      params["W_hash"], params["b_hash"],
      params["W_label"], params["b_label"],
      params["W_cross"], params["b_cross"])

    # return (squeeze(fea_I), squeeze(hsh_I), squeeze(lab_I)); fea_T_pred dropped
    return jnp.squeeze(fea), jnp.squeeze(hsh), jnp.squeeze(lab)


# ----------------------------------------------------------- pure-JAX reference
def image_net_forward_ref(base, vit, params):
    """Reference using the same bf16 quantization of the streamed operands."""
    base_q = base.astype(jnp.bfloat16).astype(jnp.float32)
    wf_q = params["W_feat"].astype(jnp.float32)
    feat_base = base_q @ wf_q + params["b_feat"]
    feat_vit = vit @ params["W_feat1"] + params["b_feat1"]
    fea = jnp.concatenate([feat_base, feat_vit], axis=1)
    hsh = jnp.tanh(fea @ params["W_hash"] + params["b_hash"])
    lab = jax.nn.sigmoid(fea @ params["W_label"] + params["b_label"])
    return jnp.squeeze(fea), jnp.squeeze(hsh), jnp.squeeze(lab)


# ------------------------------------------------------------ param creation
def make_params(key):
    ks = jax.random.split(key, 12)
    n = lambda k, shape: (0.01 * jax.random.normal(k, shape)).astype(jnp.float32)
    # feature1 is NOT touched by init_parameters() -> default nn.Linear init.
    lim = 1.0 / jnp.sqrt(jnp.float32(CLIP_FEAT))
    u = lambda k, shape: jax.random.uniform(
        k, shape, jnp.float32, minval=-lim, maxval=lim)
    return {
        # Big streamed weight kept in bf16 (the dominant HBM traffic).
        "W_feat":  n(ks[0], (CNN_FEAT, TWO_SE)).astype(jnp.bfloat16),
        "b_feat":  n(ks[1], (1, TWO_SE)),
        "W_feat1": u(ks[2], (CLIP_FEAT, TWO_SE)),
        "b_feat1": u(ks[3], (1, TWO_SE)),
        "W_hash":  n(ks[4], (FEA_DIM, BIT)),
        "b_hash":  n(ks[5], (1, BIT)),
        "W_label": n(ks[6], (FEA_DIM, LABEL_DIM)),
        "b_label": n(ks[7], (1, LABEL_DIM)),
        "W_cross": n(ks[8], (FEA_DIM, FEA_DIM)),
        "b_cross": n(ks[9], (1, FEA_DIM)),
    }


if __name__ == "__main__":
    key = jax.random.PRNGKey(0)
    k_base, k_vit, k_params = jax.random.split(key, 3)

    # TODO(synk): pretrained VGG19 / CLIP ViT-B/32 backbones are not
    # reproducible in-script; their flattened outputs are simulated here.
    base = jax.random.normal(k_base, (B, CNN_FEAT), dtype=jnp.float32)
    vit = jax.random.normal(k_vit, (B, CLIP_FEAT), dtype=jnp.float32)
    params = make_params(k_params)

    fea_I, hsh_I, lab_I = image_net_forward(base, vit, params)
    jax.block_until_ready((fea_I, hsh_I, lab_I))

    assert fea_I.shape == (B, FEA_DIM)
    assert hsh_I.shape == (B, BIT)
    assert lab_I.shape == (B, LABEL_DIM)

    # Correctness check vs. pure-JAX reference (loose tolerance: bf16 stream).
    fea_r, hsh_r, lab_r = image_net_forward_ref(base, vit, params)
    assert jnp.allclose(fea_I, fea_r, rtol=5e-2, atol=5e-2)
    assert jnp.allclose(hsh_I, hsh_r, rtol=5e-2, atol=5e-2)
    assert jnp.allclose(lab_I, lab_r, rtol=5e-2, atol=5e-2)

    print("KERNEL_OK")
</pallas_src>

<mosaic_0001>
module attributes {stable_mosaic.version = 11 : i64} {
  func.func @_head_kernel(%arg0: i32, %arg1: memref<2x12544xbf16, #tpu.memory_space<vmem>>, %arg2: memref<12544x64xbf16, #tpu.memory_space<vmem>>, %arg3: memref<1x64xf32, #tpu.memory_space<vmem>>, %arg4: memref<2x512xf32, #tpu.memory_space<vmem>>, %arg5: memref<512x64xf32, #tpu.memory_space<vmem>>, %arg6: memref<1x64xf32, #tpu.memory_space<vmem>>, %arg7: memref<128x16xf32, #tpu.memory_space<vmem>>, %arg8: memref<1x16xf32, #tpu.memory_space<vmem>>, %arg9: memref<128x8xf32, #tpu.memory_space<vmem>>, %arg10: memref<1x8xf32, #tpu.memory_space<vmem>>, %arg11: memref<128x128xf32, #tpu.memory_space<vmem>>, %arg12: memref<1x128xf32, #tpu.memory_space<vmem>>, %arg13: memref<2x128xf32, #tpu.memory_space<vmem>>, %arg14: memref<2x16xf32, #tpu.memory_space<vmem>>, %arg15: memref<2x8xf32, #tpu.memory_space<vmem>>, %arg16: memref<2x128xf32, #tpu.memory_space<vmem>>, %arg17: memref<2x64xf32, #tpu.memory_space<vmem>>, %arg18: memref<2x64xf32, #tpu.memory_space<vmem>>) attributes {dimension_semantics = [#tpu.dimension_semantics<arbitrary>], iteration_bounds = array<i64: 2>, scalar_prefetch = 0 : i64, scratch_operands = 2 : i64, tpu.core_type = #tpu.core_type<tc>, window_params = [{transform_indices = @transform_0, window_bounds = array<i64: 2, 12544>}, {transform_indices = @transform_1, window_bounds = array<i64: 12544, 64>}, {pipeline_mode = #tpu.pipeline_mode<synchronous>, transform_indices = @transform_2, window_bounds = array<i64: 1, 64>}, {pipeline_mode = #tpu.pipeline_mode<synchronous>, transform_indices = @transform_3, window_bounds = array<i64: 2, 512>}, {pipeline_mode = #tpu.pipeline_mode<synchronous>, transform_indices = @transform_4, window_bounds = array<i64: 512, 64>}, {pipeline_mode = #tpu.pipeline_mode<synchronous>, transform_indices = @transform_5, window_bounds = array<i64: 1, 64>}, {pipeline_mode = #tpu.pipeline_mode<synchronous>, transform_indices = @transform_6, window_bounds = array<i64: 128, 16>}, {pipeline_mode = #tpu.pipeline_mode<synchronous>, transform_indices = @transform_7, window_bounds = array<i64: 1, 16>}, {pipeline_mode = #tpu.pipeline_mode<synchronous>, transform_indices = @transform_8, window_bounds = array<i64: 128, 8>}, {pipeline_mode = #tpu.pipeline_mode<synchronous>, transform_indices = @transform_9, window_bounds = array<i64: 1, 8>}, {pipeline_mode = #tpu.pipeline_mode<synchronous>, transform_indices = @transform_10, window_bounds = array<i64: 128, 128>}, {pipeline_mode = #tpu.pipeline_mode<synchronous>, transform_indices = @transform_11, window_bounds = array<i64: 1, 128>}, {pipeline_mode = #tpu.pipeline_mode<synchronous>, transform_indices = @transform_12, window_bounds = array<i64: 2, 128>}, {pipeline_mode = #tpu.pipeline_mode<synchronous>, transform_indices = @transform_13, window_bounds = array<i64: 2, 16>}, {pipeline_mode = #tpu.pipeline_mode<synchronous>, transform_indices = @transform_14, window_bounds = array<i64: 2, 8>}, {pipeline_mode = #tpu.pipeline_mode<synchronous>, transform_indices = @transform_15, window_bounds = array<i64: 2, 128>}]} {
    %c0_i32 = arith.constant 0 : i32
    %0 = arith.cmpi eq, %arg0, %c0_i32 : i32
    %1 = arith.extui %0 : i1 to i32
    %c0_i32_0 = arith.constant 0 : i32
    %2 = arith.cmpi ne, %1, %c0_i32_0 : i32
    scf.if %2 {
      %cst_9 = arith.constant 0.000000e+00 : f32
      %12 = vector.broadcast %cst_9 : f32 to vector<2x64xf32>
      %c0_10 = arith.constant 0 : index
      %c0_11 = arith.constant 0 : index
      %13 = vector.load %arg17[%c0_10, %c0_11] : memref<2x64xf32, #tpu.memory_space<vmem>>, vector<2x64xf32>
      tpu.vector_store %arg17[%c0_10, %c0_11], %12 {strides = array<i32>} : memref<2x64xf32, #tpu.memory_space<vmem>>, vector<2x64xf32>,
      %c0_12 = arith.constant 0 : index
      %c0_13 = arith.constant 0 : index
      %14 = vector.load %arg4[%c0_12, %c0_13] : memref<2x512xf32, #tpu.memory_space<vmem>>, vector<2x512xf32>
      %c0_14 = arith.constant 0 : index
      %c0_15 = arith.constant 0 : index
      %15 = vector.load %arg5[%c0_14, %c0_15] : memref<512x64xf32, #tpu.memory_space<vmem>>, vector<512x64xf32>
      %cst_16 = arith.constant dense<0.000000e+00> : vector<2x64xf32>
      %16 = tpu.matmul %14, %15, %cst_16 {dimension_numbers = #tpu.dot_dimension_numbers<[1], [0], [0], [1], [0, 0, 1, 1], [], []>} : vector<2x512xf32>, vector<512x64xf32>, vector<2x64xf32> -> vector<2x64xf32>
      %c0_17 = arith.constant 0 : index
      %c0_18 = arith.constant 0 : index
      %17 = vector.load %arg6[%c0_17, %c0_18] : memref<1x64xf32, #tpu.memory_space<vmem>>, vector<1x64xf32>
      %18 = vector.broadcast %17 : vector<1x64xf32> to vector<2x64xf32>
      %19 = arith.addf %16, %18 : vector<2x64xf32>
      %c0_19 = arith.constant 0 : index
      %c0_20 = arith.constant 0 : index
      %20 = vector.load %arg18[%c0_19, %c0_20] : memref<2x64xf32, #tpu.memory_space<vmem>>, vector<2x64xf32>
      tpu.vector_store %arg18[%c0_19, %c0_20], %19 {strides = array<i32>} : memref<2x64xf32, #tpu.memory_space<vmem>>, vector<2x64xf32>,
    } else {
    }
    %c0 = arith.constant 0 : index
    %c0_1 = arith.constant 0 : index
    %3 = vector.load %arg17[%c0, %c0_1] : memref<2x64xf32, #tpu.memory_space<vmem>>, vector<2x64xf32>
    %c0_2 = arith.constant 0 : index
    %c0_3 = arith.constant 0 : index
    %4 = vector.load %arg1[%c0_2, %c0_3] : memref<2x12544xbf16, #tpu.memory_space<vmem>>, vector<2x12544xbf16>
    %c0_4 = arith.constant 0 : index
    %c0_5 = arith.constant 0 : index
    %5 = vector.load %arg2[%c0_4, %c0_5] : memref<12544x64xbf16, #tpu.memory_space<vmem>>, vector<12544x64xbf16>
    %cst = arith.constant dense<0.000000e+00> : vector<2x64xf32>
    %6 = tpu.matmul %4, %5, %cst {dimension_numbers = #tpu.dot_dimension_numbers<[1], [0], [0], [1], [0, 0, 1, 1], [], []>} : vector<2x12544xbf16>, vector<12544x64xbf16>, vector<2x64xf32> -> vector<2x64xf32>
    %7 = arith.addf %3, %6 : vector<2x64xf32>
    %c0_6 = arith.constant 0 : index
    %c0_7 = arith.constant 0 : index
    %8 = vector.load %arg17[%c0_6, %c0_7] : memref<2x64xf32, #tpu.memory_space<vmem>>, vector<2x64xf32>
    tpu.vector_store %arg17[%c0_6, %c0_7], %7 {strides = array<i32>} : memref<2x64xf32, #tpu.memory_space<vmem>>, vector<2x64xf32>,
    %c1_i32 = arith.constant 1 : i32
    %9 = arith.cmpi eq, %arg0, %c1_i32 : i32
    %10 = arith.extui %9 : i1 to i32
    %c0_i32_8 = arith.constant 0 : i32
    %11 = arith.cmpi ne, %10, %c0_i32_8 : i32
    scf.if %11 {
      %c0_9 = arith.constant 0 : index
      %c0_10 = arith.constant 0 : index
      %12 = vector.load %arg17[%c0_9, %c0_10] : memref<2x64xf32, #tpu.memory_space<vmem>>, vector<2x64xf32>
      %c0_11 = arith.constant 0 : index
      %c0_12 = arith.constant 0 : index
      %13 = vector.load %arg3[%c0_11, %c0_12] : memref<1x64xf32, #tpu.memory_space<vmem>>, vector<1x64xf32>
      %14 = vector.broadcast %13 : vector<1x64xf32> to vector<2x64xf32>
      %15 = arith.addf %12, %14 : vector<2x64xf32>
      %c0_13 = arith.constant 0 : index
      %c0_14 = arith.constant 0 : index
      %16 = vector.load %arg18[%c0_13, %c0_14] : memref<2x64xf32, #tpu.memory_space<vmem>>, vector<2x64xf32>
      %17 = tpu.concatenate %15, %16 in 1 : vector<2x64xf32>, vector<2x64xf32> -> vector<2x128xf32>
      %c0_15 = arith.constant 0 : index
      %c0_16 = arith.constant 0 : index
      %18 = vector.load %arg13[%c0_15, %c0_16] : memref<2x128xf32, #tpu.memory_space<vmem>>, vector<2x128xf32>
      tpu.vector_store %arg13[%c0_15, %c0_16], %17 {strides = array<i32>} : memref<2x128xf32, #tpu.memory_space<vmem>>, vector<2x128xf32>,
      %c0_17 = arith.constant 0 : index
      %c0_18 = arith.constant 0 : index
      %19 = vector.load %arg11[%c0_17, %c0_18] : memref<128x128xf32, #tpu.memory_space<vmem>>, vector<128x128xf32>
      %cst_19 = arith.constant dense<0.000000e+00> : vector<2x128xf32>
      %20 = tpu.matmul %17, %19, %cst_19 {dimension_numbers = #tpu.dot_dimension_numbers<[1], [0], [0], [1], [0, 0, 1, 1], [], []>} : vector<2x128xf32>, vector<128x128xf32>, vector<2x128xf32> -> vector<2x128xf32>
      %c0_20 = arith.constant 0 : index
      %c0_21 = arith.constant 0 : index
      %21 = vector.load %arg12[%c0_20, %c0_21] : memref<1x128xf32, #tpu.memory_space<vmem>>, vector<1x128xf32>
      %22 = vector.broadcast %21 : vector<1x128xf32> to vector<2x128xf32>
      %23 = arith.addf %20, %22 : vector<2x128xf32>
      %c0_22 = arith.constant 0 : index
      %c0_23 = arith.constant 0 : index
      %24 = vector.load %arg16[%c0_22, %c0_23] : memref<2x128xf32, #tpu.memory_space<vmem>>, vector<2x128xf32>
      tpu.vector_store %arg16[%c0_22, %c0_23], %23 {strides = array<i32>} : memref<2x128xf32, #tpu.memory_space<vmem>>, vector<2x128xf32>,
      %c0_24 = arith.constant 0 : index
      %c0_25 = arith.constant 0 : index
      %25 = vector.load %arg7[%c0_24, %c0_25] : memref<128x16xf32, #tpu.memory_space<vmem>>, vector<128x16xf32>
      %cst_26 = arith.constant dense<0.000000e+00> : vector<2x16xf32>
      %26 = tpu.matmul %17, %25, %cst_26 {dimension_numbers = #tpu.dot_dimension_numbers<[1], [0], [0], [1], [0, 0, 1, 1], [], []>} : vector<2x128xf32>, vector<128x16xf32>, vector<2x16xf32> -> vector<2x16xf32>
      %c0_27 = arith.constant 0 : index
      %c0_28 = arith.constant 0 : index
      %27 = vector.load %arg8[%c0_27, %c0_28] : memref<1x16xf32, #tpu.memory_space<vmem>>, vector<1x16xf32>
      %28 = vector.broadcast %27 : vector<1x16xf32> to vector<2x16xf32>
      %29 = arith.addf %26, %28 : vector<2x16xf32>
      %30 = math.tanh %29 : vector<2x16xf32>
      %c0_29 = arith.constant 0 : index
      %c0_30 = arith.constant 0 : index
      %31 = vector.load %arg14[%c0_29, %c0_30] : memref<2x16xf32, #tpu.memory_space<vmem>>, vector<2x16xf32>
      tpu.vector_store %arg14[%c0_29, %c0_30], %30 {strides = array<i32>} : memref<2x16xf32, #tpu.memory_space<vmem>>, vector<2x16xf32>,
      %c0_31 = arith.constant 0 : index
      %c0_32 = arith.constant 0 : index
      %32 = vector.load %arg9[%c0_31, %c0_32] : memref<128x8xf32, #tpu.memory_space<vmem>>, vector<128x8xf32>
      %cst_33 = arith.constant dense<0.000000e+00> : vector<2x8xf32>
      %33 = tpu.matmul %17, %32, %cst_33 {dimension_numbers = #tpu.dot_dimension_numbers<[1], [0], [0], [1], [0, 0, 1, 1], [], []>} : vector<2x128xf32>, vector<128x8xf32>, vector<2x8xf32> -> vector<2x8xf32>
      %c0_34 = arith.constant 0 : index
      %c0_35 = arith.constant 0 : index
      %34 = vector.load %arg10[%c0_34, %c0_35] : memref<1x8xf32, #tpu.memory_space<vmem>>, vector<1x8xf32>
      %35 = vector.broadcast %34 : vector<1x8xf32> to vector<2x8xf32>
      %36 = arith.addf %33, %35 : vector<2x8xf32>
      %37 = arith.negf %36 : vector<2x8xf32>
      %38 = math.exp %37 : vector<2x8xf32>
      %cst_36 = arith.constant 1.000000e+00 : f32
      %39 = vector.broadcast %cst_36 : f32 to vector<2x8xf32>
      %40 = arith.addf %39, %38 : vector<2x8xf32>
      %41 = arith.divf %39, %40 : vector<2x8xf32>
      %c0_37 = arith.constant 0 : index
      %c0_38 = arith.constant 0 : index
      %42 = vector.load %arg15[%c0_37, %c0_38] : memref<2x8xf32, #tpu.memory_space<vmem>>, vector<2x8xf32>
      tpu.vector_store %arg15[%c0_37, %c0_38], %41 {strides = array<i32>} : memref<2x8xf32, #tpu.memory_space<vmem>>, vector<2x8xf32>,
    } else {
    }
    return
  }
  func.func @transform_0(%arg0: i32) -> (i32, i32) {
    %c0_i32 = arith.constant 0 : i32
    %c0_i32_0 = arith.constant 0 : i32
    return %c0_i32, %arg0 : i32, i32
  }
  func.func @transform_1(%arg0: i32) -> (i32, i32) {
    %c0_i32 = arith.constant 0 : i32
    %c0_i32_0 = arith.constant 0 : i32
    return %arg0, %c0_i32 : i32, i32
  }
  func.func @transform_2(%arg0: i32) -> (i32, i32) {
    %c0_i32 = arith.constant 0 : i32
    %c0_i32_0 = arith.constant 0 : i32
    %c0_i32_1 = arith.constant 0 : i32
    return %c0_i32, %c0_i32_0 : i32, i32
  }
  func.func @transform_3(%arg0: i32) -> (i32, i32) {
    %c0_i32 = arith.constant 0 : i32
    %c0_i32_0 = arith.constant 0 : i32
    %c0_i32_1 = arith.constant 0 : i32
    return %c0_i32, %c0_i32_0 : i32, i32
  }
  func.func @transform_4(%arg0: i32) -> (i32, i32) {
    %c0_i32 = arith.constant 0 : i32
    %c0_i32_0 = arith.constant 0 : i32
    %c0_i32_1 = arith.constant 0 : i32
    return %c0_i32, %c0_i32_0 : i32, i32
  }
  func.func @transform_5(%arg0: i32) -> (i32, i32) {
    %c0_i32 = arith.constant 0 : i32
    %c0_i32_0 = arith.constant 0 : i32
    %c0_i32_1 = arith.constant 0 : i32
    return %c0_i32, %c0_i32_0 : i32, i32
  }
  func.func @transform_6(%arg0: i32) -> (i32, i32) {
    %c0_i32 = arith.constant 0 : i32
    %c0_i32_0 = arith.constant 0 : i32
    %c0_i32_1 = arith.constant 0 : i32
    return %c0_i32, %c0_i32_0 : i32, i32
  }
  func.func @transform_7(%arg0: i32) -> (i32, i32) {
    %c0_i32 = arith.constant 0 : i32
    %c0_i32_0 = arith.constant 0 : i32
    %c0_i32_1 = arith.constant 0 : i32
    return %c0_i32, %c0_i32_0 : i32, i32
  }
  func.func @transform_8(%arg0: i32) -> (i32, i32) {
    %c0_i32 = arith.constant 0 : i32
    %c0_i32_0 = arith.constant 0 : i32
    %c0_i32_1 = arith.constant 0 : i32
    return %c0_i32, %c0_i32_0 : i32, i32
  }
  func.func @transform_9(%arg0: i32) -> (i32, i32) {
    %c0_i32 = arith.constant 0 : i32
    %c0_i32_0 = arith.constant 0 : i32
    %c0_i32_1 = arith.constant 0 : i32
    return %c0_i32, %c0_i32_0 : i32, i32
  }
  func.func @transform_10(%arg0: i32) -> (i32, i32) {
    %c0_i32 = arith.constant 0 : i32
    %c0_i32_0 = arith.constant 0 : i32
    %c0_i32_1 = arith.constant 0 : i32
    return %c0_i32, %c0_i32_0 : i32, i32
  }
  func.func @transform_11(%arg0: i32) -> (i32, i32) {
    %c0_i32 = arith.constant 0 : i32
    %c0_i32_0 = arith.constant 0 : i32
    %c0_i32_1 = arith.constant 0 : i32
    return %c0_i32, %c0_i32_0 : i32, i32
  }
  func.func @transform_12(%arg0: i32) -> (i32, i32) {
    %c0_i32 = arith.constant 0 : i32
    %c0_i32_0 = arith.constant 0 : i32
    %c0_i32_1 = arith.constant 0 : i32
    return %c0_i32, %c0_i32_0 : i32, i32
  }
  func.func @transform_13(%arg0: i32) -> (i32, i32) {
    %c0_i32 = arith.constant 0 : i32
    %c0_i32_0 = arith.constant 0 : i32
    %c0_i32_1 = arith.constant 0 : i32
    return %c0_i32, %c0_i32_0 : i32, i32
  }
  func.func @transform_14(%arg0: i32) -> (i32, i32) {
    %c0_i32 = arith.constant 0 : i32
    %c0_i32_0 = arith.constant 0 : i32
    %c0_i32_1 = arith.constant 0 : i32
    return %c0_i32, %c0_i32_0 : i32, i32
  }
  func.func @transform_15(%arg0: i32) -> (i32, i32) {
    %c0_i32 = arith.constant 0 : i32
    %c0_i32_0 = arith.constant 0 : i32
    %c0_i32_1 = arith.constant 0 : i32
    return %c0_i32, %c0_i32_0 : i32, i32
  }
}

</mosaic_0001>

<llo_original>
// kernel: image_net_forward.1
$region0: #{image_net_forward.1}
  #allocation0 [shape = 'u32[]', space=smem, size = 0x4, offset = 0x4, fixed_abs, tag = 'smem constant byte address 0x4 - core index']
  #allocation1 [shape = 'u32[144,128]{1,0:T(1,128)}', space=vmem, size = 0x12000, scoped, tag = 'internal scratch']
  #allocation2 [shape = 'f32[2,64]{1,0:T(2,128)}', space=vmem, size = 0x400, scoped, tag = 'scratch operand']
  #allocation3 [shape = 'f32[2,64]{1,0:T(2,128)}', space=vmem, size = 0x400, scoped, tag = 'scratch operand']
  %s0 = inlined_call_operand.vmem [shape: bf16[2,25088], index: 0, kind: input, shape index: {}]
  %s1 = inlined_call_operand.vmem [shape: bf16[25088,64], index: 1, kind: input, shape index: {}]
  %s2 = inlined_call_operand.vmem [shape: f32[1,64], index: 2, kind: input, shape index: {}]
  %s3 = inlined_call_operand.vmem [shape: f32[2,512], index: 3, kind: input, shape index: {}]
  %s4 = inlined_call_operand.vmem [shape: f32[512,64], index: 4, kind: input, shape index: {}]
  %s5 = inlined_call_operand.vmem [shape: f32[1,64], index: 5, kind: input, shape index: {}]
  %s6 = inlined_call_operand.vmem [shape: f32[128,16], index: 6, kind: input, shape index: {}]
  %s7 = inlined_call_operand.vmem [shape: f32[1,16], index: 7, kind: input, shape index: {}]
  %s8 = inlined_call_operand.vmem [shape: f32[128,8], index: 8, kind: input, shape index: {}]
  %s9 = inlined_call_operand.vmem [shape: f32[1,8], index: 9, kind: input, shape index: {}]
  %s10 = inlined_call_operand.vmem [shape: f32[128,128], index: 10, kind: input, shape index: {}]
  %s11 = inlined_call_operand.vmem [shape: f32[1,128], index: 11, kind: input, shape index: {}]
  %s12 = inlined_call_operand.hbm [shape: f32[2,128], index: 12, kind: output, shape index: {0}]
  %s13 = inlined_call_operand.hbm [shape: f32[2,16], index: 13, kind: output, shape index: {1}]
  %s14 = inlined_call_operand.hbm [shape: f32[2,8], index: 14, kind: output, shape index: {2}]
  %s15 = inlined_call_operand.hbm [shape: f32[2,128], index: 15, kind: output, shape index: {3}]
  %16 = xla_tuple %s12, %s13, %s14, %s15
  %s17 = sld [smem:[#allocation0]]
  $region113: #{image_net_forward.1} parent=0
    _
  %s19 = ssub.s32 1, %s17
  %s20 = scalar_select 0, %s19, %s17
  $region1: #{image_net_forward.1} parent=0
    #allocation4 [shape = 'u8[1024]{0}', space=vmem, size = 0x400, scoped, tag = 'output window, operand 0, single buffered']
    #allocation5 [shape = 's32[2]{0}', space=sflag, size = 0x8, scoped, tag = 'scoped memory for image_net_forward.1']
    #allocation6 [shape = 'u8[1024]{0}', space=vmem, size = 0x400, scoped, tag = 'output window, operand 1, single buffered']
    #allocation7 [shape = 's32[1]{0}', space=sflag, size = 0x4, scoped, tag = 'scoped memory for image_net_forward.1']
    #allocation8 [shape = 'u8[1024]{0}', space=vmem, size = 0x400, scoped, tag = 'output window, operand 2, single buffered']
    #allocation9 [shape = 'u8[1024]{0}', space=vmem, size = 0x400, scoped, tag = 'output window, operand 3, single buffered']
    #allocation10 [shape = 's32[1]{0}', space=sflag, size = 0x4, scoped, tag = 'scoped memory for image_net_forward.1']
    %21 = vsyncpa [#allocation5], 0
    %22 = vsyncpa [#allocation7], 0
    %23 = vsyncpa [#allocation10], 0
    loop: start=0, step=1, limit=4
    $region2: #{image_net_forward.1} parent=1 // loop_pre_header
      _
    $region3: #{image_net_forward.1} parent=1 // loop_header
      %s25 = sphi 0, %s29
      %p26 = scmp.ge.s32.totalorder %s25, 4
      %s35 = sphi 0, %s37
      %s38 = sphi 0, %s35
      %s39 = sphi 0, %s38
      %s55 = sphi 0, %s39
      %s61 = sphi 0, %s63
      %s64 = sphi 0, %s61
      %s65 = sphi 0, %s64
      %s81 = sphi 0, %s65
      %s85 = sphi 0, %s85
      %s87 = sphi 0, %s85
      %s88 = sphi 0, %s87
      %s102 = sphi 0, %s88
      %s106 = sphi 0, %s106
      %s108 = sphi 0, %s106
      %s109 = sphi 0, %s108
      %s123 = sphi 0, %s109
      %s127 = sphi 0, %s127
      %s129 = sphi 0, %s127
      %s130 = sphi 0, %s129
      %s144 = sphi 0, %s130
      %s148 = sphi 0, %s148
      %s150 = sphi 0, %s148
      %s151 = sphi 0, %s150
      %s165 = sphi 0, %s151
      %s169 = sphi 0, %s169
      %s171 = sphi 0, %s169
      %s172 = sphi 0, %s171
      %s186 = sphi 0, %s172
      %s190 = sphi 0, %s190
      %s192 = sphi 0, %s190
      %s193 = sphi 0, %s192
      %s207 = sphi 0, %s193
      %s211 = sphi 0, %s211
      %s213 = sphi 0, %s211
      %s214 = sphi 0, %s213
      %s228 = sphi 0, %s214
      %s232 = sphi 0, %s232
      %s234 = sphi 0, %s232
      %s235 = sphi 0, %s234
      %s249 = sphi 0, %s235
      %s253 = sphi 0, %s253
      %s255 = sphi 0, %s253
      %s256 = sphi 0, %s255
      %s270 = sphi 0, %s256
      %s274 = sphi 0, %s274
      %s276 = sphi 0, %s274
      %s277 = sphi 0, %s276
      %s291 = sphi 0, %s277
      %s295 = sphi 0, %s295
      %s297 = sphi 0, %s295
      %s298 = sphi 0, %s297
      %s312 = sphi 0, %s298
      %s316 = sphi 0, %s316
      %s318 = sphi 0, %s316
      %s319 = sphi 0, %s318
      %s333 = sphi 0, %s319
      %s337 = sphi 0, %s337
      %s339 = sphi 0, %s337
      %s340 = sphi 0, %s339
      %s354 = sphi 0, %s340
      %s358 = sphi 0, %s358
      %s360 = sphi 0, %s358
      %s361 = sphi 0, %s360
      %s375 = sphi 0, %s361
    $region4: #{image_net_forward.1} parent=1 // loop_header_branch
      %28 = sbr.rel (%p26) target = $region8
    $region5: #{image_net_forward.1} parent=1 // loop_body
      %s30 = ssub.s32 %s25, 1
      %s31 = ssub.s32 %s25, 2
      %s32 = sadd.s32 %s25, 1
      %s33 = ssub.s32 %s25, %s32
      %p34 = scmp.eq.s32.totalorder %s33, 0
      %s36 = sadd.s32 %s35, 1
      %s37 = scalar_select %p34, %s35, %s36
      %p40 = pneg %p34
      %p41 = scmp.eq.s32.totalorder %s25, 1
      %p42 = por %p40, %p41
      %p43 = scmp.ne.s32.totalorder %s35, %s38
      %p44 = scmp.eq.s32.totalorder %s25, 0
      %p45 = por %p43, %p44
      %p46 = scmp.ne.s32.totalorder %s35, %s38
      %p47 = scmp.eq.s32.totalorder %s30, 1
      %p48 = por %p46, %p47
      %p49 = scmp.ne.s32.totalorder %s38, %s39
      %p50 = scmp.eq.s32.totalorder %s30, 0
      %p51 = por %p49, %p50
      %p52 = scmp.ne.s32.totalorder %s38, %s39
      %p53 = scmp.eq.s32.totalorder %s31, 1
      %p54 = por %p52, %p53
      %p56 = scmp.ne.s32.totalorder %s39, %s55
      %p57 = scmp.eq.s32.totalorder %s31, 0
      %p58 = por %p56, %p57
      %s59 = ssub.s32 %s25, %s32
      %p60 = scmp.eq.s32.totalorder %s59, 0
      %s62 = sadd.s32 %s61, 1
      %s63 = scalar_select %p60, %s61, %s62
      %p66 = pneg %p60
      %p67 = scmp.eq.s32.totalorder %s25, 1
      %p68 = por %p66, %p67
      %p69 = scmp.ne.s32.totalorder %s61, %s64
      %p70 = scmp.eq.s32.totalorder %s25, 0
      %p71 = por %p69, %p70
      %p72 = scmp.ne.s32.totalorder %s61, %s64
      %p73 = scmp.eq.s32.totalorder %s30, 1
      %p74 = por %p72, %p73
      %p75 = scmp.ne.s32.totalorder %s64, %s65
      %p76 = scmp.eq.s32.totalorder %s30, 0
      %p77 = por %p75, %p76
      %p78 = scmp.ne.s32.totalorder %s64, %s65
      %p79 = scmp.eq.s32.totalorder %s31, 1
      %p80 = por %p78, %p79
      %p82 = scmp.ne.s32.totalorder %s65, %s81
      %p83 = scmp.eq.s32.totalorder %s31, 0
      %p84 = por %p82, %p83
      %s86 = sadd.s32 %s85, 1
      %p89 = scmp.eq.s32.totalorder %s25, 1
      %p90 = scmp.ne.s32.totalorder %s85, %s87
      %p91 = scmp.eq.s32.totalorder %s25, 0
      %p92 = por %p90, %p91
      %p93 = scmp.ne.s32.totalorder %s85, %s87
      %p94 = scmp.eq.s32.totalorder %s30, 1
      %p95 = por %p93, %p94
      %p96 = scmp.ne.s32.totalorder %s87, %s88
      %p97 = scmp.eq.s32.totalorder %s30, 0
      %p98 = por %p96, %p97
      %p99 = scmp.ne.s32.totalorder %s87, %s88
      %p100 = scmp.eq.s32.totalorder %s31, 1
      %p101 = por %p99, %p100
      %p103 = scmp.ne.s32.totalorder %s88, %s102
      %p104 = scmp.eq.s32.totalorder %s31, 0
      %p105 = por %p103, %p104
      %s107 = sadd.s32 %s106, 1
      %p110 = scmp.eq.s32.totalorder %s25, 1
      %p111 = scmp.ne.s32.totalorder %s106, %s108
      %p112 = scmp.eq.s32.totalorder %s25, 0
      %p113 = por %p111, %p112
      %p114 = scmp.ne.s32.totalorder %s106, %s108
      %p115 = scmp.eq.s32.totalorder %s30, 1
      %p116 = por %p114, %p115
      %p117 = scmp.ne.s32.totalorder %s108, %s109
      %p118 = scmp.eq.s32.totalorder %s30, 0
      %p119 = por %p117, %p118
      %p120 = scmp.ne.s32.totalorder %s108, %s109
      %p121 = scmp.eq.s32.totalorder %s31, 1
      %p122 = por %p120, %p121
      %p124 = scmp.ne.s32.totalorder %s109, %s123
      %p125 = scmp.eq.s32.totalorder %s31, 0
      %p126 = por %p124, %p125
      %s128 = sadd.s32 %s127, 1
      %p131 = scmp.eq.s32.totalorder %s25, 1
      %p132 = scmp.ne.s32.totalorder %s127, %s129
      %p133 = scmp.eq.s32.totalorder %s25, 0
      %p134 = por %p132, %p133
      %p135 = scmp.ne.s32.totalorder %s127, %s129
      %p136 = scmp.eq.s32.totalorder %s30, 1
      %p137 = por %p135, %p136
      %p138 = scmp.ne.s32.totalorder %s129, %s130
      %p139 = scmp.eq.s32.totalorder %s30, 0
      %p140 = por %p138, %p139
      %p141 = scmp.ne.s32.totalorder %s129, %s130
      %p142 = scmp.eq.s32.totalorder %s31, 1
      %p143 = por %p141, %p142
      %p145 = scmp.ne.s32.totalorder %s130, %s144
      %p146 = scmp.eq.s32.totalorder %s31, 0
      %p147 = por %p145, %p146
      %s149 = sadd.s32 %s148, 1
      %p152 = scmp.eq.s32.totalorder %s25, 1
      %p153 = scmp.ne.s32.totalorder %s148, %s150
      %p154 = scmp.eq.s32.totalorder %s25, 0
      %p155 = por %p153, %p154
      %p156 = scmp.ne.s32.totalorder %s148, %s150
      %p157 = scmp.eq.s32.totalorder %s30, 1
      %p158 = por %p156, %p157
      %p159 = scmp.ne.s32.totalorder %s150, %s151
      %p160 = scmp.eq.s32.totalorder %s30, 0
      %p161 = por %p159, %p160
      %p162 = scmp.ne.s32.totalorder %s150, %s151
      %p163 = scmp.eq.s32.totalorder %s31, 1
      %p164 = por %p162, %p163
      %p166 = scmp.ne.s32.totalorder %s151, %s165
      %p167 = scmp.eq.s32.totalorder %s31, 0
      %p168 = por %p166, %p167
      %s170 = sadd.s32 %s169, 1
      %p173 = scmp.eq.s32.totalorder %s25, 1
      %p174 = scmp.ne.s32.totalorder %s169, %s171
      %p175 = scmp.eq.s32.totalorder %s25, 0
      %p176 = por %p174, %p175
      %p177 = scmp.ne.s32.totalorder %s169, %s171
      %p178 = scmp.eq.s32.totalorder %s30, 1
      %p179 = por %p177, %p178
      %p180 = scmp.ne.s32.totalorder %s171, %s172
      %p181 = scmp.eq.s32.totalorder %s30, 0
      %p182 = por %p180, %p181
      %p183 = scmp.ne.s32.totalorder %s171, %s172
      %p184 = scmp.eq.s32.totalorder %s31, 1
      %p185 = por %p183, %p184
      %p187 = scmp.ne.s32.totalorder %s172, %s186
      %p188 = scmp.eq.s32.totalorder %s31, 0
      %p189 = por %p187, %p188
      %s191 = sadd.s32 %s190, 1
      %p194 = scmp.eq.s32.totalorder %s25, 1
      %p195 = scmp.ne.s32.totalorder %s190, %s192
      %p196 = scmp.eq.s32.totalorder %s25, 0
      %p197 = por %p195, %p196
      %p198 = scmp.ne.s32.totalorder %s190, %s192
      %p199 = scmp.eq.s32.totalorder %s30, 1
      %p200 = por %p198, %p199
      %p201 = scmp.ne.s32.totalorder %s192, %s193
      %p202 = scmp.eq.s32.totalorder %s30, 0
      %p203 = por %p201, %p202
      %p204 = scmp.ne.s32.totalorder %s192, %s193
      %p205 = scmp.eq.s32.totalorder %s31, 1
      %p206 = por %p204, %p205
      %p208 = scmp.ne.s32.totalorder %s193, %s207
      %p209 = scmp.eq.s32.totalorder %s31, 0
      %p210 = por %p208, %p209
      %s212 = sadd.s32 %s211, 1
      %p215 = scmp.eq.s32.totalorder %s25, 1
      %p216 = scmp.ne.s32.totalorder %s211, %s213
      %p217 = scmp.eq.s32.totalorder %s25, 0
      %p218 = por %p216, %p217
      %p219 = scmp.ne.s32.totalorder %s211, %s213
      %p220 = scmp.eq.s32.totalorder %s30, 1
      %p221 = por %p219, %p220
      %p222 = scmp.ne.s32.totalorder %s213, %s214
      %p223 = scmp.eq.s32.totalorder %s30, 0
      %p224 = por %p222, %p223
      %p225 = scmp.ne.s32.totalorder %s213, %s214
      %p226 = scmp.eq.s32.totalorder %s31, 1
      %p227 = por %p225, %p226
      %p229 = scmp.ne.s32.totalorder %s214, %s228
      %p230 = scmp.eq.s32.totalorder %s31, 0
      %p231 = por %p229, %p230
      %s233 = sadd.s32 %s232, 1
      %p236 = scmp.eq.s32.totalorder %s25, 1
      %p237 = scmp.ne.s32.totalorder %s232, %s234
      %p238 = scmp.eq.s32.totalorder %s25, 0
      %p239 = por %p237, %p238
      %p240 = scmp.ne.s32.totalorder %s232, %s234
      %p241 = scmp.eq.s32.totalorder %s30, 1
      %p242 = por %p240, %p241
      %p243 = scmp.ne.s32.totalorder %s234, %s235
      %p244 = scmp.eq.s32.totalorder %s30, 0
      %p245 = por %p243, %p244
      %p246 = scmp.ne.s32.totalorder %s234, %s235
      %p247 = scmp.eq.s32.totalorder %s31, 1
      %p248 = por %p246, %p247
      %p250 = scmp.ne.s32.totalorder %s235, %s249
      %p251 = scmp.eq.s32.totalorder %s31, 0
      %p252 = por %p250, %p251
      %s254 = sadd.s32 %s253, 1
      %p257 = scmp.eq.s32.totalorder %s25, 1
      %p258 = scmp.ne.s32.totalorder %s253, %s255
      %p259 = scmp.eq.s32.totalorder %s25, 0
      %p260 = por %p258, %p259
      %p261 = scmp.ne.s32.totalorder %s253, %s255
      %p262 = scmp.eq.s32.totalorder %s30, 1
      %p263 = por %p261, %p262
      %p264 = scmp.ne.s32.totalorder %s255, %s256
      %p265 = scmp.eq.s32.totalorder %s30, 0
      %p266 = por %p264, %p265
      %p267 = scmp.ne.s32.totalorder %s255, %s256
      %p268 = scmp.eq.s32.totalorder %s31, 1
      %p269 = por %p267, %p268
      %p271 = scmp.ne.s32.totalorder %s256, %s270
      %p272 = scmp.eq.s32.totalorder %s31, 0
      %p273 = por %p271, %p272
      %s275 = sadd.s32 %s274, 1
      %p278 = scmp.eq.s32.totalorder %s25, 1
      %p279 = scmp.ne.s32.totalorder %s274, %s276
      %p280 = scmp.eq.s32.totalorder %s25, 0
      %p281 = por %p279, %p280
      %p282 = scmp.ne.s32.totalorder %s274, %s276
      %p283 = scmp.eq.s32.totalorder %s30, 1
      %p284 = por %p282, %p283
      %p285 = scmp.ne.s32.totalorder %s276, %s277
      %p286 = scmp.eq.s32.totalorder %s30, 0
      %p287 = por %p285, %p286
      %p288 = scmp.ne.s32.totalorder %s276, %s277
      %p289 = scmp.eq.s32.totalorder %s31, 1
      %p290 = por %p288, %p289
      %p292 = scmp.ne.s32.totalorder %s277, %s291
      %p293 = scmp.eq.s32.totalorder %s31, 0
      %p294 = por %p292, %p293
      %s296 = sadd.s32 %s295, 1
      %p299 = scmp.eq.s32.totalorder %s25, 1
      %p300 = scmp.ne.s32.totalorder %s295, %s297
      %p301 = scmp.eq.s32.totalorder %s25, 0
      %p302 = por %p300, %p301
      %p303 = scmp.ne.s32.totalorder %s295, %s297
      %p304 = scmp.eq.s32.totalorder %s30, 1
      %p305 = por %p303, %p304
      %p306 = scmp.ne.s32.totalorder %s297, %s298
      %p307 = scmp.eq.s32.totalorder %s30, 0
      %p308 = por %p306, %p307
      %p309 = scmp.ne.s32.totalorder %s297, %s298
      %p310 = scmp.eq.s32.totalorder %s31, 1
      %p311 = por %p309, %p310
      %p313 = scmp.ne.s32.totalorder %s298, %s312
      %p314 = scmp.eq.s32.totalorder %s31, 0
      %p315 = por %p313, %p314
      %s317 = sadd.s32 %s316, 1
      %p320 = scmp.eq.s32.totalorder %s25, 1
      %p321 = scmp.ne.s32.totalorder %s316, %s318
      %p322 = scmp.eq.s32.totalorder %s25, 0
      %p323 = por %p321, %p322
      %p324 = scmp.ne.s32.totalorder %s316, %s318
      %p325 = scmp.eq.s32.totalorder %s30, 1
      %p326 = por %p324, %p325
      %p327 = scmp.ne.s32.totalorder %s318, %s319
      %p328 = scmp.eq.s32.totalorder %s30, 0
      %p329 = por %p327, %p328
      %p330 = scmp.ne.s32.totalorder %s318, %s319
      %p331 = scmp.eq.s32.totalorder %s31, 1
      %p332 = por %p330, %p331
      %p334 = scmp.ne.s32.totalorder %s319, %s333
      %p335 = scmp.eq.s32.totalorder %s31, 0
      %p336 = por %p334, %p335
      %s338 = sadd.s32 %s337, 1
      %p341 = scmp.eq.s32.totalorder %s25, 1
      %p342 = scmp.ne.s32.totalorder %s337, %s339
      %p343 = scmp.eq.s32.totalorder %s25, 0
      %p344 = por %p342, %p343
      %p345 = scmp.ne.s32.totalorder %s337, %s339
      %p346 = scmp.eq.s32.totalorder %s30, 1
      %p347 = por %p345, %p346
      %p348 = scmp.ne.s32.totalorder %s339, %s340
      %p349 = scmp.eq.s32.totalorder %s30, 0
      %p350 = por %p348, %p349
      %p351 = scmp.ne.s32.totalorder %s339, %s340
      %p352 = scmp.eq.s32.totalorder %s31, 1
      %p353 = por %p351, %p352
      %p355 = scmp.ne.s32.totalorder %s340, %s354
      %p356 = scmp.eq.s32.totalorder %s31, 0
      %p357 = por %p355, %p356
      %s359 = sadd.s32 %s358, 1
      %p362 = scmp.eq.s32.totalorder %s25, 1
      %p363 = scmp.ne.s32.totalorder %s358, %s360
      %p364 = scmp.eq.s32.totalorder %s25, 0
      %p365 = por %p363, %p364
      %p366 = scmp.ne.s32.totalorder %s358, %s360
      %p367 = scmp.eq.s32.totalorder %s30, 1
      %p368 = por %p366, %p367
      %p369 = scmp.ne.s32.totalorder %s360, %s361
      %p370 = scmp.eq.s32.totalorder %s30, 0
      %p371 = por %p369, %p370
      %p372 = scmp.ne.s32.totalorder %s360, %s361
      %p373 = scmp.eq.s32.totalorder %s31, 1
      %p374 = por %p372, %p373
      %p376 = scmp.ne.s32.totalorder %s361, %s375
      %p377 = scmp.eq.s32.totalorder %s31, 0
      %p378 = por %p376, %p377
      %p379 = scmp.le.s32.totalorder 1, %s25
      %p380 = scmp.lt.s32.totalorder %s25, 3
      %p381 = pnand %p379, %p380
      %p382 = pneg %p381
      // Predicated region
      $region9: #{image_net_forward.1} parent=5 // pred_check
        _
      $region10: #{image_net_forward.1} parent=5 // pred_check_branch
        %384 = sbr.rel (%p381) target = $region12
      $region11: #{image_net_forward.1} parent=5 // pred_region
        %s385 = ssub.s32 %s25, 1
        // Predicated region
        $region13: #{image_net_forward.1} parent=11 // pred_check
          %p386 = pneg %p98
        $region14: #{image_net_forward.1} parent=11 // pred_check_branch
          %388 = sbr.rel (%p386) target = $region16
        $region15: #{image_net_forward.1} parent=11 // pred_region
          _
        $region16: #{image_net_forward.1} parent=11 // pred_fallthru
          _
        // Predicated region
        $region17: #{image_net_forward.1} parent=11 // pred_check
          %p389 = pneg %p119
        $region18: #{image_net_forward.1} parent=11 // pred_check_branch
          %391 = sbr.rel (%p389) target = $region20
        $region19: #{image_net_forward.1} parent=11 // pred_region
          _
        $region20: #{image_net_forward.1} parent=11 // pred_fallthru
          _
        // Predicated region
        $region21: #{image_net_forward.1} parent=11 // pred_check
          %p392 = pneg %p140
        $region22: #{image_net_forward.1} parent=11 // pred_check_branch
          %394 = sbr.rel (%p392) target = $region24
        $region23: #{image_net_forward.1} parent=11 // pred_region
          _
        $region24: #{image_net_forward.1} parent=11 // pred_fallthru
          _
        // Predicated region
        $region25: #{image_net_forward.1} parent=11 // pred_check
          %p395 = pneg %p161
        $region26: #{image_net_forward.1} parent=11 // pred_check_branch
          %397 = sbr.rel (%p395) target = $region28
        $region27: #{image_net_forward.1} parent=11 // pred_region
          _
        $region28: #{image_net_forward.1} parent=11 // pred_fallthru
          _
        // Predicated region
        $region29: #{image_net_forward.1} parent=11 // pred_check
          %p398 = pneg %p182
        $region30: #{image_net_forward.1} parent=11 // pred_check_branch
          %400 = sbr.rel (%p398) target = $region32
        $region31: #{image_net_forward.1} parent=11 // pred_region
          _
        $region32: #{image_net_forward.1} parent=11 // pred_fallthru
          _
        // Predicated region
        $region33: #{image_net_forward.1} parent=11 // pred_check
          %p401 = pneg %p203
        $region34: #{image_net_forward.1} parent=11 // pred_check_branch
          %403 = sbr.rel (%p401) target = $region36
        $region35: #{image_net_forward.1} parent=11 // pred_region
          _
        $region36: #{image_net_forward.1} parent=11 // pred_fallthru
          _
        // Predicated region
        $region37: #{image_net_forward.1} parent=11 // pred_check
          %p404 = pneg %p224
        $region38: #{image_net_forward.1} parent=11 // pred_check_branch
          %406 = sbr.rel (%p404) target = $region40
        $region39: #{image_net_forward.1} parent=11 // pred_region
          _
        $region40: #{image_net_forward.1} parent=11 // pred_fallthru
          _
        // Predicated region
        $region41: #{image_net_forward.1} parent=11 // pred_check
          %p407 = pneg %p245
        $region42: #{image_net_forward.1} parent=11 // pred_check_branch
          %409 = sbr.rel (%p407) target = $region44
        $region43: #{image_net_forward.1} parent=11 // pred_region
          _
        $region44: #{image_net_forward.1} parent=11 // pred_fallthru
          _
        // Predicated region
        $region45: #{image_net_forward.1} parent=11 // pred_check
          %p410 = pneg %p266
        $region46: #{image_net_forward.1} parent=11 // pred_check_branch
          %412 = sbr.rel (%p410) target = $region48
        $region47: #{image_net_forward.1} parent=11 // pred_region
          _
        $region48: #{image_net_forward.1} parent=11 // pred_fallthru
          _
        // Predicated region
        $region49: #{image_net_forward.1} parent=11 // pred_check
          %p413 = pneg %p287
        $region50: #{image_net_forward.1} parent=11 // pred_check_branch
          %415 = sbr.rel (%p413) target = $region52
        $region51: #{image_net_forward.1} parent=11 // pred_region
          _
        $region52: #{image_net_forward.1} parent=11 // pred_fallthru
          _
      $region12: #{image_net_forward.1} parent=5 // pred_fallthru
        _
      %p416 = scmp.lt.s32.totalorder %s25, 2
      // Predicated region
      $region53: #{image_net_forward.1} parent=5 // pred_check
        %p417 = pneg %p416
      $region54: #{image_net_forward.1} parent=5 // pred_check_branch
        %419 = sbr.rel (%p417) target = $region56
      $region55: #{image_net_forward.1} parent=5 // pred_region
        // Predicated region
        $region57: #{image_net_forward.1} parent=55 // pred_check
          %p420 = pneg %p45
        $region58: #{image_net_forward.1} parent=55 // pred_check_branch
          %422 = sbr.rel (%p420) target = $region60
        $region59: #{image_net_forward.1} parent=55 // pred_region
          %s423 = smul.u32 98, %s25
          %p424 = scmp.lt.s32.totalorder %s423, 195
          %s425 = scalar_select %p424, %s423, 195
          %s426 = scalar_lea.vmem %s0, %s425
          %s427 = smul.u32 98, %s25
        $region60: #{image_net_forward.1} parent=55 // pred_fallthru
          _
        // Predicated region
        $region61: #{image_net_forward.1} parent=55 // pred_check
          %p428 = pneg %p71
        $region62: #{image_net_forward.1} parent=55 // pred_check_branch
          %430 = sbr.rel (%p428) target = $region64
        $region63: #{image_net_forward.1} parent=55 // pred_region
          %s431 = smul.u32 1568, %s25
          %p432 = scmp.lt.s32.totalorder %s431, 3135
          %s433 = scalar_select %p432, %s431, 3135
          %s434 = smul.addr %s433, 4
          %s435 = scalar_lea.vmem %s1, %s434
          %s436 = smul.u32 1568, %s25
        $region64: #{image_net_forward.1} parent=55 // pred_fallthru
          _
      $region56: #{image_net_forward.1} parent=5 // pred_fallthru
        _
      %p437 = scmp.le.s32.totalorder 1, %s25
      %p438 = scmp.lt.s32.totalorder %s25, 3
      %p439 = pnand %p437, %p438
      %p440 = pneg %p439
      // Predicated region
      $region65: #{image_net_forward.1} parent=5 // pred_check
        _
      $region66: #{image_net_forward.1} parent=5 // pred_check_branch
        %442 = sbr.rel (%p439) target = $region68
      $region67: #{image_net_forward.1} parent=5 // pred_region
        %s443 = ssub.s32 %s25, 1
        %s444 = smul.u32 98, %s30
        %p445 = scmp.lt.s32.totalorder %s444, 195
        %s446 = scalar_select %p445, %s444, 195
        %s447 = scalar_lea.vmem %s0, %s446
        %p448 = pneg %p51
        %p449 = pneg %p48
        %s450 = smul.u32 1568, %s30
        %p451 = scmp.lt.s32.totalorder %s450, 3135
        %s452 = scalar_select %p451, %s450, 3135
        %s453 = smul.addr %s452, 4
        %s454 = scalar_lea.vmem %s1, %s453
        %p455 = pneg %p77
        %p456 = pneg %p74
        %p457 = pneg %p98
        %p458 = pneg %p95
        %p459 = pneg %p119
        %p460 = pneg %p116
        %p461 = pneg %p140
        %p462 = pneg %p137
        %p463 = pneg %p161
        %p464 = pneg %p158
        %p465 = pneg %p182
        %p466 = pneg %p179
        %p467 = pneg %p203
        %p468 = pneg %p200
        %p469 = pneg %p224
        %p470 = pneg %p221
        %p471 = pneg %p245
        %p472 = pneg %p242
        %p473 = pneg %p266
        %p474 = pneg %p263
        %p475 = pneg %p287
        %p476 = pneg %p284
        %p477 = pneg %p308
        %p478 = pneg %p305
        %p479 = pneg %p329
        %p480 = pneg %p326
        %p481 = pneg %p350
        %p482 = pneg %p347
        %p483 = pneg %p371
        %p484 = pneg %p368
        %s485 = smul.u32 98, %s30
        %p486 = scmp.lt.s32.totalorder %s485, 195
        %s487 = scalar_select %p486, %s485, 195
        %s488 = scalar_lea.vmem %s0, %s487
        %s489 = smul.u32 98, %s30
        %s490 = smul.u32 1568, %s30
        %p491 = scmp.lt.s32.totalorder %s490, 3135
        %s492 = scalar_select %p491, %s490, 3135
        %s493 = smul.addr %s492, 4
        %s494 = scalar_lea.vmem %s1, %s493
        %s495 = smul.u32 1568, %s30
        %p497 = scmp.eq.s32.totalorder %s30, 0
        // Predicated region
        $region69: #{image_net_forward.1} parent=67 // pred_check
          %p498 = pneg %p497
        $region70: #{image_net_forward.1} parent=67 // pred_check_branch
          %500 = sbr.rel (%p498) target = $region72
        $region71: #{image_net_forward.1} parent=67 // pred_region
          %vm501 = vcmask 517120
          %502 = vst.msk [vmem:[#allocation2] sm:$0x3] %vm501, 0.0
          %v503 = vld [vmem:[%s3] sm:$0xff]
          %v504 = vld [vmem:[%s4] sm:$0xff]
          %v505 = vld [vmem:[%s4 + $0x8] sm:$0xff]
          %v506 = vld [vmem:[%s4 + $0x10] sm:$0xff]
          %v507 = vld [vmem:[%s4 + $0x18] sm:$0xff]
          %v508 = vld [vmem:[%s4 + $0x20] sm:$0xff]
          %v509 = vld [vmem:[%s4 + $0x28] sm:$0xff]
          %v510 = vld [vmem:[%s4 + $0x30] sm:$0xff]
          %v511 = vld [vmem:[%s4 + $0x38] sm:$0xff]
          %v512 = vld [vmem:[%s4 + $0x40] sm:$0xff]
          %v513 = vld [vmem:[%s4 + $0x48] sm:$0xff]
          %v514 = vld [vmem:[%s4 + $0x50] sm:$0xff]
          %v515 = vld [vmem:[%s4 + $0x58] sm:$0xff]
          %v516 = vld [vmem:[%s4 + $0x60] sm:$0xff]
          %v517 = vld [vmem:[%s4 + $0x68] sm:$0xff]
          %v518 = vld [vmem:[%s4 + $0x70] sm:$0xff]
          %v519 = vld [vmem:[%s4 + $0x78] sm:$0xff]
          %v520 = vld [vmem:[%s4 + $0x80] sm:$0xff]
          %v521 = vld [vmem:[%s4 + $0x88] sm:$0xff]
          %v522 = vld [vmem:[%s4 + $0x90] sm:$0xff]
          %v523 = vld [vmem:[%s4 + $0x98] sm:$0xff]
          %v524 = vld [vmem:[%s4 + $0xa0] sm:$0xff]
          %v525 = vld [vmem:[%s4 + $0xa8] sm:$0xff]
          %v526 = vld [vmem:[%s4 + $0xb0] sm:$0xff]
          %v527 = vld [vmem:[%s4 + $0xb8] sm:$0xff]
          %v528 = vld [vmem:[%s4 + $0xc0] sm:$0xff]
          %v529 = vld [vmem:[%s4 + $0xc8] sm:$0xff]
          %v530 = vld [vmem:[%s4 + $0xd0] sm:$0xff]
          %v531 = vld [vmem:[%s4 + $0xd8] sm:$0xff]
          %v532 = vld [vmem:[%s4 + $0xe0] sm:$0xff]
          %v533 = vld [vmem:[%s4 + $0xe8] sm:$0xff]
          %v534 = vld [vmem:[%s4 + $0xf0] sm:$0xff]
          %v535 = vld [vmem:[%s4 + $0xf8] sm:$0xff]
          %v536 = vld [vmem:[%s4 + $0x100] sm:$0xff]
          %v537 = vld [vmem:[%s4 + $0x108] sm:$0xff]
          %v538 = vld [vmem:[%s4 + $0x110] sm:$0xff]
          %v539 = vld [vmem:[%s4 + $0x118] sm:$0xff]
          %v540 = vld [vmem:[%s4 + $0x120] sm:$0xff]
          %v541 = vld [vmem:[%s4 + $0x128] sm:$0xff]
          %v542 = vld [vmem:[%s4 + $0x130] sm:$0xff]
          %v543 = vld [vmem:[%s4 + $0x138] sm:$0xff]
          %v544 = vld [vmem:[%s4 + $0x140] sm:$0xff]
          %v545 = vld [vmem:[%s4 + $0x148] sm:$0xff]
          %v546 = vld [vmem:[%s4 + $0x150] sm:$0xff]
          %v547 = vld [vmem:[%s4 + $0x158] sm:$0xff]
          %v548 = vld [vmem:[%s4 + $0x160] sm:$0xff]
          %v549 = vld [vmem:[%s4 + $0x168] sm:$0xff]
          %v550 = vld [vmem:[%s4 + $0x170] sm:$0xff]
          %v551 = vld [vmem:[%s4 + $0x178] sm:$0xff]
          %v552 = vld [vmem:[%s4 + $0x180] sm:$0xff]
          %v553 = vld [vmem:[%s4 + $0x188] sm:$0xff]
          %v554 = vld [vmem:[%s4 + $0x190] sm:$0xff]
          %v555 = vld [vmem:[%s4 + $0x198] sm:$0xff]
          %v556 = vld [vmem:[%s4 + $0x1a0] sm:$0xff]
          %v557 = vld [vmem:[%s4 + $0x1a8] sm:$0xff]
          %v558 = vld [vmem:[%s4 + $0x1b0] sm:$0xff]
          %v559 = vld [vmem:[%s4 + $0x1b8] sm:$0xff]
          %v560 = vld [vmem:[%s4 + $0x1c0] sm:$0xff]
          %v561 = vld [vmem:[%s4 + $0x1c8] sm:$0xff]
          %v562 = vld [vmem:[%s4 + $0x1d0] sm:$0xff]
          %v563 = vld [vmem:[%s4 + $0x1d8] sm:$0xff]
          %v564 = vld [vmem:[%s4 + $0x1e0] sm:$0xff]
          %v565 = vld [vmem:[%s4 + $0x1e8] sm:$0xff]
          %v566 = vld [vmem:[%s4 + $0x1f0] sm:$0xff]
          %v567 = vld [vmem:[%s4 + $0x1f8] sm:$0xff]
          %v568 = vld [vmem:[%s5] sm:$0x1]
          %v570 = vlaneseq
          %v571 = vshrl.u32 %v570, 7
          %v572 = vsub.s32 0, %v571
          %v573 = vrot.slane %v568, %v572
          %v576 = vcombine.high %v503, %v503
          %v578 = vunpack.c.l.s4 1983009808
          %v579 = vunpack.c.0.s8 %v578
          %v580 = vlaneseq
          %v581 = vshrl.u32 %v580, 7
          %v582 = vsub.s32 %v579, %v581
          %v583 = vrot.slane %v503, %v582
          %v585 = vunpack.c.l.s4 1983009808
          %v586 = vunpack.c.0.s8 %v585
          %v587 = vlaneseq
          %v588 = vshrl.u32 %v587, 7
          %v589 = vsub.s32 %v586, %v588
          %v590 = vrot.slane %v576, %v589
          %v591 = vcombine.high %v583, %v583
          %v592 = vcombine.high %v590, %v590
          %597 = vmatprep.subr.mxu0 0.0
          %598 = vmatpush1.msra.mxu0 %v504
          %599 = vmatprep.subr.mxu0 0.0
          %600 = vmatpush1.msra.mxu0 %v505
          %601 = vmatprep.subr.mxu0 0.0
          %602 = vmatpush1.msra.mxu0 %v506
          %603 = vmatprep.subr.mxu0 0.0
          %604 = vmatpush1.msra.mxu0 %v507
          %605 = vmatprep.subr.mxu0 0.0
          %606 = vmatpush1.msra.mxu0 %v508
          %607 = vmatprep.subr.mxu0 0.0
          %608 = vmatpush1.msra.mxu0 %v509
          %609 = vmatprep.subr.mxu0 0.0
          %610 = vmatpush1.msra.mxu0 %v510
          %611 = vmatprep.subr.mxu0 0.0
          %612 = vmatpush1.msra.mxu0 %v511
          %613 = vmatprep.subr.mxu0 0.0
          %614 = vmatpush1.msra.mxu0 %v512
          %615 = vmatprep.subr.mxu0 0.0
          %616 = vmatpush1.msra.mxu0 %v513
          %617 = vmatprep.subr.mxu0 0.0
          %618 = vmatpush1.msra.mxu0 %v514
          %619 = vmatprep.subr.mxu0 0.0
          %620 = vmatpush1.msra.mxu0 %v515
          %621 = vmatprep.subr.mxu0 0.0
          %622 = vmatpush1.msra.mxu0 %v516
          %623 = vmatprep.subr.mxu0 0.0
          %624 = vmatpush1.msra.mxu0 %v517
          %625 = vmatprep.subr.mxu0 0.0
          %626 = vmatpush1.msra.mxu0 %v518
          %627 = vmatprep.subr.mxu0 0.0
          %628 = vmatpush1.msra.mxu0 %v519
          %629 = vmatprep.subr.mxu0 0.0
          %630 = vmatpush1.msra.mxu0 %v520
          %631 = vmatprep.subr.mxu0 0.0
          %632 = vmatpush1.msra.mxu0 %v521
          %633 = vmatprep.subr.mxu0 0.0
          %634 = vmatpush1.msra.mxu0 %v522
          %635 = vmatprep.subr.mxu0 0.0
          %636 = vmatpush1.msra.mxu0 %v523
          %637 = vmatprep.subr.mxu0 0.0
          %638 = vmatpush1.msra.mxu0 %v524
          %639 = vmatprep.subr.mxu0 0.0
          %640 = vmatpush1.msra.mxu0 %v525
          %641 = vmatprep.subr.mxu0 0.0
          %642 = vmatpush1.msra.mxu0 %v526
          %643 = vmatprep.subr.mxu0 0.0
          %644 = vmatpush1.msra.mxu0 %v527
          %645 = vmatprep.subr.mxu0 0.0
          %646 = vmatpush1.msra.mxu0 %v528
          %647 = vmatprep.subr.mxu0 0.0
          %648 = vmatpush1.msra.mxu0 %v529
          %649 = vmatprep.subr.mxu0 0.0
          %650 = vmatpush1.msra.mxu0 %v530
          %651 = vmatprep.subr.mxu0 0.0
          %652 = vmatpush1.msra.mxu0 %v531
          %653 = vmatprep.subr.mxu0 0.0
          %654 = vmatpush1.msra.mxu0 %v532
          %655 = vmatprep.subr.mxu0 0.0
          %656 = vmatpush1.msra.mxu0 %v533
          %657 = vmatprep.subr.mxu0 0.0
          %658 = vmatpush1.msra.mxu0 %v534
          %659 = vmatprep.subr.mxu0 0.0
          %660 = vmatpush1.msra.mxu0 %v535
          %661 = vmatprep.mubr.f32.mxu0 %v591
          %662 = vmatmul.mubr.f32.gmra.mrb[0].mxu0 %v583
          %v663 = vpop.f32.mrb[0].mxu0
          %v664 = vadd.f32 %v573, %v663
          %v665 = vpop.f32.mrb[0].mxu0
          %666 = vdwg.mxu0
          %667 = vmatprep.subr.mxu0 0.0
          %668 = vmatpush1.msra.mxu0 %v536
          %669 = vmatprep.subr.mxu0 0.0
          %670 = vmatpush1.msra.mxu0 %v537
          %671 = vmatprep.subr.mxu0 0.0
          %672 = vmatpush1.msra.mxu0 %v538
          %673 = vmatprep.subr.mxu0 0.0
          %674 = vmatpush1.msra.mxu0 %v539
          %675 = vmatprep.subr.mxu0 0.0
          %676 = vmatpush1.msra.mxu0 %v540
          %677 = vmatprep.subr.mxu0 0.0
          %678 = vmatpush1.msra.mxu0 %v541
          %679 = vmatprep.subr.mxu0 0.0
          %680 = vmatpush1.msra.mxu0 %v542
          %681 = vmatprep.subr.mxu0 0.0
          %682 = vmatpush1.msra.mxu0 %v543
          %683 = vmatprep.subr.mxu0 0.0
          %684 = vmatpush1.msra.mxu0 %v544
          %685 = vmatprep.subr.mxu0 0.0
          %686 = vmatpush1.msra.mxu0 %v545
          %687 = vmatprep.subr.mxu0 0.0
          %688 = vmatpush1.msra.mxu0 %v546
          %689 = vmatprep.subr.mxu0 0.0
          %690 = vmatpush1.msra.mxu0 %v547
          %691 = vmatprep.subr.mxu0 0.0
          %692 = vmatpush1.msra.mxu0 %v548
          %693 = vmatprep.subr.mxu0 0.0
          %694 = vmatpush1.msra.mxu0 %v549
          %695 = vmatprep.subr.mxu0 0.0
          %696 = vmatpush1.msra.mxu0 %v550
          %697 = vmatprep.subr.mxu0 0.0
          %698 = vmatpush1.msra.mxu0 %v551
          %699 = vmatprep.subr.mxu0 0.0
          %700 = vmatpush1.msra.mxu0 %v552
          %701 = vmatprep.subr.mxu0 0.0
          %702 = vmatpush1.msra.mxu0 %v553
          %703 = vmatprep.subr.mxu0 0.0
          %704 = vmatpush1.msra.mxu0 %v554
          %705 = vmatprep.subr.mxu0 0.0
          %706 = vmatpush1.msra.mxu0 %v555
          %707 = vmatprep.subr.mxu0 0.0
          %708 = vmatpush1.msra.mxu0 %v556
          %709 = vmatprep.subr.mxu0 0.0
          %710 = vmatpush1.msra.mxu0 %v557
          %711 = vmatprep.subr.mxu0 0.0
          %712 = vmatpush1.msra.mxu0 %v558
          %713 = vmatprep.subr.mxu0 0.0
          %714 = vmatpush1.msra.mxu0 %v559
          %715 = vmatprep.subr.mxu0 0.0
          %716 = vmatpush1.msra.mxu0 %v560
          %717 = vmatprep.subr.mxu0 0.0
          %718 = vmatpush1.msra.mxu0 %v561
          %719 = vmatprep.subr.mxu0 0.0
          %720 = vmatpush1.msra.mxu0 %v562
          %721 = vmatprep.subr.mxu0 0.0
          %722 = vmatpush1.msra.mxu0 %v563
          %723 = vmatprep.subr.mxu0 0.0
          %724 = vmatpush1.msra.mxu0 %v564
          %725 = vmatprep.subr.mxu0 0.0
          %726 = vmatpush1.msra.mxu0 %v565
          %727 = vmatprep.subr.mxu0 0.0
          %728 = vmatpush1.msra.mxu0 %v566
          %729 = vmatprep.subr.mxu0 0.0
          %730 = vmatpush1.msra.mxu0 %v567
          %731 = vmatprep.mubr.f32.mxu0 %v592
          %732 = vmatmul.mubr.f32.gmra.mrb[0].mxu0 %v590
          %v733 = vpop.f32.mrb[0].mxu0
          %v734 = vadd.f32 %v664, %v733
          %v735 = vpop.f32.mrb[0].mxu0
          %736 = vdwg.mxu0
          %737 = vst.msk [vmem:[#allocation3] sm:$0x3] %vm501, %v734
        $region72: #{image_net_forward.1} parent=67 // pred_fallthru
          _
        %v738 = vld [vmem:[#allocation2] sm:$0x3]
        %v739 = vld [vmem:[%s488] sm:$0xff]
        %v740 = vld [vmem:[%s488 + $0x8] sm:$0xff]
        %v741 = vld [vmem:[%s488 + $0x10] sm:$0xff]
        %v742 = vld [vmem:[%s488 + $0x18] sm:$0xff]
        %v743 = vld [vmem:[%s488 + $0x20] sm:$0xff]
        %v744 = vld [vmem:[%s488 + $0x28] sm:$0xff]
        %v745 = vld [vmem:[%s488 + $0x30] sm:$0xff]
        %v746 = vld [vmem:[%s488 + $0x38] sm:$0xff]
        %v747 = vld [vmem:[%s488 + $0x40] sm:$0xff]
        %v748 = vld [vmem:[%s488 + $0x48] sm:$0xff]
        %v749 = vld [vmem:[%s488 + $0x50] sm:$0xff]
        %v750 = vld [vmem:[%s488 + $0x58] sm:$0xff]
        %v751 = vld [vmem:[%s488 + $0x60] sm:$0x3]
        %v752 = vld [vmem:[%s494] sm:$0xf]
        %v753 = vld [vmem:[%s494 + $0x4] sm:$0xf]
        %v754 = vld [vmem:[%s494 + $0x8] sm:$0xf]
        %v755 = vld [vmem:[%s494 + $0xc] sm:$0xf]
        %v756 = vld [vmem:[%s494 + $0x10] sm:$0xf]
        %v757 = vld [vmem:[%s494 + $0x14] sm:$0xf]
        %v758 = vld [vmem:[%s494 + $0x18] sm:$0xf]
        %v759 = vld [vmem:[%s494 + $0x1c] sm:$0xf]
        %v760 = vld [vmem:[%s494 + $0x20] sm:$0xf]
        %v761 = vld [vmem:[%s494 + $0x24] sm:$0xf]
        %v762 = vld [vmem:[%s494 + $0x28] sm:$0xf]
        %v763 = vld [vmem:[%s494 + $0x2c] sm:$0xf]
        %v764 = vld [vmem:[%s494 + $0x30] sm:$0xf]
        %v765 = vld [vmem:[%s494 + $0x34] sm:$0xf]
        %v766 = vld [vmem:[%s494 + $0x38] sm:$0xf]
        %v767 = vld [vmem:[%s494 + $0x3c] sm:$0xf]
        %v768 = vld [vmem:[%s494 + $0x40] sm:$0xf]
        %v769 = vld [vmem:[%s494 + $0x44] sm:$0xf]
        %v770 = vld [vmem:[%s494 + $0x48] sm:$0xf]
        %v771 = vld [vmem:[%s494 + $0x4c] sm:$0xf]
        %v772 = vld [vmem:[%s494 + $0x50] sm:$0xf]
        %v773 = vld [vmem:[%s494 + $0x54] sm:$0xf]
        %v774 = vld [vmem:[%s494 + $0x58] sm:$0xf]
        %v775 = vld [vmem:[%s494 + $0x5c] sm:$0xf]
        %v776 = vld [vmem:[%s494 + $0x60] sm:$0xf]
        %v777 = vld [vmem:[%s494 + $0x64] sm:$0xf]
        %v778 = vld [vmem:[%s494 + $0x68] sm:$0xf]
        %v779 = vld [vmem:[%s494 + $0x6c] sm:$0xf]
        %v780 = vld [vmem:[%s494 + $0x70] sm:$0xf]
        %v781 = vld [vmem:[%s494 + $0x74] sm:$0xf]
        %v782 = vld [vmem:[%s494 + $0x78] sm:$0xf]
        %v783 = vld [vmem:[%s494 + $0x7c] sm:$0xf]
        %v784 = vld [vmem:[%s494 + $0x80] sm:$0xf]
        %v785 = vld [vmem:[%s494 + $0x84] sm:$0xf]
        %v786 = vld [vmem:[%s494 + $0x88] sm:$0xf]
        %v787 = vld [vmem:[%s494 + $0x8c] sm:$0xf]
        %v788 = vld [vmem:[%s494 + $0x90] sm:$0xf]
        %v789 = vld [vmem:[%s494 + $0x94] sm:$0xf]
        %v790 = vld [vmem:[%s494 + $0x98] sm:$0xf]
        %v791 = vld [vmem:[%s494 + $0x9c] sm:$0xf]
        %v792 = vld [vmem:[%s494 + $0xa0] sm:$0xf]
        %v793 = vld [vmem:[%s494 + $0xa4] sm:$0xf]
        %v794 = vld [vmem:[%s494 + $0xa8] sm:$0xf]
        %v795 = vld [vmem:[%s494 + $0xac] sm:$0xf]
        %v796 = vld [vmem:[%s494 + $0xb0] sm:$0xf]
        %v797 = vld [vmem:[%s494 + $0xb4] sm:$0xf]
        %v798 = vld [vmem:[%s494 + $0xb8] sm:$0xf]
        %v799 = vld [vmem:[%s494 + $0xbc] sm:$0xf]
        %v800 = vld [vmem:[%s494 + $0xc0] sm:$0xf]
        %v801 = vld [vmem:[%s494 + $0xc4] sm:$0xf]
        %v802 = vld [vmem:[%s494 + $0xc8] sm:$0xf]
        %v803 = vld [vmem:[%s494 + $0xcc] sm:$0xf]
        %v804 = vld [vmem:[%s494 + $0xd0] sm:$0xf]
        %v805 = vld [vmem:[%s494 + $0xd4] sm:$0xf]
        %v806 = vld [vmem:[%s494 + $0xd8] sm:$0xf]
        %v807 = vld [vmem:[%s494 + $0xdc] sm:$0xf]
        %v808 = vld [vmem:[%s494 + $0xe0] sm:$0xf]
        %v809 = vld [vmem:[%s494 + $0xe4] sm:$0xf]
        %v810 = vld [vmem:[%s494 + $0xe8] sm:$0xf]
        %v811 = vld [vmem:[%s494 + $0xec] sm:$0xf]
        %v812 = vld [vmem:[%s494 + $0xf0] sm:$0xf]
        %v813 = vld [vmem:[%s494 + $0xf4] sm:$0xf]
        %v814 = vld [vmem:[%s494 + $0xf8] sm:$0xf]
        %v815 = vld [vmem:[%s494 + $0xfc] sm:$0xf]
        %v816 = vld [vmem:[%s494 + $0x100] sm:$0xf]
        %v817 = vld [vmem:[%s494 + $0x104] sm:$0xf]
        %v818 = vld [vmem:[%s494 + $0x108] sm:$0xf]
        %v819 = vld [vmem:[%s494 + $0x10c] sm:$0xf]
        %v820 = vld [vmem:[%s494 + $0x110] sm:$0xf]
        %v821 = vld [vmem:[%s494 + $0x114] sm:$0xf]
        %v822 = vld [vmem:[%s494 + $0x118] sm:$0xf]
        %v823 = vld [vmem:[%s494 + $0x11c] sm:$0xf]
        %v824 = vld [vmem:[%s494 + $0x120] sm:$0xf]
        %v825 = vld [vmem:[%s494 + $0x124] sm:$0xf]
        %v826 = vld [vmem:[%s494 + $0x128] sm:$0xf]
        %v827 = vld [vmem:[%s494 + $0x12c] sm:$0xf]
        %v828 = vld [vmem:[%s494 + $0x130] sm:$0xf]
        %v829 = vld [vmem:[%s494 + $0x134] sm:$0xf]
        %v830 = vld [vmem:[%s494 + $0x138] sm:$0xf]
        %v831 = vld [vmem:[%s494 + $0x13c] sm:$0xf]
        %v832 = vld [vmem:[%s494 + $0x140] sm:$0xf]
        %v833 = vld [vmem:[%s494 + $0x144] sm:$0xf]
        %v834 = vld [vmem:[%s494 + $0x148] sm:$0xf]
        %v835 = vld [vmem:[%s494 + $0x14c] sm:$0xf]
        %v836 = vld [vmem:[%s494 + $0x150] sm:$0xf]
        %v837 = vld [vmem:[%s494 + $0x154] sm:$0xf]
        %v838 = vld [vmem:[%s494 + $0x158] sm:$0xf]
        %v839 = vld [vmem:[%s494 + $0x15c] sm:$0xf]
        %v840 = vld [vmem:[%s494 + $0x160] sm:$0xf]
        %v841 = vld [vmem:[%s494 + $0x164] sm:$0xf]
        %v842 = vld [vmem:[%s494 + $0x168] sm:$0xf]
        %v843 = vld [vmem:[%s494 + $0x16c] sm:$0xf]
        %v844 = vld [vmem:[%s494 + $0x170] sm:$0xf]
        %v845 = vld [vmem:[%s494 + $0x174] sm:$0xf]
        %v846 = vld [vmem:[%s494 + $0x178] sm:$0xf]
        %v847 = vld [vmem:[%s494 + $0x17c] sm:$0xf]
        %v848 = vld [vmem:[%s494 + $0x180] sm:$0xf]
        %v849 = vld [vmem:[%s494 + $0x184] sm:$0xf]
        %v850 = vld [vmem:[%s494 + $0x188] sm:$0xf]
        %v851 = vld [vmem:[%s494 + $0x18c] sm:$0xf]
        %v852 = vld [vmem:[%s494 + $0x190] sm:$0xf]
        %v853 = vld [vmem:[%s494 + $0x194] sm:$0xf]
        %v854 = vld [vmem:[%s494 + $0x198] sm:$0xf]
        %v855 = vld [vmem:[%s494 + $0x19c] sm:$0xf]
        %v856 = vld [vmem:[%s494 + $0x1a0] sm:$0xf]
        %v857 = vld [vmem:[%s494 + $0x1a4] sm:$0xf]
        %v858 = vld [vmem:[%s494 + $0x1a8] sm:$0xf]
        %v859 = vld [vmem:[%s494 + $0x1ac] sm:$0xf]
        %v860 = vld [vmem:[%s494 + $0x1b0] sm:$0xf]
        %v861 = vld [vmem:[%s494 + $0x1b4] sm:$0xf]
        %v862 = vld [vmem:[%s494 + $0x1b8] sm:$0xf]
        %v863 = vld [vmem:[%s494 + $0x1bc] sm:$0xf]
        %v864 = vld [vmem:[%s494 + $0x1c0] sm:$0xf]
        %v865 = vld [vmem:[%s494 + $0x1c4] sm:$0xf]
        %v866 = vld [vmem:[%s494 + $0x1c8] sm:$0xf]
        %v867 = vld [vmem:[%s494 + $0x1cc] sm:$0xf]
        %v868 = vld [vmem:[%s494 + $0x1d0] sm:$0xf]
        %v869 = vld [vmem:[%s494 + $0x1d4] sm:$0xf]
        %v870 = vld [vmem:[%s494 + $0x1d8] sm:$0xf]
        %v871 = vld [vmem:[%s494 + $0x1dc] sm:$0xf]
        %v872 = vld [vmem:[%s494 + $0x1e0] sm:$0xf]
        %v873 = vld [vmem:[%s494 + $0x1e4] sm:$0xf]
        %v874 = vld [vmem:[%s494 + $0x1e8] sm:$0xf]
        %v875 = vld [vmem:[%s494 + $0x1ec] sm:$0xf]
        %v876 = vld [vmem:[%s494 + $0x1f0] sm:$0xf]
        %v877 = vld [vmem:[%s494 + $0x1f4] sm:$0xf]
        %v878 = vld [vmem:[%s494 + $0x1f8] sm:$0xf]
        %v879 = vld [vmem:[%s494 + $0x1fc] sm:$0xf]
        %v880 = vld [vmem:[%s494 + $0x200] sm:$0xf]
        %v881 = vld [vmem:[%s494 + $0x204] sm:$0xf]
        %v882 = vld [vmem:[%s494 + $0x208] sm:$0xf]
        %v883 = vld [vmem:[%s494 + $0x20c] sm:$0xf]
        %v884 = vld [vmem:[%s494 + $0x210] sm:$0xf]
        %v885 = vld [vmem:[%s494 + $0x214] sm:$0xf]
        %v886 = vld [vmem:[%s494 + $0x218] sm:$0xf]
        %v887 = vld [vmem:[%s494 + $0x21c] sm:$0xf]
        %v888 = vld [vmem:[%s494 + $0x220] sm:$0xf]
        %v889 = vld [vmem:[%s494 + $0x224] sm:$0xf]
        %v890 = vld [vmem:[%s494 + $0x228] sm:$0xf]
        %v891 = vld [vmem:[%s494 + $0x22c] sm:$0xf]
        %v892 = vld [vmem:[%s494 + $0x230] sm:$0xf]
        %v893 = vld [vmem:[%s494 + $0x234] sm:$0xf]
        %v894 = vld [vmem:[%s494 + $0x238] sm:$0xf]
        %v895 = vld [vmem:[%s494 + $0x23c] sm:$0xf]
        %v896 = vld [vmem:[%s494 + $0x240] sm:$0xf]
        %v897 = vld [vmem:[%s494 + $0x244] sm:$0xf]
        %v898 = vld [vmem:[%s494 + $0x248] sm:$0xf]
        %v899 = vld [vmem:[%s494 + $0x24c] sm:$0xf]
        %v900 = vld [vmem:[%s494 + $0x250] sm:$0xf]
        %v901 = vld [vmem:[%s494 + $0x254] sm:$0xf]
        %v902 = vld [vmem:[%s494 + $0x258] sm:$0xf]
        %v903 = vld [vmem:[%s494 + $0x25c] sm:$0xf]
        %v904 = vld [vmem:[%s494 + $0x260] sm:$0xf]
        %v905 = vld [vmem:[%s494 + $0x264] sm:$0xf]
        %v906 = vld [vmem:[%s494 + $0x268] sm:$0xf]
        %v907 = vld [vmem:[%s494 + $0x26c] sm:$0xf]
        %v908 = vld [vmem:[%s494 + $0x270] sm:$0xf]
        %v909 = vld [vmem:[%s494 + $0x274] sm:$0xf]
        %v910 = vld [vmem:[%s494 + $0x278] sm:$0xf]
        %v911 = vld [vmem:[%s494 + $0x27c] sm:$0xf]
        %v912 = vld [vmem:[%s494 + $0x280] sm:$0xf]
        %v913 = vld [vmem:[%s494 + $0x284] sm:$0xf]
        %v914 = vld [vmem:[%s494 + $0x288] sm:$0xf]
        %v915 = vld [vmem:[%s494 + $0x28c] sm:$0xf]
        %v916 = vld [vmem:[%s494 + $0x290] sm:$0xf]
        %v917 = vld [vmem:[%s494 + $0x294] sm:$0xf]
        %v918 = vld [vmem:[%s494 + $0x298] sm:$0xf]
        %v919 = vld [vmem:[%s494 + $0x29c] sm:$0xf]
        %v920 = vld [vmem:[%s494 + $0x2a0] sm:$0xf]
        %v921 = vld [vmem:[%s494 + $0x2a4] sm:$0xf]
        %v922 = vld [vmem:[%s494 + $0x2a8] sm:$0xf]
        %v923 = vld [vmem:[%s494 + $0x2ac] sm:$0xf]
        %v924 = vld [vmem:[%s494 + $0x2b0] sm:$0xf]
        %v925 = vld [vmem:[%s494 + $0x2b4] sm:$0xf]
        %v926 = vld [vmem:[%s494 + $0x2b8] sm:$0xf]
        %v927 = vld [vmem:[%s494 + $0x2bc] sm:$0xf]
        %v928 = vld [vmem:[%s494 + $0x2c0] sm:$0xf]
        %v929 = vld [vmem:[%s494 + $0x2c4] sm:$0xf]
        %v930 = vld [vmem:[%s494 + $0x2c8] sm:$0xf]
        %v931 = vld [vmem:[%s494 + $0x2cc] sm:$0xf]
        %v932 = vld [vmem:[%s494 + $0x2d0] sm:$0xf]
        %v933 = vld [vmem:[%s494 + $0x2d4] sm:$0xf]
        %v934 = vld [vmem:[%s494 + $0x2d8] sm:$0xf]
        %v935 = vld [vmem:[%s494 + $0x2dc] sm:$0xf]
        %v936 = vld [vmem:[%s494 + $0x2e0] sm:$0xf]
        %v937 = vld [vmem:[%s494 + $0x2e4] sm:$0xf]
        %v938 = vld [vmem:[%s494 + $0x2e8] sm:$0xf]
        %v939 = vld [vmem:[%s494 + $0x2ec] sm:$0xf]
        %v940 = vld [vmem:[%s494 + $0x2f0] sm:$0xf]
        %v941 = vld [vmem:[%s494 + $0x2f4] sm:$0xf]
        %v942 = vld [vmem:[%s494 + $0x2f8] sm:$0xf]
        %v943 = vld [vmem:[%s494 + $0x2fc] sm:$0xf]
        %v944 = vld [vmem:[%s494 + $0x300] sm:$0xf]
        %v945 = vld [vmem:[%s494 + $0x304] sm:$0xf]
        %v946 = vld [vmem:[%s494 + $0x308] sm:$0xf]
        %v947 = vld [vmem:[%s494 + $0x30c] sm:$0xf]
        %v948 = vld [vmem:[%s494 + $0x310] sm:$0xf]
        %v949 = vld [vmem:[%s494 + $0x314] sm:$0xf]
        %v950 = vld [vmem:[%s494 + $0x318] sm:$0xf]
        %v951 = vld [vmem:[%s494 + $0x31c] sm:$0xf]
        %v952 = vld [vmem:[%s494 + $0x320] sm:$0xf]
        %v953 = vld [vmem:[%s494 + $0x324] sm:$0xf]
        %v954 = vld [vmem:[%s494 + $0x328] sm:$0xf]
        %v955 = vld [vmem:[%s494 + $0x32c] sm:$0xf]
        %v956 = vld [vmem:[%s494 + $0x330] sm:$0xf]
        %v957 = vld [vmem:[%s494 + $0x334] sm:$0xf]
        %v958 = vld [vmem:[%s494 + $0x338] sm:$0xf]
        %v959 = vld [vmem:[%s494 + $0x33c] sm:$0xf]
        %v960 = vld [vmem:[%s494 + $0x340] sm:$0xf]
        %v961 = vld [vmem:[%s494 + $0x344] sm:$0xf]
        %v962 = vld [vmem:[%s494 + $0x348] sm:$0xf]
        %v963 = vld [vmem:[%s494 + $0x34c] sm:$0xf]
        %v964 = vld [vmem:[%s494 + $0x350] sm:$0xf]
        %v965 = vld [vmem:[%s494 + $0x354] sm:$0xf]
        %v966 = vld [vmem:[%s494 + $0x358] sm:$0xf]
        %v967 = vld [vmem:[%s494 + $0x35c] sm:$0xf]
        %v968 = vld [vmem:[%s494 + $0x360] sm:$0xf]
        %v969 = vld [vmem:[%s494 + $0x364] sm:$0xf]
        %v970 = vld [vmem:[%s494 + $0x368] sm:$0xf]
        %v971 = vld [vmem:[%s494 + $0x36c] sm:$0xf]
        %v972 = vld [vmem:[%s494 + $0x370] sm:$0xf]
        %v973 = vld [vmem:[%s494 + $0x374] sm:$0xf]
        %v974 = vld [vmem:[%s494 + $0x378] sm:$0xf]
        %v975 = vld [vmem:[%s494 + $0x37c] sm:$0xf]
        %v976 = vld [vmem:[%s494 + $0x380] sm:$0xf]
        %v977 = vld [vmem:[%s494 + $0x384] sm:$0xf]
        %v978 = vld [vmem:[%s494 + $0x388] sm:$0xf]
        %v979 = vld [vmem:[%s494 + $0x38c] sm:$0xf]
        %v980 = vld [vmem:[%s494 + $0x390] sm:$0xf]
        %v981 = vld [vmem:[%s494 + $0x394] sm:$0xf]
        %v982 = vld [vmem:[%s494 + $0x398] sm:$0xf]
        %v983 = vld [vmem:[%s494 + $0x39c] sm:$0xf]
        %v984 = vld [vmem:[%s494 + $0x3a0] sm:$0xf]
        %v985 = vld [vmem:[%s494 + $0x3a4] sm:$0xf]
        %v986 = vld [vmem:[%s494 + $0x3a8] sm:$0xf]
        %v987 = vld [vmem:[%s494 + $0x3ac] sm:$0xf]
        %v988 = vld [vmem:[%s494 + $0x3b0] sm:$0xf]
        %v989 = vld [vmem:[%s494 + $0x3b4] sm:$0xf]
        %v990 = vld [vmem:[%s494 + $0x3b8] sm:$0xf]
        %v991 = vld [vmem:[%s494 + $0x3bc] sm:$0xf]
        %v992 = vld [vmem:[%s494 + $0x3c0] sm:$0xf]
        %v993 = vld [vmem:[%s494 + $0x3c4] sm:$0xf]
        %v994 = vld [vmem:[%s494 + $0x3c8] sm:$0xf]
        %v995 = vld [vmem:[%s494 + $0x3cc] sm:$0xf]
        %v996 = vld [vmem:[%s494 + $0x3d0] sm:$0xf]
        %v997 = vld [vmem:[%s494 + $0x3d4] sm:$0xf]
        %v998 = vld [vmem:[%s494 + $0x3d8] sm:$0xf]
        %v999 = vld [vmem:[%s494 + $0x3dc] sm:$0xf]
        %v1000 = vld [vmem:[%s494 + $0x3e0] sm:$0xf]
        %v1001 = vld [vmem:[%s494 + $0x3e4] sm:$0xf]
        %v1002 = vld [vmem:[%s494 + $0x3e8] sm:$0xf]
        %v1003 = vld [vmem:[%s494 + $0x3ec] sm:$0xf]
        %v1004 = vld [vmem:[%s494 + $0x3f0] sm:$0xf]
        %v1005 = vld [vmem:[%s494 + $0x3f4] sm:$0xf]
        %v1006 = vld [vmem:[%s494 + $0x3f8] sm:$0xf]
        %v1007 = vld [vmem:[%s494 + $0x3fc] sm:$0xf]
        %v1008 = vld [vmem:[%s494 + $0x400] sm:$0xf]
        %v1009 = vld [vmem:[%s494 + $0x404] sm:$0xf]
        %v1010 = vld [vmem:[%s494 + $0x408] sm:$0xf]
        %v1011 = vld [vmem:[%s494 + $0x40c] sm:$0xf]
        %v1012 = vld [vmem:[%s494 + $0x410] sm:$0xf]
        %v1013 = vld [vmem:[%s494 + $0x414] sm:$0xf]
        %v1014 = vld [vmem:[%s494 + $0x418] sm:$0xf]
        %v1015 = vld [vmem:[%s494 + $0x41c] sm:$0xf]
        %v1016 = vld [vmem:[%s494 + $0x420] sm:$0xf]
        %v1017 = vld [vmem:[%s494 + $0x424] sm:$0xf]
        %v1018 = vld [vmem:[%s494 + $0x428] sm:$0xf]
        %v1019 = vld [vmem:[%s494 + $0x42c] sm:$0xf]
        %v1020 = vld [vmem:[%s494 + $0x430] sm:$0xf]
        %v1021 = vld [vmem:[%s494 + $0x434] sm:$0xf]
        %v1022 = vld [vmem:[%s494 + $0x438] sm:$0xf]
        %v1023 = vld [vmem:[%s494 + $0x43c] sm:$0xf]
        %v1024 = vld [vmem:[%s494 + $0x440] sm:$0xf]
        %v1025 = vld [vmem:[%s494 + $0x444] sm:$0xf]
        %v1026 = vld [vmem:[%s494 + $0x448] sm:$0xf]
        %v1027 = vld [vmem:[%s494 + $0x44c] sm:$0xf]
        %v1028 = vld [vmem:[%s494 + $0x450] sm:$0xf]
        %v1029 = vld [vmem:[%s494 + $0x454] sm:$0xf]
        %v1030 = vld [vmem:[%s494 + $0x458] sm:$0xf]
        %v1031 = vld [vmem:[%s494 + $0x45c] sm:$0xf]
        %v1032 = vld [vmem:[%s494 + $0x460] sm:$0xf]
        %v1033 = vld [vmem:[%s494 + $0x464] sm:$0xf]
        %v1034 = vld [vmem:[%s494 + $0x468] sm:$0xf]
        %v1035 = vld [vmem:[%s494 + $0x46c] sm:$0xf]
        %v1036 = vld [vmem:[%s494 + $0x470] sm:$0xf]
        %v1037 = vld [vmem:[%s494 + $0x474] sm:$0xf]
        %v1038 = vld [vmem:[%s494 + $0x478] sm:$0xf]
        %v1039 = vld [vmem:[%s494 + $0x47c] sm:$0xf]
        %v1040 = vld [vmem:[%s494 + $0x480] sm:$0xf]
        %v1041 = vld [vmem:[%s494 + $0x484] sm:$0xf]
        %v1042 = vld [vmem:[%s494 + $0x488] sm:$0xf]
        %v1043 = vld [vmem:[%s494 + $0x48c] sm:$0xf]
        %v1044 = vld [vmem:[%s494 + $0x490] sm:$0xf]
        %v1045 = vld [vmem:[%s494 + $0x494] sm:$0xf]
        %v1046 = vld [vmem:[%s494 + $0x498] sm:$0xf]
        %v1047 = vld [vmem:[%s494 + $0x49c] sm:$0xf]
        %v1048 = vld [vmem:[%s494 + $0x4a0] sm:$0xf]
        %v1049 = vld [vmem:[%s494 + $0x4a4] sm:$0xf]
        %v1050 = vld [vmem:[%s494 + $0x4a8] sm:$0xf]
        %v1051 = vld [vmem:[%s494 + $0x4ac] sm:$0xf]
        %v1052 = vld [vmem:[%s494 + $0x4b0] sm:$0xf]
        %v1053 = vld [vmem:[%s494 + $0x4b4] sm:$0xf]
        %v1054 = vld [vmem:[%s494 + $0x4b8] sm:$0xf]
        %v1055 = vld [vmem:[%s494 + $0x4bc] sm:$0xf]
        %v1056 = vld [vmem:[%s494 + $0x4c0] sm:$0xf]
        %v1057 = vld [vmem:[%s494 + $0x4c4] sm:$0xf]
        %v1058 = vld [vmem:[%s494 + $0x4c8] sm:$0xf]
        %v1059 = vld [vmem:[%s494 + $0x4cc] sm:$0xf]
        %v1060 = vld [vmem:[%s494 + $0x4d0] sm:$0xf]
        %v1061 = vld [vmem:[%s494 + $0x4d4] sm:$0xf]
        %v1062 = vld [vmem:[%s494 + $0x4d8] sm:$0xf]
        %v1063 = vld [vmem:[%s494 + $0x4dc] sm:$0xf]
        %v1064 = vld [vmem:[%s494 + $0x4e0] sm:$0xf]
        %v1065 = vld [vmem:[%s494 + $0x4e4] sm:$0xf]
        %v1066 = vld [vmem:[%s494 + $0x4e8] sm:$0xf]
        %v1067 = vld [vmem:[%s494 + $0x4ec] sm:$0xf]
        %v1068 = vld [vmem:[%s494 + $0x4f0] sm:$0xf]
        %v1069 = vld [vmem:[%s494 + $0x4f4] sm:$0xf]
        %v1070 = vld [vmem:[%s494 + $0x4f8] sm:$0xf]
        %v1071 = vld [vmem:[%s494 + $0x4fc] sm:$0xf]
        %v1072 = vld [vmem:[%s494 + $0x500] sm:$0xf]
        %v1073 = vld [vmem:[%s494 + $0x504] sm:$0xf]
        %v1074 = vld [vmem:[%s494 + $0x508] sm:$0xf]
        %v1075 = vld [vmem:[%s494 + $0x50c] sm:$0xf]
        %v1076 = vld [vmem:[%s494 + $0x510] sm:$0xf]
        %v1077 = vld [vmem:[%s494 + $0x514] sm:$0xf]
        %v1078 = vld [vmem:[%s494 + $0x518] sm:$0xf]
        %v1079 = vld [vmem:[%s494 + $0x51c] sm:$0xf]
        %v1080 = vld [vmem:[%s494 + $0x520] sm:$0xf]
        %v1081 = vld [vmem:[%s494 + $0x524] sm:$0xf]
        %v1082 = vld [vmem:[%s494 + $0x528] sm:$0xf]
        %v1083 = vld [vmem:[%s494 + $0x52c] sm:$0xf]
        %v1084 = vld [vmem:[%s494 + $0x530] sm:$0xf]
        %v1085 = vld [vmem:[%s494 + $0x534] sm:$0xf]
        %v1086 = vld [vmem:[%s494 + $0x538] sm:$0xf]
        %v1087 = vld [vmem:[%s494 + $0x53c] sm:$0xf]
        %v1088 = vld [vmem:[%s494 + $0x540] sm:$0xf]
        %v1089 = vld [vmem:[%s494 + $0x544] sm:$0xf]
        %v1090 = vld [vmem:[%s494 + $0x548] sm:$0xf]
        %v1091 = vld [vmem:[%s494 + $0x54c] sm:$0xf]
        %v1092 = vld [vmem:[%s494 + $0x550] sm:$0xf]
        %v1093 = vld [vmem:[%s494 + $0x554] sm:$0xf]
        %v1094 = vld [vmem:[%s494 + $0x558] sm:$0xf]
        %v1095 = vld [vmem:[%s494 + $0x55c] sm:$0xf]
        %v1096 = vld [vmem:[%s494 + $0x560] sm:$0xf]
        %v1097 = vld [vmem:[%s494 + $0x564] sm:$0xf]
        %v1098 = vld [vmem:[%s494 + $0x568] sm:$0xf]
        %v1099 = vld [vmem:[%s494 + $0x56c] sm:$0xf]
        %v1100 = vld [vmem:[%s494 + $0x570] sm:$0xf]
        %v1101 = vld [vmem:[%s494 + $0x574] sm:$0xf]
        %v1102 = vld [vmem:[%s494 + $0x578] sm:$0xf]
        %v1103 = vld [vmem:[%s494 + $0x57c] sm:$0xf]
        %v1104 = vld [vmem:[%s494 + $0x580] sm:$0xf]
        %v1105 = vld [vmem:[%s494 + $0x584] sm:$0xf]
        %v1106 = vld [vmem:[%s494 + $0x588] sm:$0xf]
        %v1107 = vld [vmem:[%s494 + $0x58c] sm:$0xf]
        %v1108 = vld [vmem:[%s494 + $0x590] sm:$0xf]
        %v1109 = vld [vmem:[%s494 + $0x594] sm:$0xf]
        %v1110 = vld [vmem:[%s494 + $0x598] sm:$0xf]
        %v1111 = vld [vmem:[%s494 + $0x59c] sm:$0xf]
        %v1112 = vld [vmem:[%s494 + $0x5a0] sm:$0xf]
        %v1113 = vld [vmem:[%s494 + $0x5a4] sm:$0xf]
        %v1114 = vld [vmem:[%s494 + $0x5a8] sm:$0xf]
        %v1115 = vld [vmem:[%s494 + $0x5ac] sm:$0xf]
        %v1116 = vld [vmem:[%s494 + $0x5b0] sm:$0xf]
        %v1117 = vld [vmem:[%s494 + $0x5b4] sm:$0xf]
        %v1118 = vld [vmem:[%s494 + $0x5b8] sm:$0xf]
        %v1119 = vld [vmem:[%s494 + $0x5bc] sm:$0xf]
        %v1120 = vld [vmem:[%s494 + $0x5c0] sm:$0xf]
        %v1121 = vld [vmem:[%s494 + $0x5c4] sm:$0xf]
        %v1122 = vld [vmem:[%s494 + $0x5c8] sm:$0xf]
        %v1123 = vld [vmem:[%s494 + $0x5cc] sm:$0xf]
        %v1124 = vld [vmem:[%s494 + $0x5d0] sm:$0xf]
        %v1125 = vld [vmem:[%s494 + $0x5d4] sm:$0xf]
        %v1126 = vld [vmem:[%s494 + $0x5d8] sm:$0xf]
        %v1127 = vld [vmem:[%s494 + $0x5dc] sm:$0xf]
        %v1128 = vld [vmem:[%s494 + $0x5e0] sm:$0xf]
        %v1129 = vld [vmem:[%s494 + $0x5e4] sm:$0xf]
        %v1130 = vld [vmem:[%s494 + $0x5e8] sm:$0xf]
        %v1131 = vld [vmem:[%s494 + $0x5ec] sm:$0xf]
        %v1132 = vld [vmem:[%s494 + $0x5f0] sm:$0xf]
        %v1133 = vld [vmem:[%s494 + $0x5f4] sm:$0xf]
        %v1134 = vld [vmem:[%s494 + $0x5f8] sm:$0xf]
        %v1135 = vld [vmem:[%s494 + $0x5fc] sm:$0xf]
        %v1136 = vld [vmem:[%s494 + $0x600] sm:$0xf]
        %v1137 = vld [vmem:[%s494 + $0x604] sm:$0xf]
        %v1138 = vld [vmem:[%s494 + $0x608] sm:$0xf]
        %v1139 = vld [vmem:[%s494 + $0x60c] sm:$0xf]
        %v1140 = vld [vmem:[%s494 + $0x610] sm:$0xf]
        %v1141 = vld [vmem:[%s494 + $0x614] sm:$0xf]
        %v1142 = vld [vmem:[%s494 + $0x618] sm:$0xf]
        %v1143 = vld [vmem:[%s494 + $0x61c] sm:$0xf]
        %v1144 = vld [vmem:[%s494 + $0x620] sm:$0xf]
        %v1145 = vld [vmem:[%s494 + $0x624] sm:$0xf]
        %v1146 = vld [vmem:[%s494 + $0x628] sm:$0xf]
        %v1147 = vld [vmem:[%s494 + $0x62c] sm:$0xf]
        %v1148 = vld [vmem:[%s494 + $0x630] sm:$0xf]
        %v1149 = vld [vmem:[%s494 + $0x634] sm:$0xf]
        %v1150 = vld [vmem:[%s494 + $0x638] sm:$0xf]
        %v1151 = vld [vmem:[%s494 + $0x63c] sm:$0xf]
        %v1152 = vld [vmem:[%s494 + $0x640] sm:$0xf]
        %v1153 = vld [vmem:[%s494 + $0x644] sm:$0xf]
        %v1154 = vld [vmem:[%s494 + $0x648] sm:$0xf]
        %v1155 = vld [vmem:[%s494 + $0x64c] sm:$0xf]
        %v1156 = vld [vmem:[%s494 + $0x650] sm:$0xf]
        %v1157 = vld [vmem:[%s494 + $0x654] sm:$0xf]
        %v1158 = vld [vmem:[%s494 + $0x658] sm:$0xf]
        %v1159 = vld [vmem:[%s494 + $0x65c] sm:$0xf]
        %v1160 = vld [vmem:[%s494 + $0x660] sm:$0xf]
        %v1161 = vld [vmem:[%s494 + $0x664] sm:$0xf]
        %v1162 = vld [vmem:[%s494 + $0x668] sm:$0xf]
        %v1163 = vld [vmem:[%s494 + $0x66c] sm:$0xf]
        %v1164 = vld [vmem:[%s494 + $0x670] sm:$0xf]
        %v1165 = vld [vmem:[%s494 + $0x674] sm:$0xf]
        %v1166 = vld [vmem:[%s494 + $0x678] sm:$0xf]
        %v1167 = vld [vmem:[%s494 + $0x67c] sm:$0xf]
        %v1168 = vld [vmem:[%s494 + $0x680] sm:$0xf]
        %v1169 = vld [vmem:[%s494 + $0x684] sm:$0xf]
        %v1170 = vld [vmem:[%s494 + $0x688] sm:$0xf]
        %v1171 = vld [vmem:[%s494 + $0x68c] sm:$0xf]
        %v1172 = vld [vmem:[%s494 + $0x690] sm:$0xf]
        %v1173 = vld [vmem:[%s494 + $0x694] sm:$0xf]
        %v1174 = vld [vmem:[%s494 + $0x698] sm:$0xf]
        %v1175 = vld [vmem:[%s494 + $0x69c] sm:$0xf]
        %v1176 = vld [vmem:[%s494 + $0x6a0] sm:$0xf]
        %v1177 = vld [vmem:[%s494 + $0x6a4] sm:$0xf]
        %v1178 = vld [vmem:[%s494 + $0x6a8] sm:$0xf]
        %v1179 = vld [vmem:[%s494 + $0x6ac] sm:$0xf]
        %v1180 = vld [vmem:[%s494 + $0x6b0] sm:$0xf]
        %v1181 = vld [vmem:[%s494 + $0x6b4] sm:$0xf]
        %v1182 = vld [vmem:[%s494 + $0x6b8] sm:$0xf]
        %v1183 = vld [vmem:[%s494 + $0x6bc] sm:$0xf]
        %v1184 = vld [vmem:[%s494 + $0x6c0] sm:$0xf]
        %v1185 = vld [vmem:[%s494 + $0x6c4] sm:$0xf]
        %v1186 = vld [vmem:[%s494 + $0x6c8] sm:$0xf]
        %v1187 = vld [vmem:[%s494 + $0x6cc] sm:$0xf]
        %v1188 = vld [vmem:[%s494 + $0x6d0] sm:$0xf]
        %v1189 = vld [vmem:[%s494 + $0x6d4] sm:$0xf]
        %v1190 = vld [vmem:[%s494 + $0x6d8] sm:$0xf]
        %v1191 = vld [vmem:[%s494 + $0x6dc] sm:$0xf]
        %v1192 = vld [vmem:[%s494 + $0x6e0] sm:$0xf]
        %v1193 = vld [vmem:[%s494 + $0x6e4] sm:$0xf]
        %v1194 = vld [vmem:[%s494 + $0x6e8] sm:$0xf]
        %v1195 = vld [vmem:[%s494 + $0x6ec] sm:$0xf]
        %v1196 = vld [vmem:[%s494 + $0x6f0] sm:$0xf]
        %v1197 = vld [vmem:[%s494 + $0x6f4] sm:$0xf]
        %v1198 = vld [vmem:[%s494 + $0x6f8] sm:$0xf]
        %v1199 = vld [vmem:[%s494 + $0x6fc] sm:$0xf]
        %v1200 = vld [vmem:[%s494 + $0x700] sm:$0xf]
        %v1201 = vld [vmem:[%s494 + $0x704] sm:$0xf]
        %v1202 = vld [vmem:[%s494 + $0x708] sm:$0xf]
        %v1203 = vld [vmem:[%s494 + $0x70c] sm:$0xf]
        %v1204 = vld [vmem:[%s494 + $0x710] sm:$0xf]
        %v1205 = vld [vmem:[%s494 + $0x714] sm:$0xf]
        %v1206 = vld [vmem:[%s494 + $0x718] sm:$0xf]
        %v1207 = vld [vmem:[%s494 + $0x71c] sm:$0xf]
        %v1208 = vld [vmem:[%s494 + $0x720] sm:$0xf]
        %v1209 = vld [vmem:[%s494 + $0x724] sm:$0xf]
        %v1210 = vld [vmem:[%s494 + $0x728] sm:$0xf]
        %v1211 = vld [vmem:[%s494 + $0x72c] sm:$0xf]
        %v1212 = vld [vmem:[%s494 + $0x730] sm:$0xf]
        %v1213 = vld [vmem:[%s494 + $0x734] sm:$0xf]
        %v1214 = vld [vmem:[%s494 + $0x738] sm:$0xf]
        %v1215 = vld [vmem:[%s494 + $0x73c] sm:$0xf]
        %v1216 = vld [vmem:[%s494 + $0x740] sm:$0xf]
        %v1217 = vld [vmem:[%s494 + $0x744] sm:$0xf]
        %v1218 = vld [vmem:[%s494 + $0x748] sm:$0xf]
        %v1219 = vld [vmem:[%s494 + $0x74c] sm:$0xf]
        %v1220 = vld [vmem:[%s494 + $0x750] sm:$0xf]
        %v1221 = vld [vmem:[%s494 + $0x754] sm:$0xf]
        %v1222 = vld [vmem:[%s494 + $0x758] sm:$0xf]
        %v1223 = vld [vmem:[%s494 + $0x75c] sm:$0xf]
        %v1224 = vld [vmem:[%s494 + $0x760] sm:$0xf]
        %v1225 = vld [vmem:[%s494 + $0x764] sm:$0xf]
        %v1226 = vld [vmem:[%s494 + $0x768] sm:$0xf]
        %v1227 = vld [vmem:[%s494 + $0x76c] sm:$0xf]
        %v1228 = vld [vmem:[%s494 + $0x770] sm:$0xf]
        %v1229 = vld [vmem:[%s494 + $0x774] sm:$0xf]
        %v1230 = vld [vmem:[%s494 + $0x778] sm:$0xf]
        %v1231 = vld [vmem:[%s494 + $0x77c] sm:$0xf]
        %v1232 = vld [vmem:[%s494 + $0x780] sm:$0xf]
        %v1233 = vld [vmem:[%s494 + $0x784] sm:$0xf]
        %v1234 = vld [vmem:[%s494 + $0x788] sm:$0xf]
        %v1235 = vld [vmem:[%s494 + $0x78c] sm:$0xf]
        %v1236 = vld [vmem:[%s494 + $0x790] sm:$0xf]
        %v1237 = vld [vmem:[%s494 + $0x794] sm:$0xf]
        %v1238 = vld [vmem:[%s494 + $0x798] sm:$0xf]
        %v1239 = vld [vmem:[%s494 + $0x79c] sm:$0xf]
        %v1240 = vld [vmem:[%s494 + $0x7a0] sm:$0xf]
        %v1241 = vld [vmem:[%s494 + $0x7a4] sm:$0xf]
        %v1242 = vld [vmem:[%s494 + $0x7a8] sm:$0xf]
        %v1243 = vld [vmem:[%s494 + $0x7ac] sm:$0xf]
        %v1244 = vld [vmem:[%s494 + $0x7b0] sm:$0xf]
        %v1245 = vld [vmem:[%s494 + $0x7b4] sm:$0xf]
        %v1246 = vld [vmem:[%s494 + $0x7b8] sm:$0xf]
        %v1247 = vld [vmem:[%s494 + $0x7bc] sm:$0xf]
        %v1248 = vld [vmem:[%s494 + $0x7c0] sm:$0xf]
        %v1249 = vld [vmem:[%s494 + $0x7c4] sm:$0xf]
        %v1250 = vld [vmem:[%s494 + $0x7c8] sm:$0xf]
        %v1251 = vld [vmem:[%s494 + $0x7cc] sm:$0xf]
        %v1252 = vld [vmem:[%s494 + $0x7d0] sm:$0xf]
        %v1253 = vld [vmem:[%s494 + $0x7d4] sm:$0xf]
        %v1254 = vld [vmem:[%s494 + $0x7d8] sm:$0xf]
        %v1255 = vld [vmem:[%s494 + $0x7dc] sm:$0xf]
        %v1256 = vld [vmem:[%s494 + $0x7e0] sm:$0xf]
        %v1257 = vld [vmem:[%s494 + $0x7e4] sm:$0xf]
        %v1258 = vld [vmem:[%s494 + $0x7e8] sm:$0xf]
        %v1259 = vld [vmem:[%s494 + $0x7ec] sm:$0xf]
        %v1260 = vld [vmem:[%s494 + $0x7f0] sm:$0xf]
        %v1261 = vld [vmem:[%s494 + $0x7f4] sm:$0xf]
        %v1262 = vld [vmem:[%s494 + $0x7f8] sm:$0xf]
        %v1263 = vld [vmem:[%s494 + $0x7fc] sm:$0xf]
        %v1264 = vld [vmem:[%s494 + $0x800] sm:$0xf]
        %v1265 = vld [vmem:[%s494 + $0x804] sm:$0xf]
        %v1266 = vld [vmem:[%s494 + $0x808] sm:$0xf]
        %v1267 = vld [vmem:[%s494 + $0x80c] sm:$0xf]
        %v1268 = vld [vmem:[%s494 + $0x810] sm:$0xf]
        %v1269 = vld [vmem:[%s494 + $0x814] sm:$0xf]
        %v1270 = vld [vmem:[%s494 + $0x818] sm:$0xf]
        %v1271 = vld [vmem:[%s494 + $0x81c] sm:$0xf]
        %v1272 = vld [vmem:[%s494 + $0x820] sm:$0xf]
        %v1273 = vld [vmem:[%s494 + $0x824] sm:$0xf]
        %v1274 = vld [vmem:[%s494 + $0x828] sm:$0xf]
        %v1275 = vld [vmem:[%s494 + $0x82c] sm:$0xf]
        %v1276 = vld [vmem:[%s494 + $0x830] sm:$0xf]
        %v1277 = vld [vmem:[%s494 + $0x834] sm:$0xf]
        %v1278 = vld [vmem:[%s494 + $0x838] sm:$0xf]
        %v1279 = vld [vmem:[%s494 + $0x83c] sm:$0xf]
        %v1280 = vld [vmem:[%s494 + $0x840] sm:$0xf]
        %v1281 = vld [vmem:[%s494 + $0x844] sm:$0xf]
        %v1282 = vld [vmem:[%s494 + $0x848] sm:$0xf]
        %v1283 = vld [vmem:[%s494 + $0x84c] sm:$0xf]
        %v1284 = vld [vmem:[%s494 + $0x850] sm:$0xf]
        %v1285 = vld [vmem:[%s494 + $0x854] sm:$0xf]
        %v1286 = vld [vmem:[%s494 + $0x858] sm:$0xf]
        %v1287 = vld [vmem:[%s494 + $0x85c] sm:$0xf]
        %v1288 = vld [vmem:[%s494 + $0x860] sm:$0xf]
        %v1289 = vld [vmem:[%s494 + $0x864] sm:$0xf]
        %v1290 = vld [vmem:[%s494 + $0x868] sm:$0xf]
        %v1291 = vld [vmem:[%s494 + $0x86c] sm:$0xf]
        %v1292 = vld [vmem:[%s494 + $0x870] sm:$0xf]
        %v1293 = vld [vmem:[%s494 + $0x874] sm:$0xf]
        %v1294 = vld [vmem:[%s494 + $0x878] sm:$0xf]
        %v1295 = vld [vmem:[%s494 + $0x87c] sm:$0xf]
        %v1296 = vld [vmem:[%s494 + $0x880] sm:$0xf]
        %v1297 = vld [vmem:[%s494 + $0x884] sm:$0xf]
        %v1298 = vld [vmem:[%s494 + $0x888] sm:$0xf]
        %v1299 = vld [vmem:[%s494 + $0x88c] sm:$0xf]
        %v1300 = vld [vmem:[%s494 + $0x890] sm:$0xf]
        %v1301 = vld [vmem:[%s494 + $0x894] sm:$0xf]
        %v1302 = vld [vmem:[%s494 + $0x898] sm:$0xf]
        %v1303 = vld [vmem:[%s494 + $0x89c] sm:$0xf]
        %v1304 = vld [vmem:[%s494 + $0x8a0] sm:$0xf]
        %v1305 = vld [vmem:[%s494 + $0x8a4] sm:$0xf]
        %v1306 = vld [vmem:[%s494 + $0x8a8] sm:$0xf]
        %v1307 = vld [vmem:[%s494 + $0x8ac] sm:$0xf]
        %v1308 = vld [vmem:[%s494 + $0x8b0] sm:$0xf]
        %v1309 = vld [vmem:[%s494 + $0x8b4] sm:$0xf]
        %v1310 = vld [vmem:[%s494 + $0x8b8] sm:$0xf]
        %v1311 = vld [vmem:[%s494 + $0x8bc] sm:$0xf]
        %v1312 = vld [vmem:[%s494 + $0x8c0] sm:$0xf]
        %v1313 = vld [vmem:[%s494 + $0x8c4] sm:$0xf]
        %v1314 = vld [vmem:[%s494 + $0x8c8] sm:$0xf]
        %v1315 = vld [vmem:[%s494 + $0x8cc] sm:$0xf]
        %v1316 = vld [vmem:[%s494 + $0x8d0] sm:$0xf]
        %v1317 = vld [vmem:[%s494 + $0x8d4] sm:$0xf]
        %v1318 = vld [vmem:[%s494 + $0x8d8] sm:$0xf]
        %v1319 = vld [vmem:[%s494 + $0x8dc] sm:$0xf]
        %v1320 = vld [vmem:[%s494 + $0x8e0] sm:$0xf]
        %v1321 = vld [vmem:[%s494 + $0x8e4] sm:$0xf]
        %v1322 = vld [vmem:[%s494 + $0x8e8] sm:$0xf]
        %v1323 = vld [vmem:[%s494 + $0x8ec] sm:$0xf]
        %v1324 = vld [vmem:[%s494 + $0x8f0] sm:$0xf]
        %v1325 = vld [vmem:[%s494 + $0x8f4] sm:$0xf]
        %v1326 = vld [vmem:[%s494 + $0x8f8] sm:$0xf]
        %v1327 = vld [vmem:[%s494 + $0x8fc] sm:$0xf]
        %v1328 = vld [vmem:[%s494 + $0x900] sm:$0xf]
        %v1329 = vld [vmem:[%s494 + $0x904] sm:$0xf]
        %v1330 = vld [vmem:[%s494 + $0x908] sm:$0xf]
        %v1331 = vld [vmem:[%s494 + $0x90c] sm:$0xf]
        %v1332 = vld [vmem:[%s494 + $0x910] sm:$0xf]
        %v1333 = vld [vmem:[%s494 + $0x914] sm:$0xf]
        %v1334 = vld [vmem:[%s494 + $0x918] sm:$0xf]
        %v1335 = vld [vmem:[%s494 + $0x91c] sm:$0xf]
        %v1336 = vld [vmem:[%s494 + $0x920] sm:$0xf]
        %v1337 = vld [vmem:[%s494 + $0x924] sm:$0xf]
        %v1338 = vld [vmem:[%s494 + $0x928] sm:$0xf]
        %v1339 = vld [vmem:[%s494 + $0x92c] sm:$0xf]
        %v1340 = vld [vmem:[%s494 + $0x930] sm:$0xf]
        %v1341 = vld [vmem:[%s494 + $0x934] sm:$0xf]
        %v1342 = vld [vmem:[%s494 + $0x938] sm:$0xf]
        %v1343 = vld [vmem:[%s494 + $0x93c] sm:$0xf]
        %v1344 = vld [vmem:[%s494 + $0x940] sm:$0xf]
        %v1345 = vld [vmem:[%s494 + $0x944] sm:$0xf]
        %v1346 = vld [vmem:[%s494 + $0x948] sm:$0xf]
        %v1347 = vld [vmem:[%s494 + $0x94c] sm:$0xf]
        %v1348 = vld [vmem:[%s494 + $0x950] sm:$0xf]
        %v1349 = vld [vmem:[%s494 + $0x954] sm:$0xf]
        %v1350 = vld [vmem:[%s494 + $0x958] sm:$0xf]
        %v1351 = vld [vmem:[%s494 + $0x95c] sm:$0xf]
        %v1352 = vld [vmem:[%s494 + $0x960] sm:$0xf]
        %v1353 = vld [vmem:[%s494 + $0x964] sm:$0xf]
        %v1354 = vld [vmem:[%s494 + $0x968] sm:$0xf]
        %v1355 = vld [vmem:[%s494 + $0x96c] sm:$0xf]
        %v1356 = vld [vmem:[%s494 + $0x970] sm:$0xf]
        %v1357 = vld [vmem:[%s494 + $0x974] sm:$0xf]
        %v1358 = vld [vmem:[%s494 + $0x978] sm:$0xf]
        %v1359 = vld [vmem:[%s494 + $0x97c] sm:$0xf]
        %v1360 = vld [vmem:[%s494 + $0x980] sm:$0xf]
        %v1361 = vld [vmem:[%s494 + $0x984] sm:$0xf]
        %v1362 = vld [vmem:[%s494 + $0x988] sm:$0xf]
        %v1363 = vld [vmem:[%s494 + $0x98c] sm:$0xf]
        %v1364 = vld [vmem:[%s494 + $0x990] sm:$0xf]
        %v1365 = vld [vmem:[%s494 + $0x994] sm:$0xf]
        %v1366 = vld [vmem:[%s494 + $0x998] sm:$0xf]
        %v1367 = vld [vmem:[%s494 + $0x99c] sm:$0xf]
        %v1368 = vld [vmem:[%s494 + $0x9a0] sm:$0xf]
        %v1369 = vld [vmem:[%s494 + $0x9a4] sm:$0xf]
        %v1370 = vld [vmem:[%s494 + $0x9a8] sm:$0xf]
        %v1371 = vld [vmem:[%s494 + $0x9ac] sm:$0xf]
        %v1372 = vld [vmem:[%s494 + $0x9b0] sm:$0xf]
        %v1373 = vld [vmem:[%s494 + $0x9b4] sm:$0xf]
        %v1374 = vld [vmem:[%s494 + $0x9b8] sm:$0xf]
        %v1375 = vld [vmem:[%s494 + $0x9bc] sm:$0xf]
        %v1376 = vld [vmem:[%s494 + $0x9c0] sm:$0xf]
        %v1377 = vld [vmem:[%s494 + $0x9c4] sm:$0xf]
        %v1378 = vld [vmem:[%s494 + $0x9c8] sm:$0xf]
        %v1379 = vld [vmem:[%s494 + $0x9cc] sm:$0xf]
        %v1380 = vld [vmem:[%s494 + $0x9d0] sm:$0xf]
        %v1381 = vld [vmem:[%s494 + $0x9d4] sm:$0xf]
        %v1382 = vld [vmem:[%s494 + $0x9d8] sm:$0xf]
        %v1383 = vld [vmem:[%s494 + $0x9dc] sm:$0xf]
        %v1384 = vld [vmem:[%s494 + $0x9e0] sm:$0xf]
        %v1385 = vld [vmem:[%s494 + $0x9e4] sm:$0xf]
        %v1386 = vld [vmem:[%s494 + $0x9e8] sm:$0xf]
        %v1387 = vld [vmem:[%s494 + $0x9ec] sm:$0xf]
        %v1388 = vld [vmem:[%s494 + $0x9f0] sm:$0xf]
        %v1389 = vld [vmem:[%s494 + $0x9f4] sm:$0xf]
        %v1390 = vld [vmem:[%s494 + $0x9f8] sm:$0xf]
        %v1391 = vld [vmem:[%s494 + $0x9fc] sm:$0xf]
        %v1392 = vld [vmem:[%s494 + $0xa00] sm:$0xf]
        %v1393 = vld [vmem:[%s494 + $0xa04] sm:$0xf]
        %v1394 = vld [vmem:[%s494 + $0xa08] sm:$0xf]
        %v1395 = vld [vmem:[%s494 + $0xa0c] sm:$0xf]
        %v1396 = vld [vmem:[%s494 + $0xa10] sm:$0xf]
        %v1397 = vld [vmem:[%s494 + $0xa14] sm:$0xf]
        %v1398 = vld [vmem:[%s494 + $0xa18] sm:$0xf]
        %v1399 = vld [vmem:[%s494 + $0xa1c] sm:$0xf]
        %v1400 = vld [vmem:[%s494 + $0xa20] sm:$0xf]
        %v1401 = vld [vmem:[%s494 + $0xa24] sm:$0xf]
        %v1402 = vld [vmem:[%s494 + $0xa28] sm:$0xf]
        %v1403 = vld [vmem:[%s494 + $0xa2c] sm:$0xf]
        %v1404 = vld [vmem:[%s494 + $0xa30] sm:$0xf]
        %v1405 = vld [vmem:[%s494 + $0xa34] sm:$0xf]
        %v1406 = vld [vmem:[%s494 + $0xa38] sm:$0xf]
        %v1407 = vld [vmem:[%s494 + $0xa3c] sm:$0xf]
        %v1408 = vld [vmem:[%s494 + $0xa40] sm:$0xf]
        %v1409 = vld [vmem:[%s494 + $0xa44] sm:$0xf]
        %v1410 = vld [vmem:[%s494 + $0xa48] sm:$0xf]
        %v1411 = vld [vmem:[%s494 + $0xa4c] sm:$0xf]
        %v1412 = vld [vmem:[%s494 + $0xa50] sm:$0xf]
        %v1413 = vld [vmem:[%s494 + $0xa54] sm:$0xf]
        %v1414 = vld [vmem:[%s494 + $0xa58] sm:$0xf]
        %v1415 = vld [vmem:[%s494 + $0xa5c] sm:$0xf]
        %v1416 = vld [vmem:[%s494 + $0xa60] sm:$0xf]
        %v1417 = vld [vmem:[%s494 + $0xa64] sm:$0xf]
        %v1418 = vld [vmem:[%s494 + $0xa68] sm:$0xf]
        %v1419 = vld [vmem:[%s494 + $0xa6c] sm:$0xf]
        %v1420 = vld [vmem:[%s494 + $0xa70] sm:$0xf]
        %v1421 = vld [vmem:[%s494 + $0xa74] sm:$0xf]
        %v1422 = vld [vmem:[%s494 + $0xa78] sm:$0xf]
        %v1423 = vld [vmem:[%s494 + $0xa7c] sm:$0xf]
        %v1424 = vld [vmem:[%s494 + $0xa80] sm:$0xf]
        %v1425 = vld [vmem:[%s494 + $0xa84] sm:$0xf]
        %v1426 = vld [vmem:[%s494 + $0xa88] sm:$0xf]
        %v1427 = vld [vmem:[%s494 + $0xa8c] sm:$0xf]
        %v1428 = vld [vmem:[%s494 + $0xa90] sm:$0xf]
        %v1429 = vld [vmem:[%s494 + $0xa94] sm:$0xf]
        %v1430 = vld [vmem:[%s494 + $0xa98] sm:$0xf]
        %v1431 = vld [vmem:[%s494 + $0xa9c] sm:$0xf]
        %v1432 = vld [vmem:[%s494 + $0xaa0] sm:$0xf]
        %v1433 = vld [vmem:[%s494 + $0xaa4] sm:$0xf]
        %v1434 = vld [vmem:[%s494 + $0xaa8] sm:$0xf]
        %v1435 = vld [vmem:[%s494 + $0xaac] sm:$0xf]
        %v1436 = vld [vmem:[%s494 + $0xab0] sm:$0xf]
        %v1437 = vld [vmem:[%s494 + $0xab4] sm:$0xf]
        %v1438 = vld [vmem:[%s494 + $0xab8] sm:$0xf]
        %v1439 = vld [vmem:[%s494 + $0xabc] sm:$0xf]
        %v1440 = vld [vmem:[%s494 + $0xac0] sm:$0xf]
        %v1441 = vld [vmem:[%s494 + $0xac4] sm:$0xf]
        %v1442 = vld [vmem:[%s494 + $0xac8] sm:$0xf]
        %v1443 = vld [vmem:[%s494 + $0xacc] sm:$0xf]
        %v1444 = vld [vmem:[%s494 + $0xad0] sm:$0xf]
        %v1445 = vld [vmem:[%s494 + $0xad4] sm:$0xf]
        %v1446 = vld [vmem:[%s494 + $0xad8] sm:$0xf]
        %v1447 = vld [vmem:[%s494 + $0xadc] sm:$0xf]
        %v1448 = vld [vmem:[%s494 + $0xae0] sm:$0xf]
        %v1449 = vld [vmem:[%s494 + $0xae4] sm:$0xf]
        %v1450 = vld [vmem:[%s494 + $0xae8] sm:$0xf]
        %v1451 = vld [vmem:[%s494 + $0xaec] sm:$0xf]
        %v1452 = vld [vmem:[%s494 + $0xaf0] sm:$0xf]
        %v1453 = vld [vmem:[%s494 + $0xaf4] sm:$0xf]
        %v1454 = vld [vmem:[%s494 + $0xaf8] sm:$0xf]
        %v1455 = vld [vmem:[%s494 + $0xafc] sm:$0xf]
        %v1456 = vld [vmem:[%s494 + $0xb00] sm:$0xf]
        %v1457 = vld [vmem:[%s494 + $0xb04] sm:$0xf]
        %v1458 = vld [vmem:[%s494 + $0xb08] sm:$0xf]
        %v1459 = vld [vmem:[%s494 + $0xb0c] sm:$0xf]
        %v1460 = vld [vmem:[%s494 + $0xb10] sm:$0xf]
        %v1461 = vld [vmem:[%s494 + $0xb14] sm:$0xf]
        %v1462 = vld [vmem:[%s494 + $0xb18] sm:$0xf]
        %v1463 = vld [vmem:[%s494 + $0xb1c] sm:$0xf]
        %v1464 = vld [vmem:[%s494 + $0xb20] sm:$0xf]
        %v1465 = vld [vmem:[%s494 + $0xb24] sm:$0xf]
        %v1466 = vld [vmem:[%s494 + $0xb28] sm:$0xf]
        %v1467 = vld [vmem:[%s494 + $0xb2c] sm:$0xf]
        %v1468 = vld [vmem:[%s494 + $0xb30] sm:$0xf]
        %v1469 = vld [vmem:[%s494 + $0xb34] sm:$0xf]
        %v1470 = vld [vmem:[%s494 + $0xb38] sm:$0xf]
        %v1471 = vld [vmem:[%s494 + $0xb3c] sm:$0xf]
        %v1472 = vld [vmem:[%s494 + $0xb40] sm:$0xf]
        %v1473 = vld [vmem:[%s494 + $0xb44] sm:$0xf]
        %v1474 = vld [vmem:[%s494 + $0xb48] sm:$0xf]
        %v1475 = vld [vmem:[%s494 + $0xb4c] sm:$0xf]
        %v1476 = vld [vmem:[%s494 + $0xb50] sm:$0xf]
        %v1477 = vld [vmem:[%s494 + $0xb54] sm:$0xf]
        %v1478 = vld [vmem:[%s494 + $0xb58] sm:$0xf]
        %v1479 = vld [vmem:[%s494 + $0xb5c] sm:$0xf]
        %v1480 = vld [vmem:[%s494 + $0xb60] sm:$0xf]
        %v1481 = vld [vmem:[%s494 + $0xb64] sm:$0xf]
        %v1482 = vld [vmem:[%s494 + $0xb68] sm:$0xf]
        %v1483 = vld [vmem:[%s494 + $0xb6c] sm:$0xf]
        %v1484 = vld [vmem:[%s494 + $0xb70] sm:$0xf]
        %v1485 = vld [vmem:[%s494 + $0xb74] sm:$0xf]
        %v1486 = vld [vmem:[%s494 + $0xb78] sm:$0xf]
        %v1487 = vld [vmem:[%s494 + $0xb7c] sm:$0xf]
        %v1488 = vld [vmem:[%s494 + $0xb80] sm:$0xf]
        %v1489 = vld [vmem:[%s494 + $0xb84] sm:$0xf]
        %v1490 = vld [vmem:[%s494 + $0xb88] sm:$0xf]
        %v1491 = vld [vmem:[%s494 + $0xb8c] sm:$0xf]
        %v1492 = vld [vmem:[%s494 + $0xb90] sm:$0xf]
        %v1493 = vld [vmem:[%s494 + $0xb94] sm:$0xf]
        %v1494 = vld [vmem:[%s494 + $0xb98] sm:$0xf]
        %v1495 = vld [vmem:[%s494 + $0xb9c] sm:$0xf]
        %v1496 = vld [vmem:[%s494 + $0xba0] sm:$0xf]
        %v1497 = vld [vmem:[%s494 + $0xba4] sm:$0xf]
        %v1498 = vld [vmem:[%s494 + $0xba8] sm:$0xf]
        %v1499 = vld [vmem:[%s494 + $0xbac] sm:$0xf]
        %v1500 = vld [vmem:[%s494 + $0xbb0] sm:$0xf]
        %v1501 = vld [vmem:[%s494 + $0xbb4] sm:$0xf]
        %v1502 = vld [vmem:[%s494 + $0xbb8] sm:$0xf]
        %v1503 = vld [vmem:[%s494 + $0xbbc] sm:$0xf]
        %v1504 = vld [vmem:[%s494 + $0xbc0] sm:$0xf]
        %v1505 = vld [vmem:[%s494 + $0xbc4] sm:$0xf]
        %v1506 = vld [vmem:[%s494 + $0xbc8] sm:$0xf]
        %v1507 = vld [vmem:[%s494 + $0xbcc] sm:$0xf]
        %v1508 = vld [vmem:[%s494 + $0xbd0] sm:$0xf]
        %v1509 = vld [vmem:[%s494 + $0xbd4] sm:$0xf]
        %v1510 = vld [vmem:[%s494 + $0xbd8] sm:$0xf]
        %v1511 = vld [vmem:[%s494 + $0xbdc] sm:$0xf]
        %v1512 = vld [vmem:[%s494 + $0xbe0] sm:$0xf]
        %v1513 = vld [vmem:[%s494 + $0xbe4] sm:$0xf]
        %v1514 = vld [vmem:[%s494 + $0xbe8] sm:$0xf]
        %v1515 = vld [vmem:[%s494 + $0xbec] sm:$0xf]
        %v1516 = vld [vmem:[%s494 + $0xbf0] sm:$0xf]
        %v1517 = vld [vmem:[%s494 + $0xbf4] sm:$0xf]
        %v1518 = vld [vmem:[%s494 + $0xbf8] sm:$0xf]
        %v1519 = vld [vmem:[%s494 + $0xbfc] sm:$0xf]
        %v1520 = vld [vmem:[%s494 + $0xc00] sm:$0xf]
        %v1521 = vld [vmem:[%s494 + $0xc04] sm:$0xf]
        %v1522 = vld [vmem:[%s494 + $0xc08] sm:$0xf]
        %v1523 = vld [vmem:[%s494 + $0xc0c] sm:$0xf]
        %v1524 = vld [vmem:[%s494 + $0xc10] sm:$0xf]
        %v1525 = vld [vmem:[%s494 + $0xc14] sm:$0xf]
        %v1526 = vld [vmem:[%s494 + $0xc18] sm:$0xf]
        %v1527 = vld [vmem:[%s494 + $0xc1c] sm:$0xf]
        %v1528 = vld [vmem:[%s494 + $0xc20] sm:$0xf]
        %v1529 = vld [vmem:[%s494 + $0xc24] sm:$0xf]
        %v1530 = vld [vmem:[%s494 + $0xc28] sm:$0xf]
        %v1531 = vld [vmem:[%s494 + $0xc2c] sm:$0xf]
        %v1532 = vld [vmem:[%s494 + $0xc30] sm:$0xf]
        %v1533 = vld [vmem:[%s494 + $0xc34] sm:$0xf]
        %v1534 = vld [vmem:[%s494 + $0xc38] sm:$0xf]
        %v1535 = vld [vmem:[%s494 + $0xc3c] sm:$0xf]
        %v1536 = vld [vmem:[%s494 + $0xc40] sm:$0xf]
        %v1537 = vld [vmem:[%s494 + $0xc44] sm:$0xf]
        %v1538 = vld [vmem:[%s494 + $0xc48] sm:$0xf]
        %v1539 = vld [vmem:[%s494 + $0xc4c] sm:$0xf]
        %v1540 = vld [vmem:[%s494 + $0xc50] sm:$0xf]
        %v1541 = vld [vmem:[%s494 + $0xc54] sm:$0xf]
        %v1542 = vld [vmem:[%s494 + $0xc58] sm:$0xf]
        %v1543 = vld [vmem:[%s494 + $0xc5c] sm:$0xf]
        %v1544 = vld [vmem:[%s494 + $0xc60] sm:$0xf]
        %v1545 = vld [vmem:[%s494 + $0xc64] sm:$0xf]
        %v1546 = vld [vmem:[%s494 + $0xc68] sm:$0xf]
        %v1547 = vld [vmem:[%s494 + $0xc6c] sm:$0xf]
        %v1548 = vld [vmem:[%s494 + $0xc70] sm:$0xf]
        %v1549 = vld [vmem:[%s494 + $0xc74] sm:$0xf]
        %v1550 = vld [vmem:[%s494 + $0xc78] sm:$0xf]
        %v1551 = vld [vmem:[%s494 + $0xc7c] sm:$0xf]
        %v1552 = vld [vmem:[%s494 + $0xc80] sm:$0xf]
        %v1553 = vld [vmem:[%s494 + $0xc84] sm:$0xf]
        %v1554 = vld [vmem:[%s494 + $0xc88] sm:$0xf]
        %v1555 = vld [vmem:[%s494 + $0xc8c] sm:$0xf]
        %v1556 = vld [vmem:[%s494 + $0xc90] sm:$0xf]
        %v1557 = vld [vmem:[%s494 + $0xc94] sm:$0xf]
        %v1558 = vld [vmem:[%s494 + $0xc98] sm:$0xf]
        %v1559 = vld [vmem:[%s494 + $0xc9c] sm:$0xf]
        %v1560 = vld [vmem:[%s494 + $0xca0] sm:$0xf]
        %v1561 = vld [vmem:[%s494 + $0xca4] sm:$0xf]
        %v1562 = vld [vmem:[%s494 + $0xca8] sm:$0xf]
        %v1563 = vld [vmem:[%s494 + $0xcac] sm:$0xf]
        %v1564 = vld [vmem:[%s494 + $0xcb0] sm:$0xf]
        %v1565 = vld [vmem:[%s494 + $0xcb4] sm:$0xf]
        %v1566 = vld [vmem:[%s494 + $0xcb8] sm:$0xf]
        %v1567 = vld [vmem:[%s494 + $0xcbc] sm:$0xf]
        %v1568 = vld [vmem:[%s494 + $0xcc0] sm:$0xf]
        %v1569 = vld [vmem:[%s494 + $0xcc4] sm:$0xf]
        %v1570 = vld [vmem:[%s494 + $0xcc8] sm:$0xf]
        %v1571 = vld [vmem:[%s494 + $0xccc] sm:$0xf]
        %v1572 = vld [vmem:[%s494 + $0xcd0] sm:$0xf]
        %v1573 = vld [vmem:[%s494 + $0xcd4] sm:$0xf]
        %v1574 = vld [vmem:[%s494 + $0xcd8] sm:$0xf]
        %v1575 = vld [vmem:[%s494 + $0xcdc] sm:$0xf]
        %v1576 = vld [vmem:[%s494 + $0xce0] sm:$0xf]
        %v1577 = vld [vmem:[%s494 + $0xce4] sm:$0xf]
        %v1578 = vld [vmem:[%s494 + $0xce8] sm:$0xf]
        %v1579 = vld [vmem:[%s494 + $0xcec] sm:$0xf]
        %v1580 = vld [vmem:[%s494 + $0xcf0] sm:$0xf]
        %v1581 = vld [vmem:[%s494 + $0xcf4] sm:$0xf]
        %v1582 = vld [vmem:[%s494 + $0xcf8] sm:$0xf]
        %v1583 = vld [vmem:[%s494 + $0xcfc] sm:$0xf]
        %v1584 = vld [vmem:[%s494 + $0xd00] sm:$0xf]
        %v1585 = vld [vmem:[%s494 + $0xd04] sm:$0xf]
        %v1586 = vld [vmem:[%s494 + $0xd08] sm:$0xf]
        %v1587 = vld [vmem:[%s494 + $0xd0c] sm:$0xf]
        %v1588 = vld [vmem:[%s494 + $0xd10] sm:$0xf]
        %v1589 = vld [vmem:[%s494 + $0xd14] sm:$0xf]
        %v1590 = vld [vmem:[%s494 + $0xd18] sm:$0xf]
        %v1591 = vld [vmem:[%s494 + $0xd1c] sm:$0xf]
        %v1592 = vld [vmem:[%s494 + $0xd20] sm:$0xf]
        %v1593 = vld [vmem:[%s494 + $0xd24] sm:$0xf]
        %v1594 = vld [vmem:[%s494 + $0xd28] sm:$0xf]
        %v1595 = vld [vmem:[%s494 + $0xd2c] sm:$0xf]
        %v1596 = vld [vmem:[%s494 + $0xd30] sm:$0xf]
        %v1597 = vld [vmem:[%s494 + $0xd34] sm:$0xf]
        %v1598 = vld [vmem:[%s494 + $0xd38] sm:$0xf]
        %v1599 = vld [vmem:[%s494 + $0xd3c] sm:$0xf]
        %v1600 = vld [vmem:[%s494 + $0xd40] sm:$0xf]
        %v1601 = vld [vmem:[%s494 + $0xd44] sm:$0xf]
        %v1602 = vld [vmem:[%s494 + $0xd48] sm:$0xf]
        %v1603 = vld [vmem:[%s494 + $0xd4c] sm:$0xf]
        %v1604 = vld [vmem:[%s494 + $0xd50] sm:$0xf]
        %v1605 = vld [vmem:[%s494 + $0xd54] sm:$0xf]
        %v1606 = vld [vmem:[%s494 + $0xd58] sm:$0xf]
        %v1607 = vld [vmem:[%s494 + $0xd5c] sm:$0xf]
        %v1608 = vld [vmem:[%s494 + $0xd60] sm:$0xf]
        %v1609 = vld [vmem:[%s494 + $0xd64] sm:$0xf]
        %v1610 = vld [vmem:[%s494 + $0xd68] sm:$0xf]
        %v1611 = vld [vmem:[%s494 + $0xd6c] sm:$0xf]
        %v1612 = vld [vmem:[%s494 + $0xd70] sm:$0xf]
        %v1613 = vld [vmem:[%s494 + $0xd74] sm:$0xf]
        %v1614 = vld [vmem:[%s494 + $0xd78] sm:$0xf]
        %v1615 = vld [vmem:[%s494 + $0xd7c] sm:$0xf]
        %v1616 = vld [vmem:[%s494 + $0xd80] sm:$0xf]
        %v1617 = vld [vmem:[%s494 + $0xd84] sm:$0xf]
        %v1618 = vld [vmem:[%s494 + $0xd88] sm:$0xf]
        %v1619 = vld [vmem:[%s494 + $0xd8c] sm:$0xf]
        %v1620 = vld [vmem:[%s494 + $0xd90] sm:$0xf]
        %v1621 = vld [vmem:[%s494 + $0xd94] sm:$0xf]
        %v1622 = vld [vmem:[%s494 + $0xd98] sm:$0xf]
        %v1623 = vld [vmem:[%s494 + $0xd9c] sm:$0xf]
        %v1624 = vld [vmem:[%s494 + $0xda0] sm:$0xf]
        %v1625 = vld [vmem:[%s494 + $0xda4] sm:$0xf]
        %v1626 = vld [vmem:[%s494 + $0xda8] sm:$0xf]
        %v1627 = vld [vmem:[%s494 + $0xdac] sm:$0xf]
        %v1628 = vld [vmem:[%s494 + $0xdb0] sm:$0xf]
        %v1629 = vld [vmem:[%s494 + $0xdb4] sm:$0xf]
        %v1630 = vld [vmem:[%s494 + $0xdb8] sm:$0xf]
        %v1631 = vld [vmem:[%s494 + $0xdbc] sm:$0xf]
        %v1632 = vld [vmem:[%s494 + $0xdc0] sm:$0xf]
        %v1633 = vld [vmem:[%s494 + $0xdc4] sm:$0xf]
        %v1634 = vld [vmem:[%s494 + $0xdc8] sm:$0xf]
        %v1635 = vld [vmem:[%s494 + $0xdcc] sm:$0xf]
        %v1636 = vld [vmem:[%s494 + $0xdd0] sm:$0xf]
        %v1637 = vld [vmem:[%s494 + $0xdd4] sm:$0xf]
        %v1638 = vld [vmem:[%s494 + $0xdd8] sm:$0xf]
        %v1639 = vld [vmem:[%s494 + $0xddc] sm:$0xf]
        %v1640 = vld [vmem:[%s494 + $0xde0] sm:$0xf]
        %v1641 = vld [vmem:[%s494 + $0xde4] sm:$0xf]
        %v1642 = vld [vmem:[%s494 + $0xde8] sm:$0xf]
        %v1643 = vld [vmem:[%s494 + $0xdec] sm:$0xf]
        %v1644 = vld [vmem:[%s494 + $0xdf0] sm:$0xf]
        %v1645 = vld [vmem:[%s494 + $0xdf4] sm:$0xf]
        %v1646 = vld [vmem:[%s494 + $0xdf8] sm:$0xf]
        %v1647 = vld [vmem:[%s494 + $0xdfc] sm:$0xf]
        %v1648 = vld [vmem:[%s494 + $0xe00] sm:$0xf]
        %v1649 = vld [vmem:[%s494 + $0xe04] sm:$0xf]
        %v1650 = vld [vmem:[%s494 + $0xe08] sm:$0xf]
        %v1651 = vld [vmem:[%s494 + $0xe0c] sm:$0xf]
        %v1652 = vld [vmem:[%s494 + $0xe10] sm:$0xf]
        %v1653 = vld [vmem:[%s494 + $0xe14] sm:$0xf]
        %v1654 = vld [vmem:[%s494 + $0xe18] sm:$0xf]
        %v1655 = vld [vmem:[%s494 + $0xe1c] sm:$0xf]
        %v1656 = vld [vmem:[%s494 + $0xe20] sm:$0xf]
        %v1657 = vld [vmem:[%s494 + $0xe24] sm:$0xf]
        %v1658 = vld [vmem:[%s494 + $0xe28] sm:$0xf]
        %v1659 = vld [vmem:[%s494 + $0xe2c] sm:$0xf]
        %v1660 = vld [vmem:[%s494 + $0xe30] sm:$0xf]
        %v1661 = vld [vmem:[%s494 + $0xe34] sm:$0xf]
        %v1662 = vld [vmem:[%s494 + $0xe38] sm:$0xf]
        %v1663 = vld [vmem:[%s494 + $0xe3c] sm:$0xf]
        %v1664 = vld [vmem:[%s494 + $0xe40] sm:$0xf]
        %v1665 = vld [vmem:[%s494 + $0xe44] sm:$0xf]
        %v1666 = vld [vmem:[%s494 + $0xe48] sm:$0xf]
        %v1667 = vld [vmem:[%s494 + $0xe4c] sm:$0xf]
        %v1668 = vld [vmem:[%s494 + $0xe50] sm:$0xf]
        %v1669 = vld [vmem:[%s494 + $0xe54] sm:$0xf]
        %v1670 = vld [vmem:[%s494 + $0xe58] sm:$0xf]
        %v1671 = vld [vmem:[%s494 + $0xe5c] sm:$0xf]
        %v1672 = vld [vmem:[%s494 + $0xe60] sm:$0xf]
        %v1673 = vld [vmem:[%s494 + $0xe64] sm:$0xf]
        %v1674 = vld [vmem:[%s494 + $0xe68] sm:$0xf]
        %v1675 = vld [vmem:[%s494 + $0xe6c] sm:$0xf]
        %v1676 = vld [vmem:[%s494 + $0xe70] sm:$0xf]
        %v1677 = vld [vmem:[%s494 + $0xe74] sm:$0xf]
        %v1678 = vld [vmem:[%s494 + $0xe78] sm:$0xf]
        %v1679 = vld [vmem:[%s494 + $0xe7c] sm:$0xf]
        %v1680 = vld [vmem:[%s494 + $0xe80] sm:$0xf]
        %v1681 = vld [vmem:[%s494 + $0xe84] sm:$0xf]
        %v1682 = vld [vmem:[%s494 + $0xe88] sm:$0xf]
        %v1683 = vld [vmem:[%s494 + $0xe8c] sm:$0xf]
        %v1684 = vld [vmem:[%s494 + $0xe90] sm:$0xf]
        %v1685 = vld [vmem:[%s494 + $0xe94] sm:$0xf]
        %v1686 = vld [vmem:[%s494 + $0xe98] sm:$0xf]
        %v1687 = vld [vmem:[%s494 + $0xe9c] sm:$0xf]
        %v1688 = vld [vmem:[%s494 + $0xea0] sm:$0xf]
        %v1689 = vld [vmem:[%s494 + $0xea4] sm:$0xf]
        %v1690 = vld [vmem:[%s494 + $0xea8] sm:$0xf]
        %v1691 = vld [vmem:[%s494 + $0xeac] sm:$0xf]
        %v1692 = vld [vmem:[%s494 + $0xeb0] sm:$0xf]
        %v1693 = vld [vmem:[%s494 + $0xeb4] sm:$0xf]
        %v1694 = vld [vmem:[%s494 + $0xeb8] sm:$0xf]
        %v1695 = vld [vmem:[%s494 + $0xebc] sm:$0xf]
        %v1696 = vld [vmem:[%s494 + $0xec0] sm:$0xf]
        %v1697 = vld [vmem:[%s494 + $0xec4] sm:$0xf]
        %v1698 = vld [vmem:[%s494 + $0xec8] sm:$0xf]
        %v1699 = vld [vmem:[%s494 + $0xecc] sm:$0xf]
        %v1700 = vld [vmem:[%s494 + $0xed0] sm:$0xf]
        %v1701 = vld [vmem:[%s494 + $0xed4] sm:$0xf]
        %v1702 = vld [vmem:[%s494 + $0xed8] sm:$0xf]
        %v1703 = vld [vmem:[%s494 + $0xedc] sm:$0xf]
        %v1704 = vld [vmem:[%s494 + $0xee0] sm:$0xf]
        %v1705 = vld [vmem:[%s494 + $0xee4] sm:$0xf]
        %v1706 = vld [vmem:[%s494 + $0xee8] sm:$0xf]
        %v1707 = vld [vmem:[%s494 + $0xeec] sm:$0xf]
        %v1708 = vld [vmem:[%s494 + $0xef0] sm:$0xf]
        %v1709 = vld [vmem:[%s494 + $0xef4] sm:$0xf]
        %v1710 = vld [vmem:[%s494 + $0xef8] sm:$0xf]
        %v1711 = vld [vmem:[%s494 + $0xefc] sm:$0xf]
        %v1712 = vld [vmem:[%s494 + $0xf00] sm:$0xf]
        %v1713 = vld [vmem:[%s494 + $0xf04] sm:$0xf]
        %v1714 = vld [vmem:[%s494 + $0xf08] sm:$0xf]
        %v1715 = vld [vmem:[%s494 + $0xf0c] sm:$0xf]
        %v1716 = vld [vmem:[%s494 + $0xf10] sm:$0xf]
        %v1717 = vld [vmem:[%s494 + $0xf14] sm:$0xf]
        %v1718 = vld [vmem:[%s494 + $0xf18] sm:$0xf]
        %v1719 = vld [vmem:[%s494 + $0xf1c] sm:$0xf]
        %v1720 = vld [vmem:[%s494 + $0xf20] sm:$0xf]
        %v1721 = vld [vmem:[%s494 + $0xf24] sm:$0xf]
        %v1722 = vld [vmem:[%s494 + $0xf28] sm:$0xf]
        %v1723 = vld [vmem:[%s494 + $0xf2c] sm:$0xf]
        %v1724 = vld [vmem:[%s494 + $0xf30] sm:$0xf]
        %v1725 = vld [vmem:[%s494 + $0xf34] sm:$0xf]
        %v1726 = vld [vmem:[%s494 + $0xf38] sm:$0xf]
        %v1727 = vld [vmem:[%s494 + $0xf3c] sm:$0xf]
        %v1728 = vld [vmem:[%s494 + $0xf40] sm:$0xf]
        %v1729 = vld [vmem:[%s494 + $0xf44] sm:$0xf]
        %v1730 = vld [vmem:[%s494 + $0xf48] sm:$0xf]
        %v1731 = vld [vmem:[%s494 + $0xf4c] sm:$0xf]
        %v1732 = vld [vmem:[%s494 + $0xf50] sm:$0xf]
        %v1733 = vld [vmem:[%s494 + $0xf54] sm:$0xf]
        %v1734 = vld [vmem:[%s494 + $0xf58] sm:$0xf]
        %v1735 = vld [vmem:[%s494 + $0xf5c] sm:$0xf]
        %v1736 = vld [vmem:[%s494 + $0xf60] sm:$0xf]
        %v1737 = vld [vmem:[%s494 + $0xf64] sm:$0xf]
        %v1738 = vld [vmem:[%s494 + $0xf68] sm:$0xf]
        %v1739 = vld [vmem:[%s494 + $0xf6c] sm:$0xf]
        %v1740 = vld [vmem:[%s494 + $0xf70] sm:$0xf]
        %v1741 = vld [vmem:[%s494 + $0xf74] sm:$0xf]
        %v1742 = vld [vmem:[%s494 + $0xf78] sm:$0xf]
        %v1743 = vld [vmem:[%s494 + $0xf7c] sm:$0xf]
        %v1744 = vld [vmem:[%s494 + $0xf80] sm:$0xf]
        %v1745 = vld [vmem:[%s494 + $0xf84] sm:$0xf]
        %v1746 = vld [vmem:[%s494 + $0xf88] sm:$0xf]
        %v1747 = vld [vmem:[%s494 + $0xf8c] sm:$0xf]
        %v1748 = vld [vmem:[%s494 + $0xf90] sm:$0xf]
        %v1749 = vld [vmem:[%s494 + $0xf94] sm:$0xf]
        %v1750 = vld [vmem:[%s494 + $0xf98] sm:$0xf]
        %v1751 = vld [vmem:[%s494 + $0xf9c] sm:$0xf]
        %v1752 = vld [vmem:[%s494 + $0xfa0] sm:$0xf]
        %v1753 = vld [vmem:[%s494 + $0xfa4] sm:$0xf]
        %v1754 = vld [vmem:[%s494 + $0xfa8] sm:$0xf]
        %v1755 = vld [vmem:[%s494 + $0xfac] sm:$0xf]
        %v1756 = vld [vmem:[%s494 + $0xfb0] sm:$0xf]
        %v1757 = vld [vmem:[%s494 + $0xfb4] sm:$0xf]
        %v1758 = vld [vmem:[%s494 + $0xfb8] sm:$0xf]
        %v1759 = vld [vmem:[%s494 + $0xfbc] sm:$0xf]
        %v1760 = vld [vmem:[%s494 + $0xfc0] sm:$0xf]
        %v1761 = vld [vmem:[%s494 + $0xfc4] sm:$0xf]
        %v1762 = vld [vmem:[%s494 + $0xfc8] sm:$0xf]
        %v1763 = vld [vmem:[%s494 + $0xfcc] sm:$0xf]
        %v1764 = vld [vmem:[%s494 + $0xfd0] sm:$0xf]
        %v1765 = vld [vmem:[%s494 + $0xfd4] sm:$0xf]
        %v1766 = vld [vmem:[%s494 + $0xfd8] sm:$0xf]
        %v1767 = vld [vmem:[%s494 + $0xfdc] sm:$0xf]
        %v1768 = vld [vmem:[%s494 + $0xfe0] sm:$0xf]
        %v1769 = vld [vmem:[%s494 + $0xfe4] sm:$0xf]
        %v1770 = vld [vmem:[%s494 + $0xfe8] sm:$0xf]
        %v1771 = vld [vmem:[%s494 + $0xfec] sm:$0xf]
        %v1772 = vld [vmem:[%s494 + $0xff0] sm:$0xf]
        %v1773 = vld [vmem:[%s494 + $0xff4] sm:$0xf]
        %v1774 = vld [vmem:[%s494 + $0xff8] sm:$0xf]
        %v1775 = vld [vmem:[%s494 + $0xffc] sm:$0xf]
        %v1776 = vld [vmem:[%s494 + $0x1000] sm:$0xf]
        %v1777 = vld [vmem:[%s494 + $0x1004] sm:$0xf]
        %v1778 = vld [vmem:[%s494 + $0x1008] sm:$0xf]
        %v1779 = vld [vmem:[%s494 + $0x100c] sm:$0xf]
        %v1780 = vld [vmem:[%s494 + $0x1010] sm:$0xf]
        %v1781 = vld [vmem:[%s494 + $0x1014] sm:$0xf]
        %v1782 = vld [vmem:[%s494 + $0x1018] sm:$0xf]
        %v1783 = vld [vmem:[%s494 + $0x101c] sm:$0xf]
        %v1784 = vld [vmem:[%s494 + $0x1020] sm:$0xf]
        %v1785 = vld [vmem:[%s494 + $0x1024] sm:$0xf]
        %v1786 = vld [vmem:[%s494 + $0x1028] sm:$0xf]
        %v1787 = vld [vmem:[%s494 + $0x102c] sm:$0xf]
        %v1788 = vld [vmem:[%s494 + $0x1030] sm:$0xf]
        %v1789 = vld [vmem:[%s494 + $0x1034] sm:$0xf]
        %v1790 = vld [vmem:[%s494 + $0x1038] sm:$0xf]
        %v1791 = vld [vmem:[%s494 + $0x103c] sm:$0xf]
        %v1792 = vld [vmem:[%s494 + $0x1040] sm:$0xf]
        %v1793 = vld [vmem:[%s494 + $0x1044] sm:$0xf]
        %v1794 = vld [vmem:[%s494 + $0x1048] sm:$0xf]
        %v1795 = vld [vmem:[%s494 + $0x104c] sm:$0xf]
        %v1796 = vld [vmem:[%s494 + $0x1050] sm:$0xf]
        %v1797 = vld [vmem:[%s494 + $0x1054] sm:$0xf]
        %v1798 = vld [vmem:[%s494 + $0x1058] sm:$0xf]
        %v1799 = vld [vmem:[%s494 + $0x105c] sm:$0xf]
        %v1800 = vld [vmem:[%s494 + $0x1060] sm:$0xf]
        %v1801 = vld [vmem:[%s494 + $0x1064] sm:$0xf]
        %v1802 = vld [vmem:[%s494 + $0x1068] sm:$0xf]
        %v1803 = vld [vmem:[%s494 + $0x106c] sm:$0xf]
        %v1804 = vld [vmem:[%s494 + $0x1070] sm:$0xf]
        %v1805 = vld [vmem:[%s494 + $0x1074] sm:$0xf]
        %v1806 = vld [vmem:[%s494 + $0x1078] sm:$0xf]
        %v1807 = vld [vmem:[%s494 + $0x107c] sm:$0xf]
        %v1808 = vld [vmem:[%s494 + $0x1080] sm:$0xf]
        %v1809 = vld [vmem:[%s494 + $0x1084] sm:$0xf]
        %v1810 = vld [vmem:[%s494 + $0x1088] sm:$0xf]
        %v1811 = vld [vmem:[%s494 + $0x108c] sm:$0xf]
        %v1812 = vld [vmem:[%s494 + $0x1090] sm:$0xf]
        %v1813 = vld [vmem:[%s494 + $0x1094] sm:$0xf]
        %v1814 = vld [vmem:[%s494 + $0x1098] sm:$0xf]
        %v1815 = vld [vmem:[%s494 + $0x109c] sm:$0xf]
        %v1816 = vld [vmem:[%s494 + $0x10a0] sm:$0xf]
        %v1817 = vld [vmem:[%s494 + $0x10a4] sm:$0xf]
        %v1818 = vld [vmem:[%s494 + $0x10a8] sm:$0xf]
        %v1819 = vld [vmem:[%s494 + $0x10ac] sm:$0xf]
        %v1820 = vld [vmem:[%s494 + $0x10b0] sm:$0xf]
        %v1821 = vld [vmem:[%s494 + $0x10b4] sm:$0xf]
        %v1822 = vld [vmem:[%s494 + $0x10b8] sm:$0xf]
        %v1823 = vld [vmem:[%s494 + $0x10bc] sm:$0xf]
        %v1824 = vld [vmem:[%s494 + $0x10c0] sm:$0xf]
        %v1825 = vld [vmem:[%s494 + $0x10c4] sm:$0xf]
        %v1826 = vld [vmem:[%s494 + $0x10c8] sm:$0xf]
        %v1827 = vld [vmem:[%s494 + $0x10cc] sm:$0xf]
        %v1828 = vld [vmem:[%s494 + $0x10d0] sm:$0xf]
        %v1829 = vld [vmem:[%s494 + $0x10d4] sm:$0xf]
        %v1830 = vld [vmem:[%s494 + $0x10d8] sm:$0xf]
        %v1831 = vld [vmem:[%s494 + $0x10dc] sm:$0xf]
        %v1832 = vld [vmem:[%s494 + $0x10e0] sm:$0xf]
        %v1833 = vld [vmem:[%s494 + $0x10e4] sm:$0xf]
        %v1834 = vld [vmem:[%s494 + $0x10e8] sm:$0xf]
        %v1835 = vld [vmem:[%s494 + $0x10ec] sm:$0xf]
        %v1836 = vld [vmem:[%s494 + $0x10f0] sm:$0xf]
        %v1837 = vld [vmem:[%s494 + $0x10f4] sm:$0xf]
        %v1838 = vld [vmem:[%s494 + $0x10f8] sm:$0xf]
        %v1839 = vld [vmem:[%s494 + $0x10fc] sm:$0xf]
        %v1840 = vld [vmem:[%s494 + $0x1100] sm:$0xf]
        %v1841 = vld [vmem:[%s494 + $0x1104] sm:$0xf]
        %v1842 = vld [vmem:[%s494 + $0x1108] sm:$0xf]
        %v1843 = vld [vmem:[%s494 + $0x110c] sm:$0xf]
        %v1844 = vld [vmem:[%s494 + $0x1110] sm:$0xf]
        %v1845 = vld [vmem:[%s494 + $0x1114] sm:$0xf]
        %v1846 = vld [vmem:[%s494 + $0x1118] sm:$0xf]
        %v1847 = vld [vmem:[%s494 + $0x111c] sm:$0xf]
        %v1848 = vld [vmem:[%s494 + $0x1120] sm:$0xf]
        %v1849 = vld [vmem:[%s494 + $0x1124] sm:$0xf]
        %v1850 = vld [vmem:[%s494 + $0x1128] sm:$0xf]
        %v1851 = vld [vmem:[%s494 + $0x112c] sm:$0xf]
        %v1852 = vld [vmem:[%s494 + $0x1130] sm:$0xf]
        %v1853 = vld [vmem:[%s494 + $0x1134] sm:$0xf]
        %v1854 = vld [vmem:[%s494 + $0x1138] sm:$0xf]
        %v1855 = vld [vmem:[%s494 + $0x113c] sm:$0xf]
        %v1856 = vld [vmem:[%s494 + $0x1140] sm:$0xf]
        %v1857 = vld [vmem:[%s494 + $0x1144] sm:$0xf]
        %v1858 = vld [vmem:[%s494 + $0x1148] sm:$0xf]
        %v1859 = vld [vmem:[%s494 + $0x114c] sm:$0xf]
        %v1860 = vld [vmem:[%s494 + $0x1150] sm:$0xf]
        %v1861 = vld [vmem:[%s494 + $0x1154] sm:$0xf]
        %v1862 = vld [vmem:[%s494 + $0x1158] sm:$0xf]
        %v1863 = vld [vmem:[%s494 + $0x115c] sm:$0xf]
        %v1864 = vld [vmem:[%s494 + $0x1160] sm:$0xf]
        %v1865 = vld [vmem:[%s494 + $0x1164] sm:$0xf]
        %v1866 = vld [vmem:[%s494 + $0x1168] sm:$0xf]
        %v1867 = vld [vmem:[%s494 + $0x116c] sm:$0xf]
        %v1868 = vld [vmem:[%s494 + $0x1170] sm:$0xf]
        %v1869 = vld [vmem:[%s494 + $0x1174] sm:$0xf]
        %v1870 = vld [vmem:[%s494 + $0x1178] sm:$0xf]
        %v1871 = vld [vmem:[%s494 + $0x117c] sm:$0xf]
        %v1872 = vld [vmem:[%s494 + $0x1180] sm:$0xf]
        %v1873 = vld [vmem:[%s494 + $0x1184] sm:$0xf]
        %v1874 = vld [vmem:[%s494 + $0x1188] sm:$0xf]
        %v1875 = vld [vmem:[%s494 + $0x118c] sm:$0xf]
        %v1876 = vld [vmem:[%s494 + $0x1190] sm:$0xf]
        %v1877 = vld [vmem:[%s494 + $0x1194] sm:$0xf]
        %v1878 = vld [vmem:[%s494 + $0x1198] sm:$0xf]
        %v1879 = vld [vmem:[%s494 + $0x119c] sm:$0xf]
        %v1880 = vld [vmem:[%s494 + $0x11a0] sm:$0xf]
        %v1881 = vld [vmem:[%s494 + $0x11a4] sm:$0xf]
        %v1882 = vld [vmem:[%s494 + $0x11a8] sm:$0xf]
        %v1883 = vld [vmem:[%s494 + $0x11ac] sm:$0xf]
        %v1884 = vld [vmem:[%s494 + $0x11b0] sm:$0xf]
        %v1885 = vld [vmem:[%s494 + $0x11b4] sm:$0xf]
        %v1886 = vld [vmem:[%s494 + $0x11b8] sm:$0xf]
        %v1887 = vld [vmem:[%s494 + $0x11bc] sm:$0xf]
        %v1888 = vld [vmem:[%s494 + $0x11c0] sm:$0xf]
        %v1889 = vld [vmem:[%s494 + $0x11c4] sm:$0xf]
        %v1890 = vld [vmem:[%s494 + $0x11c8] sm:$0xf]
        %v1891 = vld [vmem:[%s494 + $0x11cc] sm:$0xf]
        %v1892 = vld [vmem:[%s494 + $0x11d0] sm:$0xf]
        %v1893 = vld [vmem:[%s494 + $0x11d4] sm:$0xf]
        %v1894 = vld [vmem:[%s494 + $0x11d8] sm:$0xf]
        %v1895 = vld [vmem:[%s494 + $0x11dc] sm:$0xf]
        %v1896 = vld [vmem:[%s494 + $0x11e0] sm:$0xf]
        %v1897 = vld [vmem:[%s494 + $0x11e4] sm:$0xf]
        %v1898 = vld [vmem:[%s494 + $0x11e8] sm:$0xf]
        %v1899 = vld [vmem:[%s494 + $0x11ec] sm:$0xf]
        %v1900 = vld [vmem:[%s494 + $0x11f0] sm:$0xf]
        %v1901 = vld [vmem:[%s494 + $0x11f4] sm:$0xf]
        %v1902 = vld [vmem:[%s494 + $0x11f8] sm:$0xf]
        %v1903 = vld [vmem:[%s494 + $0x11fc] sm:$0xf]
        %v1904 = vld [vmem:[%s494 + $0x1200] sm:$0xf]
        %v1905 = vld [vmem:[%s494 + $0x1204] sm:$0xf]
        %v1906 = vld [vmem:[%s494 + $0x1208] sm:$0xf]
        %v1907 = vld [vmem:[%s494 + $0x120c] sm:$0xf]
        %v1908 = vld [vmem:[%s494 + $0x1210] sm:$0xf]
        %v1909 = vld [vmem:[%s494 + $0x1214] sm:$0xf]
        %v1910 = vld [vmem:[%s494 + $0x1218] sm:$0xf]
        %v1911 = vld [vmem:[%s494 + $0x121c] sm:$0xf]
        %v1912 = vld [vmem:[%s494 + $0x1220] sm:$0xf]
        %v1913 = vld [vmem:[%s494 + $0x1224] sm:$0xf]
        %v1914 = vld [vmem:[%s494 + $0x1228] sm:$0xf]
        %v1915 = vld [vmem:[%s494 + $0x122c] sm:$0xf]
        %v1916 = vld [vmem:[%s494 + $0x1230] sm:$0xf]
        %v1917 = vld [vmem:[%s494 + $0x1234] sm:$0xf]
        %v1918 = vld [vmem:[%s494 + $0x1238] sm:$0xf]
        %v1919 = vld [vmem:[%s494 + $0x123c] sm:$0xf]
        %v1920 = vld [vmem:[%s494 + $0x1240] sm:$0xf]
        %v1921 = vld [vmem:[%s494 + $0x1244] sm:$0xf]
        %v1922 = vld [vmem:[%s494 + $0x1248] sm:$0xf]
        %v1923 = vld [vmem:[%s494 + $0x124c] sm:$0xf]
        %v1924 = vld [vmem:[%s494 + $0x1250] sm:$0xf]
        %v1925 = vld [vmem:[%s494 + $0x1254] sm:$0xf]
        %v1926 = vld [vmem:[%s494 + $0x1258] sm:$0xf]
        %v1927 = vld [vmem:[%s494 + $0x125c] sm:$0xf]
        %v1928 = vld [vmem:[%s494 + $0x1260] sm:$0xf]
        %v1929 = vld [vmem:[%s494 + $0x1264] sm:$0xf]
        %v1930 = vld [vmem:[%s494 + $0x1268] sm:$0xf]
        %v1931 = vld [vmem:[%s494 + $0x126c] sm:$0xf]
        %v1932 = vld [vmem:[%s494 + $0x1270] sm:$0xf]
        %v1933 = vld [vmem:[%s494 + $0x1274] sm:$0xf]
        %v1934 = vld [vmem:[%s494 + $0x1278] sm:$0xf]
        %v1935 = vld [vmem:[%s494 + $0x127c] sm:$0xf]
        %v1936 = vld [vmem:[%s494 + $0x1280] sm:$0xf]
        %v1937 = vld [vmem:[%s494 + $0x1284] sm:$0xf]
        %v1938 = vld [vmem:[%s494 + $0x1288] sm:$0xf]
        %v1939 = vld [vmem:[%s494 + $0x128c] sm:$0xf]
        %v1940 = vld [vmem:[%s494 + $0x1290] sm:$0xf]
        %v1941 = vld [vmem:[%s494 + $0x1294] sm:$0xf]
        %v1942 = vld [vmem:[%s494 + $0x1298] sm:$0xf]
        %v1943 = vld [vmem:[%s494 + $0x129c] sm:$0xf]
        %v1944 = vld [vmem:[%s494 + $0x12a0] sm:$0xf]
        %v1945 = vld [vmem:[%s494 + $0x12a4] sm:$0xf]
        %v1946 = vld [vmem:[%s494 + $0x12a8] sm:$0xf]
        %v1947 = vld [vmem:[%s494 + $0x12ac] sm:$0xf]
        %v1948 = vld [vmem:[%s494 + $0x12b0] sm:$0xf]
        %v1949 = vld [vmem:[%s494 + $0x12b4] sm:$0xf]
        %v1950 = vld [vmem:[%s494 + $0x12b8] sm:$0xf]
        %v1951 = vld [vmem:[%s494 + $0x12bc] sm:$0xf]
        %v1952 = vld [vmem:[%s494 + $0x12c0] sm:$0xf]
        %v1953 = vld [vmem:[%s494 + $0x12c4] sm:$0xf]
        %v1954 = vld [vmem:[%s494 + $0x12c8] sm:$0xf]
        %v1955 = vld [vmem:[%s494 + $0x12cc] sm:$0xf]
        %v1956 = vld [vmem:[%s494 + $0x12d0] sm:$0xf]
        %v1957 = vld [vmem:[%s494 + $0x12d4] sm:$0xf]
        %v1958 = vld [vmem:[%s494 + $0x12d8] sm:$0xf]
        %v1959 = vld [vmem:[%s494 + $0x12dc] sm:$0xf]
        %v1960 = vld [vmem:[%s494 + $0x12e0] sm:$0xf]
        %v1961 = vld [vmem:[%s494 + $0x12e4] sm:$0xf]
        %v1962 = vld [vmem:[%s494 + $0x12e8] sm:$0xf]
        %v1963 = vld [vmem:[%s494 + $0x12ec] sm:$0xf]
        %v1964 = vld [vmem:[%s494 + $0x12f0] sm:$0xf]
        %v1965 = vld [vmem:[%s494 + $0x12f4] sm:$0xf]
        %v1966 = vld [vmem:[%s494 + $0x12f8] sm:$0xf]
        %v1967 = vld [vmem:[%s494 + $0x12fc] sm:$0xf]
        %v1968 = vld [vmem:[%s494 + $0x1300] sm:$0xf]
        %v1969 = vld [vmem:[%s494 + $0x1304] sm:$0xf]
        %v1970 = vld [vmem:[%s494 + $0x1308] sm:$0xf]
        %v1971 = vld [vmem:[%s494 + $0x130c] sm:$0xf]
        %v1972 = vld [vmem:[%s494 + $0x1310] sm:$0xf]
        %v1973 = vld [vmem:[%s494 + $0x1314] sm:$0xf]
        %v1974 = vld [vmem:[%s494 + $0x1318] sm:$0xf]
        %v1975 = vld [vmem:[%s494 + $0x131c] sm:$0xf]
        %v1976 = vld [vmem:[%s494 + $0x1320] sm:$0xf]
        %v1977 = vld [vmem:[%s494 + $0x1324] sm:$0xf]
        %v1978 = vld [vmem:[%s494 + $0x1328] sm:$0xf]
        %v1979 = vld [vmem:[%s494 + $0x132c] sm:$0xf]
        %v1980 = vld [vmem:[%s494 + $0x1330] sm:$0xf]
        %v1981 = vld [vmem:[%s494 + $0x1334] sm:$0xf]
        %v1982 = vld [vmem:[%s494 + $0x1338] sm:$0xf]
        %v1983 = vld [vmem:[%s494 + $0x133c] sm:$0xf]
        %v1984 = vld [vmem:[%s494 + $0x1340] sm:$0xf]
        %v1985 = vld [vmem:[%s494 + $0x1344] sm:$0xf]
        %v1986 = vld [vmem:[%s494 + $0x1348] sm:$0xf]
        %v1987 = vld [vmem:[%s494 + $0x134c] sm:$0xf]
        %v1988 = vld [vmem:[%s494 + $0x1350] sm:$0xf]
        %v1989 = vld [vmem:[%s494 + $0x1354] sm:$0xf]
        %v1990 = vld [vmem:[%s494 + $0x1358] sm:$0xf]
        %v1991 = vld [vmem:[%s494 + $0x135c] sm:$0xf]
        %v1992 = vld [vmem:[%s494 + $0x1360] sm:$0xf]
        %v1993 = vld [vmem:[%s494 + $0x1364] sm:$0xf]
        %v1994 = vld [vmem:[%s494 + $0x1368] sm:$0xf]
        %v1995 = vld [vmem:[%s494 + $0x136c] sm:$0xf]
        %v1996 = vld [vmem:[%s494 + $0x1370] sm:$0xf]
        %v1997 = vld [vmem:[%s494 + $0x1374] sm:$0xf]
        %v1998 = vld [vmem:[%s494 + $0x1378] sm:$0xf]
        %v1999 = vld [vmem:[%s494 + $0x137c] sm:$0xf]
        %v2000 = vld [vmem:[%s494 + $0x1380] sm:$0xf]
        %v2001 = vld [vmem:[%s494 + $0x1384] sm:$0xf]
        %v2002 = vld [vmem:[%s494 + $0x1388] sm:$0xf]
        %v2003 = vld [vmem:[%s494 + $0x138c] sm:$0xf]
        %v2004 = vld [vmem:[%s494 + $0x1390] sm:$0xf]
        %v2005 = vld [vmem:[%s494 + $0x1394] sm:$0xf]
        %v2006 = vld [vmem:[%s494 + $0x1398] sm:$0xf]
        %v2007 = vld [vmem:[%s494 + $0x139c] sm:$0xf]
        %v2008 = vld [vmem:[%s494 + $0x13a0] sm:$0xf]
        %v2009 = vld [vmem:[%s494 + $0x13a4] sm:$0xf]
        %v2010 = vld [vmem:[%s494 + $0x13a8] sm:$0xf]
        %v2011 = vld [vmem:[%s494 + $0x13ac] sm:$0xf]
        %v2012 = vld [vmem:[%s494 + $0x13b0] sm:$0xf]
        %v2013 = vld [vmem:[%s494 + $0x13b4] sm:$0xf]
        %v2014 = vld [vmem:[%s494 + $0x13b8] sm:$0xf]
        %v2015 = vld [vmem:[%s494 + $0x13bc] sm:$0xf]
        %v2016 = vld [vmem:[%s494 + $0x13c0] sm:$0xf]
        %v2017 = vld [vmem:[%s494 + $0x13c4] sm:$0xf]
        %v2018 = vld [vmem:[%s494 + $0x13c8] sm:$0xf]
        %v2019 = vld [vmem:[%s494 + $0x13cc] sm:$0xf]
        %v2020 = vld [vmem:[%s494 + $0x13d0] sm:$0xf]
        %v2021 = vld [vmem:[%s494 + $0x13d4] sm:$0xf]
        %v2022 = vld [vmem:[%s494 + $0x13d8] sm:$0xf]
        %v2023 = vld [vmem:[%s494 + $0x13dc] sm:$0xf]
        %v2024 = vld [vmem:[%s494 + $0x13e0] sm:$0xf]
        %v2025 = vld [vmem:[%s494 + $0x13e4] sm:$0xf]
        %v2026 = vld [vmem:[%s494 + $0x13e8] sm:$0xf]
        %v2027 = vld [vmem:[%s494 + $0x13ec] sm:$0xf]
        %v2028 = vld [vmem:[%s494 + $0x13f0] sm:$0xf]
        %v2029 = vld [vmem:[%s494 + $0x13f4] sm:$0xf]
        %v2030 = vld [vmem:[%s494 + $0x13f8] sm:$0xf]
        %v2031 = vld [vmem:[%s494 + $0x13fc] sm:$0xf]
        %v2032 = vld [vmem:[%s494 + $0x1400] sm:$0xf]
        %v2033 = vld [vmem:[%s494 + $0x1404] sm:$0xf]
        %v2034 = vld [vmem:[%s494 + $0x1408] sm:$0xf]
        %v2035 = vld [vmem:[%s494 + $0x140c] sm:$0xf]
        %v2036 = vld [vmem:[%s494 + $0x1410] sm:$0xf]
        %v2037 = vld [vmem:[%s494 + $0x1414] sm:$0xf]
        %v2038 = vld [vmem:[%s494 + $0x1418] sm:$0xf]
        %v2039 = vld [vmem:[%s494 + $0x141c] sm:$0xf]
        %v2040 = vld [vmem:[%s494 + $0x1420] sm:$0xf]
        %v2041 = vld [vmem:[%s494 + $0x1424] sm:$0xf]
        %v2042 = vld [vmem:[%s494 + $0x1428] sm:$0xf]
        %v2043 = vld [vmem:[%s494 + $0x142c] sm:$0xf]
        %v2044 = vld [vmem:[%s494 + $0x1430] sm:$0xf]
        %v2045 = vld [vmem:[%s494 + $0x1434] sm:$0xf]
        %v2046 = vld [vmem:[%s494 + $0x1438] sm:$0xf]
        %v2047 = vld [vmem:[%s494 + $0x143c] sm:$0xf]
        %v2048 = vld [vmem:[%s494 + $0x1440] sm:$0xf]
        %v2049 = vld [vmem:[%s494 + $0x1444] sm:$0xf]
        %v2050 = vld [vmem:[%s494 + $0x1448] sm:$0xf]
        %v2051 = vld [vmem:[%s494 + $0x144c] sm:$0xf]
        %v2052 = vld [vmem:[%s494 + $0x1450] sm:$0xf]
        %v2053 = vld [vmem:[%s494 + $0x1454] sm:$0xf]
        %v2054 = vld [vmem:[%s494 + $0x1458] sm:$0xf]
        %v2055 = vld [vmem:[%s494 + $0x145c] sm:$0xf]
        %v2056 = vld [vmem:[%s494 + $0x1460] sm:$0xf]
        %v2057 = vld [vmem:[%s494 + $0x1464] sm:$0xf]
        %v2058 = vld [vmem:[%s494 + $0x1468] sm:$0xf]
        %v2059 = vld [vmem:[%s494 + $0x146c] sm:$0xf]
        %v2060 = vld [vmem:[%s494 + $0x1470] sm:$0xf]
        %v2061 = vld [vmem:[%s494 + $0x1474] sm:$0xf]
        %v2062 = vld [vmem:[%s494 + $0x1478] sm:$0xf]
        %v2063 = vld [vmem:[%s494 + $0x147c] sm:$0xf]
        %v2064 = vld [vmem:[%s494 + $0x1480] sm:$0xf]
        %v2065 = vld [vmem:[%s494 + $0x1484] sm:$0xf]
        %v2066 = vld [vmem:[%s494 + $0x1488] sm:$0xf]
        %v2067 = vld [vmem:[%s494 + $0x148c] sm:$0xf]
        %v2068 = vld [vmem:[%s494 + $0x1490] sm:$0xf]
        %v2069 = vld [vmem:[%s494 + $0x1494] sm:$0xf]
        %v2070 = vld [vmem:[%s494 + $0x1498] sm:$0xf]
        %v2071 = vld [vmem:[%s494 + $0x149c] sm:$0xf]
        %v2072 = vld [vmem:[%s494 + $0x14a0] sm:$0xf]
        %v2073 = vld [vmem:[%s494 + $0x14a4] sm:$0xf]
        %v2074 = vld [vmem:[%s494 + $0x14a8] sm:$0xf]
        %v2075 = vld [vmem:[%s494 + $0x14ac] sm:$0xf]
        %v2076 = vld [vmem:[%s494 + $0x14b0] sm:$0xf]
        %v2077 = vld [vmem:[%s494 + $0x14b4] sm:$0xf]
        %v2078 = vld [vmem:[%s494 + $0x14b8] sm:$0xf]
        %v2079 = vld [vmem:[%s494 + $0x14bc] sm:$0xf]
        %v2080 = vld [vmem:[%s494 + $0x14c0] sm:$0xf]
        %v2081 = vld [vmem:[%s494 + $0x14c4] sm:$0xf]
        %v2082 = vld [vmem:[%s494 + $0x14c8] sm:$0xf]
        %v2083 = vld [vmem:[%s494 + $0x14cc] sm:$0xf]
        %v2084 = vld [vmem:[%s494 + $0x14d0] sm:$0xf]
        %v2085 = vld [vmem:[%s494 + $0x14d4] sm:$0xf]
        %v2086 = vld [vmem:[%s494 + $0x14d8] sm:$0xf]
        %v2087 = vld [vmem:[%s494 + $0x14dc] sm:$0xf]
        %v2088 = vld [vmem:[%s494 + $0x14e0] sm:$0xf]
        %v2089 = vld [vmem:[%s494 + $0x14e4] sm:$0xf]
        %v2090 = vld [vmem:[%s494 + $0x14e8] sm:$0xf]
        %v2091 = vld [vmem:[%s494 + $0x14ec] sm:$0xf]
        %v2092 = vld [vmem:[%s494 + $0x14f0] sm:$0xf]
        %v2093 = vld [vmem:[%s494 + $0x14f4] sm:$0xf]
        %v2094 = vld [vmem:[%s494 + $0x14f8] sm:$0xf]
        %v2095 = vld [vmem:[%s494 + $0x14fc] sm:$0xf]
        %v2096 = vld [vmem:[%s494 + $0x1500] sm:$0xf]
        %v2097 = vld [vmem:[%s494 + $0x1504] sm:$0xf]
        %v2098 = vld [vmem:[%s494 + $0x1508] sm:$0xf]
        %v2099 = vld [vmem:[%s494 + $0x150c] sm:$0xf]
        %v2100 = vld [vmem:[%s494 + $0x1510] sm:$0xf]
        %v2101 = vld [vmem:[%s494 + $0x1514] sm:$0xf]
        %v2102 = vld [vmem:[%s494 + $0x1518] sm:$0xf]
        %v2103 = vld [vmem:[%s494 + $0x151c] sm:$0xf]
        %v2104 = vld [vmem:[%s494 + $0x1520] sm:$0xf]
        %v2105 = vld [vmem:[%s494 + $0x1524] sm:$0xf]
        %v2106 = vld [vmem:[%s494 + $0x1528] sm:$0xf]
        %v2107 = vld [vmem:[%s494 + $0x152c] sm:$0xf]
        %v2108 = vld [vmem:[%s494 + $0x1530] sm:$0xf]
        %v2109 = vld [vmem:[%s494 + $0x1534] sm:$0xf]
        %v2110 = vld [vmem:[%s494 + $0x1538] sm:$0xf]
        %v2111 = vld [vmem:[%s494 + $0x153c] sm:$0xf]
        %v2112 = vld [vmem:[%s494 + $0x1540] sm:$0xf]
        %v2113 = vld [vmem:[%s494 + $0x1544] sm:$0xf]
        %v2114 = vld [vmem:[%s494 + $0x1548] sm:$0xf]
        %v2115 = vld [vmem:[%s494 + $0x154c] sm:$0xf]
        %v2116 = vld [vmem:[%s494 + $0x1550] sm:$0xf]
        %v2117 = vld [vmem:[%s494 + $0x1554] sm:$0xf]
        %v2118 = vld [vmem:[%s494 + $0x1558] sm:$0xf]
        %v2119 = vld [vmem:[%s494 + $0x155c] sm:$0xf]
        %v2120 = vld [vmem:[%s494 + $0x1560] sm:$0xf]
        %v2121 = vld [vmem:[%s494 + $0x1564] sm:$0xf]
        %v2122 = vld [vmem:[%s494 + $0x1568] sm:$0xf]
        %v2123 = vld [vmem:[%s494 + $0x156c] sm:$0xf]
        %v2124 = vld [vmem:[%s494 + $0x1570] sm:$0xf]
        %v2125 = vld [vmem:[%s494 + $0x1574] sm:$0xf]
        %v2126 = vld [vmem:[%s494 + $0x1578] sm:$0xf]
        %v2127 = vld [vmem:[%s494 + $0x157c] sm:$0xf]
        %v2128 = vld [vmem:[%s494 + $0x1580] sm:$0xf]
        %v2129 = vld [vmem:[%s494 + $0x1584] sm:$0xf]
        %v2130 = vld [vmem:[%s494 + $0x1588] sm:$0xf]
        %v2131 = vld [vmem:[%s494 + $0x158c] sm:$0xf]
        %v2132 = vld [vmem:[%s494 + $0x1590] sm:$0xf]
        %v2133 = vld [vmem:[%s494 + $0x1594] sm:$0xf]
        %v2134 = vld [vmem:[%s494 + $0x1598] sm:$0xf]
        %v2135 = vld [vmem:[%s494 + $0x159c] sm:$0xf]
        %v2136 = vld [vmem:[%s494 + $0x15a0] sm:$0xf]
        %v2137 = vld [vmem:[%s494 + $0x15a4] sm:$0xf]
        %v2138 = vld [vmem:[%s494 + $0x15a8] sm:$0xf]
        %v2139 = vld [vmem:[%s494 + $0x15ac] sm:$0xf]
        %v2140 = vld [vmem:[%s494 + $0x15b0] sm:$0xf]
        %v2141 = vld [vmem:[%s494 + $0x15b4] sm:$0xf]
        %v2142 = vld [vmem:[%s494 + $0x15b8] sm:$0xf]
        %v2143 = vld [vmem:[%s494 + $0x15bc] sm:$0xf]
        %v2144 = vld [vmem:[%s494 + $0x15c0] sm:$0xf]
        %v2145 = vld [vmem:[%s494 + $0x15c4] sm:$0xf]
        %v2146 = vld [vmem:[%s494 + $0x15c8] sm:$0xf]
        %v2147 = vld [vmem:[%s494 + $0x15cc] sm:$0xf]
        %v2148 = vld [vmem:[%s494 + $0x15d0] sm:$0xf]
        %v2149 = vld [vmem:[%s494 + $0x15d4] sm:$0xf]
        %v2150 = vld [vmem:[%s494 + $0x15d8] sm:$0xf]
        %v2151 = vld [vmem:[%s494 + $0x15dc] sm:$0xf]
        %v2152 = vld [vmem:[%s494 + $0x15e0] sm:$0xf]
        %v2153 = vld [vmem:[%s494 + $0x15e4] sm:$0xf]
        %v2154 = vld [vmem:[%s494 + $0x15e8] sm:$0xf]
        %v2155 = vld [vmem:[%s494 + $0x15ec] sm:$0xf]
        %v2156 = vld [vmem:[%s494 + $0x15f0] sm:$0xf]
        %v2157 = vld [vmem:[%s494 + $0x15f4] sm:$0xf]
        %v2158 = vld [vmem:[%s494 + $0x15f8] sm:$0xf]
        %v2159 = vld [vmem:[%s494 + $0x15fc] sm:$0xf]
        %v2160 = vld [vmem:[%s494 + $0x1600] sm:$0xf]
        %v2161 = vld [vmem:[%s494 + $0x1604] sm:$0xf]
        %v2162 = vld [vmem:[%s494 + $0x1608] sm:$0xf]
        %v2163 = vld [vmem:[%s494 + $0x160c] sm:$0xf]
        %v2164 = vld [vmem:[%s494 + $0x1610] sm:$0xf]
        %v2165 = vld [vmem:[%s494 + $0x1614] sm:$0xf]
        %v2166 = vld [vmem:[%s494 + $0x1618] sm:$0xf]
        %v2167 = vld [vmem:[%s494 + $0x161c] sm:$0xf]
        %v2168 = vld [vmem:[%s494 + $0x1620] sm:$0xf]
        %v2169 = vld [vmem:[%s494 + $0x1624] sm:$0xf]
        %v2170 = vld [vmem:[%s494 + $0x1628] sm:$0xf]
        %v2171 = vld [vmem:[%s494 + $0x162c] sm:$0xf]
        %v2172 = vld [vmem:[%s494 + $0x1630] sm:$0xf]
        %v2173 = vld [vmem:[%s494 + $0x1634] sm:$0xf]
        %v2174 = vld [vmem:[%s494 + $0x1638] sm:$0xf]
        %v2175 = vld [vmem:[%s494 + $0x163c] sm:$0xf]
        %v2176 = vld [vmem:[%s494 + $0x1640] sm:$0xf]
        %v2177 = vld [vmem:[%s494 + $0x1644] sm:$0xf]
        %v2178 = vld [vmem:[%s494 + $0x1648] sm:$0xf]
        %v2179 = vld [vmem:[%s494 + $0x164c] sm:$0xf]
        %v2180 = vld [vmem:[%s494 + $0x1650] sm:$0xf]
        %v2181 = vld [vmem:[%s494 + $0x1654] sm:$0xf]
        %v2182 = vld [vmem:[%s494 + $0x1658] sm:$0xf]
        %v2183 = vld [vmem:[%s494 + $0x165c] sm:$0xf]
        %v2184 = vld [vmem:[%s494 + $0x1660] sm:$0xf]
        %v2185 = vld [vmem:[%s494 + $0x1664] sm:$0xf]
        %v2186 = vld [vmem:[%s494 + $0x1668] sm:$0xf]
        %v2187 = vld [vmem:[%s494 + $0x166c] sm:$0xf]
        %v2188 = vld [vmem:[%s494 + $0x1670] sm:$0xf]
        %v2189 = vld [vmem:[%s494 + $0x1674] sm:$0xf]
        %v2190 = vld [vmem:[%s494 + $0x1678] sm:$0xf]
        %v2191 = vld [vmem:[%s494 + $0x167c] sm:$0xf]
        %v2192 = vld [vmem:[%s494 + $0x1680] sm:$0xf]
        %v2193 = vld [vmem:[%s494 + $0x1684] sm:$0xf]
        %v2194 = vld [vmem:[%s494 + $0x1688] sm:$0xf]
        %v2195 = vld [vmem:[%s494 + $0x168c] sm:$0xf]
        %v2196 = vld [vmem:[%s494 + $0x1690] sm:$0xf]
        %v2197 = vld [vmem:[%s494 + $0x1694] sm:$0xf]
        %v2198 = vld [vmem:[%s494 + $0x1698] sm:$0xf]
        %v2199 = vld [vmem:[%s494 + $0x169c] sm:$0xf]
        %v2200 = vld [vmem:[%s494 + $0x16a0] sm:$0xf]
        %v2201 = vld [vmem:[%s494 + $0x16a4] sm:$0xf]
        %v2202 = vld [vmem:[%s494 + $0x16a8] sm:$0xf]
        %v2203 = vld [vmem:[%s494 + $0x16ac] sm:$0xf]
        %v2204 = vld [vmem:[%s494 + $0x16b0] sm:$0xf]
        %v2205 = vld [vmem:[%s494 + $0x16b4] sm:$0xf]
        %v2206 = vld [vmem:[%s494 + $0x16b8] sm:$0xf]
        %v2207 = vld [vmem:[%s494 + $0x16bc] sm:$0xf]
        %v2208 = vld [vmem:[%s494 + $0x16c0] sm:$0xf]
        %v2209 = vld [vmem:[%s494 + $0x16c4] sm:$0xf]
        %v2210 = vld [vmem:[%s494 + $0x16c8] sm:$0xf]
        %v2211 = vld [vmem:[%s494 + $0x16cc] sm:$0xf]
        %v2212 = vld [vmem:[%s494 + $0x16d0] sm:$0xf]
        %v2213 = vld [vmem:[%s494 + $0x16d4] sm:$0xf]
        %v2214 = vld [vmem:[%s494 + $0x16d8] sm:$0xf]
        %v2215 = vld [vmem:[%s494 + $0x16dc] sm:$0xf]
        %v2216 = vld [vmem:[%s494 + $0x16e0] sm:$0xf]
        %v2217 = vld [vmem:[%s494 + $0x16e4] sm:$0xf]
        %v2218 = vld [vmem:[%s494 + $0x16e8] sm:$0xf]
        %v2219 = vld [vmem:[%s494 + $0x16ec] sm:$0xf]
        %v2220 = vld [vmem:[%s494 + $0x16f0] sm:$0xf]
        %v2221 = vld [vmem:[%s494 + $0x16f4] sm:$0xf]
        %v2222 = vld [vmem:[%s494 + $0x16f8] sm:$0xf]
        %v2223 = vld [vmem:[%s494 + $0x16fc] sm:$0xf]
        %v2224 = vld [vmem:[%s494 + $0x1700] sm:$0xf]
        %v2225 = vld [vmem:[%s494 + $0x1704] sm:$0xf]
        %v2226 = vld [vmem:[%s494 + $0x1708] sm:$0xf]
        %v2227 = vld [vmem:[%s494 + $0x170c] sm:$0xf]
        %v2228 = vld [vmem:[%s494 + $0x1710] sm:$0xf]
        %v2229 = vld [vmem:[%s494 + $0x1714] sm:$0xf]
        %v2230 = vld [vmem:[%s494 + $0x1718] sm:$0xf]
        %v2231 = vld [vmem:[%s494 + $0x171c] sm:$0xf]
        %v2232 = vld [vmem:[%s494 + $0x1720] sm:$0xf]
        %v2233 = vld [vmem:[%s494 + $0x1724] sm:$0xf]
        %v2234 = vld [vmem:[%s494 + $0x1728] sm:$0xf]
        %v2235 = vld [vmem:[%s494 + $0x172c] sm:$0xf]
        %v2236 = vld [vmem:[%s494 + $0x1730] sm:$0xf]
        %v2237 = vld [vmem:[%s494 + $0x1734] sm:$0xf]
        %v2238 = vld [vmem:[%s494 + $0x1738] sm:$0xf]
        %v2239 = vld [vmem:[%s494 + $0x173c] sm:$0xf]
        %v2240 = vld [vmem:[%s494 + $0x1740] sm:$0xf]
        %v2241 = vld [vmem:[%s494 + $0x1744] sm:$0xf]
        %v2242 = vld [vmem:[%s494 + $0x1748] sm:$0xf]
        %v2243 = vld [vmem:[%s494 + $0x174c] sm:$0xf]
        %v2244 = vld [vmem:[%s494 + $0x1750] sm:$0xf]
        %v2245 = vld [vmem:[%s494 + $0x1754] sm:$0xf]
        %v2246 = vld [vmem:[%s494 + $0x1758] sm:$0xf]
        %v2247 = vld [vmem:[%s494 + $0x175c] sm:$0xf]
        %v2248 = vld [vmem:[%s494 + $0x1760] sm:$0xf]
        %v2249 = vld [vmem:[%s494 + $0x1764] sm:$0xf]
        %v2250 = vld [vmem:[%s494 + $0x1768] sm:$0xf]
        %v2251 = vld [vmem:[%s494 + $0x176c] sm:$0xf]
        %v2252 = vld [vmem:[%s494 + $0x1770] sm:$0xf]
        %v2253 = vld [vmem:[%s494 + $0x1774] sm:$0xf]
        %v2254 = vld [vmem:[%s494 + $0x1778] sm:$0xf]
        %v2255 = vld [vmem:[%s494 + $0x177c] sm:$0xf]
        %v2256 = vld [vmem:[%s494 + $0x1780] sm:$0xf]
        %v2257 = vld [vmem:[%s494 + $0x1784] sm:$0xf]
        %v2258 = vld [vmem:[%s494 + $0x1788] sm:$0xf]
        %v2259 = vld [vmem:[%s494 + $0x178c] sm:$0xf]
        %v2260 = vld [vmem:[%s494 + $0x1790] sm:$0xf]
        %v2261 = vld [vmem:[%s494 + $0x1794] sm:$0xf]
        %v2262 = vld [vmem:[%s494 + $0x1798] sm:$0xf]
        %v2263 = vld [vmem:[%s494 + $0x179c] sm:$0xf]
        %v2264 = vld [vmem:[%s494 + $0x17a0] sm:$0xf]
        %v2265 = vld [vmem:[%s494 + $0x17a4] sm:$0xf]
        %v2266 = vld [vmem:[%s494 + $0x17a8] sm:$0xf]
        %v2267 = vld [vmem:[%s494 + $0x17ac] sm:$0xf]
        %v2268 = vld [vmem:[%s494 + $0x17b0] sm:$0xf]
        %v2269 = vld [vmem:[%s494 + $0x17b4] sm:$0xf]
        %v2270 = vld [vmem:[%s494 + $0x17b8] sm:$0xf]
        %v2271 = vld [vmem:[%s494 + $0x17bc] sm:$0xf]
        %v2272 = vld [vmem:[%s494 + $0x17c0] sm:$0xf]
        %v2273 = vld [vmem:[%s494 + $0x17c4] sm:$0xf]
        %v2274 = vld [vmem:[%s494 + $0x17c8] sm:$0xf]
        %v2275 = vld [vmem:[%s494 + $0x17cc] sm:$0xf]
        %v2276 = vld [vmem:[%s494 + $0x17d0] sm:$0xf]
        %v2277 = vld [vmem:[%s494 + $0x17d4] sm:$0xf]
        %v2278 = vld [vmem:[%s494 + $0x17d8] sm:$0xf]
        %v2279 = vld [vmem:[%s494 + $0x17dc] sm:$0xf]
        %v2280 = vld [vmem:[%s494 + $0x17e0] sm:$0xf]
        %v2281 = vld [vmem:[%s494 + $0x17e4] sm:$0xf]
        %v2282 = vld [vmem:[%s494 + $0x17e8] sm:$0xf]
        %v2283 = vld [vmem:[%s494 + $0x17ec] sm:$0xf]
        %v2284 = vld [vmem:[%s494 + $0x17f0] sm:$0xf]
        %v2285 = vld [vmem:[%s494 + $0x17f4] sm:$0xf]
        %v2286 = vld [vmem:[%s494 + $0x17f8] sm:$0xf]
        %v2287 = vld [vmem:[%s494 + $0x17fc] sm:$0xf]
        %v2288 = vld [vmem:[%s494 + $0x1800] sm:$0xf]
        %v2289 = vld [vmem:[%s494 + $0x1804] sm:$0xf]
        %v2290 = vld [vmem:[%s494 + $0x1808] sm:$0xf]
        %v2291 = vld [vmem:[%s494 + $0x180c] sm:$0xf]
        %v2292 = vld [vmem:[%s494 + $0x1810] sm:$0xf]
        %v2293 = vld [vmem:[%s494 + $0x1814] sm:$0xf]
        %v2294 = vld [vmem:[%s494 + $0x1818] sm:$0xf]
        %v2295 = vld [vmem:[%s494 + $0x181c] sm:$0xf]
        %v2296 = vld [vmem:[%s494 + $0x1820] sm:$0xf]
        %v2297 = vld [vmem:[%s494 + $0x1824] sm:$0xf]
        %v2298 = vld [vmem:[%s494 + $0x1828] sm:$0xf]
        %v2299 = vld [vmem:[%s494 + $0x182c] sm:$0xf]
        %v2300 = vld [vmem:[%s494 + $0x1830] sm:$0xf]
        %v2301 = vld [vmem:[%s494 + $0x1834] sm:$0xf]
        %v2302 = vld [vmem:[%s494 + $0x1838] sm:$0xf]
        %v2303 = vld [vmem:[%s494 + $0x183c] sm:$0xf]
        %v2304 = vld [vmem:[%s494 + $0x1840] sm:$0xf]
        %v2305 = vld [vmem:[%s494 + $0x1844] sm:$0xf]
        %v2306 = vld [vmem:[%s494 + $0x1848] sm:$0xf]
        %v2307 = vld [vmem:[%s494 + $0x184c] sm:$0xf]
        %v2308 = vld [vmem:[%s494 + $0x1850] sm:$0xf]
        %v2309 = vld [vmem:[%s494 + $0x1854] sm:$0xf]
        %v2310 = vld [vmem:[%s494 + $0x1858] sm:$0xf]
        %v2311 = vld [vmem:[%s494 + $0x185c] sm:$0xf]
        %v2312 = vld [vmem:[%s494 + $0x1860] sm:$0xf]
        %v2313 = vld [vmem:[%s494 + $0x1864] sm:$0xf]
        %v2314 = vld [vmem:[%s494 + $0x1868] sm:$0xf]
        %v2315 = vld [vmem:[%s494 + $0x186c] sm:$0xf]
        %v2316 = vld [vmem:[%s494 + $0x1870] sm:$0xf]
        %v2317 = vld [vmem:[%s494 + $0x1874] sm:$0xf]
        %v2318 = vld [vmem:[%s494 + $0x1878] sm:$0xf]
        %v2319 = vld [vmem:[%s494 + $0x187c] sm:$0xf]
        %v2333 = vcombine.high %v739, %v739
        %v2335 = vunpack.c.l.s4 1966171168
        %v2336 = vunpack.c.0.s8 %v2335
        %v2337 = vlaneseq
        %v2338 = vshrl.u32 %v2337, 7
        %v2339 = vsub.s32 %v2336, %v2338
        %v2340 = vrot.slane %v739, %v2339
        %v2342 = vunpack.c.l.s4 1966171168
        %v2343 = vunpack.c.0.s8 %v2342
        %v2344 = vlaneseq
        %v2345 = vshrl.u32 %v2344, 7
        %v2346 = vsub.s32 %v2343, %v2345
        %v2347 = vrot.slane %v2333, %v2346
        %v2348 = vcombine.high %v2340, %v2340
        %v2349 = vcombine.high %v2347, %v2347
        %v2351 = vunpack.c.l.s4 1966171168
        %v2352 = vunpack.c.0.s8 %v2351
        %v2353 = vlaneseq
        %v2354 = vshrl.u32 %v2353, 7
        %v2355 = vsub.s32 %v2352, %v2354
        %v2356 = vrot.slane %v2340, %v2355
        %v2358 = vunpack.c.l.s4 1966171168
        %v2359 = vunpack.c.0.s8 %v2358
        %v2360 = vlaneseq
        %v2361 = vshrl.u32 %v2360, 7
        %v2362 = vsub.s32 %v2359, %v2361
        %v2363 = vrot.slane %v2347, %v2362
        %v2365 = vunpack.c.l.s4 1966171168
        %v2366 = vunpack.c.0.s8 %v2365
        %v2367 = vlaneseq
        %v2368 = vshrl.u32 %v2367, 7
        %v2369 = vsub.s32 %v2366, %v2368
        %v2370 = vrot.slane %v2348, %v2369
        %v2372 = vunpack.c.l.s4 1966171168
        %v2373 = vunpack.c.0.s8 %v2372
        %v2374 = vlaneseq
        %v2375 = vshrl.u32 %v2374, 7
        %v2376 = vsub.s32 %v2373, %v2375
        %v2377 = vrot.slane %v2349, %v2376
        %v2378 = vcombine.high %v2356, %v2356
        %v2379 = vcombine.high %v2363, %v2363
        %v2380 = vcombine.high %v2370, %v2370
        %v2381 = vcombine.high %v2377, %v2377
        %v2382 = vcombine.high %v740, %v740
        %v2384 = vunpack.c.l.s4 1966171168
        %v2385 = vunpack.c.0.s8 %v2384
        %v2386 = vlaneseq
        %v2387 = vshrl.u32 %v2386, 7
        %v2388 = vsub.s32 %v2385, %v2387
        %v2389 = vrot.slane %v740, %v2388
        %v2391 = vunpack.c.l.s4 1966171168
        %v2392 = vunpack.c.0.s8 %v2391
        %v2393 = vlaneseq
        %v2394 = vshrl.u32 %v2393, 7
        %v2395 = vsub.s32 %v2392, %v2394
        %v2396 = vrot.slane %v2382, %v2395
        %v2397 = vcombine.high %v2389, %v2389
        %v2398 = vcombine.high %v2396, %v2396
        %v2400 = vunpack.c.l.s4 1966171168
        %v2401 = vunpack.c.0.s8 %v2400
        %v2402 = vlaneseq
        %v2403 = vshrl.u32 %v2402, 7
        %v2404 = vsub.s32 %v2401, %v2403
        %v2405 = vrot.slane %v2389, %v2404
        %v2407 = vunpack.c.l.s4 1966171168
        %v2408 = vunpack.c.0.s8 %v2407
        %v2409 = vlaneseq
        %v2410 = vshrl.u32 %v2409, 7
        %v2411 = vsub.s32 %v2408, %v2410
        %v2412 = vrot.slane %v2396, %v2411
        %v2414 = vunpack.c.l.s4 1966171168
        %v2415 = vunpack.c.0.s8 %v2414
        %v2416 = vlaneseq
        %v2417 = vshrl.u32 %v2416, 7
        %v2418 = vsub.s32 %v2415, %v2417
        %v2419 = vrot.slane %v2397, %v2418
        %v2421 = vunpack.c.l.s4 1966171168
        %v2422 = vunpack.c.0.s8 %v2421
        %v2423 = vlaneseq
        %v2424 = vshrl.u32 %v2423, 7
        %v2425 = vsub.s32 %v2422, %v2424
        %v2426 = vrot.slane %v2398, %v2425
        %v2427 = vcombine.high %v2405, %v2405
        %v2428 = vcombine.high %v2412, %v2412
        %v2429 = vcombine.high %v2419, %v2419
        %v2430 = vcombine.high %v2426, %v2426
        %v2431 = vcombine.high %v741, %v741
        %v2433 = vunpack.c.l.s4 1966171168
        %v2434 = vunpack.c.0.s8 %v2433
        %v2435 = vlaneseq
        %v2436 = vshrl.u32 %v2435, 7
        %v2437 = vsub.s32 %v2434, %v2436
        %v2438 = vrot.slane %v741, %v2437
        %v2440 = vunpack.c.l.s4 1966171168
        %v2441 = vunpack.c.0.s8 %v2440
        %v2442 = vlaneseq
        %v2443 = vshrl.u32 %v2442, 7
        %v2444 = vsub.s32 %v2441, %v2443
        %v2445 = vrot.slane %v2431, %v2444
        %v2446 = vcombine.high %v2438, %v2438
        %v2447 = vcombine.high %v2445, %v2445
        %v2449 = vunpack.c.l.s4 1966171168
        %v2450 = vunpack.c.0.s8 %v2449
        %v2451 = vlaneseq
        %v2452 = vshrl.u32 %v2451, 7
        %v2453 = vsub.s32 %v2450, %v2452
        %v2454 = vrot.slane %v2438, %v2453
        %v2456 = vunpack.c.l.s4 1966171168
        %v2457 = vunpack.c.0.s8 %v2456
        %v2458 = vlaneseq
        %v2459 = vshrl.u32 %v2458, 7
        %v2460 = vsub.s32 %v2457, %v2459
        %v2461 = vrot.slane %v2445, %v2460
        %v2463 = vunpack.c.l.s4 1966171168
        %v2464 = vunpack.c.0.s8 %v2463
        %v2465 = vlaneseq
        %v2466 = vshrl.u32 %v2465, 7
        %v2467 = vsub.s32 %v2464, %v2466
        %v2468 = vrot.slane %v2446, %v2467
        %v2470 = vunpack.c.l.s4 1966171168
        %v2471 = vunpack.c.0.s8 %v2470
        %v2472 = vlaneseq
        %v2473 = vshrl.u32 %v2472, 7
        %v2474 = vsub.s32 %v2471, %v2473
        %v2475 = vrot.slane %v2447, %v2474
        %v2476 = vcombine.high %v2454, %v2454
        %v2477 = vcombine.high %v2461, %v2461
        %v2478 = vcombine.high %v2468, %v2468
        %v2479 = vcombine.high %v2475, %v2475
        %v2480 = vcombine.high %v742, %v742
        %v2482 = vunpack.c.l.s4 1966171168
        %v2483 = vunpack.c.0.s8 %v2482
        %v2484 = vlaneseq
        %v2485 = vshrl.u32 %v2484, 7
        %v2486 = vsub.s32 %v2483, %v2485
        %v2487 = vrot.slane %v742, %v2486
        %v2489 = vunpack.c.l.s4 1966171168
        %v2490 = vunpack.c.0.s8 %v2489
        %v2491 = vlaneseq
        %v2492 = vshrl.u32 %v2491, 7
        %v2493 = vsub.s32 %v2490, %v2492
        %v2494 = vrot.slane %v2480, %v2493
        %v2495 = vcombine.high %v2487, %v2487
        %v2496 = vcombine.high %v2494, %v2494
        %v2498 = vunpack.c.l.s4 1966171168
        %v2499 = vunpack.c.0.s8 %v2498
        %v2500 = vlaneseq
        %v2501 = vshrl.u32 %v2500, 7
        %v2502 = vsub.s32 %v2499, %v2501
        %v2503 = vrot.slane %v2487, %v2502
        %v2505 = vunpack.c.l.s4 1966171168
        %v2506 = vunpack.c.0.s8 %v2505
        %v2507 = vlaneseq
        %v2508 = vshrl.u32 %v2507, 7
        %v2509 = vsub.s32 %v2506, %v2508
        %v2510 = vrot.slane %v2494, %v2509
        %v2512 = vunpack.c.l.s4 1966171168
        %v2513 = vunpack.c.0.s8 %v2512
        %v2514 = vlaneseq
        %v2515 = vshrl.u32 %v2514, 7
        %v2516 = vsub.s32 %v2513, %v2515
        %v2517 = vrot.slane %v2495, %v2516
        %v2519 = vunpack.c.l.s4 1966171168
        %v2520 = vunpack.c.0.s8 %v2519
        %v2521 = vlaneseq
        %v2522 = vshrl.u32 %v2521, 7
        %v2523 = vsub.s32 %v2520, %v2522
        %v2524 = vrot.slane %v2496, %v2523
        %v2525 = vcombine.high %v2503, %v2503
        %v2526 = vcombine.high %v2510, %v2510
        %v2527 = vcombine.high %v2517, %v2517
        %v2528 = vcombine.high %v2524, %v2524
        %v2529 = vcombine.high %v743, %v743
        %v2531 = vunpack.c.l.s4 1966171168
        %v2532 = vunpack.c.0.s8 %v2531
        %v2533 = vlaneseq
        %v2534 = vshrl.u32 %v2533, 7
        %v2535 = vsub.s32 %v2532, %v2534
        %v2536 = vrot.slane %v743, %v2535
        %v2538 = vunpack.c.l.s4 1966171168
        %v2539 = vunpack.c.0.s8 %v2538
        %v2540 = vlaneseq
        %v2541 = vshrl.u32 %v2540, 7
        %v2542 = vsub.s32 %v2539, %v2541
        %v2543 = vrot.slane %v2529, %v2542
        %v2544 = vcombine.high %v2536, %v2536
        %v2545 = vcombine.high %v2543, %v2543
        %v2547 = vunpack.c.l.s4 1966171168
        %v2548 = vunpack.c.0.s8 %v2547
        %v2549 = vlaneseq
        %v2550 = vshrl.u32 %v2549, 7
        %v2551 = vsub.s32 %v2548, %v2550
        %v2552 = vrot.slane %v2536, %v2551
        %v2554 = vunpack.c.l.s4 1966171168
        %v2555 = vunpack.c.0.s8 %v2554
        %v2556 = vlaneseq
        %v2557 = vshrl.u32 %v2556, 7
        %v2558 = vsub.s32 %v2555, %v2557
        %v2559 = vrot.slane %v2543, %v2558
        %v2561 = vunpack.c.l.s4 1966171168
        %v2562 = vunpack.c.0.s8 %v2561
        %v2563 = vlaneseq
        %v2564 = vshrl.u32 %v2563, 7
        %v2565 = vsub.s32 %v2562, %v2564
        %v2566 = vrot.slane %v2544, %v2565
        %v2568 = vunpack.c.l.s4 1966171168
        %v2569 = vunpack.c.0.s8 %v2568
        %v2570 = vlaneseq
        %v2571 = vshrl.u32 %v2570, 7
        %v2572 = vsub.s32 %v2569, %v2571
        %v2573 = vrot.slane %v2545, %v2572
        %v2574 = vcombine.high %v2552, %v2552
        %v2575 = vcombine.high %v2559, %v2559
        %v2576 = vcombine.high %v2566, %v2566
        %v2577 = vcombine.high %v2573, %v2573
        %v2578 = vcombine.high %v744, %v744
        %v2580 = vunpack.c.l.s4 1966171168
        %v2581 = vunpack.c.0.s8 %v2580
        %v2582 = vlaneseq
        %v2583 = vshrl.u32 %v2582, 7
        %v2584 = vsub.s32 %v2581, %v2583
        %v2585 = vrot.slane %v744, %v2584
        %v2587 = vunpack.c.l.s4 1966171168
        %v2588 = vunpack.c.0.s8 %v2587
        %v2589 = vlaneseq
        %v2590 = vshrl.u32 %v2589, 7
        %v2591 = vsub.s32 %v2588, %v2590
        %v2592 = vrot.slane %v2578, %v2591
        %v2593 = vcombine.high %v2585, %v2585
        %v2594 = vcombine.high %v2592, %v2592
        %v2596 = vunpack.c.l.s4 1966171168
        %v2597 = vunpack.c.0.s8 %v2596
        %v2598 = vlaneseq
        %v2599 = vshrl.u32 %v2598, 7
        %v2600 = vsub.s32 %v2597, %v2599
        %v2601 = vrot.slane %v2585, %v2600
        %v2603 = vunpack.c.l.s4 1966171168
        %v2604 = vunpack.c.0.s8 %v2603
        %v2605 = vlaneseq
        %v2606 = vshrl.u32 %v2605, 7
        %v2607 = vsub.s32 %v2604, %v2606
        %v2608 = vrot.slane %v2592, %v2607
        %v2610 = vunpack.c.l.s4 1966171168
        %v2611 = vunpack.c.0.s8 %v2610
        %v2612 = vlaneseq
        %v2613 = vshrl.u32 %v2612, 7
        %v2614 = vsub.s32 %v2611, %v2613
        %v2615 = vrot.slane %v2593, %v2614
        %v2617 = vunpack.c.l.s4 1966171168
        %v2618 = vunpack.c.0.s8 %v2617
        %v2619 = vlaneseq
        %v2620 = vshrl.u32 %v2619, 7
        %v2621 = vsub.s32 %v2618, %v2620
        %v2622 = vrot.slane %v2594, %v2621
        %v2623 = vcombine.high %v2601, %v2601
        %v2624 = vcombine.high %v2608, %v2608
        %v2625 = vcombine.high %v2615, %v2615
        %v2626 = vcombine.high %v2622, %v2622
        %v2627 = vcombine.high %v745, %v745
        %v2629 = vunpack.c.l.s4 1966171168
        %v2630 = vunpack.c.0.s8 %v2629
        %v2631 = vlaneseq
        %v2632 = vshrl.u32 %v2631, 7
        %v2633 = vsub.s32 %v2630, %v2632
        %v2634 = vrot.slane %v745, %v2633
        %v2636 = vunpack.c.l.s4 1966171168
        %v2637 = vunpack.c.0.s8 %v2636
        %v2638 = vlaneseq
        %v2639 = vshrl.u32 %v2638, 7
        %v2640 = vsub.s32 %v2637, %v2639
        %v2641 = vrot.slane %v2627, %v2640
        %v2642 = vcombine.high %v2634, %v2634
        %v2643 = vcombine.high %v2641, %v2641
        %v2645 = vunpack.c.l.s4 1966171168
        %v2646 = vunpack.c.0.s8 %v2645
        %v2647 = vlaneseq
        %v2648 = vshrl.u32 %v2647, 7
        %v2649 = vsub.s32 %v2646, %v2648
        %v2650 = vrot.slane %v2634, %v2649
        %v2652 = vunpack.c.l.s4 1966171168
        %v2653 = vunpack.c.0.s8 %v2652
        %v2654 = vlaneseq
        %v2655 = vshrl.u32 %v2654, 7
        %v2656 = vsub.s32 %v2653, %v2655
        %v2657 = vrot.slane %v2641, %v2656
        %v2659 = vunpack.c.l.s4 1966171168
        %v2660 = vunpack.c.0.s8 %v2659
        %v2661 = vlaneseq
        %v2662 = vshrl.u32 %v2661, 7
        %v2663 = vsub.s32 %v2660, %v2662
        %v2664 = vrot.slane %v2642, %v2663
        %v2666 = vunpack.c.l.s4 1966171168
        %v2667 = vunpack.c.0.s8 %v2666
        %v2668 = vlaneseq
        %v2669 = vshrl.u32 %v2668, 7
        %v2670 = vsub.s32 %v2667, %v2669
        %v2671 = vrot.slane %v2643, %v2670
        %v2672 = vcombine.high %v2650, %v2650
        %v2673 = vcombine.high %v2657, %v2657
        %v2674 = vcombine.high %v2664, %v2664
        %v2675 = vcombine.high %v2671, %v2671
        %v2676 = vcombine.high %v746, %v746
        %v2678 = vunpack.c.l.s4 1966171168
        %v2679 = vunpack.c.0.s8 %v2678
        %v2680 = vlaneseq
        %v2681 = vshrl.u32 %v2680, 7
        %v2682 = vsub.s32 %v2679, %v2681
        %v2683 = vrot.slane %v746, %v2682
        %v2685 = vunpack.c.l.s4 1966171168
        %v2686 = vunpack.c.0.s8 %v2685
        %v2687 = vlaneseq
        %v2688 = vshrl.u32 %v2687, 7
        %v2689 = vsub.s32 %v2686, %v2688
        %v2690 = vrot.slane %v2676, %v2689
        %v2691 = vcombine.high %v2683, %v2683
        %v2692 = vcombine.high %v2690, %v2690
        %v2694 = vunpack.c.l.s4 1966171168
        %v2695 = vunpack.c.0.s8 %v2694
        %v2696 = vlaneseq
        %v2697 = vshrl.u32 %v2696, 7
        %v2698 = vsub.s32 %v2695, %v2697
        %v2699 = vrot.slane %v2683, %v2698
        %v2701 = vunpack.c.l.s4 1966171168
        %v2702 = vunpack.c.0.s8 %v2701
        %v2703 = vlaneseq
        %v2704 = vshrl.u32 %v2703, 7
        %v2705 = vsub.s32 %v2702, %v2704
        %v2706 = vrot.slane %v2690, %v2705
        %v2708 = vunpack.c.l.s4 1966171168
        %v2709 = vunpack.c.0.s8 %v2708
        %v2710 = vlaneseq
        %v2711 = vshrl.u32 %v2710, 7
        %v2712 = vsub.s32 %v2709, %v2711
        %v2713 = vrot.slane %v2691, %v2712
        %v2715 = vunpack.c.l.s4 1966171168
        %v2716 = vunpack.c.0.s8 %v2715
        %v2717 = vlaneseq
        %v2718 = vshrl.u32 %v2717, 7
        %v2719 = vsub.s32 %v2716, %v2718
        %v2720 = vrot.slane %v2692, %v2719
        %v2721 = vcombine.high %v2699, %v2699
        %v2722 = vcombine.high %v2706, %v2706
        %v2723 = vcombine.high %v2713, %v2713
        %v2724 = vcombine.high %v2720, %v2720
        %v2725 = vcombine.high %v747, %v747
        %v2727 = vunpack.c.l.s4 1966171168
        %v2728 = vunpack.c.0.s8 %v2727
        %v2729 = vlaneseq
        %v2730 = vshrl.u32 %v2729, 7
        %v2731 = vsub.s32 %v2728, %v2730
        %v2732 = vrot.slane %v747, %v2731
        %v2734 = vunpack.c.l.s4 1966171168
        %v2735 = vunpack.c.0.s8 %v2734
        %v2736 = vlaneseq
        %v2737 = vshrl.u32 %v2736, 7
        %v2738 = vsub.s32 %v2735, %v2737
        %v2739 = vrot.slane %v2725, %v2738
        %v2740 = vcombine.high %v2732, %v2732
        %v2741 = vcombine.high %v2739, %v2739
        %v2743 = vunpack.c.l.s4 1966171168
        %v2744 = vunpack.c.0.s8 %v2743
        %v2745 = vlaneseq
        %v2746 = vshrl.u32 %v2745, 7
        %v2747 = vsub.s32 %v2744, %v2746
        %v2748 = vrot.slane %v2732, %v2747
        %v2750 = vunpack.c.l.s4 1966171168
        %v2751 = vunpack.c.0.s8 %v2750
        %v2752 = vlaneseq
        %v2753 = vshrl.u32 %v2752, 7
        %v2754 = vsub.s32 %v2751, %v2753
        %v2755 = vrot.slane %v2739, %v2754
        %v2757 = vunpack.c.l.s4 1966171168
        %v2758 = vunpack.c.0.s8 %v2757
        %v2759 = vlaneseq
        %v2760 = vshrl.u32 %v2759, 7
        %v2761 = vsub.s32 %v2758, %v2760
        %v2762 = vrot.slane %v2740, %v2761
        %v2764 = vunpack.c.l.s4 1966171168
        %v2765 = vunpack.c.0.s8 %v2764
        %v2766 = vlaneseq
        %v2767 = vshrl.u32 %v2766, 7
        %v2768 = vsub.s32 %v2765, %v2767
        %v2769 = vrot.slane %v2741, %v2768
        %v2770 = vcombine.high %v2748, %v2748
        %v2771 = vcombine.high %v2755, %v2755
        %v2772 = vcombine.high %v2762, %v2762
        %v2773 = vcombine.high %v2769, %v2769
        %v2774 = vcombine.high %v748, %v748
        %v2776 = vunpack.c.l.s4 1966171168
        %v2777 = vunpack.c.0.s8 %v2776
        %v2778 = vlaneseq
        %v2779 = vshrl.u32 %v2778, 7
        %v2780 = vsub.s32 %v2777, %v2779
        %v2781 = vrot.slane %v748, %v2780
        %v2783 = vunpack.c.l.s4 1966171168
        %v2784 = vunpack.c.0.s8 %v2783
        %v2785 = vlaneseq
        %v2786 = vshrl.u32 %v2785, 7
        %v2787 = vsub.s32 %v2784, %v2786
        %v2788 = vrot.slane %v2774, %v2787
        %v2789 = vcombine.high %v2781, %v2781
        %v2790 = vcombine.high %v2788, %v2788
        %v2792 = vunpack.c.l.s4 1966171168
        %v2793 = vunpack.c.0.s8 %v2792
        %v2794 = vlaneseq
        %v2795 = vshrl.u32 %v2794, 7
        %v2796 = vsub.s32 %v2793, %v2795
        %v2797 = vrot.slane %v2781, %v2796
        %v2799 = vunpack.c.l.s4 1966171168
        %v2800 = vunpack.c.0.s8 %v2799
        %v2801 = vlaneseq
        %v2802 = vshrl.u32 %v2801, 7
        %v2803 = vsub.s32 %v2800, %v2802
        %v2804 = vrot.slane %v2788, %v2803
        %v2806 = vunpack.c.l.s4 1966171168
        %v2807 = vunpack.c.0.s8 %v2806
        %v2808 = vlaneseq
        %v2809 = vshrl.u32 %v2808, 7
        %v2810 = vsub.s32 %v2807, %v2809
        %v2811 = vrot.slane %v2789, %v2810
        %v2813 = vunpack.c.l.s4 1966171168
        %v2814 = vunpack.c.0.s8 %v2813
        %v2815 = vlaneseq
        %v2816 = vshrl.u32 %v2815, 7
        %v2817 = vsub.s32 %v2814, %v2816
        %v2818 = vrot.slane %v2790, %v2817
        %v2819 = vcombine.high %v2797, %v2797
        %v2820 = vcombine.high %v2804, %v2804
        %v2821 = vcombine.high %v2811, %v2811
        %v2822 = vcombine.high %v2818, %v2818
        %v2823 = vcombine.high %v749, %v749
        %v2825 = vunpack.c.l.s4 1966171168
        %v2826 = vunpack.c.0.s8 %v2825
        %v2827 = vlaneseq
        %v2828 = vshrl.u32 %v2827, 7
        %v2829 = vsub.s32 %v2826, %v2828
        %v2830 = vrot.slane %v749, %v2829
        %v2832 = vunpack.c.l.s4 1966171168
        %v2833 = vunpack.c.0.s8 %v2832
        %v2834 = vlaneseq
        %v2835 = vshrl.u32 %v2834, 7
        %v2836 = vsub.s32 %v2833, %v2835
        %v2837 = vrot.slane %v2823, %v2836
        %v2838 = vcombine.high %v2830, %v2830
        %v2839 = vcombine.high %v2837, %v2837
        %v2841 = vunpack.c.l.s4 1966171168
        %v2842 = vunpack.c.0.s8 %v2841
        %v2843 = vlaneseq
        %v2844 = vshrl.u32 %v2843, 7
        %v2845 = vsub.s32 %v2842, %v2844
        %v2846 = vrot.slane %v2830, %v2845
        %v2848 = vunpack.c.l.s4 1966171168
        %v2849 = vunpack.c.0.s8 %v2848
        %v2850 = vlaneseq
        %v2851 = vshrl.u32 %v2850, 7
        %v2852 = vsub.s32 %v2849, %v2851
        %v2853 = vrot.slane %v2837, %v2852
        %v2855 = vunpack.c.l.s4 1966171168
        %v2856 = vunpack.c.0.s8 %v2855
        %v2857 = vlaneseq
        %v2858 = vshrl.u32 %v2857, 7
        %v2859 = vsub.s32 %v2856, %v2858
        %v2860 = vrot.slane %v2838, %v2859
        %v2862 = vunpack.c.l.s4 1966171168
        %v2863 = vunpack.c.0.s8 %v2862
        %v2864 = vlaneseq
        %v2865 = vshrl.u32 %v2864, 7
        %v2866 = vsub.s32 %v2863, %v2865
        %v2867 = vrot.slane %v2839, %v2866
        %v2868 = vcombine.high %v2846, %v2846
        %v2869 = vcombine.high %v2853, %v2853
        %v2870 = vcombine.high %v2860, %v2860
        %v2871 = vcombine.high %v2867, %v2867
        %v2872 = vcombine.high %v750, %v750
        %v2874 = vunpack.c.l.s4 1966171168
        %v2875 = vunpack.c.0.s8 %v2874
        %v2876 = vlaneseq
        %v2877 = vshrl.u32 %v2876, 7
        %v2878 = vsub.s32 %v2875, %v2877
        %v2879 = vrot.slane %v750, %v2878
        %v2881 = vunpack.c.l.s4 1966171168
        %v2882 = vunpack.c.0.s8 %v2881
        %v2883 = vlaneseq
        %v2884 = vshrl.u32 %v2883, 7
        %v2885 = vsub.s32 %v2882, %v2884
        %v2886 = vrot.slane %v2872, %v2885
        %v2887 = vcombine.high %v2879, %v2879
        %v2888 = vcombine.high %v2886, %v2886
        %v2890 = vunpack.c.l.s4 1966171168
        %v2891 = vunpack.c.0.s8 %v2890
        %v2892 = vlaneseq
        %v2893 = vshrl.u32 %v2892, 7
        %v2894 = vsub.s32 %v2891, %v2893
        %v2895 = vrot.slane %v2879, %v2894
        %v2897 = vunpack.c.l.s4 1966171168
        %v2898 = vunpack.c.0.s8 %v2897
        %v2899 = vlaneseq
        %v2900 = vshrl.u32 %v2899, 7
        %v2901 = vsub.s32 %v2898, %v2900
        %v2902 = vrot.slane %v2886, %v2901
        %v2904 = vunpack.c.l.s4 1966171168
        %v2905 = vunpack.c.0.s8 %v2904
        %v2906 = vlaneseq
        %v2907 = vshrl.u32 %v2906, 7
        %v2908 = vsub.s32 %v2905, %v2907
        %v2909 = vrot.slane %v2887, %v2908
        %v2911 = vunpack.c.l.s4 1966171168
        %v2912 = vunpack.c.0.s8 %v2911
        %v2913 = vlaneseq
        %v2914 = vshrl.u32 %v2913, 7
        %v2915 = vsub.s32 %v2912, %v2914
        %v2916 = vrot.slane %v2888, %v2915
        %v2917 = vcombine.high %v2895, %v2895
        %v2918 = vcombine.high %v2902, %v2902
        %v2919 = vcombine.high %v2909, %v2909
        %v2920 = vcombine.high %v2916, %v2916
        %v2922 = vunpack.c.l.s4 1966171168
        %v2923 = vunpack.c.0.s8 %v2922
        %v2924 = vlaneseq
        %v2925 = vshrl.u32 %v2924, 7
        %v2926 = vsub.s32 %v2923, %v2925
        %v2927 = vrot.slane %v751, %v2926
        %v2928 = vcombine.high %v2927, %v2927
        %v2930 = vunpack.c.l.s4 1966171168
        %v2931 = vunpack.c.0.s8 %v2930
        %v2932 = vlaneseq
        %v2933 = vshrl.u32 %v2932, 7
        %v2934 = vsub.s32 %v2931, %v2933
        %v2935 = vrot.slane %v2927, %v2934
        %v2937 = vunpack.c.l.s4 1966171168
        %v2938 = vunpack.c.0.s8 %v2937
        %v2939 = vlaneseq
        %v2940 = vshrl.u32 %v2939, 7
        %v2941 = vsub.s32 %v2938, %v2940
        %v2942 = vrot.slane %v2928, %v2941
        %v4609 = vunpack.c.l.b16 %v752
        %v4610 = vunpack.c.l.b16 %v753
        %v4611 = vunpack.c.l.b16 %v754
        %v4612 = vunpack.c.l.b16 %v755
        %v4613 = vunpack.c.l.b16 %v756
        %v4614 = vunpack.c.l.b16 %v757
        %v4615 = vunpack.c.l.b16 %v758
        %v4616 = vunpack.c.l.b16 %v759
        %v4617 = vunpack.c.l.b16 %v760
        %v4618 = vunpack.c.l.b16 %v761
        %v4619 = vunpack.c.l.b16 %v762
        %v4620 = vunpack.c.l.b16 %v763
        %v4621 = vunpack.c.l.b16 %v764
        %v4622 = vunpack.c.l.b16 %v765
        %v4623 = vunpack.c.l.b16 %v766
        %v4624 = vunpack.c.l.b16 %v767
        %v4625 = vunpack.c.l.b16 %v768
        %v4626 = vunpack.c.l.b16 %v769
        %v4627 = vunpack.c.l.b16 %v770
        %v4628 = vunpack.c.l.b16 %v771
        %v4629 = vunpack.c.l.b16 %v772
        %v4630 = vunpack.c.l.b16 %v773
        %v4631 = vunpack.c.l.b16 %v774
        %v4632 = vunpack.c.l.b16 %v775
        %v4633 = vunpack.c.l.b16 %v776
        %v4634 = vunpack.c.l.b16 %v777
        %v4635 = vunpack.c.l.b16 %v778
        %v4636 = vunpack.c.l.b16 %v779
        %v4637 = vunpack.c.l.b16 %v780
        %v4638 = vunpack.c.l.b16 %v781
        %v4639 = vunpack.c.l.b16 %v782
        %v4640 = vunpack.c.l.b16 %v783
        %v4641 = vunpack.c.l.b16 %v784
        %v4642 = vunpack.c.l.b16 %v785
        %v4643 = vunpack.c.l.b16 %v786
        %v4644 = vunpack.c.l.b16 %v787
        %v4645 = vunpack.c.l.b16 %v788
        %v4646 = vunpack.c.l.b16 %v789
        %v4647 = vunpack.c.l.b16 %v790
        %v4648 = vunpack.c.l.b16 %v791
        %v4649 = vunpack.c.l.b16 %v792
        %v4650 = vunpack.c.l.b16 %v793
        %v4651 = vunpack.c.l.b16 %v794
        %v4652 = vunpack.c.l.b16 %v795
        %v4653 = vunpack.c.l.b16 %v796
        %v4654 = vunpack.c.l.b16 %v797
        %v4655 = vunpack.c.l.b16 %v798
        %v4656 = vunpack.c.l.b16 %v799
        %v4657 = vunpack.c.l.b16 %v800
        %v4658 = vunpack.c.l.b16 %v801
        %v4659 = vunpack.c.l.b16 %v802
        %v4660 = vunpack.c.l.b16 %v803
        %v4661 = vunpack.c.l.b16 %v804
        %v4662 = vunpack.c.l.b16 %v805
        %v4663 = vunpack.c.l.b16 %v806
        %v4664 = vunpack.c.l.b16 %v807
        %v4665 = vunpack.c.l.b16 %v808
        %v4666 = vunpack.c.l.b16 %v809
        %v4667 = vunpack.c.l.b16 %v810
        %v4668 = vunpack.c.l.b16 %v811
        %v4669 = vunpack.c.l.b16 %v812
        %v4670 = vunpack.c.l.b16 %v813
        %v4671 = vunpack.c.l.b16 %v814
        %v4672 = vunpack.c.l.b16 %v815
        %v4673 = vunpack.c.l.b16 %v816
        %v4674 = vunpack.c.l.b16 %v817
        %v4675 = vunpack.c.l.b16 %v818
        %v4676 = vunpack.c.l.b16 %v819
        %v4677 = vunpack.c.l.b16 %v820
        %v4678 = vunpack.c.l.b16 %v821
        %v4679 = vunpack.c.l.b16 %v822
        %v4680 = vunpack.c.l.b16 %v823
        %v4681 = vunpack.c.l.b16 %v824
        %v4682 = vunpack.c.l.b16 %v825
        %v4683 = vunpack.c.l.b16 %v826
        %v4684 = vunpack.c.l.b16 %v827
        %v4685 = vunpack.c.l.b16 %v828
        %v4686 = vunpack.c.l.b16 %v829
        %v4687 = vunpack.c.l.b16 %v830
        %v4688 = vunpack.c.l.b16 %v831
        %v4689 = vunpack.c.l.b16 %v832
        %v4690 = vunpack.c.l.b16 %v833
        %v4691 = vunpack.c.l.b16 %v834
        %v4692 = vunpack.c.l.b16 %v835
        %v4693 = vunpack.c.l.b16 %v836
        %v4694 = vunpack.c.l.b16 %v837
        %v4695 = vunpack.c.l.b16 %v838
        %v4696 = vunpack.c.l.b16 %v839
        %v4697 = vunpack.c.l.b16 %v840
        %v4698 = vunpack.c.l.b16 %v841
        %v4699 = vunpack.c.l.b16 %v842
        %v4700 = vunpack.c.l.b16 %v843
        %v4701 = vunpack.c.l.b16 %v844
        %v4702 = vunpack.c.l.b16 %v845
        %v4703 = vunpack.c.l.b16 %v846
        %v4704 = vunpack.c.l.b16 %v847
        %v4705 = vunpack.c.l.b16 %v848
        %v4706 = vunpack.c.l.b16 %v849
        %v4707 = vunpack.c.l.b16 %v850
        %v4708 = vunpack.c.l.b16 %v851
        %v4709 = vunpack.c.l.b16 %v852
        %v4710 = vunpack.c.l.b16 %v853
        %v4711 = vunpack.c.l.b16 %v854
        %v4712 = vunpack.c.l.b16 %v855
        %v4713 = vunpack.c.l.b16 %v856
        %v4714 = vunpack.c.l.b16 %v857
        %v4715 = vunpack.c.l.b16 %v858
        %v4716 = vunpack.c.l.b16 %v859
        %v4717 = vunpack.c.l.b16 %v860
        %v4718 = vunpack.c.l.b16 %v861
        %v4719 = vunpack.c.l.b16 %v862
        %v4720 = vunpack.c.l.b16 %v863
        %v4721 = vunpack.c.l.b16 %v864
        %v4722 = vunpack.c.l.b16 %v865
        %v4723 = vunpack.c.l.b16 %v866
        %v4724 = vunpack.c.l.b16 %v867
        %v4725 = vunpack.c.l.b16 %v868
        %v4726 = vunpack.c.l.b16 %v869
        %v4727 = vunpack.c.l.b16 %v870
        %v4728 = vunpack.c.l.b16 %v871
        %v4729 = vunpack.c.l.b16 %v872
        %v4730 = vunpack.c.l.b16 %v873
        %v4731 = vunpack.c.l.b16 %v874
        %v4732 = vunpack.c.l.b16 %v875
        %v4733 = vunpack.c.l.b16 %v876
        %v4734 = vunpack.c.l.b16 %v877
        %v4735 = vunpack.c.l.b16 %v878
        %v4736 = vunpack.c.l.b16 %v879
        %v4737 = vunpack.c.l.b16 %v880
        %v4738 = vunpack.c.l.b16 %v881
        %v4739 = vunpack.c.l.b16 %v882
        %v4740 = vunpack.c.l.b16 %v883
        %v4741 = vunpack.c.l.b16 %v884
        %v4742 = vunpack.c.l.b16 %v885
        %v4743 = vunpack.c.l.b16 %v886
        %v4744 = vunpack.c.l.b16 %v887
        %v4745 = vunpack.c.l.b16 %v888
        %v4746 = vunpack.c.l.b16 %v889
        %v4747 = vunpack.c.l.b16 %v890
        %v4748 = vunpack.c.l.b16 %v891
        %v4749 = vunpack.c.l.b16 %v892
        %v4750 = vunpack.c.l.b16 %v893
        %v4751 = vunpack.c.l.b16 %v894
        %v4752 = vunpack.c.l.b16 %v895
        %v4753 = vunpack.c.l.b16 %v896
        %v4754 = vunpack.c.l.b16 %v897
        %v4755 = vunpack.c.l.b16 %v898
        %v4756 = vunpack.c.l.b16 %v899
        %v4757 = vunpack.c.l.b16 %v900
        %v4758 = vunpack.c.l.b16 %v901
        %v4759 = vunpack.c.l.b16 %v902
        %v4760 = vunpack.c.l.b16 %v903
        %v4761 = vunpack.c.l.b16 %v904
        %v4762 = vunpack.c.l.b16 %v905
        %v4763 = vunpack.c.l.b16 %v906
        %v4764 = vunpack.c.l.b16 %v907
        %v4765 = vunpack.c.l.b16 %v908
        %v4766 = vunpack.c.l.b16 %v909
        %v4767 = vunpack.c.l.b16 %v910
        %v4768 = vunpack.c.l.b16 %v911
        %v4769 = vunpack.c.l.b16 %v912
        %v4770 = vunpack.c.l.b16 %v913
        %v4771 = vunpack.c.l.b16 %v914
        %v4772 = vunpack.c.l.b16 %v915
        %v4773 = vunpack.c.l.b16 %v916
        %v4774 = vunpack.c.l.b16 %v917
        %v4775 = vunpack.c.l.b16 %v918
        %v4776 = vunpack.c.l.b16 %v919
        %v4777 = vunpack.c.l.b16 %v920
        %v4778 = vunpack.c.l.b16 %v921
        %v4779 = vunpack.c.l.b16 %v922
        %v4780 = vunpack.c.l.b16 %v923
        %v4781 = vunpack.c.l.b16 %v924
        %v4782 = vunpack.c.l.b16 %v925
        %v4783 = vunpack.c.l.b16 %v926
        %v4784 = vunpack.c.l.b16 %v927
        %v4785 = vunpack.c.l.b16 %v928
        %v4786 = vunpack.c.l.b16 %v929
        %v4787 = vunpack.c.l.b16 %v930
        %v4788 = vunpack.c.l.b16 %v931
        %v4789 = vunpack.c.l.b16 %v932
        %v4790 = vunpack.c.l.b16 %v933
        %v4791 = vunpack.c.l.b16 %v934
        %v4792 = vunpack.c.l.b16 %v935
        %v4793 = vunpack.c.l.b16 %v936
        %v4794 = vunpack.c.l.b16 %v937
        %v4795 = vunpack.c.l.b16 %v938
        %v4796 = vunpack.c.l.b16 %v939
        %v4797 = vunpack.c.l.b16 %v940
        %v4798 = vunpack.c.l.b16 %v941
        %v4799 = vunpack.c.l.b16 %v942
        %v4800 = vunpack.c.l.b16 %v943
        %v4801 = vunpack.c.l.b16 %v944
        %v4802 = vunpack.c.l.b16 %v945
        %v4803 = vunpack.c.l.b16 %v946
        %v4804 = vunpack.c.l.b16 %v947
        %v4805 = vunpack.c.l.b16 %v948
        %v4806 = vunpack.c.l.b16 %v949
        %v4807 = vunpack.c.l.b16 %v950
        %v4808 = vunpack.c.l.b16 %v951
        %v4809 = vunpack.c.l.b16 %v952
        %v4810 = vunpack.c.l.b16 %v953
        %v4811 = vunpack.c.l.b16 %v954
        %v4812 = vunpack.c.l.b16 %v955
        %v4813 = vunpack.c.l.b16 %v956
        %v4814 = vunpack.c.l.b16 %v957
        %v4815 = vunpack.c.l.b16 %v958
        %v4816 = vunpack.c.l.b16 %v959
        %v4817 = vunpack.c.l.b16 %v960
        %v4818 = vunpack.c.l.b16 %v961
        %v4819 = vunpack.c.l.b16 %v962
        %v4820 = vunpack.c.l.b16 %v963
        %v4821 = vunpack.c.l.b16 %v964
        %v4822 = vunpack.c.l.b16 %v965
        %v4823 = vunpack.c.l.b16 %v966
        %v4824 = vunpack.c.l.b16 %v967
        %v4825 = vunpack.c.l.b16 %v968
        %v4826 = vunpack.c.l.b16 %v969
        %v4827 = vunpack.c.l.b16 %v970
        %v4828 = vunpack.c.l.b16 %v971
        %v4829 = vunpack.c.l.b16 %v972
        %v4830 = vunpack.c.l.b16 %v973
        %v4831 = vunpack.c.l.b16 %v974
        %v4832 = vunpack.c.l.b16 %v975
        %v4833 = vunpack.c.l.b16 %v976
        %v4834 = vunpack.c.l.b16 %v977
        %v4835 = vunpack.c.l.b16 %v978
        %v4836 = vunpack.c.l.b16 %v979
        %v4837 = vunpack.c.l.b16 %v980
        %v4838 = vunpack.c.l.b16 %v981
        %v4839 = vunpack.c.l.b16 %v982
        %v4840 = vunpack.c.l.b16 %v983
        %v4841 = vunpack.c.l.b16 %v984
        %v4842 = vunpack.c.l.b16 %v985
        %v4843 = vunpack.c.l.b16 %v986
        %v4844 = vunpack.c.l.b16 %v987
        %v4845 = vunpack.c.l.b16 %v988
        %v4846 = vunpack.c.l.b16 %v989
        %v4847 = vunpack.c.l.b16 %v990
        %v4848 = vunpack.c.l.b16 %v991
        %v4849 = vunpack.c.l.b16 %v992
        %v4850 = vunpack.c.l.b16 %v993
        %v4851 = vunpack.c.l.b16 %v994
        %v4852 = vunpack.c.l.b16 %v995
        %v4853 = vunpack.c.l.b16 %v996
        %v4854 = vunpack.c.l.b16 %v997
        %v4855 = vunpack.c.l.b16 %v998
        %v4856 = vunpack.c.l.b16 %v999
        %v4857 = vunpack.c.l.b16 %v1000
        %v4858 = vunpack.c.l.b16 %v1001
        %v4859 = vunpack.c.l.b16 %v1002
        %v4860 = vunpack.c.l.b16 %v1003
        %v4861 = vunpack.c.l.b16 %v1004
        %v4862 = vunpack.c.l.b16 %v1005
        %v4863 = vunpack.c.l.b16 %v1006
        %v4864 = vunpack.c.l.b16 %v1007
        %v4865 = vunpack.c.l.b16 %v1008
        %v4866 = vunpack.c.l.b16 %v1009
        %v4867 = vunpack.c.l.b16 %v1010
        %v4868 = vunpack.c.l.b16 %v1011
        %v4869 = vunpack.c.l.b16 %v1012
        %v4870 = vunpack.c.l.b16 %v1013
        %v4871 = vunpack.c.l.b16 %v1014
        %v4872 = vunpack.c.l.b16 %v1015
        %v4873 = vunpack.c.l.b16 %v1016
        %v4874 = vunpack.c.l.b16 %v1017
        %v4875 = vunpack.c.l.b16 %v1018
        %v4876 = vunpack.c.l.b16 %v1019
        %v4877 = vunpack.c.l.b16 %v1020
        %v4878 = vunpack.c.l.b16 %v1021
        %v4879 = vunpack.c.l.b16 %v1022
        %v4880 = vunpack.c.l.b16 %v1023
        %v4881 = vunpack.c.l.b16 %v1024
        %v4882 = vunpack.c.l.b16 %v1025
        %v4883 = vunpack.c.l.b16 %v1026
        %v4884 = vunpack.c.l.b16 %v1027
        %v4885 = vunpack.c.l.b16 %v1028
        %v4886 = vunpack.c.l.b16 %v1029
        %v4887 = vunpack.c.l.b16 %v1030
        %v4888 = vunpack.c.l.b16 %v1031
        %v4889 = vunpack.c.l.b16 %v1032
        %v4890 = vunpack.c.l.b16 %v1033
        %v4891 = vunpack.c.l.b16 %v1034
        %v4892 = vunpack.c.l.b16 %v1035
        %v4893 = vunpack.c.l.b16 %v1036
        %v4894 = vunpack.c.l.b16 %v1037
        %v4895 = vunpack.c.l.b16 %v1038
        %v4896 = vunpack.c.l.b16 %v1039
        %v4897 = vunpack.c.l.b16 %v1040
        %v4898 = vunpack.c.l.b16 %v1041
        %v4899 = vunpack.c.l.b16 %v1042
        %v4900 = vunpack.c.l.b16 %v1043
        %v4901 = vunpack.c.l.b16 %v1044
        %v4902 = vunpack.c.l.b16 %v1045
        %v4903 = vunpack.c.l.b16 %v1046
        %v4904 = vunpack.c.l.b16 %v1047
        %v4905 = vunpack.c.l.b16 %v1048
        %v4906 = vunpack.c.l.b16 %v1049
        %v4907 = vunpack.c.l.b16 %v1050
        %v4908 = vunpack.c.l.b16 %v1051
        %v4909 = vunpack.c.l.b16 %v1052
        %v4910 = vunpack.c.l.b16 %v1053
        %v4911 = vunpack.c.l.b16 %v1054
        %v4912 = vunpack.c.l.b16 %v1055
        %v4913 = vunpack.c.l.b16 %v1056
        %v4914 = vunpack.c.l.b16 %v1057
        %v4915 = vunpack.c.l.b16 %v1058
        %v4916 = vunpack.c.l.b16 %v1059
        %v4917 = vunpack.c.l.b16 %v1060
        %v4918 = vunpack.c.l.b16 %v1061
        %v4919 = vunpack.c.l.b16 %v1062
        %v4920 = vunpack.c.l.b16 %v1063
        %v4921 = vunpack.c.l.b16 %v1064
        %v4922 = vunpack.c.l.b16 %v1065
        %v4923 = vunpack.c.l.b16 %v1066
        %v4924 = vunpack.c.l.b16 %v1067
        %v4925 = vunpack.c.l.b16 %v1068
        %v4926 = vunpack.c.l.b16 %v1069
        %v4927 = vunpack.c.l.b16 %v1070
        %v4928 = vunpack.c.l.b16 %v1071
        %v4929 = vunpack.c.l.b16 %v1072
        %v4930 = vunpack.c.l.b16 %v1073
        %v4931 = vunpack.c.l.b16 %v1074
        %v4932 = vunpack.c.l.b16 %v1075
        %v4933 = vunpack.c.l.b16 %v1076
        %v4934 = vunpack.c.l.b16 %v1077
        %v4935 = vunpack.c.l.b16 %v1078
        %v4936 = vunpack.c.l.b16 %v1079
        %v4937 = vunpack.c.l.b16 %v1080
        %v4938 = vunpack.c.l.b16 %v1081
        %v4939 = vunpack.c.l.b16 %v1082
        %v4940 = vunpack.c.l.b16 %v1083
        %v4941 = vunpack.c.l.b16 %v1084
        %v4942 = vunpack.c.l.b16 %v1085
        %v4943 = vunpack.c.l.b16 %v1086
        %v4944 = vunpack.c.l.b16 %v1087
        %v4945 = vunpack.c.l.b16 %v1088
        %v4946 = vunpack.c.l.b16 %v1089
        %v4947 = vunpack.c.l.b16 %v1090
        %v4948 = vunpack.c.l.b16 %v1091
        %v4949 = vunpack.c.l.b16 %v1092
        %v4950 = vunpack.c.l.b16 %v1093
        %v4951 = vunpack.c.l.b16 %v1094
        %v4952 = vunpack.c.l.b16 %v1095
        %v4953 = vunpack.c.l.b16 %v1096
        %v4954 = vunpack.c.l.b16 %v1097
        %v4955 = vunpack.c.l.b16 %v1098
        %v4956 = vunpack.c.l.b16 %v1099
        %v4957 = vunpack.c.l.b16 %v1100
        %v4958 = vunpack.c.l.b16 %v1101
        %v4959 = vunpack.c.l.b16 %v1102
        %v4960 = vunpack.c.l.b16 %v1103
        %v4961 = vunpack.c.l.b16 %v1104
        %v4962 = vunpack.c.l.b16 %v1105
        %v4963 = vunpack.c.l.b16 %v1106
        %v4964 = vunpack.c.l.b16 %v1107
        %v4965 = vunpack.c.l.b16 %v1108
        %v4966 = vunpack.c.l.b16 %v1109
        %v4967 = vunpack.c.l.b16 %v1110
        %v4968 = vunpack.c.l.b16 %v1111
        %v4969 = vunpack.c.l.b16 %v1112
        %v4970 = vunpack.c.l.b16 %v1113
        %v4971 = vunpack.c.l.b16 %v1114
        %v4972 = vunpack.c.l.b16 %v1115
        %v4973 = vunpack.c.l.b16 %v1116
        %v4974 = vunpack.c.l.b16 %v1117
        %v4975 = vunpack.c.l.b16 %v1118
        %v4976 = vunpack.c.l.b16 %v1119
        %v4977 = vunpack.c.l.b16 %v1120
        %v4978 = vunpack.c.l.b16 %v1121
        %v4979 = vunpack.c.l.b16 %v1122
        %v4980 = vunpack.c.l.b16 %v1123
        %v4981 = vunpack.c.l.b16 %v1124
        %v4982 = vunpack.c.l.b16 %v1125
        %v4983 = vunpack.c.l.b16 %v1126
        %v4984 = vunpack.c.l.b16 %v1127
        %v4985 = vunpack.c.l.b16 %v1128
        %v4986 = vunpack.c.l.b16 %v1129
        %v4987 = vunpack.c.l.b16 %v1130
        %v4988 = vunpack.c.l.b16 %v1131
        %v4989 = vunpack.c.l.b16 %v1132
        %v4990 = vunpack.c.l.b16 %v1133
        %v4991 = vunpack.c.l.b16 %v1134
        %v4992 = vunpack.c.l.b16 %v1135
        %v4993 = vunpack.c.l.b16 %v1136
        %v4994 = vunpack.c.l.b16 %v1137
        %v4995 = vunpack.c.l.b16 %v1138
        %v4996 = vunpack.c.l.b16 %v1139
        %v4997 = vunpack.c.l.b16 %v1140
        %v4998 = vunpack.c.l.b16 %v1141
        %v4999 = vunpack.c.l.b16 %v1142
        %v5000 = vunpack.c.l.b16 %v1143
        %v5001 = vunpack.c.l.b16 %v1144
        %v5002 = vunpack.c.l.b16 %v1145
        %v5003 = vunpack.c.l.b16 %v1146
        %v5004 = vunpack.c.l.b16 %v1147
        %v5005 = vunpack.c.l.b16 %v1148
        %v5006 = vunpack.c.l.b16 %v1149
        %v5007 = vunpack.c.l.b16 %v1150
        %v5008 = vunpack.c.l.b16 %v1151
        %v5009 = vunpack.c.l.b16 %v1152
        %v5010 = vunpack.c.l.b16 %v1153
        %v5011 = vunpack.c.l.b16 %v1154
        %v5012 = vunpack.c.l.b16 %v1155
        %v5013 = vunpack.c.l.b16 %v1156
        %v5014 = vunpack.c.l.b16 %v1157
        %v5015 = vunpack.c.l.b16 %v1158
        %v5016 = vunpack.c.l.b16 %v1159
        %v5017 = vunpack.c.l.b16 %v1160
        %v5018 = vunpack.c.l.b16 %v1161
        %v5019 = vunpack.c.l.b16 %v1162
        %v5020 = vunpack.c.l.b16 %v1163
        %v5021 = vunpack.c.l.b16 %v1164
        %v5022 = vunpack.c.l.b16 %v1165
        %v5023 = vunpack.c.l.b16 %v1166
        %v5024 = vunpack.c.l.b16 %v1167
        %v5025 = vunpack.c.l.b16 %v1168
        %v5026 = vunpack.c.l.b16 %v1169
        %v5027 = vunpack.c.l.b16 %v1170
        %v5028 = vunpack.c.l.b16 %v1171
        %v5029 = vunpack.c.l.b16 %v1172
        %v5030 = vunpack.c.l.b16 %v1173
        %v5031 = vunpack.c.l.b16 %v1174
        %v5032 = vunpack.c.l.b16 %v1175
        %v5033 = vunpack.c.l.b16 %v1176
        %v5034 = vunpack.c.l.b16 %v1177
        %v5035 = vunpack.c.l.b16 %v1178
        %v5036 = vunpack.c.l.b16 %v1179
        %v5037 = vunpack.c.l.b16 %v1180
        %v5038 = vunpack.c.l.b16 %v1181
        %v5039 = vunpack.c.l.b16 %v1182
        %v5040 = vunpack.c.l.b16 %v1183
        %v5041 = vunpack.c.l.b16 %v1184
        %v5042 = vunpack.c.l.b16 %v1185
        %v5043 = vunpack.c.l.b16 %v1186
        %v5044 = vunpack.c.l.b16 %v1187
        %v5045 = vunpack.c.l.b16 %v1188
        %v5046 = vunpack.c.l.b16 %v1189
        %v5047 = vunpack.c.l.b16 %v1190
        %v5048 = vunpack.c.l.b16 %v1191
        %v5049 = vunpack.c.l.b16 %v1192
        %v5050 = vunpack.c.l.b16 %v1193
        %v5051 = vunpack.c.l.b16 %v1194
        %v5052 = vunpack.c.l.b16 %v1195
        %v5053 = vunpack.c.l.b16 %v1196
        %v5054 = vunpack.c.l.b16 %v1197
        %v5055 = vunpack.c.l.b16 %v1198
        %v5056 = vunpack.c.l.b16 %v1199
        %v5057 = vunpack.c.l.b16 %v1200
        %v5058 = vunpack.c.l.b16 %v1201
        %v5059 = vunpack.c.l.b16 %v1202
        %v5060 = vunpack.c.l.b16 %v1203
        %v5061 = vunpack.c.l.b16 %v1204
        %v5062 = vunpack.c.l.b16 %v1205
        %v5063 = vunpack.c.l.b16 %v1206
        %v5064 = vunpack.c.l.b16 %v1207
        %v5065 = vunpack.c.l.b16 %v1208
        %v5066 = vunpack.c.l.b16 %v1209
        %v5067 = vunpack.c.l.b16 %v1210
        %v5068 = vunpack.c.l.b16 %v1211
        %v5069 = vunpack.c.l.b16 %v1212
        %v5070 = vunpack.c.l.b16 %v1213
        %v5071 = vunpack.c.l.b16 %v1214
        %v5072 = vunpack.c.l.b16 %v1215
        %v5073 = vunpack.c.l.b16 %v1216
        %v5074 = vunpack.c.l.b16 %v1217
        %v5075 = vunpack.c.l.b16 %v1218
        %v5076 = vunpack.c.l.b16 %v1219
        %v5077 = vunpack.c.l.b16 %v1220
        %v5078 = vunpack.c.l.b16 %v1221
        %v5079 = vunpack.c.l.b16 %v1222
        %v5080 = vunpack.c.l.b16 %v1223
        %v5081 = vunpack.c.l.b16 %v1224
        %v5082 = vunpack.c.l.b16 %v1225
        %v5083 = vunpack.c.l.b16 %v1226
        %v5084 = vunpack.c.l.b16 %v1227
        %v5085 = vunpack.c.l.b16 %v1228
        %v5086 = vunpack.c.l.b16 %v1229
        %v5087 = vunpack.c.l.b16 %v1230
        %v5088 = vunpack.c.l.b16 %v1231
        %v5089 = vunpack.c.l.b16 %v1232
        %v5090 = vunpack.c.l.b16 %v1233
        %v5091 = vunpack.c.l.b16 %v1234
        %v5092 = vunpack.c.l.b16 %v1235
        %v5093 = vunpack.c.l.b16 %v1236
        %v5094 = vunpack.c.l.b16 %v1237
        %v5095 = vunpack.c.l.b16 %v1238
        %v5096 = vunpack.c.l.b16 %v1239
        %v5097 = vunpack.c.l.b16 %v1240
        %v5098 = vunpack.c.l.b16 %v1241
        %v5099 = vunpack.c.l.b16 %v1242
        %v5100 = vunpack.c.l.b16 %v1243
        %v5101 = vunpack.c.l.b16 %v1244
        %v5102 = vunpack.c.l.b16 %v1245
        %v5103 = vunpack.c.l.b16 %v1246
        %v5104 = vunpack.c.l.b16 %v1247
        %v5105 = vunpack.c.l.b16 %v1248
        %v5106 = vunpack.c.l.b16 %v1249
        %v5107 = vunpack.c.l.b16 %v1250
        %v5108 = vunpack.c.l.b16 %v1251
        %v5109 = vunpack.c.l.b16 %v1252
        %v5110 = vunpack.c.l.b16 %v1253
        %v5111 = vunpack.c.l.b16 %v1254
        %v5112 = vunpack.c.l.b16 %v1255
        %v5113 = vunpack.c.l.b16 %v1256
        %v5114 = vunpack.c.l.b16 %v1257
        %v5115 = vunpack.c.l.b16 %v1258
        %v5116 = vunpack.c.l.b16 %v1259
        %v5117 = vunpack.c.l.b16 %v1260
        %v5118 = vunpack.c.l.b16 %v1261
        %v5119 = vunpack.c.l.b16 %v1262
        %v5120 = vunpack.c.l.b16 %v1263
        %v5121 = vunpack.c.l.b16 %v1264
        %v5122 = vunpack.c.l.b16 %v1265
        %v5123 = vunpack.c.l.b16 %v1266
        %v5124 = vunpack.c.l.b16 %v1267
        %v5125 = vunpack.c.l.b16 %v1268
        %v5126 = vunpack.c.l.b16 %v1269
        %v5127 = vunpack.c.l.b16 %v1270
        %v5128 = vunpack.c.l.b16 %v1271
        %v5129 = vunpack.c.l.b16 %v1272
        %v5130 = vunpack.c.l.b16 %v1273
        %v5131 = vunpack.c.l.b16 %v1274
        %v5132 = vunpack.c.l.b16 %v1275
        %v5133 = vunpack.c.l.b16 %v1276
        %v5134 = vunpack.c.l.b16 %v1277
        %v5135 = vunpack.c.l.b16 %v1278
        %v5136 = vunpack.c.l.b16 %v1279
        %v5137 = vunpack.c.l.b16 %v1280
        %v5138 = vunpack.c.l.b16 %v1281
        %v5139 = vunpack.c.l.b16 %v1282
        %v5140 = vunpack.c.l.b16 %v1283
        %v5141 = vunpack.c.l.b16 %v1284
        %v5142 = vunpack.c.l.b16 %v1285
        %v5143 = vunpack.c.l.b16 %v1286
        %v5144 = vunpack.c.l.b16 %v1287
        %v5145 = vunpack.c.l.b16 %v1288
        %v5146 = vunpack.c.l.b16 %v1289
        %v5147 = vunpack.c.l.b16 %v1290
        %v5148 = vunpack.c.l.b16 %v1291
        %v5149 = vunpack.c.l.b16 %v1292
        %v5150 = vunpack.c.l.b16 %v1293
        %v5151 = vunpack.c.l.b16 %v1294
        %v5152 = vunpack.c.l.b16 %v1295
        %v5153 = vunpack.c.l.b16 %v1296
        %v5154 = vunpack.c.l.b16 %v1297
        %v5155 = vunpack.c.l.b16 %v1298
        %v5156 = vunpack.c.l.b16 %v1299
        %v5157 = vunpack.c.l.b16 %v1300
        %v5158 = vunpack.c.l.b16 %v1301
        %v5159 = vunpack.c.l.b16 %v1302
        %v5160 = vunpack.c.l.b16 %v1303
        %v5161 = vunpack.c.l.b16 %v1304
        %v5162 = vunpack.c.l.b16 %v1305
        %v5163 = vunpack.c.l.b16 %v1306
        %v5164 = vunpack.c.l.b16 %v1307
        %v5165 = vunpack.c.l.b16 %v1308
        %v5166 = vunpack.c.l.b16 %v1309
        %v5167 = vunpack.c.l.b16 %v1310
        %v5168 = vunpack.c.l.b16 %v1311
        %v5169 = vunpack.c.l.b16 %v1312
        %v5170 = vunpack.c.l.b16 %v1313
        %v5171 = vunpack.c.l.b16 %v1314
        %v5172 = vunpack.c.l.b16 %v1315
        %v5173 = vunpack.c.l.b16 %v1316
        %v5174 = vunpack.c.l.b16 %v1317
        %v5175 = vunpack.c.l.b16 %v1318
        %v5176 = vunpack.c.l.b16 %v1319
        %v5177 = vunpack.c.l.b16 %v1320
        %v5178 = vunpack.c.l.b16 %v1321
        %v5179 = vunpack.c.l.b16 %v1322
        %v5180 = vunpack.c.l.b16 %v1323
        %v5181 = vunpack.c.l.b16 %v1324
        %v5182 = vunpack.c.l.b16 %v1325
        %v5183 = vunpack.c.l.b16 %v1326
        %v5184 = vunpack.c.l.b16 %v1327
        %v5185 = vunpack.c.l.b16 %v1328
        %v5186 = vunpack.c.l.b16 %v1329
        %v5187 = vunpack.c.l.b16 %v1330
        %v5188 = vunpack.c.l.b16 %v1331
        %v5189 = vunpack.c.l.b16 %v1332
        %v5190 = vunpack.c.l.b16 %v1333
        %v5191 = vunpack.c.l.b16 %v1334
        %v5192 = vunpack.c.l.b16 %v1335
        %v5193 = vunpack.c.l.b16 %v1336
        %v5194 = vunpack.c.l.b16 %v1337
        %v5195 = vunpack.c.l.b16 %v1338
        %v5196 = vunpack.c.l.b16 %v1339
        %v5197 = vunpack.c.l.b16 %v1340
        %v5198 = vunpack.c.l.b16 %v1341
        %v5199 = vunpack.c.l.b16 %v1342
        %v5200 = vunpack.c.l.b16 %v1343
        %v5201 = vunpack.c.l.b16 %v1344
        %v5202 = vunpack.c.l.b16 %v1345
        %v5203 = vunpack.c.l.b16 %v1346
        %v5204 = vunpack.c.l.b16 %v1347
        %v5205 = vunpack.c.l.b16 %v1348
        %v5206 = vunpack.c.l.b16 %v1349
        %v5207 = vunpack.c.l.b16 %v1350
        %v5208 = vunpack.c.l.b16 %v1351
        %v5209 = vunpack.c.l.b16 %v1352
        %v5210 = vunpack.c.l.b16 %v1353
        %v5211 = vunpack.c.l.b16 %v1354
        %v5212 = vunpack.c.l.b16 %v1355
        %v5213 = vunpack.c.l.b16 %v1356
        %v5214 = vunpack.c.l.b16 %v1357
        %v5215 = vunpack.c.l.b16 %v1358
        %v5216 = vunpack.c.l.b16 %v1359
        %v5217 = vunpack.c.l.b16 %v1360
        %v5218 = vunpack.c.l.b16 %v1361
        %v5219 = vunpack.c.l.b16 %v1362
        %v5220 = vunpack.c.l.b16 %v1363
        %v5221 = vunpack.c.l.b16 %v1364
        %v5222 = vunpack.c.l.b16 %v1365
        %v5223 = vunpack.c.l.b16 %v1366
        %v5224 = vunpack.c.l.b16 %v1367
        %v5225 = vunpack.c.l.b16 %v1368
        %v5226 = vunpack.c.l.b16 %v1369
        %v5227 = vunpack.c.l.b16 %v1370
        %v5228 = vunpack.c.l.b16 %v1371
        %v5229 = vunpack.c.l.b16 %v1372
        %v5230 = vunpack.c.l.b16 %v1373
        %v5231 = vunpack.c.l.b16 %v1374
        %v5232 = vunpack.c.l.b16 %v1375
        %v5233 = vunpack.c.l.b16 %v1376
        %v5234 = vunpack.c.l.b16 %v1377
        %v5235 = vunpack.c.l.b16 %v1378
        %v5236 = vunpack.c.l.b16 %v1379
        %v5237 = vunpack.c.l.b16 %v1380
        %v5238 = vunpack.c.l.b16 %v1381
        %v5239 = vunpack.c.l.b16 %v1382
        %v5240 = vunpack.c.l.b16 %v1383
        %v5241 = vunpack.c.l.b16 %v1384
        %v5242 = vunpack.c.l.b16 %v1385
        %v5243 = vunpack.c.l.b16 %v1386
        %v5244 = vunpack.c.l.b16 %v1387
        %v5245 = vunpack.c.l.b16 %v1388
        %v5246 = vunpack.c.l.b16 %v1389
        %v5247 = vunpack.c.l.b16 %v1390
        %v5248 = vunpack.c.l.b16 %v1391
        %v5249 = vunpack.c.l.b16 %v1392
        %v5250 = vunpack.c.l.b16 %v1393
        %v5251 = vunpack.c.l.b16 %v1394
        %v5252 = vunpack.c.l.b16 %v1395
        %v5253 = vunpack.c.l.b16 %v1396
        %v5254 = vunpack.c.l.b16 %v1397
        %v5255 = vunpack.c.l.b16 %v1398
        %v5256 = vunpack.c.l.b16 %v1399
        %v5257 = vunpack.c.l.b16 %v1400
        %v5258 = vunpack.c.l.b16 %v1401
        %v5259 = vunpack.c.l.b16 %v1402
        %v5260 = vunpack.c.l.b16 %v1403
        %v5261 = vunpack.c.l.b16 %v1404
        %v5262 = vunpack.c.l.b16 %v1405
        %v5263 = vunpack.c.l.b16 %v1406
        %v5264 = vunpack.c.l.b16 %v1407
        %v5265 = vunpack.c.l.b16 %v1408
        %v5266 = vunpack.c.l.b16 %v1409
        %v5267 = vunpack.c.l.b16 %v1410
        %v5268 = vunpack.c.l.b16 %v1411
        %v5269 = vunpack.c.l.b16 %v1412
        %v5270 = vunpack.c.l.b16 %v1413
        %v5271 = vunpack.c.l.b16 %v1414
        %v5272 = vunpack.c.l.b16 %v1415
        %v5273 = vunpack.c.l.b16 %v1416
        %v5274 = vunpack.c.l.b16 %v1417
        %v5275 = vunpack.c.l.b16 %v1418
        %v5276 = vunpack.c.l.b16 %v1419
        %v5277 = vunpack.c.l.b16 %v1420
        %v5278 = vunpack.c.l.b16 %v1421
        %v5279 = vunpack.c.l.b16 %v1422
        %v5280 = vunpack.c.l.b16 %v1423
        %v5281 = vunpack.c.l.b16 %v1424
        %v5282 = vunpack.c.l.b16 %v1425
        %v5283 = vunpack.c.l.b16 %v1426
        %v5284 = vunpack.c.l.b16 %v1427
        %v5285 = vunpack.c.l.b16 %v1428
        %v5286 = vunpack.c.l.b16 %v1429
        %v5287 = vunpack.c.l.b16 %v1430
        %v5288 = vunpack.c.l.b16 %v1431
        %v5289 = vunpack.c.l.b16 %v1432
        %v5290 = vunpack.c.l.b16 %v1433
        %v5291 = vunpack.c.l.b16 %v1434
        %v5292 = vunpack.c.l.b16 %v1435
        %v5293 = vunpack.c.l.b16 %v1436
        %v5294 = vunpack.c.l.b16 %v1437
        %v5295 = vunpack.c.l.b16 %v1438
        %v5296 = vunpack.c.l.b16 %v1439
        %v5297 = vunpack.c.l.b16 %v1440
        %v5298 = vunpack.c.l.b16 %v1441
        %v5299 = vunpack.c.l.b16 %v1442
        %v5300 = vunpack.c.l.b16 %v1443
        %v5301 = vunpack.c.l.b16 %v1444
        %v5302 = vunpack.c.l.b16 %v1445
        %v5303 = vunpack.c.l.b16 %v1446
        %v5304 = vunpack.c.l.b16 %v1447
        %v5305 = vunpack.c.l.b16 %v1448
        %v5306 = vunpack.c.l.b16 %v1449
        %v5307 = vunpack.c.l.b16 %v1450
        %v5308 = vunpack.c.l.b16 %v1451
        %v5309 = vunpack.c.l.b16 %v1452
        %v5310 = vunpack.c.l.b16 %v1453
        %v5311 = vunpack.c.l.b16 %v1454
        %v5312 = vunpack.c.l.b16 %v1455
        %v5313 = vunpack.c.l.b16 %v1456
        %v5314 = vunpack.c.l.b16 %v1457
        %v5315 = vunpack.c.l.b16 %v1458
        %v5316 = vunpack.c.l.b16 %v1459
        %v5317 = vunpack.c.l.b16 %v1460
        %v5318 = vunpack.c.l.b16 %v1461
        %v5319 = vunpack.c.l.b16 %v1462
        %v5320 = vunpack.c.l.b16 %v1463
        %v5321 = vunpack.c.l.b16 %v1464
        %v5322 = vunpack.c.l.b16 %v1465
        %v5323 = vunpack.c.l.b16 %v1466
        %v5324 = vunpack.c.l.b16 %v1467
        %v5325 = vunpack.c.l.b16 %v1468
        %v5326 = vunpack.c.l.b16 %v1469
        %v5327 = vunpack.c.l.b16 %v1470
        %v5328 = vunpack.c.l.b16 %v1471
        %v5329 = vunpack.c.l.b16 %v1472
        %v5330 = vunpack.c.l.b16 %v1473
        %v5331 = vunpack.c.l.b16 %v1474
        %v5332 = vunpack.c.l.b16 %v1475
        %v5333 = vunpack.c.l.b16 %v1476
        %v5334 = vunpack.c.l.b16 %v1477
        %v5335 = vunpack.c.l.b16 %v1478
        %v5336 = vunpack.c.l.b16 %v1479
        %v5337 = vunpack.c.l.b16 %v1480
        %v5338 = vunpack.c.l.b16 %v1481
        %v5339 = vunpack.c.l.b16 %v1482
        %v5340 = vunpack.c.l.b16 %v1483
        %v5341 = vunpack.c.l.b16 %v1484
        %v5342 = vunpack.c.l.b16 %v1485
        %v5343 = vunpack.c.l.b16 %v1486
        %v5344 = vunpack.c.l.b16 %v1487
        %v5345 = vunpack.c.l.b16 %v1488
        %v5346 = vunpack.c.l.b16 %v1489
        %v5347 = vunpack.c.l.b16 %v1490
        %v5348 = vunpack.c.l.b16 %v1491
        %v5349 = vunpack.c.l.b16 %v1492
        %v5350 = vunpack.c.l.b16 %v1493
        %v5351 = vunpack.c.l.b16 %v1494
        %v5352 = vunpack.c.l.b16 %v1495
        %v5353 = vunpack.c.l.b16 %v1496
        %v5354 = vunpack.c.l.b16 %v1497
        %v5355 = vunpack.c.l.b16 %v1498
        %v5356 = vunpack.c.l.b16 %v1499
        %v5357 = vunpack.c.l.b16 %v1500
        %v5358 = vunpack.c.l.b16 %v1501
        %v5359 = vunpack.c.l.b16 %v1502
        %v5360 = vunpack.c.l.b16 %v1503
        %v5361 = vunpack.c.l.b16 %v1504
        %v5362 = vunpack.c.l.b16 %v1505
        %v5363 = vunpack.c.l.b16 %v1506
        %v5364 = vunpack.c.l.b16 %v1507
        %v5365 = vunpack.c.l.b16 %v1508
        %v5366 = vunpack.c.l.b16 %v1509
        %v5367 = vunpack.c.l.b16 %v1510
        %v5368 = vunpack.c.l.b16 %v1511
        %v5369 = vunpack.c.l.b16 %v1512
        %v5370 = vunpack.c.l.b16 %v1513
        %v5371 = vunpack.c.l.b16 %v1514
        %v5372 = vunpack.c.l.b16 %v1515
        %v5373 = vunpack.c.l.b16 %v1516
        %v5374 = vunpack.c.l.b16 %v1517
        %v5375 = vunpack.c.l.b16 %v1518
        %v5376 = vunpack.c.l.b16 %v1519
        %v5377 = vunpack.c.l.b16 %v1520
        %v5378 = vunpack.c.l.b16 %v1521
        %v5379 = vunpack.c.l.b16 %v1522
        %v5380 = vunpack.c.l.b16 %v1523
        %v5381 = vunpack.c.l.b16 %v1524
        %v5382 = vunpack.c.l.b16 %v1525
        %v5383 = vunpack.c.l.b16 %v1526
        %v5384 = vunpack.c.l.b16 %v1527
        %v5385 = vunpack.c.l.b16 %v1528
        %v5386 = vunpack.c.l.b16 %v1529
        %v5387 = vunpack.c.l.b16 %v1530
        %v5388 = vunpack.c.l.b16 %v1531
        %v5389 = vunpack.c.l.b16 %v1532
        %v5390 = vunpack.c.l.b16 %v1533
        %v5391 = vunpack.c.l.b16 %v1534
        %v5392 = vunpack.c.l.b16 %v1535
        %v5393 = vunpack.c.l.b16 %v1536
        %v5394 = vunpack.c.l.b16 %v1537
        %v5395 = vunpack.c.l.b16 %v1538
        %v5396 = vunpack.c.l.b16 %v1539
        %v5397 = vunpack.c.l.b16 %v1540
        %v5398 = vunpack.c.l.b16 %v1541
        %v5399 = vunpack.c.l.b16 %v1542
        %v5400 = vunpack.c.l.b16 %v1543
        %v5401 = vunpack.c.l.b16 %v1544
        %v5402 = vunpack.c.l.b16 %v1545
        %v5403 = vunpack.c.l.b16 %v1546
        %v5404 = vunpack.c.l.b16 %v1547
        %v5405 = vunpack.c.l.b16 %v1548
        %v5406 = vunpack.c.l.b16 %v1549
        %v5407 = vunpack.c.l.b16 %v1550
        %v5408 = vunpack.c.l.b16 %v1551
        %v5409 = vunpack.c.l.b16 %v1552
        %v5410 = vunpack.c.l.b16 %v1553
        %v5411 = vunpack.c.l.b16 %v1554
        %v5412 = vunpack.c.l.b16 %v1555
        %v5413 = vunpack.c.l.b16 %v1556
        %v5414 = vunpack.c.l.b16 %v1557
        %v5415 = vunpack.c.l.b16 %v1558
        %v5416 = vunpack.c.l.b16 %v1559
        %v5417 = vunpack.c.l.b16 %v1560
        %v5418 = vunpack.c.l.b16 %v1561
        %v5419 = vunpack.c.l.b16 %v1562
        %v5420 = vunpack.c.l.b16 %v1563
        %v5421 = vunpack.c.l.b16 %v1564
        %v5422 = vunpack.c.l.b16 %v1565
        %v5423 = vunpack.c.l.b16 %v1566
        %v5424 = vunpack.c.l.b16 %v1567
        %v5425 = vunpack.c.l.b16 %v1568
        %v5426 = vunpack.c.l.b16 %v1569
        %v5427 = vunpack.c.l.b16 %v1570
        %v5428 = vunpack.c.l.b16 %v1571
        %v5429 = vunpack.c.l.b16 %v1572
        %v5430 = vunpack.c.l.b16 %v1573
        %v5431 = vunpack.c.l.b16 %v1574
        %v5432 = vunpack.c.l.b16 %v1575
        %v5433 = vunpack.c.l.b16 %v1576
        %v5434 = vunpack.c.l.b16 %v1577
        %v5435 = vunpack.c.l.b16 %v1578
        %v5436 = vunpack.c.l.b16 %v1579
        %v5437 = vunpack.c.l.b16 %v1580
        %v5438 = vunpack.c.l.b16 %v1581
        %v5439 = vunpack.c.l.b16 %v1582
        %v5440 = vunpack.c.l.b16 %v1583
        %v5441 = vunpack.c.l.b16 %v1584
        %v5442 = vunpack.c.l.b16 %v1585
        %v5443 = vunpack.c.l.b16 %v1586
        %v5444 = vunpack.c.l.b16 %v1587
        %v5445 = vunpack.c.l.b16 %v1588
        %v5446 = vunpack.c.l.b16 %v1589
        %v5447 = vunpack.c.l.b16 %v1590
        %v5448 = vunpack.c.l.b16 %v1591
        %v5449 = vunpack.c.l.b16 %v1592
        %v5450 = vunpack.c.l.b16 %v1593
        %v5451 = vunpack.c.l.b16 %v1594
        %v5452 = vunpack.c.l.b16 %v1595
        %v5453 = vunpack.c.l.b16 %v1596
        %v5454 = vunpack.c.l.b16 %v1597
        %v5455 = vunpack.c.l.b16 %v1598
        %v5456 = vunpack.c.l.b16 %v1599
        %v5457 = vunpack.c.l.b16 %v1600
        %v5458 = vunpack.c.l.b16 %v1601
        %v5459 = vunpack.c.l.b16 %v1602
        %v5460 = vunpack.c.l.b16 %v1603
        %v5461 = vunpack.c.l.b16 %v1604
        %v5462 = vunpack.c.l.b16 %v1605
        %v5463 = vunpack.c.l.b16 %v1606
        %v5464 = vunpack.c.l.b16 %v1607
        %v5465 = vunpack.c.l.b16 %v1608
        %v5466 = vunpack.c.l.b16 %v1609
        %v5467 = vunpack.c.l.b16 %v1610
        %v5468 = vunpack.c.l.b16 %v1611
        %v5469 = vunpack.c.l.b16 %v1612
        %v5470 = vunpack.c.l.b16 %v1613
        %v5471 = vunpack.c.l.b16 %v1614
        %v5472 = vunpack.c.l.b16 %v1615
        %v5473 = vunpack.c.l.b16 %v1616
        %v5474 = vunpack.c.l.b16 %v1617
        %v5475 = vunpack.c.l.b16 %v1618
        %v5476 = vunpack.c.l.b16 %v1619
        %v5477 = vunpack.c.l.b16 %v1620
        %v5478 = vunpack.c.l.b16 %v1621
        %v5479 = vunpack.c.l.b16 %v1622
        %v5480 = vunpack.c.l.b16 %v1623
        %v5481 = vunpack.c.l.b16 %v1624
        %v5482 = vunpack.c.l.b16 %v1625
        %v5483 = vunpack.c.l.b16 %v1626
        %v5484 = vunpack.c.l.b16 %v1627
        %v5485 = vunpack.c.l.b16 %v1628
        %v5486 = vunpack.c.l.b16 %v1629
        %v5487 = vunpack.c.l.b16 %v1630
        %v5488 = vunpack.c.l.b16 %v1631
        %v5489 = vunpack.c.l.b16 %v1632
        %v5490 = vunpack.c.l.b16 %v1633
        %v5491 = vunpack.c.l.b16 %v1634
        %v5492 = vunpack.c.l.b16 %v1635
        %v5493 = vunpack.c.l.b16 %v1636
        %v5494 = vunpack.c.l.b16 %v1637
        %v5495 = vunpack.c.l.b16 %v1638
        %v5496 = vunpack.c.l.b16 %v1639
        %v5497 = vunpack.c.l.b16 %v1640
        %v5498 = vunpack.c.l.b16 %v1641
        %v5499 = vunpack.c.l.b16 %v1642
        %v5500 = vunpack.c.l.b16 %v1643
        %v5501 = vunpack.c.l.b16 %v1644
        %v5502 = vunpack.c.l.b16 %v1645
        %v5503 = vunpack.c.l.b16 %v1646
        %v5504 = vunpack.c.l.b16 %v1647
        %v5505 = vunpack.c.l.b16 %v1648
        %v5506 = vunpack.c.l.b16 %v1649
        %v5507 = vunpack.c.l.b16 %v1650
        %v5508 = vunpack.c.l.b16 %v1651
        %v5509 = vunpack.c.l.b16 %v1652
        %v5510 = vunpack.c.l.b16 %v1653
        %v5511 = vunpack.c.l.b16 %v1654
        %v5512 = vunpack.c.l.b16 %v1655
        %v5513 = vunpack.c.l.b16 %v1656
        %v5514 = vunpack.c.l.b16 %v1657
        %v5515 = vunpack.c.l.b16 %v1658
        %v5516 = vunpack.c.l.b16 %v1659
        %v5517 = vunpack.c.l.b16 %v1660
        %v5518 = vunpack.c.l.b16 %v1661
        %v5519 = vunpack.c.l.b16 %v1662
        %v5520 = vunpack.c.l.b16 %v1663
        %v5521 = vunpack.c.l.b16 %v1664
        %v5522 = vunpack.c.l.b16 %v1665
        %v5523 = vunpack.c.l.b16 %v1666
        %v5524 = vunpack.c.l.b16 %v1667
        %v5525 = vunpack.c.l.b16 %v1668
        %v5526 = vunpack.c.l.b16 %v1669
        %v5527 = vunpack.c.l.b16 %v1670
        %v5528 = vunpack.c.l.b16 %v1671
        %v5529 = vunpack.c.l.b16 %v1672
        %v5530 = vunpack.c.l.b16 %v1673
        %v5531 = vunpack.c.l.b16 %v1674
        %v5532 = vunpack.c.l.b16 %v1675
        %v5533 = vunpack.c.l.b16 %v1676
        %v5534 = vunpack.c.l.b16 %v1677
        %v5535 = vunpack.c.l.b16 %v1678
        %v5536 = vunpack.c.l.b16 %v1679
        %v5537 = vunpack.c.l.b16 %v1680
        %v5538 = vunpack.c.l.b16 %v1681
        %v5539 = vunpack.c.l.b16 %v1682
        %v5540 = vunpack.c.l.b16 %v1683
        %v5541 = vunpack.c.l.b16 %v1684
        %v5542 = vunpack.c.l.b16 %v1685
        %v5543 = vunpack.c.l.b16 %v1686
        %v5544 = vunpack.c.l.b16 %v1687
        %v5545 = vunpack.c.l.b16 %v1688
        %v5546 = vunpack.c.l.b16 %v1689
        %v5547 = vunpack.c.l.b16 %v1690
        %v5548 = vunpack.c.l.b16 %v1691
        %v5549 = vunpack.c.l.b16 %v1692
        %v5550 = vunpack.c.l.b16 %v1693
        %v5551 = vunpack.c.l.b16 %v1694
        %v5552 = vunpack.c.l.b16 %v1695
        %v5553 = vunpack.c.l.b16 %v1696
        %v5554 = vunpack.c.l.b16 %v1697
        %v5555 = vunpack.c.l.b16 %v1698
        %v5556 = vunpack.c.l.b16 %v1699
        %v5557 = vunpack.c.l.b16 %v1700
        %v5558 = vunpack.c.l.b16 %v1701
        %v5559 = vunpack.c.l.b16 %v1702
        %v5560 = vunpack.c.l.b16 %v1703
        %v5561 = vunpack.c.l.b16 %v1704
        %v5562 = vunpack.c.l.b16 %v1705
        %v5563 = vunpack.c.l.b16 %v1706
        %v5564 = vunpack.c.l.b16 %v1707
        %v5565 = vunpack.c.l.b16 %v1708
        %v5566 = vunpack.c.l.b16 %v1709
        %v5567 = vunpack.c.l.b16 %v1710
        %v5568 = vunpack.c.l.b16 %v1711
        %v5569 = vunpack.c.l.b16 %v1712
        %v5570 = vunpack.c.l.b16 %v1713
        %v5571 = vunpack.c.l.b16 %v1714
        %v5572 = vunpack.c.l.b16 %v1715
        %v5573 = vunpack.c.l.b16 %v1716
        %v5574 = vunpack.c.l.b16 %v1717
        %v5575 = vunpack.c.l.b16 %v1718
        %v5576 = vunpack.c.l.b16 %v1719
        %v5577 = vunpack.c.l.b16 %v1720
        %v5578 = vunpack.c.l.b16 %v1721
        %v5579 = vunpack.c.l.b16 %v1722
        %v5580 = vunpack.c.l.b16 %v1723
        %v5581 = vunpack.c.l.b16 %v1724
        %v5582 = vunpack.c.l.b16 %v1725
        %v5583 = vunpack.c.l.b16 %v1726
        %v5584 = vunpack.c.l.b16 %v1727
        %v5585 = vunpack.c.l.b16 %v1728
        %v5586 = vunpack.c.l.b16 %v1729
        %v5587 = vunpack.c.l.b16 %v1730
        %v5588 = vunpack.c.l.b16 %v1731
        %v5589 = vunpack.c.l.b16 %v1732
        %v5590 = vunpack.c.l.b16 %v1733
        %v5591 = vunpack.c.l.b16 %v1734
        %v5592 = vunpack.c.l.b16 %v1735
        %v5593 = vunpack.c.l.b16 %v1736
        %v5594 = vunpack.c.l.b16 %v1737
        %v5595 = vunpack.c.l.b16 %v1738
        %v5596 = vunpack.c.l.b16 %v1739
        %v5597 = vunpack.c.l.b16 %v1740
        %v5598 = vunpack.c.l.b16 %v1741
        %v5599 = vunpack.c.l.b16 %v1742
        %v5600 = vunpack.c.l.b16 %v1743
        %v5601 = vunpack.c.l.b16 %v1744
        %v5602 = vunpack.c.l.b16 %v1745
        %v5603 = vunpack.c.l.b16 %v1746
        %v5604 = vunpack.c.l.b16 %v1747
        %v5605 = vunpack.c.l.b16 %v1748
        %v5606 = vunpack.c.l.b16 %v1749
        %v5607 = vunpack.c.l.b16 %v1750
        %v5608 = vunpack.c.l.b16 %v1751
        %v5609 = vunpack.c.l.b16 %v1752
        %v5610 = vunpack.c.l.b16 %v1753
        %v5611 = vunpack.c.l.b16 %v1754
        %v5612 = vunpack.c.l.b16 %v1755
        %v5613 = vunpack.c.l.b16 %v1756
        %v5614 = vunpack.c.l.b16 %v1757
        %v5615 = vunpack.c.l.b16 %v1758
        %v5616 = vunpack.c.l.b16 %v1759
        %v5617 = vunpack.c.l.b16 %v1760
        %v5618 = vunpack.c.l.b16 %v1761
        %v5619 = vunpack.c.l.b16 %v1762
        %v5620 = vunpack.c.l.b16 %v1763
        %v5621 = vunpack.c.l.b16 %v1764
        %v5622 = vunpack.c.l.b16 %v1765
        %v5623 = vunpack.c.l.b16 %v1766
        %v5624 = vunpack.c.l.b16 %v1767
        %v5625 = vunpack.c.l.b16 %v1768
        %v5626 = vunpack.c.l.b16 %v1769
        %v5627 = vunpack.c.l.b16 %v1770
        %v5628 = vunpack.c.l.b16 %v1771
        %v5629 = vunpack.c.l.b16 %v1772
        %v5630 = vunpack.c.l.b16 %v1773
        %v5631 = vunpack.c.l.b16 %v1774
        %v5632 = vunpack.c.l.b16 %v1775
        %v5633 = vunpack.c.l.b16 %v1776
        %v5634 = vunpack.c.l.b16 %v1777
        %v5635 = vunpack.c.l.b16 %v1778
        %v5636 = vunpack.c.l.b16 %v1779
        %v5637 = vunpack.c.l.b16 %v1780
        %v5638 = vunpack.c.l.b16 %v1781
        %v5639 = vunpack.c.l.b16 %v1782
        %v5640 = vunpack.c.l.b16 %v1783
        %v5641 = vunpack.c.l.b16 %v1784
        %v5642 = vunpack.c.l.b16 %v1785
        %v5643 = vunpack.c.l.b16 %v1786
        %v5644 = vunpack.c.l.b16 %v1787
        %v5645 = vunpack.c.l.b16 %v1788
        %v5646 = vunpack.c.l.b16 %v1789
        %v5647 = vunpack.c.l.b16 %v1790
        %v5648 = vunpack.c.l.b16 %v1791
        %v5649 = vunpack.c.l.b16 %v1792
        %v5650 = vunpack.c.l.b16 %v1793
        %v5651 = vunpack.c.l.b16 %v1794
        %v5652 = vunpack.c.l.b16 %v1795
        %v5653 = vunpack.c.l.b16 %v1796
        %v5654 = vunpack.c.l.b16 %v1797
        %v5655 = vunpack.c.l.b16 %v1798
        %v5656 = vunpack.c.l.b16 %v1799
        %v5657 = vunpack.c.l.b16 %v1800
        %v5658 = vunpack.c.l.b16 %v1801
        %v5659 = vunpack.c.l.b16 %v1802
        %v5660 = vunpack.c.l.b16 %v1803
        %v5661 = vunpack.c.l.b16 %v1804
        %v5662 = vunpack.c.l.b16 %v1805
        %v5663 = vunpack.c.l.b16 %v1806
        %v5664 = vunpack.c.l.b16 %v1807
        %v5665 = vunpack.c.l.b16 %v1808
        %v5666 = vunpack.c.l.b16 %v1809
        %v5667 = vunpack.c.l.b16 %v1810
        %v5668 = vunpack.c.l.b16 %v1811
        %v5669 = vunpack.c.l.b16 %v1812
        %v5670 = vunpack.c.l.b16 %v1813
        %v5671 = vunpack.c.l.b16 %v1814
        %v5672 = vunpack.c.l.b16 %v1815
        %v5673 = vunpack.c.l.b16 %v1816
        %v5674 = vunpack.c.l.b16 %v1817
        %v5675 = vunpack.c.l.b16 %v1818
        %v5676 = vunpack.c.l.b16 %v1819
        %v5677 = vunpack.c.l.b16 %v1820
        %v5678 = vunpack.c.l.b16 %v1821
        %v5679 = vunpack.c.l.b16 %v1822
        %v5680 = vunpack.c.l.b16 %v1823
        %v5681 = vunpack.c.l.b16 %v1824
        %v5682 = vunpack.c.l.b16 %v1825
        %v5683 = vunpack.c.l.b16 %v1826
        %v5684 = vunpack.c.l.b16 %v1827
        %v5685 = vunpack.c.l.b16 %v1828
        %v5686 = vunpack.c.l.b16 %v1829
        %v5687 = vunpack.c.l.b16 %v1830
        %v5688 = vunpack.c.l.b16 %v1831
        %v5689 = vunpack.c.l.b16 %v1832
        %v5690 = vunpack.c.l.b16 %v1833
        %v5691 = vunpack.c.l.b16 %v1834
        %v5692 = vunpack.c.l.b16 %v1835
        %v5693 = vunpack.c.l.b16 %v1836
        %v5694 = vunpack.c.l.b16 %v1837
        %v5695 = vunpack.c.l.b16 %v1838
        %v5696 = vunpack.c.l.b16 %v1839
        %v5697 = vunpack.c.l.b16 %v1840
        %v5698 = vunpack.c.l.b16 %v1841
        %v5699 = vunpack.c.l.b16 %v1842
        %v5700 = vunpack.c.l.b16 %v1843
        %v5701 = vunpack.c.l.b16 %v1844
        %v5702 = vunpack.c.l.b16 %v1845
        %v5703 = vunpack.c.l.b16 %v1846
        %v5704 = vunpack.c.l.b16 %v1847
        %v5705 = vunpack.c.l.b16 %v1848
        %v5706 = vunpack.c.l.b16 %v1849
        %v5707 = vunpack.c.l.b16 %v1850
        %v5708 = vunpack.c.l.b16 %v1851
        %v5709 = vunpack.c.l.b16 %v1852
        %v5710 = vunpack.c.l.b16 %v1853
        %v5711 = vunpack.c.l.b16 %v1854
        %v5712 = vunpack.c.l.b16 %v1855
        %v5713 = vunpack.c.l.b16 %v1856
        %v5714 = vunpack.c.l.b16 %v1857
        %v5715 = vunpack.c.l.b16 %v1858
        %v5716 = vunpack.c.l.b16 %v1859
        %v5717 = vunpack.c.l.b16 %v1860
        %v5718 = vunpack.c.l.b16 %v1861
        %v5719 = vunpack.c.l.b16 %v1862
        %v5720 = vunpack.c.l.b16 %v1863
        %v5721 = vunpack.c.l.b16 %v1864
        %v5722 = vunpack.c.l.b16 %v1865
        %v5723 = vunpack.c.l.b16 %v1866
        %v5724 = vunpack.c.l.b16 %v1867
        %v5725 = vunpack.c.l.b16 %v1868
        %v5726 = vunpack.c.l.b16 %v1869
        %v5727 = vunpack.c.l.b16 %v1870
        %v5728 = vunpack.c.l.b16 %v1871
        %v5729 = vunpack.c.l.b16 %v1872
        %v5730 = vunpack.c.l.b16 %v1873
        %v5731 = vunpack.c.l.b16 %v1874
        %v5732 = vunpack.c.l.b16 %v1875
        %v5733 = vunpack.c.l.b16 %v1876
        %v5734 = vunpack.c.l.b16 %v1877
        %v5735 = vunpack.c.l.b16 %v1878
        %v5736 = vunpack.c.l.b16 %v1879
        %v5737 = vunpack.c.l.b16 %v1880
        %v5738 = vunpack.c.l.b16 %v1881
        %v5739 = vunpack.c.l.b16 %v1882
        %v5740 = vunpack.c.l.b16 %v1883
        %v5741 = vunpack.c.l.b16 %v1884
        %v5742 = vunpack.c.l.b16 %v1885
        %v5743 = vunpack.c.l.b16 %v1886
        %v5744 = vunpack.c.l.b16 %v1887
        %v5745 = vunpack.c.l.b16 %v1888
        %v5746 = vunpack.c.l.b16 %v1889
        %v5747 = vunpack.c.l.b16 %v1890
        %v5748 = vunpack.c.l.b16 %v1891
        %v5749 = vunpack.c.l.b16 %v1892
        %v5750 = vunpack.c.l.b16 %v1893
        %v5751 = vunpack.c.l.b16 %v1894
        %v5752 = vunpack.c.l.b16 %v1895
        %v5753 = vunpack.c.l.b16 %v1896
        %v5754 = vunpack.c.l.b16 %v1897
        %v5755 = vunpack.c.l.b16 %v1898
        %v5756 = vunpack.c.l.b16 %v1899
        %v5757 = vunpack.c.l.b16 %v1900
        %v5758 = vunpack.c.l.b16 %v1901
        %v5759 = vunpack.c.l.b16 %v1902
        %v5760 = vunpack.c.l.b16 %v1903
        %v5761 = vunpack.c.l.b16 %v1904
        %v5762 = vunpack.c.l.b16 %v1905
        %v5763 = vunpack.c.l.b16 %v1906
        %v5764 = vunpack.c.l.b16 %v1907
        %v5765 = vunpack.c.l.b16 %v1908
        %v5766 = vunpack.c.l.b16 %v1909
        %v5767 = vunpack.c.l.b16 %v1910
        %v5768 = vunpack.c.l.b16 %v1911
        %v5769 = vunpack.c.l.b16 %v1912
        %v5770 = vunpack.c.l.b16 %v1913
        %v5771 = vunpack.c.l.b16 %v1914
        %v5772 = vunpack.c.l.b16 %v1915
        %v5773 = vunpack.c.l.b16 %v1916
        %v5774 = vunpack.c.l.b16 %v1917
        %v5775 = vunpack.c.l.b16 %v1918
        %v5776 = vunpack.c.l.b16 %v1919
        %v5777 = vunpack.c.l.b16 %v1920
        %v5778 = vunpack.c.l.b16 %v1921
        %v5779 = vunpack.c.l.b16 %v1922
        %v5780 = vunpack.c.l.b16 %v1923
        %v5781 = vunpack.c.l.b16 %v1924
        %v5782 = vunpack.c.l.b16 %v1925
        %v5783 = vunpack.c.l.b16 %v1926
        %v5784 = vunpack.c.l.b16 %v1927
        %v5785 = vunpack.c.l.b16 %v1928
        %v5786 = vunpack.c.l.b16 %v1929
        %v5787 = vunpack.c.l.b16 %v1930
        %v5788 = vunpack.c.l.b16 %v1931
        %v5789 = vunpack.c.l.b16 %v1932
        %v5790 = vunpack.c.l.b16 %v1933
        %v5791 = vunpack.c.l.b16 %v1934
        %v5792 = vunpack.c.l.b16 %v1935
        %v5793 = vunpack.c.l.b16 %v1936
        %v5794 = vunpack.c.l.b16 %v1937
        %v5795 = vunpack.c.l.b16 %v1938
        %v5796 = vunpack.c.l.b16 %v1939
        %v5797 = vunpack.c.l.b16 %v1940
        %v5798 = vunpack.c.l.b16 %v1941
        %v5799 = vunpack.c.l.b16 %v1942
        %v5800 = vunpack.c.l.b16 %v1943
        %v5801 = vunpack.c.l.b16 %v1944
        %v5802 = vunpack.c.l.b16 %v1945
        %v5803 = vunpack.c.l.b16 %v1946
        %v5804 = vunpack.c.l.b16 %v1947
        %v5805 = vunpack.c.l.b16 %v1948
        %v5806 = vunpack.c.l.b16 %v1949
        %v5807 = vunpack.c.l.b16 %v1950
        %v5808 = vunpack.c.l.b16 %v1951
        %v5809 = vunpack.c.l.b16 %v1952
        %v5810 = vunpack.c.l.b16 %v1953
        %v5811 = vunpack.c.l.b16 %v1954
        %v5812 = vunpack.c.l.b16 %v1955
        %v5813 = vunpack.c.l.b16 %v1956
        %v5814 = vunpack.c.l.b16 %v1957
        %v5815 = vunpack.c.l.b16 %v1958
        %v5816 = vunpack.c.l.b16 %v1959
        %v5817 = vunpack.c.l.b16 %v1960
        %v5818 = vunpack.c.l.b16 %v1961
        %v5819 = vunpack.c.l.b16 %v1962
        %v5820 = vunpack.c.l.b16 %v1963
        %v5821 = vunpack.c.l.b16 %v1964
        %v5822 = vunpack.c.l.b16 %v1965
        %v5823 = vunpack.c.l.b16 %v1966
        %v5824 = vunpack.c.l.b16 %v1967
        %v5825 = vunpack.c.l.b16 %v1968
        %v5826 = vunpack.c.l.b16 %v1969
        %v5827 = vunpack.c.l.b16 %v1970
        %v5828 = vunpack.c.l.b16 %v1971
        %v5829 = vunpack.c.l.b16 %v1972
        %v5830 = vunpack.c.l.b16 %v1973
        %v5831 = vunpack.c.l.b16 %v1974
        %v5832 = vunpack.c.l.b16 %v1975
        %v5833 = vunpack.c.l.b16 %v1976
        %v5834 = vunpack.c.l.b16 %v1977
        %v5835 = vunpack.c.l.b16 %v1978
        %v5836 = vunpack.c.l.b16 %v1979
        %v5837 = vunpack.c.l.b16 %v1980
        %v5838 = vunpack.c.l.b16 %v1981
        %v5839 = vunpack.c.l.b16 %v1982
        %v5840 = vunpack.c.l.b16 %v1983
        %v5841 = vunpack.c.l.b16 %v1984
        %v5842 = vunpack.c.l.b16 %v1985
        %v5843 = vunpack.c.l.b16 %v1986
        %v5844 = vunpack.c.l.b16 %v1987
        %v5845 = vunpack.c.l.b16 %v1988
        %v5846 = vunpack.c.l.b16 %v1989
        %v5847 = vunpack.c.l.b16 %v1990
        %v5848 = vunpack.c.l.b16 %v1991
        %v5849 = vunpack.c.l.b16 %v1992
        %v5850 = vunpack.c.l.b16 %v1993
        %v5851 = vunpack.c.l.b16 %v1994
        %v5852 = vunpack.c.l.b16 %v1995
        %v5853 = vunpack.c.l.b16 %v1996
        %v5854 = vunpack.c.l.b16 %v1997
        %v5855 = vunpack.c.l.b16 %v1998
        %v5856 = vunpack.c.l.b16 %v1999
        %v5857 = vunpack.c.l.b16 %v2000
        %v5858 = vunpack.c.l.b16 %v2001
        %v5859 = vunpack.c.l.b16 %v2002
        %v5860 = vunpack.c.l.b16 %v2003
        %v5861 = vunpack.c.l.b16 %v2004
        %v5862 = vunpack.c.l.b16 %v2005
        %v5863 = vunpack.c.l.b16 %v2006
        %v5864 = vunpack.c.l.b16 %v2007
        %v5865 = vunpack.c.l.b16 %v2008
        %v5866 = vunpack.c.l.b16 %v2009
        %v5867 = vunpack.c.l.b16 %v2010
        %v5868 = vunpack.c.l.b16 %v2011
        %v5869 = vunpack.c.l.b16 %v2012
        %v5870 = vunpack.c.l.b16 %v2013
        %v5871 = vunpack.c.l.b16 %v2014
        %v5872 = vunpack.c.l.b16 %v2015
        %v5873 = vunpack.c.l.b16 %v2016
        %v5874 = vunpack.c.l.b16 %v2017
        %v5875 = vunpack.c.l.b16 %v2018
        %v5876 = vunpack.c.l.b16 %v2019
        %v5877 = vunpack.c.l.b16 %v2020
        %v5878 = vunpack.c.l.b16 %v2021
        %v5879 = vunpack.c.l.b16 %v2022
        %v5880 = vunpack.c.l.b16 %v2023
        %v5881 = vunpack.c.l.b16 %v2024
        %v5882 = vunpack.c.l.b16 %v2025
        %v5883 = vunpack.c.l.b16 %v2026
        %v5884 = vunpack.c.l.b16 %v2027
        %v5885 = vunpack.c.l.b16 %v2028
        %v5886 = vunpack.c.l.b16 %v2029
        %v5887 = vunpack.c.l.b16 %v2030
        %v5888 = vunpack.c.l.b16 %v2031
        %v5889 = vunpack.c.l.b16 %v2032
        %v5890 = vunpack.c.l.b16 %v2033
        %v5891 = vunpack.c.l.b16 %v2034
        %v5892 = vunpack.c.l.b16 %v2035
        %v5893 = vunpack.c.l.b16 %v2036
        %v5894 = vunpack.c.l.b16 %v2037
        %v5895 = vunpack.c.l.b16 %v2038
        %v5896 = vunpack.c.l.b16 %v2039
        %v5897 = vunpack.c.l.b16 %v2040
        %v5898 = vunpack.c.l.b16 %v2041
        %v5899 = vunpack.c.l.b16 %v2042
        %v5900 = vunpack.c.l.b16 %v2043
        %v5901 = vunpack.c.l.b16 %v2044
        %v5902 = vunpack.c.l.b16 %v2045
        %v5903 = vunpack.c.l.b16 %v2046
        %v5904 = vunpack.c.l.b16 %v2047
        %v5905 = vunpack.c.l.b16 %v2048
        %v5906 = vunpack.c.l.b16 %v2049
        %v5907 = vunpack.c.l.b16 %v2050
        %v5908 = vunpack.c.l.b16 %v2051
        %v5909 = vunpack.c.l.b16 %v2052
        %v5910 = vunpack.c.l.b16 %v2053
        %v5911 = vunpack.c.l.b16 %v2054
        %v5912 = vunpack.c.l.b16 %v2055
        %v5913 = vunpack.c.l.b16 %v2056
        %v5914 = vunpack.c.l.b16 %v2057
        %v5915 = vunpack.c.l.b16 %v2058
        %v5916 = vunpack.c.l.b16 %v2059
        %v5917 = vunpack.c.l.b16 %v2060
        %v5918 = vunpack.c.l.b16 %v2061
        %v5919 = vunpack.c.l.b16 %v2062
        %v5920 = vunpack.c.l.b16 %v2063
        %v5921 = vunpack.c.l.b16 %v2064
        %v5922 = vunpack.c.l.b16 %v2065
        %v5923 = vunpack.c.l.b16 %v2066
        %v5924 = vunpack.c.l.b16 %v2067
        %v5925 = vunpack.c.l.b16 %v2068
        %v5926 = vunpack.c.l.b16 %v2069
        %v5927 = vunpack.c.l.b16 %v2070
        %v5928 = vunpack.c.l.b16 %v2071
        %v5929 = vunpack.c.l.b16 %v2072
        %v5930 = vunpack.c.l.b16 %v2073
        %v5931 = vunpack.c.l.b16 %v2074
        %v5932 = vunpack.c.l.b16 %v2075
        %v5933 = vunpack.c.l.b16 %v2076
        %v5934 = vunpack.c.l.b16 %v2077
        %v5935 = vunpack.c.l.b16 %v2078
        %v5936 = vunpack.c.l.b16 %v2079
        %v5937 = vunpack.c.l.b16 %v2080
        %v5938 = vunpack.c.l.b16 %v2081
        %v5939 = vunpack.c.l.b16 %v2082
        %v5940 = vunpack.c.l.b16 %v2083
        %v5941 = vunpack.c.l.b16 %v2084
        %v5942 = vunpack.c.l.b16 %v2085
        %v5943 = vunpack.c.l.b16 %v2086
        %v5944 = vunpack.c.l.b16 %v2087
        %v5945 = vunpack.c.l.b16 %v2088
        %v5946 = vunpack.c.l.b16 %v2089
        %v5947 = vunpack.c.l.b16 %v2090
        %v5948 = vunpack.c.l.b16 %v2091
        %v5949 = vunpack.c.l.b16 %v2092
        %v5950 = vunpack.c.l.b16 %v2093
        %v5951 = vunpack.c.l.b16 %v2094
        %v5952 = vunpack.c.l.b16 %v2095
        %v5953 = vunpack.c.l.b16 %v2096
        %v5954 = vunpack.c.l.b16 %v2097
        %v5955 = vunpack.c.l.b16 %v2098
        %v5956 = vunpack.c.l.b16 %v2099
        %v5957 = vunpack.c.l.b16 %v2100
        %v5958 = vunpack.c.l.b16 %v2101
        %v5959 = vunpack.c.l.b16 %v2102
        %v5960 = vunpack.c.l.b16 %v2103
        %v5961 = vunpack.c.l.b16 %v2104
        %v5962 = vunpack.c.l.b16 %v2105
        %v5963 = vunpack.c.l.b16 %v2106
        %v5964 = vunpack.c.l.b16 %v2107
        %v5965 = vunpack.c.l.b16 %v2108
        %v5966 = vunpack.c.l.b16 %v2109
        %v5967 = vunpack.c.l.b16 %v2110
        %v5968 = vunpack.c.l.b16 %v2111
        %v5969 = vunpack.c.l.b16 %v2112
        %v5970 = vunpack.c.l.b16 %v2113
        %v5971 = vunpack.c.l.b16 %v2114
        %v5972 = vunpack.c.l.b16 %v2115
        %v5973 = vunpack.c.l.b16 %v2116
        %v5974 = vunpack.c.l.b16 %v2117
        %v5975 = vunpack.c.l.b16 %v2118
        %v5976 = vunpack.c.l.b16 %v2119
        %v5977 = vunpack.c.l.b16 %v2120
        %v5978 = vunpack.c.l.b16 %v2121
        %v5979 = vunpack.c.l.b16 %v2122
        %v5980 = vunpack.c.l.b16 %v2123
        %v5981 = vunpack.c.l.b16 %v2124
        %v5982 = vunpack.c.l.b16 %v2125
        %v5983 = vunpack.c.l.b16 %v2126
        %v5984 = vunpack.c.l.b16 %v2127
        %v5985 = vunpack.c.l.b16 %v2128
        %v5986 = vunpack.c.l.b16 %v2129
        %v5987 = vunpack.c.l.b16 %v2130
        %v5988 = vunpack.c.l.b16 %v2131
        %v5989 = vunpack.c.l.b16 %v2132
        %v5990 = vunpack.c.l.b16 %v2133
        %v5991 = vunpack.c.l.b16 %v2134
        %v5992 = vunpack.c.l.b16 %v2135
        %v5993 = vunpack.c.l.b16 %v2136
        %v5994 = vunpack.c.l.b16 %v2137
        %v5995 = vunpack.c.l.b16 %v2138
        %v5996 = vunpack.c.l.b16 %v2139
        %v5997 = vunpack.c.l.b16 %v2140
        %v5998 = vunpack.c.l.b16 %v2141
        %v5999 = vunpack.c.l.b16 %v2142
        %v6000 = vunpack.c.l.b16 %v2143
        %v6001 = vunpack.c.l.b16 %v2144
        %v6002 = vunpack.c.l.b16 %v2145
        %v6003 = vunpack.c.l.b16 %v2146
        %v6004 = vunpack.c.l.b16 %v2147
        %v6005 = vunpack.c.l.b16 %v2148
        %v6006 = vunpack.c.l.b16 %v2149
        %v6007 = vunpack.c.l.b16 %v2150
        %v6008 = vunpack.c.l.b16 %v2151
        %v6009 = vunpack.c.l.b16 %v2152
        %v6010 = vunpack.c.l.b16 %v2153
        %v6011 = vunpack.c.l.b16 %v2154
        %v6012 = vunpack.c.l.b16 %v2155
        %v6013 = vunpack.c.l.b16 %v2156
        %v6014 = vunpack.c.l.b16 %v2157
        %v6015 = vunpack.c.l.b16 %v2158
        %v6016 = vunpack.c.l.b16 %v2159
        %v6017 = vunpack.c.l.b16 %v2160
        %v6018 = vunpack.c.l.b16 %v2161
        %v6019 = vunpack.c.l.b16 %v2162
        %v6020 = vunpack.c.l.b16 %v2163
        %v6021 = vunpack.c.l.b16 %v2164
        %v6022 = vunpack.c.l.b16 %v2165
        %v6023 = vunpack.c.l.b16 %v2166
        %v6024 = vunpack.c.l.b16 %v2167
        %v6025 = vunpack.c.l.b16 %v2168
        %v6026 = vunpack.c.l.b16 %v2169
        %v6027 = vunpack.c.l.b16 %v2170
        %v6028 = vunpack.c.l.b16 %v2171
        %v6029 = vunpack.c.l.b16 %v2172
        %v6030 = vunpack.c.l.b16 %v2173
        %v6031 = vunpack.c.l.b16 %v2174
        %v6032 = vunpack.c.l.b16 %v2175
        %v6033 = vunpack.c.l.b16 %v2176
        %v6034 = vunpack.c.l.b16 %v2177
        %v6035 = vunpack.c.l.b16 %v2178
        %v6036 = vunpack.c.l.b16 %v2179
        %v6037 = vunpack.c.l.b16 %v2180
        %v6038 = vunpack.c.l.b16 %v2181
        %v6039 = vunpack.c.l.b16 %v2182
        %v6040 = vunpack.c.l.b16 %v2183
        %v6041 = vunpack.c.l.b16 %v2184
        %v6042 = vunpack.c.l.b16 %v2185
        %v6043 = vunpack.c.l.b16 %v2186
        %v6044 = vunpack.c.l.b16 %v2187
        %v6045 = vunpack.c.l.b16 %v2188
        %v6046 = vunpack.c.l.b16 %v2189
        %v6047 = vunpack.c.l.b16 %v2190
        %v6048 = vunpack.c.l.b16 %v2191
        %v6049 = vunpack.c.l.b16 %v2192
        %v6050 = vunpack.c.l.b16 %v2193
        %v6051 = vunpack.c.l.b16 %v2194
        %v6052 = vunpack.c.l.b16 %v2195
        %v6053 = vunpack.c.l.b16 %v2196
        %v6054 = vunpack.c.l.b16 %v2197
        %v6055 = vunpack.c.l.b16 %v2198
        %v6056 = vunpack.c.l.b16 %v2199
        %v6057 = vunpack.c.l.b16 %v2200
        %v6058 = vunpack.c.l.b16 %v2201
        %v6059 = vunpack.c.l.b16 %v2202
        %v6060 = vunpack.c.l.b16 %v2203
        %v6061 = vunpack.c.l.b16 %v2204
        %v6062 = vunpack.c.l.b16 %v2205
        %v6063 = vunpack.c.l.b16 %v2206
        %v6064 = vunpack.c.l.b16 %v2207
        %v6065 = vunpack.c.l.b16 %v2208
        %v6066 = vunpack.c.l.b16 %v2209
        %v6067 = vunpack.c.l.b16 %v2210
        %v6068 = vunpack.c.l.b16 %v2211
        %v6069 = vunpack.c.l.b16 %v2212
        %v6070 = vunpack.c.l.b16 %v2213
        %v6071 = vunpack.c.l.b16 %v2214
        %v6072 = vunpack.c.l.b16 %v2215
        %v6073 = vunpack.c.l.b16 %v2216
        %v6074 = vunpack.c.l.b16 %v2217
        %v6075 = vunpack.c.l.b16 %v2218
        %v6076 = vunpack.c.l.b16 %v2219
        %v6077 = vunpack.c.l.b16 %v2220
        %v6078 = vunpack.c.l.b16 %v2221
        %v6079 = vunpack.c.l.b16 %v2222
        %v6080 = vunpack.c.l.b16 %v2223
        %v6081 = vunpack.c.l.b16 %v2224
        %v6082 = vunpack.c.l.b16 %v2225
        %v6083 = vunpack.c.l.b16 %v2226
        %v6084 = vunpack.c.l.b16 %v2227
        %v6085 = vunpack.c.l.b16 %v2228
        %v6086 = vunpack.c.l.b16 %v2229
        %v6087 = vunpack.c.l.b16 %v2230
        %v6088 = vunpack.c.l.b16 %v2231
        %v6089 = vunpack.c.l.b16 %v2232
        %v6090 = vunpack.c.l.b16 %v2233
        %v6091 = vunpack.c.l.b16 %v2234
        %v6092 = vunpack.c.l.b16 %v2235
        %v6093 = vunpack.c.l.b16 %v2236
        %v6094 = vunpack.c.l.b16 %v2237
        %v6095 = vunpack.c.l.b16 %v2238
        %v6096 = vunpack.c.l.b16 %v2239
        %v6097 = vunpack.c.l.b16 %v2240
        %v6098 = vunpack.c.l.b16 %v2241
        %v6099 = vunpack.c.l.b16 %v2242
        %v6100 = vunpack.c.l.b16 %v2243
        %v6101 = vunpack.c.l.b16 %v2244
        %v6102 = vunpack.c.l.b16 %v2245
        %v6103 = vunpack.c.l.b16 %v2246
        %v6104 = vunpack.c.l.b16 %v2247
        %v6105 = vunpack.c.l.b16 %v2248
        %v6106 = vunpack.c.l.b16 %v2249
        %v6107 = vunpack.c.l.b16 %v2250
        %v6108 = vunpack.c.l.b16 %v2251
        %v6109 = vunpack.c.l.b16 %v2252
        %v6110 = vunpack.c.l.b16 %v2253
        %v6111 = vunpack.c.l.b16 %v2254
        %v6112 = vunpack.c.l.b16 %v2255
        %v6113 = vunpack.c.l.b16 %v2256
        %v6114 = vunpack.c.l.b16 %v2257
        %v6115 = vunpack.c.l.b16 %v2258
        %v6116 = vunpack.c.l.b16 %v2259
        %v6117 = vunpack.c.l.b16 %v2260
        %v6118 = vunpack.c.l.b16 %v2261
        %v6119 = vunpack.c.l.b16 %v2262
        %v6120 = vunpack.c.l.b16 %v2263
        %v6121 = vunpack.c.l.b16 %v2264
        %v6122 = vunpack.c.l.b16 %v2265
        %v6123 = vunpack.c.l.b16 %v2266
        %v6124 = vunpack.c.l.b16 %v2267
        %v6125 = vunpack.c.l.b16 %v2268
        %v6126 = vunpack.c.l.b16 %v2269
        %v6127 = vunpack.c.l.b16 %v2270
        %v6128 = vunpack.c.l.b16 %v2271
        %v6129 = vunpack.c.l.b16 %v2272
        %v6130 = vunpack.c.l.b16 %v2273
        %v6131 = vunpack.c.l.b16 %v2274
        %v6132 = vunpack.c.l.b16 %v2275
        %v6133 = vunpack.c.l.b16 %v2276
        %v6134 = vunpack.c.l.b16 %v2277
        %v6135 = vunpack.c.l.b16 %v2278
        %v6136 = vunpack.c.l.b16 %v2279
        %v6137 = vunpack.c.l.b16 %v2280
        %v6138 = vunpack.c.l.b16 %v2281
        %v6139 = vunpack.c.l.b16 %v2282
        %v6140 = vunpack.c.l.b16 %v2283
        %v6141 = vunpack.c.l.b16 %v2284
        %v6142 = vunpack.c.l.b16 %v2285
        %v6143 = vunpack.c.l.b16 %v2286
        %v6144 = vunpack.c.l.b16 %v2287
        %v6145 = vunpack.c.l.b16 %v2288
        %v6146 = vunpack.c.l.b16 %v2289
        %v6147 = vunpack.c.l.b16 %v2290
        %v6148 = vunpack.c.l.b16 %v2291
        %v6149 = vunpack.c.l.b16 %v2292
        %v6150 = vunpack.c.l.b16 %v2293
        %v6151 = vunpack.c.l.b16 %v2294
        %v6152 = vunpack.c.l.b16 %v2295
        %v6153 = vunpack.c.l.b16 %v2296
        %v6154 = vunpack.c.l.b16 %v2297
        %v6155 = vunpack.c.l.b16 %v2298
        %v6156 = vunpack.c.l.b16 %v2299
        %v6157 = vunpack.c.l.b16 %v2300
        %v6158 = vunpack.c.l.b16 %v2301
        %v6159 = vunpack.c.l.b16 %v2302
        %v6160 = vunpack.c.l.b16 %v2303
        %v6161 = vunpack.c.l.b16 %v2304
        %v6162 = vunpack.c.l.b16 %v2305
        %v6163 = vunpack.c.l.b16 %v2306
        %v6164 = vunpack.c.l.b16 %v2307
        %v6165 = vunpack.c.l.b16 %v2308
        %v6166 = vunpack.c.l.b16 %v2309
        %v6167 = vunpack.c.l.b16 %v2310
        %v6168 = vunpack.c.l.b16 %v2311
        %v6169 = vunpack.c.l.b16 %v2312
        %v6170 = vunpack.c.l.b16 %v2313
        %v6171 = vunpack.c.l.b16 %v2314
        %v6172 = vunpack.c.l.b16 %v2315
        %v6173 = vunpack.c.l.b16 %v2316
        %v6174 = vunpack.c.l.b16 %v2317
        %v6175 = vunpack.c.l.b16 %v2318
        %v6176 = vunpack.c.l.b16 %v2319
        %v6177 = vpack.c.b16 %v4610, %v4609
        %v6178 = vpack.c.b16 %v4612, %v4611
        %v6179 = vpack.c.b16 %v4614, %v4613
        %v6180 = vpack.c.b16 %v4616, %v4615
        %v6181 = vpack.c.b16 %v4618, %v4617
        %v6182 = vpack.c.b16 %v4620, %v4619
        %v6183 = vpack.c.b16 %v4622, %v4621
        %v6184 = vpack.c.b16 %v4624, %v4623
        %v6185 = vpack.c.b16 %v4626, %v4625
        %v6186 = vpack.c.b16 %v4628, %v4627
        %v6187 = vpack.c.b16 %v4630, %v4629
        %v6188 = vpack.c.b16 %v4632, %v4631
        %v6189 = vpack.c.b16 %v4634, %v4633
        %v6190 = vpack.c.b16 %v4636, %v4635
        %v6191 = vpack.c.b16 %v4638, %v4637
        %v6192 = vpack.c.b16 %v4640, %v4639
        %v6193 = vpack.c.b16 %v4642, %v4641
        %v6194 = vpack.c.b16 %v4644, %v4643
        %v6195 = vpack.c.b16 %v4646, %v4645
        %v6196 = vpack.c.b16 %v4648, %v4647
        %v6197 = vpack.c.b16 %v4650, %v4649
        %v6198 = vpack.c.b16 %v4652, %v4651
        %v6199 = vpack.c.b16 %v4654, %v4653
        %v6200 = vpack.c.b16 %v4656, %v4655
        %v6201 = vpack.c.b16 %v4658, %v4657
        %v6202 = vpack.c.b16 %v4660, %v4659
        %v6203 = vpack.c.b16 %v4662, %v4661
        %v6204 = vpack.c.b16 %v4664, %v4663
        %v6205 = vpack.c.b16 %v4666, %v4665
        %v6206 = vpack.c.b16 %v4668, %v4667
        %v6207 = vpack.c.b16 %v4670, %v4669
        %v6208 = vpack.c.b16 %v4672, %v4671
        %v6209 = vpack.c.b16 %v4674, %v4673
        %v6210 = vpack.c.b16 %v4676, %v4675
        %v6211 = vpack.c.b16 %v4678, %v4677
        %v6212 = vpack.c.b16 %v4680, %v4679
        %v6213 = vpack.c.b16 %v4682, %v4681
        %v6214 = vpack.c.b16 %v4684, %v4683
        %v6215 = vpack.c.b16 %v4686, %v4685
        %v6216 = vpack.c.b16 %v4688, %v4687
        %v6217 = vpack.c.b16 %v4690, %v4689
        %v6218 = vpack.c.b16 %v4692, %v4691
        %v6219 = vpack.c.b16 %v4694, %v4693
        %v6220 = vpack.c.b16 %v4696, %v4695
        %v6221 = vpack.c.b16 %v4698, %v4697
        %v6222 = vpack.c.b16 %v4700, %v4699
        %v6223 = vpack.c.b16 %v4702, %v4701
        %v6224 = vpack.c.b16 %v4704, %v4703
        %v6225 = vpack.c.b16 %v4706, %v4705
        %v6226 = vpack.c.b16 %v4708, %v4707
        %v6227 = vpack.c.b16 %v4710, %v4709
        %v6228 = vpack.c.b16 %v4712, %v4711
        %v6229 = vpack.c.b16 %v4714, %v4713
        %v6230 = vpack.c.b16 %v4716, %v4715
        %v6231 = vpack.c.b16 %v4718, %v4717
        %v6232 = vpack.c.b16 %v4720, %v4719
        %v6233 = vpack.c.b16 %v4722, %v4721
        %v6234 = vpack.c.b16 %v4724, %v4723
        %v6235 = vpack.c.b16 %v4726, %v4725
        %v6236 = vpack.c.b16 %v4728, %v4727
        %v6237 = vpack.c.b16 %v4730, %v4729
        %v6238 = vpack.c.b16 %v4732, %v4731
        %v6239 = vpack.c.b16 %v4734, %v4733
        %v6240 = vpack.c.b16 %v4736, %v4735
        %v6241 = vpack.c.b16 %v4738, %v4737
        %v6242 = vpack.c.b16 %v4740, %v4739
        %v6243 = vpack.c.b16 %v4742, %v4741
        %v6244 = vpack.c.b16 %v4744, %v4743
        %v6245 = vpack.c.b16 %v4746, %v4745
        %v6246 = vpack.c.b16 %v4748, %v4747
        %v6247 = vpack.c.b16 %v4750, %v4749
        %v6248 = vpack.c.b16 %v4752, %v4751
        %v6249 = vpack.c.b16 %v4754, %v4753
        %v6250 = vpack.c.b16 %v4756, %v4755
        %v6251 = vpack.c.b16 %v4758, %v4757
        %v6252 = vpack.c.b16 %v4760, %v4759
        %v6253 = vpack.c.b16 %v4762, %v4761
        %v6254 = vpack.c.b16 %v4764, %v4763
        %v6255 = vpack.c.b16 %v4766, %v4765
        %v6256 = vpack.c.b16 %v4768, %v4767
        %v6257 = vpack.c.b16 %v4770, %v4769
        %v6258 = vpack.c.b16 %v4772, %v4771
        %v6259 = vpack.c.b16 %v4774, %v4773
        %v6260 = vpack.c.b16 %v4776, %v4775
        %v6261 = vpack.c.b16 %v4778, %v4777
        %v6262 = vpack.c.b16 %v4780, %v4779
        %v6263 = vpack.c.b16 %v4782, %v4781
        %v6264 = vpack.c.b16 %v4784, %v4783
        %v6265 = vpack.c.b16 %v4786, %v4785
        %v6266 = vpack.c.b16 %v4788, %v4787
        %v6267 = vpack.c.b16 %v4790, %v4789
        %v6268 = vpack.c.b16 %v4792, %v4791
        %v6269 = vpack.c.b16 %v4794, %v4793
        %v6270 = vpack.c.b16 %v4796, %v4795
        %v6271 = vpack.c.b16 %v4798, %v4797
        %v6272 = vpack.c.b16 %v4800, %v4799
        %v6273 = vpack.c.b16 %v4802, %v4801
        %v6274 = vpack.c.b16 %v4804, %v4803
        %v6275 = vpack.c.b16 %v4806, %v4805
        %v6276 = vpack.c.b16 %v4808, %v4807
        %v6277 = vpack.c.b16 %v4810, %v4809
        %v6278 = vpack.c.b16 %v4812, %v4811
        %v6279 = vpack.c.b16 %v4814, %v4813
        %v6280 = vpack.c.b16 %v4816, %v4815
        %v6281 = vpack.c.b16 %v4818, %v4817
        %v6282 = vpack.c.b16 %v4820, %v4819
        %v6283 = vpack.c.b16 %v4822, %v4821
        %v6284 = vpack.c.b16 %v4824, %v4823
        %v6285 = vpack.c.b16 %v4826, %v4825
        %v6286 = vpack.c.b16 %v4828, %v4827
        %v6287 = vpack.c.b16 %v4830, %v4829
        %v6288 = vpack.c.b16 %v4832, %v4831
        %v6289 = vpack.c.b16 %v4834, %v4833
        %v6290 = vpack.c.b16 %v4836, %v4835
        %v6291 = vpack.c.b16 %v4838, %v4837
        %v6292 = vpack.c.b16 %v4840, %v4839
        %v6293 = vpack.c.b16 %v4842, %v4841
        %v6294 = vpack.c.b16 %v4844, %v4843
        %v6295 = vpack.c.b16 %v4846, %v4845
        %v6296 = vpack.c.b16 %v4848, %v4847
        %v6297 = vpack.c.b16 %v4850, %v4849
        %v6298 = vpack.c.b16 %v4852, %v4851
        %v6299 = vpack.c.b16 %v4854, %v4853
        %v6300 = vpack.c.b16 %v4856, %v4855
        %v6301 = vpack.c.b16 %v4858, %v4857
        %v6302 = vpack.c.b16 %v4860, %v4859
        %v6303 = vpack.c.b16 %v4862, %v4861
        %v6304 = vpack.c.b16 %v4864, %v4863
        %v6305 = vpack.c.b16 %v4866, %v4865
        %v6306 = vpack.c.b16 %v4868, %v4867
        %v6307 = vpack.c.b16 %v4870, %v4869
        %v6308 = vpack.c.b16 %v4872, %v4871
        %v6309 = vpack.c.b16 %v4874, %v4873
        %v6310 = vpack.c.b16 %v4876, %v4875
        %v6311 = vpack.c.b16 %v4878, %v4877
        %v6312 = vpack.c.b16 %v4880, %v4879
        %v6313 = vpack.c.b16 %v4882, %v4881
        %v6314 = vpack.c.b16 %v4884, %v4883
        %v6315 = vpack.c.b16 %v4886, %v4885
        %v6316 = vpack.c.b16 %v4888, %v4887
        %v6317 = vpack.c.b16 %v4890, %v4889
        %v6318 = vpack.c.b16 %v4892, %v4891
        %v6319 = vpack.c.b16 %v4894, %v4893
        %v6320 = vpack.c.b16 %v4896, %v4895
        %v6321 = vpack.c.b16 %v4898, %v4897
        %v6322 = vpack.c.b16 %v4900, %v4899
        %v6323 = vpack.c.b16 %v4902, %v4901
        %v6324 = vpack.c.b16 %v4904, %v4903
        %v6325 = vpack.c.b16 %v4906, %v4905
        %v6326 = vpack.c.b16 %v4908, %v4907
        %v6327 = vpack.c.b16 %v4910, %v4909
        %v6328 = vpack.c.b16 %v4912, %v4911
        %v6329 = vpack.c.b16 %v4914, %v4913
        %v6330 = vpack.c.b16 %v4916, %v4915
        %v6331 = vpack.c.b16 %v4918, %v4917
        %v6332 = vpack.c.b16 %v4920, %v4919
        %v6333 = vpack.c.b16 %v4922, %v4921
        %v6334 = vpack.c.b16 %v4924, %v4923
        %v6335 = vpack.c.b16 %v4926, %v4925
        %v6336 = vpack.c.b16 %v4928, %v4927
        %v6337 = vpack.c.b16 %v4930, %v4929
        %v6338 = vpack.c.b16 %v4932, %v4931
        %v6339 = vpack.c.b16 %v4934, %v4933
        %v6340 = vpack.c.b16 %v4936, %v4935
        %v6341 = vpack.c.b16 %v4938, %v4937
        %v6342 = vpack.c.b16 %v4940, %v4939
        %v6343 = vpack.c.b16 %v4942, %v4941
        %v6344 = vpack.c.b16 %v4944, %v4943
        %v6345 = vpack.c.b16 %v4946, %v4945
        %v6346 = vpack.c.b16 %v4948, %v4947
        %v6347 = vpack.c.b16 %v4950, %v4949
        %v6348 = vpack.c.b16 %v4952, %v4951
        %v6349 = vpack.c.b16 %v4954, %v4953
        %v6350 = vpack.c.b16 %v4956, %v4955
        %v6351 = vpack.c.b16 %v4958, %v4957
        %v6352 = vpack.c.b16 %v4960, %v4959
        %v6353 = vpack.c.b16 %v4962, %v4961
        %v6354 = vpack.c.b16 %v4964, %v4963
        %v6355 = vpack.c.b16 %v4966, %v4965
        %v6356 = vpack.c.b16 %v4968, %v4967
        %v6357 = vpack.c.b16 %v4970, %v4969
        %v6358 = vpack.c.b16 %v4972, %v4971
        %v6359 = vpack.c.b16 %v4974, %v4973
        %v6360 = vpack.c.b16 %v4976, %v4975
        %v6361 = vpack.c.b16 %v4978, %v4977
        %v6362 = vpack.c.b16 %v4980, %v4979
        %v6363 = vpack.c.b16 %v4982, %v4981
        %v6364 = vpack.c.b16 %v4984, %v4983
        %v6365 = vpack.c.b16 %v4986, %v4985
        %v6366 = vpack.c.b16 %v4988, %v4987
        %v6367 = vpack.c.b16 %v4990, %v4989
        %v6368 = vpack.c.b16 %v4992, %v4991
        %v6369 = vpack.c.b16 %v4994, %v4993
        %v6370 = vpack.c.b16 %v4996, %v4995
        %v6371 = vpack.c.b16 %v4998, %v4997
        %v6372 = vpack.c.b16 %v5000, %v4999
        %v6373 = vpack.c.b16 %v5002, %v5001
        %v6374 = vpack.c.b16 %v5004, %v5003
        %v6375 = vpack.c.b16 %v5006, %v5005
        %v6376 = vpack.c.b16 %v5008, %v5007
        %v6377 = vpack.c.b16 %v5010, %v5009
        %v6378 = vpack.c.b16 %v5012, %v5011
        %v6379 = vpack.c.b16 %v5014, %v5013
        %v6380 = vpack.c.b16 %v5016, %v5015
        %v6381 = vpack.c.b16 %v5018, %v5017
        %v6382 = vpack.c.b16 %v5020, %v5019
        %v6383 = vpack.c.b16 %v5022, %v5021
        %v6384 = vpack.c.b16 %v5024, %v5023
        %v6385 = vpack.c.b16 %v5026, %v5025
        %v6386 = vpack.c.b16 %v5028, %v5027
        %v6387 = vpack.c.b16 %v5030, %v5029
        %v6388 = vpack.c.b16 %v5032, %v5031
        %v6389 = vpack.c.b16 %v5034, %v5033
        %v6390 = vpack.c.b16 %v5036, %v5035
        %v6391 = vpack.c.b16 %v5038, %v5037
        %v6392 = vpack.c.b16 %v5040, %v5039
        %v6393 = vpack.c.b16 %v5042, %v5041
        %v6394 = vpack.c.b16 %v5044, %v5043
        %v6395 = vpack.c.b16 %v5046, %v5045
        %v6396 = vpack.c.b16 %v5048, %v5047
        %v6397 = vpack.c.b16 %v5050, %v5049
        %v6398 = vpack.c.b16 %v5052, %v5051
        %v6399 = vpack.c.b16 %v5054, %v5053
        %v6400 = vpack.c.b16 %v5056, %v5055
        %v6401 = vpack.c.b16 %v5058, %v5057
        %v6402 = vpack.c.b16 %v5060, %v5059
        %v6403 = vpack.c.b16 %v5062, %v5061
        %v6404 = vpack.c.b16 %v5064, %v5063
        %v6405 = vpack.c.b16 %v5066, %v5065
        %v6406 = vpack.c.b16 %v5068, %v5067
        %v6407 = vpack.c.b16 %v5070, %v5069
        %v6408 = vpack.c.b16 %v5072, %v5071
        %v6409 = vpack.c.b16 %v5074, %v5073
        %v6410 = vpack.c.b16 %v5076, %v5075
        %v6411 = vpack.c.b16 %v5078, %v5077
        %v6412 = vpack.c.b16 %v5080, %v5079
        %v6413 = vpack.c.b16 %v5082, %v5081
        %v6414 = vpack.c.b16 %v5084, %v5083
        %v6415 = vpack.c.b16 %v5086, %v5085
        %v6416 = vpack.c.b16 %v5088, %v5087
        %v6417 = vpack.c.b16 %v5090, %v5089
        %v6418 = vpack.c.b16 %v5092, %v5091
        %v6419 = vpack.c.b16 %v5094, %v5093
        %v6420 = vpack.c.b16 %v5096, %v5095
        %v6421 = vpack.c.b16 %v5098, %v5097
        %v6422 = vpack.c.b16 %v5100, %v5099
        %v6423 = vpack.c.b16 %v5102, %v5101
        %v6424 = vpack.c.b16 %v5104, %v5103
        %v6425 = vpack.c.b16 %v5106, %v5105
        %v6426 = vpack.c.b16 %v5108, %v5107
        %v6427 = vpack.c.b16 %v5110, %v5109
        %v6428 = vpack.c.b16 %v5112, %v5111
        %v6429 = vpack.c.b16 %v5114, %v5113
        %v6430 = vpack.c.b16 %v5116, %v5115
        %v6431 = vpack.c.b16 %v5118, %v5117
        %v6432 = vpack.c.b16 %v5120, %v5119
        %v6433 = vpack.c.b16 %v5122, %v5121
        %v6434 = vpack.c.b16 %v5124, %v5123
        %v6435 = vpack.c.b16 %v5126, %v5125
        %v6436 = vpack.c.b16 %v5128, %v5127
        %v6437 = vpack.c.b16 %v5130, %v5129
        %v6438 = vpack.c.b16 %v5132, %v5131
        %v6439 = vpack.c.b16 %v5134, %v5133
        %v6440 = vpack.c.b16 %v5136, %v5135
        %v6441 = vpack.c.b16 %v5138, %v5137
        %v6442 = vpack.c.b16 %v5140, %v5139
        %v6443 = vpack.c.b16 %v5142, %v5141
        %v6444 = vpack.c.b16 %v5144, %v5143
        %v6445 = vpack.c.b16 %v5146, %v5145
        %v6446 = vpack.c.b16 %v5148, %v5147
        %v6447 = vpack.c.b16 %v5150, %v5149
        %v6448 = vpack.c.b16 %v5152, %v5151
        %v6449 = vpack.c.b16 %v5154, %v5153
        %v6450 = vpack.c.b16 %v5156, %v5155
        %v6451 = vpack.c.b16 %v5158, %v5157
        %v6452 = vpack.c.b16 %v5160, %v5159
        %v6453 = vpack.c.b16 %v5162, %v5161
        %v6454 = vpack.c.b16 %v5164, %v5163
        %v6455 = vpack.c.b16 %v5166, %v5165
        %v6456 = vpack.c.b16 %v5168, %v5167
        %v6457 = vpack.c.b16 %v5170, %v5169
        %v6458 = vpack.c.b16 %v5172, %v5171
        %v6459 = vpack.c.b16 %v5174, %v5173
        %v6460 = vpack.c.b16 %v5176, %v5175
        %v6461 = vpack.c.b16 %v5178, %v5177
        %v6462 = vpack.c.b16 %v5180, %v5179
        %v6463 = vpack.c.b16 %v5182, %v5181
        %v6464 = vpack.c.b16 %v5184, %v5183
        %v6465 = vpack.c.b16 %v5186, %v5185
        %v6466 = vpack.c.b16 %v5188, %v5187
        %v6467 = vpack.c.b16 %v5190, %v5189
        %v6468 = vpack.c.b16 %v5192, %v5191
        %v6469 = vpack.c.b16 %v5194, %v5193
        %v6470 = vpack.c.b16 %v5196, %v5195
        %v6471 = vpack.c.b16 %v5198, %v5197
        %v6472 = vpack.c.b16 %v5200, %v5199
        %v6473 = vpack.c.b16 %v5202, %v5201
        %v6474 = vpack.c.b16 %v5204, %v5203
        %v6475 = vpack.c.b16 %v5206, %v5205
        %v6476 = vpack.c.b16 %v5208, %v5207
        %v6477 = vpack.c.b16 %v5210, %v5209
        %v6478 = vpack.c.b16 %v5212, %v5211
        %v6479 = vpack.c.b16 %v5214, %v5213
        %v6480 = vpack.c.b16 %v5216, %v5215
        %v6481 = vpack.c.b16 %v5218, %v5217
        %v6482 = vpack.c.b16 %v5220, %v5219
        %v6483 = vpack.c.b16 %v5222, %v5221
        %v6484 = vpack.c.b16 %v5224, %v5223
        %v6485 = vpack.c.b16 %v5226, %v5225
        %v6486 = vpack.c.b16 %v5228, %v5227
        %v6487 = vpack.c.b16 %v5230, %v5229
        %v6488 = vpack.c.b16 %v5232, %v5231
        %v6489 = vpack.c.b16 %v5234, %v5233
        %v6490 = vpack.c.b16 %v5236, %v5235
        %v6491 = vpack.c.b16 %v5238, %v5237
        %v6492 = vpack.c.b16 %v5240, %v5239
        %v6493 = vpack.c.b16 %v5242, %v5241
        %v6494 = vpack.c.b16 %v5244, %v5243
        %v6495 = vpack.c.b16 %v5246, %v5245
        %v6496 = vpack.c.b16 %v5248, %v5247
        %v6497 = vpack.c.b16 %v5250, %v5249
        %v6498 = vpack.c.b16 %v5252, %v5251
        %v6499 = vpack.c.b16 %v5254, %v5253
        %v6500 = vpack.c.b16 %v5256, %v5255
        %v6501 = vpack.c.b16 %v5258, %v5257
        %v6502 = vpack.c.b16 %v5260, %v5259
        %v6503 = vpack.c.b16 %v5262, %v5261
        %v6504 = vpack.c.b16 %v5264, %v5263
        %v6505 = vpack.c.b16 %v5266, %v5265
        %v6506 = vpack.c.b16 %v5268, %v5267
        %v6507 = vpack.c.b16 %v5270, %v5269
        %v6508 = vpack.c.b16 %v5272, %v5271
        %v6509 = vpack.c.b16 %v5274, %v5273
        %v6510 = vpack.c.b16 %v5276, %v5275
        %v6511 = vpack.c.b16 %v5278, %v5277
        %v6512 = vpack.c.b16 %v5280, %v5279
        %v6513 = vpack.c.b16 %v5282, %v5281
        %v6514 = vpack.c.b16 %v5284, %v5283
        %v6515 = vpack.c.b16 %v5286, %v5285
        %v6516 = vpack.c.b16 %v5288, %v5287
        %v6517 = vpack.c.b16 %v5290, %v5289
        %v6518 = vpack.c.b16 %v5292, %v5291
        %v6519 = vpack.c.b16 %v5294, %v5293
        %v6520 = vpack.c.b16 %v5296, %v5295
        %v6521 = vpack.c.b16 %v5298, %v5297
        %v6522 = vpack.c.b16 %v5300, %v5299
        %v6523 = vpack.c.b16 %v5302, %v5301
        %v6524 = vpack.c.b16 %v5304, %v5303
        %v6525 = vpack.c.b16 %v5306, %v5305
        %v6526 = vpack.c.b16 %v5308, %v5307
        %v6527 = vpack.c.b16 %v5310, %v5309
        %v6528 = vpack.c.b16 %v5312, %v5311
        %v6529 = vpack.c.b16 %v5314, %v5313
        %v6530 = vpack.c.b16 %v5316, %v5315
        %v6531 = vpack.c.b16 %v5318, %v5317
        %v6532 = vpack.c.b16 %v5320, %v5319
        %v6533 = vpack.c.b16 %v5322, %v5321
        %v6534 = vpack.c.b16 %v5324, %v5323
        %v6535 = vpack.c.b16 %v5326, %v5325
        %v6536 = vpack.c.b16 %v5328, %v5327
        %v6537 = vpack.c.b16 %v5330, %v5329
        %v6538 = vpack.c.b16 %v5332, %v5331
        %v6539 = vpack.c.b16 %v5334, %v5333
        %v6540 = vpack.c.b16 %v5336, %v5335
        %v6541 = vpack.c.b16 %v5338, %v5337
        %v6542 = vpack.c.b16 %v5340, %v5339
        %v6543 = vpack.c.b16 %v5342, %v5341
        %v6544 = vpack.c.b16 %v5344, %v5343
        %v6545 = vpack.c.b16 %v5346, %v5345
        %v6546 = vpack.c.b16 %v5348, %v5347
        %v6547 = vpack.c.b16 %v5350, %v5349
        %v6548 = vpack.c.b16 %v5352, %v5351
        %v6549 = vpack.c.b16 %v5354, %v5353
        %v6550 = vpack.c.b16 %v5356, %v5355
        %v6551 = vpack.c.b16 %v5358, %v5357
        %v6552 = vpack.c.b16 %v5360, %v5359
        %v6553 = vpack.c.b16 %v5362, %v5361
        %v6554 = vpack.c.b16 %v5364, %v5363
        %v6555 = vpack.c.b16 %v5366, %v5365
        %v6556 = vpack.c.b16 %v5368, %v5367
        %v6557 = vpack.c.b16 %v5370, %v5369
        %v6558 = vpack.c.b16 %v5372, %v5371
        %v6559 = vpack.c.b16 %v5374, %v5373
        %v6560 = vpack.c.b16 %v5376, %v5375
        %v6561 = vpack.c.b16 %v5378, %v5377
        %v6562 = vpack.c.b16 %v5380, %v5379
        %v6563 = vpack.c.b16 %v5382, %v5381
        %v6564 = vpack.c.b16 %v5384, %v5383
        %v6565 = vpack.c.b16 %v5386, %v5385
        %v6566 = vpack.c.b16 %v5388, %v5387
        %v6567 = vpack.c.b16 %v5390, %v5389
        %v6568 = vpack.c.b16 %v5392, %v5391
        %v6569 = vpack.c.b16 %v5394, %v5393
        %v6570 = vpack.c.b16 %v5396, %v5395
        %v6571 = vpack.c.b16 %v5398, %v5397
        %v6572 = vpack.c.b16 %v5400, %v5399
        %v6573 = vpack.c.b16 %v5402, %v5401
        %v6574 = vpack.c.b16 %v5404, %v5403
        %v6575 = vpack.c.b16 %v5406, %v5405
        %v6576 = vpack.c.b16 %v5408, %v5407
        %v6577 = vpack.c.b16 %v5410, %v5409
        %v6578 = vpack.c.b16 %v5412, %v5411
        %v6579 = vpack.c.b16 %v5414, %v5413
        %v6580 = vpack.c.b16 %v5416, %v5415
        %v6581 = vpack.c.b16 %v5418, %v5417
        %v6582 = vpack.c.b16 %v5420, %v5419
        %v6583 = vpack.c.b16 %v5422, %v5421
        %v6584 = vpack.c.b16 %v5424, %v5423
        %v6585 = vpack.c.b16 %v5426, %v5425
        %v6586 = vpack.c.b16 %v5428, %v5427
        %v6587 = vpack.c.b16 %v5430, %v5429
        %v6588 = vpack.c.b16 %v5432, %v5431
        %v6589 = vpack.c.b16 %v5434, %v5433
        %v6590 = vpack.c.b16 %v5436, %v5435
        %v6591 = vpack.c.b16 %v5438, %v5437
        %v6592 = vpack.c.b16 %v5440, %v5439
        %v6593 = vpack.c.b16 %v5442, %v5441
        %v6594 = vpack.c.b16 %v5444, %v5443
        %v6595 = vpack.c.b16 %v5446, %v5445
        %v6596 = vpack.c.b16 %v5448, %v5447
        %v6597 = vpack.c.b16 %v5450, %v5449
        %v6598 = vpack.c.b16 %v5452, %v5451
        %v6599 = vpack.c.b16 %v5454, %v5453
        %v6600 = vpack.c.b16 %v5456, %v5455
        %v6601 = vpack.c.b16 %v5458, %v5457
        %v6602 = vpack.c.b16 %v5460, %v5459
        %v6603 = vpack.c.b16 %v5462, %v5461
        %v6604 = vpack.c.b16 %v5464, %v5463
        %v6605 = vpack.c.b16 %v5466, %v5465
        %v6606 = vpack.c.b16 %v5468, %v5467
        %v6607 = vpack.c.b16 %v5470, %v5469
        %v6608 = vpack.c.b16 %v5472, %v5471
        %v6609 = vpack.c.b16 %v5474, %v5473
        %v6610 = vpack.c.b16 %v5476, %v5475
        %v6611 = vpack.c.b16 %v5478, %v5477
        %v6612 = vpack.c.b16 %v5480, %v5479
        %v6613 = vpack.c.b16 %v5482, %v5481
        %v6614 = vpack.c.b16 %v5484, %v5483
        %v6615 = vpack.c.b16 %v5486, %v5485
        %v6616 = vpack.c.b16 %v5488, %v5487
        %v6617 = vpack.c.b16 %v5490, %v5489
        %v6618 = vpack.c.b16 %v5492, %v5491
        %v6619 = vpack.c.b16 %v5494, %v5493
        %v6620 = vpack.c.b16 %v5496, %v5495
        %v6621 = vpack.c.b16 %v5498, %v5497
        %v6622 = vpack.c.b16 %v5500, %v5499
        %v6623 = vpack.c.b16 %v5502, %v5501
        %v6624 = vpack.c.b16 %v5504, %v5503
        %v6625 = vpack.c.b16 %v5506, %v5505
        %v6626 = vpack.c.b16 %v5508, %v5507
        %v6627 = vpack.c.b16 %v5510, %v5509
        %v6628 = vpack.c.b16 %v5512, %v5511
        %v6629 = vpack.c.b16 %v5514, %v5513
        %v6630 = vpack.c.b16 %v5516, %v5515
        %v6631 = vpack.c.b16 %v5518, %v5517
        %v6632 = vpack.c.b16 %v5520, %v5519
        %v6633 = vpack.c.b16 %v5522, %v5521
        %v6634 = vpack.c.b16 %v5524, %v5523
        %v6635 = vpack.c.b16 %v5526, %v5525
        %v6636 = vpack.c.b16 %v5528, %v5527
        %v6637 = vpack.c.b16 %v5530, %v5529
        %v6638 = vpack.c.b16 %v5532, %v5531
        %v6639 = vpack.c.b16 %v5534, %v5533
        %v6640 = vpack.c.b16 %v5536, %v5535
        %v6641 = vpack.c.b16 %v5538, %v5537
        %v6642 = vpack.c.b16 %v5540, %v5539
        %v6643 = vpack.c.b16 %v5542, %v5541
        %v6644 = vpack.c.b16 %v5544, %v5543
        %v6645 = vpack.c.b16 %v5546, %v5545
        %v6646 = vpack.c.b16 %v5548, %v5547
        %v6647 = vpack.c.b16 %v5550, %v5549
        %v6648 = vpack.c.b16 %v5552, %v5551
        %v6649 = vpack.c.b16 %v5554, %v5553
        %v6650 = vpack.c.b16 %v5556, %v5555
        %v6651 = vpack.c.b16 %v5558, %v5557
        %v6652 = vpack.c.b16 %v5560, %v5559
        %v6653 = vpack.c.b16 %v5562, %v5561
        %v6654 = vpack.c.b16 %v5564, %v5563
        %v6655 = vpack.c.b16 %v5566, %v5565
        %v6656 = vpack.c.b16 %v5568, %v5567
        %v6657 = vpack.c.b16 %v5570, %v5569
        %v6658 = vpack.c.b16 %v5572, %v5571
        %v6659 = vpack.c.b16 %v5574, %v5573
        %v6660 = vpack.c.b16 %v5576, %v5575
        %v6661 = vpack.c.b16 %v5578, %v5577
        %v6662 = vpack.c.b16 %v5580, %v5579
        %v6663 = vpack.c.b16 %v5582, %v5581
        %v6664 = vpack.c.b16 %v5584, %v5583
        %v6665 = vpack.c.b16 %v5586, %v5585
        %v6666 = vpack.c.b16 %v5588, %v5587
        %v6667 = vpack.c.b16 %v5590, %v5589
        %v6668 = vpack.c.b16 %v5592, %v5591
        %v6669 = vpack.c.b16 %v5594, %v5593
        %v6670 = vpack.c.b16 %v5596, %v5595
        %v6671 = vpack.c.b16 %v5598, %v5597
        %v6672 = vpack.c.b16 %v5600, %v5599
        %v6673 = vpack.c.b16 %v5602, %v5601
        %v6674 = vpack.c.b16 %v5604, %v5603
        %v6675 = vpack.c.b16 %v5606, %v5605
        %v6676 = vpack.c.b16 %v5608, %v5607
        %v6677 = vpack.c.b16 %v5610, %v5609
        %v6678 = vpack.c.b16 %v5612, %v5611
        %v6679 = vpack.c.b16 %v5614, %v5613
        %v6680 = vpack.c.b16 %v5616, %v5615
        %v6681 = vpack.c.b16 %v5618, %v5617
        %v6682 = vpack.c.b16 %v5620, %v5619
        %v6683 = vpack.c.b16 %v5622, %v5621
        %v6684 = vpack.c.b16 %v5624, %v5623
        %v6685 = vpack.c.b16 %v5626, %v5625
        %v6686 = vpack.c.b16 %v5628, %v5627
        %v6687 = vpack.c.b16 %v5630, %v5629
        %v6688 = vpack.c.b16 %v5632, %v5631
        %v6689 = vpack.c.b16 %v5634, %v5633
        %v6690 = vpack.c.b16 %v5636, %v5635
        %v6691 = vpack.c.b16 %v5638, %v5637
        %v6692 = vpack.c.b16 %v5640, %v5639
        %v6693 = vpack.c.b16 %v5642, %v5641
        %v6694 = vpack.c.b16 %v5644, %v5643
        %v6695 = vpack.c.b16 %v5646, %v5645
        %v6696 = vpack.c.b16 %v5648, %v5647
        %v6697 = vpack.c.b16 %v5650, %v5649
        %v6698 = vpack.c.b16 %v5652, %v5651
        %v6699 = vpack.c.b16 %v5654, %v5653
        %v6700 = vpack.c.b16 %v5656, %v5655
        %v6701 = vpack.c.b16 %v5658, %v5657
        %v6702 = vpack.c.b16 %v5660, %v5659
        %v6703 = vpack.c.b16 %v5662, %v5661
        %v6704 = vpack.c.b16 %v5664, %v5663
        %v6705 = vpack.c.b16 %v5666, %v5665
        %v6706 = vpack.c.b16 %v5668, %v5667
        %v6707 = vpack.c.b16 %v5670, %v5669
        %v6708 = vpack.c.b16 %v5672, %v5671
        %v6709 = vpack.c.b16 %v5674, %v5673
        %v6710 = vpack.c.b16 %v5676, %v5675
        %v6711 = vpack.c.b16 %v5678, %v5677
        %v6712 = vpack.c.b16 %v5680, %v5679
        %v6713 = vpack.c.b16 %v5682, %v5681
        %v6714 = vpack.c.b16 %v5684, %v5683
        %v6715 = vpack.c.b16 %v5686, %v5685
        %v6716 = vpack.c.b16 %v5688, %v5687
        %v6717 = vpack.c.b16 %v5690, %v5689
        %v6718 = vpack.c.b16 %v5692, %v5691
        %v6719 = vpack.c.b16 %v5694, %v5693
        %v6720 = vpack.c.b16 %v5696, %v5695
        %v6721 = vpack.c.b16 %v5698, %v5697
        %v6722 = vpack.c.b16 %v5700, %v5699
        %v6723 = vpack.c.b16 %v5702, %v5701
        %v6724 = vpack.c.b16 %v5704, %v5703
        %v6725 = vpack.c.b16 %v5706, %v5705
        %v6726 = vpack.c.b16 %v5708, %v5707
        %v6727 = vpack.c.b16 %v5710, %v5709
        %v6728 = vpack.c.b16 %v5712, %v5711
        %v6729 = vpack.c.b16 %v5714, %v5713
        %v6730 = vpack.c.b16 %v5716, %v5715
        %v6731 = vpack.c.b16 %v5718, %v5717
        %v6732 = vpack.c.b16 %v5720, %v5719
        %v6733 = vpack.c.b16 %v5722, %v5721
        %v6734 = vpack.c.b16 %v5724, %v5723
        %v6735 = vpack.c.b16 %v5726, %v5725
        %v6736 = vpack.c.b16 %v5728, %v5727
        %v6737 = vpack.c.b16 %v5730, %v5729
        %v6738 = vpack.c.b16 %v5732, %v5731
        %v6739 = vpack.c.b16 %v5734, %v5733
        %v6740 = vpack.c.b16 %v5736, %v5735
        %v6741 = vpack.c.b16 %v5738, %v5737
        %v6742 = vpack.c.b16 %v5740, %v5739
        %v6743 = vpack.c.b16 %v5742, %v5741
        %v6744 = vpack.c.b16 %v5744, %v5743
        %v6745 = vpack.c.b16 %v5746, %v5745
        %v6746 = vpack.c.b16 %v5748, %v5747
        %v6747 = vpack.c.b16 %v5750, %v5749
        %v6748 = vpack.c.b16 %v5752, %v5751
        %v6749 = vpack.c.b16 %v5754, %v5753
        %v6750 = vpack.c.b16 %v5756, %v5755
        %v6751 = vpack.c.b16 %v5758, %v5757
        %v6752 = vpack.c.b16 %v5760, %v5759
        %v6753 = vpack.c.b16 %v5762, %v5761
        %v6754 = vpack.c.b16 %v5764, %v5763
        %v6755 = vpack.c.b16 %v5766, %v5765
        %v6756 = vpack.c.b16 %v5768, %v5767
        %v6757 = vpack.c.b16 %v5770, %v5769
        %v6758 = vpack.c.b16 %v5772, %v5771
        %v6759 = vpack.c.b16 %v5774, %v5773
        %v6760 = vpack.c.b16 %v5776, %v5775
        %v6761 = vpack.c.b16 %v5778, %v5777
        %v6762 = vpack.c.b16 %v5780, %v5779
        %v6763 = vpack.c.b16 %v5782, %v5781
        %v6764 = vpack.c.b16 %v5784, %v5783
        %v6765 = vpack.c.b16 %v5786, %v5785
        %v6766 = vpack.c.b16 %v5788, %v5787
        %v6767 = vpack.c.b16 %v5790, %v5789
        %v6768 = vpack.c.b16 %v5792, %v5791
        %v6769 = vpack.c.b16 %v5794, %v5793
        %v6770 = vpack.c.b16 %v5796, %v5795
        %v6771 = vpack.c.b16 %v5798, %v5797
        %v6772 = vpack.c.b16 %v5800, %v5799
        %v6773 = vpack.c.b16 %v5802, %v5801
        %v6774 = vpack.c.b16 %v5804, %v5803
        %v6775 = vpack.c.b16 %v5806, %v5805
        %v6776 = vpack.c.b16 %v5808, %v5807
        %v6777 = vpack.c.b16 %v5810, %v5809
        %v6778 = vpack.c.b16 %v5812, %v5811
        %v6779 = vpack.c.b16 %v5814, %v5813
        %v6780 = vpack.c.b16 %v5816, %v5815
        %v6781 = vpack.c.b16 %v5818, %v5817
        %v6782 = vpack.c.b16 %v5820, %v5819
        %v6783 = vpack.c.b16 %v5822, %v5821
        %v6784 = vpack.c.b16 %v5824, %v5823
        %v6785 = vpack.c.b16 %v5826, %v5825
        %v6786 = vpack.c.b16 %v5828, %v5827
        %v6787 = vpack.c.b16 %v5830, %v5829
        %v6788 = vpack.c.b16 %v5832, %v5831
        %v6789 = vpack.c.b16 %v5834, %v5833
        %v6790 = vpack.c.b16 %v5836, %v5835
        %v6791 = vpack.c.b16 %v5838, %v5837
        %v6792 = vpack.c.b16 %v5840, %v5839
        %v6793 = vpack.c.b16 %v5842, %v5841
        %v6794 = vpack.c.b16 %v5844, %v5843
        %v6795 = vpack.c.b16 %v5846, %v5845
        %v6796 = vpack.c.b16 %v5848, %v5847
        %v6797 = vpack.c.b16 %v5850, %v5849
        %v6798 = vpack.c.b16 %v5852, %v5851
        %v6799 = vpack.c.b16 %v5854, %v5853
        %v6800 = vpack.c.b16 %v5856, %v5855
        %v6801 = vpack.c.b16 %v5858, %v5857
        %v6802 = vpack.c.b16 %v5860, %v5859
        %v6803 = vpack.c.b16 %v5862, %v5861
        %v6804 = vpack.c.b16 %v5864, %v5863
        %v6805 = vpack.c.b16 %v5866, %v5865
        %v6806 = vpack.c.b16 %v5868, %v5867
        %v6807 = vpack.c.b16 %v5870, %v5869
        %v6808 = vpack.c.b16 %v5872, %v5871
        %v6809 = vpack.c.b16 %v5874, %v5873
        %v6810 = vpack.c.b16 %v5876, %v5875
        %v6811 = vpack.c.b16 %v5878, %v5877
        %v6812 = vpack.c.b16 %v5880, %v5879
        %v6813 = vpack.c.b16 %v5882, %v5881
        %v6814 = vpack.c.b16 %v5884, %v5883
        %v6815 = vpack.c.b16 %v5886, %v5885
        %v6816 = vpack.c.b16 %v5888, %v5887
        %v6817 = vpack.c.b16 %v5890, %v5889
        %v6818 = vpack.c.b16 %v5892, %v5891
        %v6819 = vpack.c.b16 %v5894, %v5893
        %v6820 = vpack.c.b16 %v5896, %v5895
        %v6821 = vpack.c.b16 %v5898, %v5897
        %v6822 = vpack.c.b16 %v5900, %v5899
        %v6823 = vpack.c.b16 %v5902, %v5901
        %v6824 = vpack.c.b16 %v5904, %v5903
        %v6825 = vpack.c.b16 %v5906, %v5905
        %v6826 = vpack.c.b16 %v5908, %v5907
        %v6827 = vpack.c.b16 %v5910, %v5909
        %v6828 = vpack.c.b16 %v5912, %v5911
        %v6829 = vpack.c.b16 %v5914, %v5913
        %v6830 = vpack.c.b16 %v5916, %v5915
        %v6831 = vpack.c.b16 %v5918, %v5917
        %v6832 = vpack.c.b16 %v5920, %v5919
        %v6833 = vpack.c.b16 %v5922, %v5921
        %v6834 = vpack.c.b16 %v5924, %v5923
        %v6835 = vpack.c.b16 %v5926, %v5925
        %v6836 = vpack.c.b16 %v5928, %v5927
        %v6837 = vpack.c.b16 %v5930, %v5929
        %v6838 = vpack.c.b16 %v5932, %v5931
        %v6839 = vpack.c.b16 %v5934, %v5933
        %v6840 = vpack.c.b16 %v5936, %v5935
        %v6841 = vpack.c.b16 %v5938, %v5937
        %v6842 = vpack.c.b16 %v5940, %v5939
        %v6843 = vpack.c.b16 %v5942, %v5941
        %v6844 = vpack.c.b16 %v5944, %v5943
        %v6845 = vpack.c.b16 %v5946, %v5945
        %v6846 = vpack.c.b16 %v5948, %v5947
        %v6847 = vpack.c.b16 %v5950, %v5949
        %v6848 = vpack.c.b16 %v5952, %v5951
        %v6849 = vpack.c.b16 %v5954, %v5953
        %v6850 = vpack.c.b16 %v5956, %v5955
        %v6851 = vpack.c.b16 %v5958, %v5957
        %v6852 = vpack.c.b16 %v5960, %v5959
        %v6853 = vpack.c.b16 %v5962, %v5961
        %v6854 = vpack.c.b16 %v5964, %v5963
        %v6855 = vpack.c.b16 %v5966, %v5965
        %v6856 = vpack.c.b16 %v5968, %v5967
        %v6857 = vpack.c.b16 %v5970, %v5969
        %v6858 = vpack.c.b16 %v5972, %v5971
        %v6859 = vpack.c.b16 %v5974, %v5973
        %v6860 = vpack.c.b16 %v5976, %v5975
        %v6861 = vpack.c.b16 %v5978, %v5977
        %v6862 = vpack.c.b16 %v5980, %v5979
        %v6863 = vpack.c.b16 %v5982, %v5981
        %v6864 = vpack.c.b16 %v5984, %v5983
        %v6865 = vpack.c.b16 %v5986, %v5985
        %v6866 = vpack.c.b16 %v5988, %v5987
        %v6867 = vpack.c.b16 %v5990, %v5989
        %v6868 = vpack.c.b16 %v5992, %v5991
        %v6869 = vpack.c.b16 %v5994, %v5993
        %v6870 = vpack.c.b16 %v5996, %v5995
        %v6871 = vpack.c.b16 %v5998, %v5997
        %v6872 = vpack.c.b16 %v6000, %v5999
        %v6873 = vpack.c.b16 %v6002, %v6001
        %v6874 = vpack.c.b16 %v6004, %v6003
        %v6875 = vpack.c.b16 %v6006, %v6005
        %v6876 = vpack.c.b16 %v6008, %v6007
        %v6877 = vpack.c.b16 %v6010, %v6009
        %v6878 = vpack.c.b16 %v6012, %v6011
        %v6879 = vpack.c.b16 %v6014, %v6013
        %v6880 = vpack.c.b16 %v6016, %v6015
        %v6881 = vpack.c.b16 %v6018, %v6017
        %v6882 = vpack.c.b16 %v6020, %v6019
        %v6883 = vpack.c.b16 %v6022, %v6021
        %v6884 = vpack.c.b16 %v6024, %v6023
        %v6885 = vpack.c.b16 %v6026, %v6025
        %v6886 = vpack.c.b16 %v6028, %v6027
        %v6887 = vpack.c.b16 %v6030, %v6029
        %v6888 = vpack.c.b16 %v6032, %v6031
        %v6889 = vpack.c.b16 %v6034, %v6033
        %v6890 = vpack.c.b16 %v6036, %v6035
        %v6891 = vpack.c.b16 %v6038, %v6037
        %v6892 = vpack.c.b16 %v6040, %v6039
        %v6893 = vpack.c.b16 %v6042, %v6041
        %v6894 = vpack.c.b16 %v6044, %v6043
        %v6895 = vpack.c.b16 %v6046, %v6045
        %v6896 = vpack.c.b16 %v6048, %v6047
        %v6897 = vpack.c.b16 %v6050, %v6049
        %v6898 = vpack.c.b16 %v6052, %v6051
        %v6899 = vpack.c.b16 %v6054, %v6053
        %v6900 = vpack.c.b16 %v6056, %v6055
        %v6901 = vpack.c.b16 %v6058, %v6057
        %v6902 = vpack.c.b16 %v6060, %v6059
        %v6903 = vpack.c.b16 %v6062, %v6061
        %v6904 = vpack.c.b16 %v6064, %v6063
        %v6905 = vpack.c.b16 %v6066, %v6065
        %v6906 = vpack.c.b16 %v6068, %v6067
        %v6907 = vpack.c.b16 %v6070, %v6069
        %v6908 = vpack.c.b16 %v6072, %v6071
        %v6909 = vpack.c.b16 %v6074, %v6073
        %v6910 = vpack.c.b16 %v6076, %v6075
        %v6911 = vpack.c.b16 %v6078, %v6077
        %v6912 = vpack.c.b16 %v6080, %v6079
        %v6913 = vpack.c.b16 %v6082, %v6081
        %v6914 = vpack.c.b16 %v6084, %v6083
        %v6915 = vpack.c.b16 %v6086, %v6085
        %v6916 = vpack.c.b16 %v6088, %v6087
        %v6917 = vpack.c.b16 %v6090, %v6089
        %v6918 = vpack.c.b16 %v6092, %v6091
        %v6919 = vpack.c.b16 %v6094, %v6093
        %v6920 = vpack.c.b16 %v6096, %v6095
        %v6921 = vpack.c.b16 %v6098, %v6097
        %v6922 = vpack.c.b16 %v6100, %v6099
        %v6923 = vpack.c.b16 %v6102, %v6101
        %v6924 = vpack.c.b16 %v6104, %v6103
        %v6925 = vpack.c.b16 %v6106, %v6105
        %v6926 = vpack.c.b16 %v6108, %v6107
        %v6927 = vpack.c.b16 %v6110, %v6109
        %v6928 = vpack.c.b16 %v6112, %v6111
        %v6929 = vpack.c.b16 %v6114, %v6113
        %v6930 = vpack.c.b16 %v6116, %v6115
        %v6931 = vpack.c.b16 %v6118, %v6117
        %v6932 = vpack.c.b16 %v6120, %v6119
        %v6933 = vpack.c.b16 %v6122, %v6121
        %v6934 = vpack.c.b16 %v6124, %v6123
        %v6935 = vpack.c.b16 %v6126, %v6125
        %v6936 = vpack.c.b16 %v6128, %v6127
        %v6937 = vpack.c.b16 %v6130, %v6129
        %v6938 = vpack.c.b16 %v6132, %v6131
        %v6939 = vpack.c.b16 %v6134, %v6133
        %v6940 = vpack.c.b16 %v6136, %v6135
        %v6941 = vpack.c.b16 %v6138, %v6137
        %v6942 = vpack.c.b16 %v6140, %v6139
        %v6943 = vpack.c.b16 %v6142, %v6141
        %v6944 = vpack.c.b16 %v6144, %v6143
        %v6945 = vpack.c.b16 %v6146, %v6145
        %v6946 = vpack.c.b16 %v6148, %v6147
        %v6947 = vpack.c.b16 %v6150, %v6149
        %v6948 = vpack.c.b16 %v6152, %v6151
        %v6949 = vpack.c.b16 %v6154, %v6153
        %v6950 = vpack.c.b16 %v6156, %v6155
        %v6951 = vpack.c.b16 %v6158, %v6157
        %v6952 = vpack.c.b16 %v6160, %v6159
        %v6953 = vpack.c.b16 %v6162, %v6161
        %v6954 = vpack.c.b16 %v6164, %v6163
        %v6955 = vpack.c.b16 %v6166, %v6165
        %v6956 = vpack.c.b16 %v6168, %v6167
        %v6957 = vpack.c.b16 %v6170, %v6169
        %v6958 = vpack.c.b16 %v6172, %v6171
        %v6959 = vpack.c.b16 %v6174, %v6173
        %v6960 = vpack.c.b16 %v6176, %v6175
        %7745 = vmatprep.subr.bf16.mxu0 0
        %7746 = vmatpush1.bf16.msra.mxu0 %v6177
        %7747 = vmatprep.subr.bf16.mxu0 0
        %7748 = vmatpush1.bf16.msra.mxu0 %v6178
        %7749 = vmatprep.subr.bf16.mxu0 0
        %7750 = vmatpush1.bf16.msra.mxu0 %v6179
        %7751 = vmatprep.subr.bf16.mxu0 0
        %7752 = vmatpush1.bf16.msra.mxu0 %v6180
        %7753 = vmatprep.subr.bf16.mxu0 0
        %7754 = vmatpush1.bf16.msra.mxu0 %v6181
        %7755 = vmatprep.subr.bf16.mxu0 0
        %7756 = vmatpush1.bf16.msra.mxu0 %v6182
        %7757 = vmatprep.subr.bf16.mxu0 0
        %7758 = vmatpush1.bf16.msra.mxu0 %v6183
        %7759 = vmatprep.subr.bf16.mxu0 0
        %7760 = vmatpush1.bf16.msra.mxu0 %v6184
        %7761 = vmatprep.subr.bf16.mxu0 0
        %7762 = vmatpush1.bf16.msra.mxu0 %v6185
        %7763 = vmatprep.subr.bf16.mxu0 0
        %7764 = vmatpush1.bf16.msra.mxu0 %v6186
        %7765 = vmatprep.subr.bf16.mxu0 0
        %7766 = vmatpush1.bf16.msra.mxu0 %v6187
        %7767 = vmatprep.subr.bf16.mxu0 0
        %7768 = vmatpush1.bf16.msra.mxu0 %v6188
        %7769 = vmatprep.subr.bf16.mxu0 0
        %7770 = vmatpush1.bf16.msra.mxu0 %v6189
        %7771 = vmatprep.subr.bf16.mxu0 0
        %7772 = vmatpush1.bf16.msra.mxu0 %v6190
        %7773 = vmatprep.subr.bf16.mxu0 0
        %7774 = vmatpush1.bf16.msra.mxu0 %v6191
        %7775 = vmatprep.subr.bf16.mxu0 0
        %7776 = vmatpush1.bf16.msra.mxu0 %v6192
        %7777 = vmatprep.mubr.bf16.mxu0 %v2370
        %7778 = vmatmul.mubr.bf16.gmra.mrb[0].mxu0 %v2356
        %v7779 = vpop.f32.mrb[0].mxu0
        %v7780 = vadd.f32 0.0, %v7779
        %v7781 = vpop.f32.mrb[0].mxu0
        %v7782 = vpop.f32.mrb[0].mxu0
        %v7783 = vpop.f32.mrb[0].mxu0
        %7784 = vdwg.mxu0
        %7785 = vmatprep.subr.bf16.mxu0 0
        %7786 = vmatpush1.bf16.msra.mxu0 %v6193
        %7787 = vmatprep.subr.bf16.mxu0 0
        %7788 = vmatpush1.bf16.msra.mxu0 %v6194
        %7789 = vmatprep.subr.bf16.mxu0 0
        %7790 = vmatpush1.bf16.msra.mxu0 %v6195
        %7791 = vmatprep.subr.bf16.mxu0 0
        %7792 = vmatpush1.bf16.msra.mxu0 %v6196
        %7793 = vmatprep.subr.bf16.mxu0 0
        %7794 = vmatpush1.bf16.msra.mxu0 %v6197
        %7795 = vmatprep.subr.bf16.mxu0 0
        %7796 = vmatpush1.bf16.msra.mxu0 %v6198
        %7797 = vmatprep.subr.bf16.mxu0 0
        %7798 = vmatpush1.bf16.msra.mxu0 %v6199
        %7799 = vmatprep.subr.bf16.mxu0 0
        %7800 = vmatpush1.bf16.msra.mxu0 %v6200
        %7801 = vmatprep.subr.bf16.mxu0 0
        %7802 = vmatpush1.bf16.msra.mxu0 %v6201
        %7803 = vmatprep.subr.bf16.mxu0 0
        %7804 = vmatpush1.bf16.msra.mxu0 %v6202
        %7805 = vmatprep.subr.bf16.mxu0 0
        %7806 = vmatpush1.bf16.msra.mxu0 %v6203
        %7807 = vmatprep.subr.bf16.mxu0 0
        %7808 = vmatpush1.bf16.msra.mxu0 %v6204
        %7809 = vmatprep.subr.bf16.mxu0 0
        %7810 = vmatpush1.bf16.msra.mxu0 %v6205
        %7811 = vmatprep.subr.bf16.mxu0 0
        %7812 = vmatpush1.bf16.msra.mxu0 %v6206
        %7813 = vmatprep.subr.bf16.mxu0 0
        %7814 = vmatpush1.bf16.msra.mxu0 %v6207
        %7815 = vmatprep.subr.bf16.mxu0 0
        %7816 = vmatpush1.bf16.msra.mxu0 %v6208
        %7817 = vmatprep.mubr.bf16.mxu0 %v2380
        %7818 = vmatmul.mubr.bf16.gmra.mrb[0].mxu0 %v2378
        %v7819 = vpop.f32.mrb[0].mxu0
        %v7820 = vadd.f32 %v7780, %v7819
        %v7821 = vpop.f32.mrb[0].mxu0
        %v7822 = vpop.f32.mrb[0].mxu0
        %v7823 = vpop.f32.mrb[0].mxu0
        %7824 = vdwg.mxu0
        %7825 = vmatprep.subr.bf16.mxu0 0
        %7826 = vmatpush1.bf16.msra.mxu0 %v6209
        %7827 = vmatprep.subr.bf16.mxu0 0
        %7828 = vmatpush1.bf16.msra.mxu0 %v6210
        %7829 = vmatprep.subr.bf16.mxu0 0
        %7830 = vmatpush1.bf16.msra.mxu0 %v6211
        %7831 = vmatprep.subr.bf16.mxu0 0
        %7832 = vmatpush1.bf16.msra.mxu0 %v6212
        %7833 = vmatprep.subr.bf16.mxu0 0
        %7834 = vmatpush1.bf16.msra.mxu0 %v6213
        %7835 = vmatprep.subr.bf16.mxu0 0
        %7836 = vmatpush1.bf16.msra.mxu0 %v6214
        %7837 = vmatprep.subr.bf16.mxu0 0
        %7838 = vmatpush1.bf16.msra.mxu0 %v6215
        %7839 = vmatprep.subr.bf16.mxu0 0
        %7840 = vmatpush1.bf16.msra.mxu0 %v6216
        %7841 = vmatprep.subr.bf16.mxu0 0
        %7842 = vmatpush1.bf16.msra.mxu0 %v6217
        %7843 = vmatprep.subr.bf16.mxu0 0
        %7844 = vmatpush1.bf16.msra.mxu0 %v6218
        %7845 = vmatprep.subr.bf16.mxu0 0
        %7846 = vmatpush1.bf16.msra.mxu0 %v6219
        %7847 = vmatprep.subr.bf16.mxu0 0
        %7848 = vmatpush1.bf16.msra.mxu0 %v6220
        %7849 = vmatprep.subr.bf16.mxu0 0
        %7850 = vmatpush1.bf16.msra.mxu0 %v6221
        %7851 = vmatprep.subr.bf16.mxu0 0
        %7852 = vmatpush1.bf16.msra.mxu0 %v6222
        %7853 = vmatprep.subr.bf16.mxu0 0
        %7854 = vmatpush1.bf16.msra.mxu0 %v6223
        %7855 = vmatprep.subr.bf16.mxu0 0
        %7856 = vmatpush1.bf16.msra.mxu0 %v6224
        %7857 = vmatprep.mubr.bf16.mxu0 %v2377
        %7858 = vmatmul.mubr.bf16.gmra.mrb[0].mxu0 %v2363
        %v7859 = vpop.f32.mrb[0].mxu0
        %v7860 = vadd.f32 %v7820, %v7859
        %v7861 = vpop.f32.mrb[0].mxu0
        %v7862 = vpop.f32.mrb[0].mxu0
        %v7863 = vpop.f32.mrb[0].mxu0
        %7864 = vdwg.mxu0
        %7865 = vmatprep.subr.bf16.mxu0 0
        %7866 = vmatpush1.bf16.msra.mxu0 %v6225
        %7867 = vmatprep.subr.bf16.mxu0 0
        %7868 = vmatpush1.bf16.msra.mxu0 %v6226
        %7869 = vmatprep.subr.bf16.mxu0 0
        %7870 = vmatpush1.bf16.msra.mxu0 %v6227
        %7871 = vmatprep.subr.bf16.mxu0 0
        %7872 = vmatpush1.bf16.msra.mxu0 %v6228
        %7873 = vmatprep.subr.bf16.mxu0 0
        %7874 = vmatpush1.bf16.msra.mxu0 %v6229
        %7875 = vmatprep.subr.bf16.mxu0 0
        %7876 = vmatpush1.bf16.msra.mxu0 %v6230
        %7877 = vmatprep.subr.bf16.mxu0 0
        %7878 = vmatpush1.bf16.msra.mxu0 %v6231
        %7879 = vmatprep.subr.bf16.mxu0 0
        %7880 = vmatpush1.bf16.msra.mxu0 %v6232
        %7881 = vmatprep.subr.bf16.mxu0 0
        %7882 = vmatpush1.bf16.msra.mxu0 %v6233
        %7883 = vmatprep.subr.bf16.mxu0 0
        %7884 = vmatpush1.bf16.msra.mxu0 %v6234
        %7885 = vmatprep.subr.bf16.mxu0 0
        %7886 = vmatpush1.bf16.msra.mxu0 %v6235
        %7887 = vmatprep.subr.bf16.mxu0 0
        %7888 = vmatpush1.bf16.msra.mxu0 %v6236
        %7889 = vmatprep.subr.bf16.mxu0 0
        %7890 = vmatpush1.bf16.msra.mxu0 %v6237
        %7891 = vmatprep.subr.bf16.mxu0 0
        %7892 = vmatpush1.bf16.msra.mxu0 %v6238
        %7893 = vmatprep.subr.bf16.mxu0 0
        %7894 = vmatpush1.bf16.msra.mxu0 %v6239
        %7895 = vmatprep.subr.bf16.mxu0 0
        %7896 = vmatpush1.bf16.msra.mxu0 %v6240
        %7897 = vmatprep.mubr.bf16.mxu0 %v2381
        %7898 = vmatmul.mubr.bf16.gmra.mrb[0].mxu0 %v2379
        %v7899 = vpop.f32.mrb[0].mxu0
        %v7900 = vadd.f32 %v7860, %v7899
        %v7901 = vpop.f32.mrb[0].mxu0
        %v7902 = vpop.f32.mrb[0].mxu0
        %v7903 = vpop.f32.mrb[0].mxu0
        %7904 = vdwg.mxu0
        %7905 = vmatprep.subr.bf16.mxu0 0
        %7906 = vmatpush1.bf16.msra.mxu0 %v6241
        %7907 = vmatprep.subr.bf16.mxu0 0
        %7908 = vmatpush1.bf16.msra.mxu0 %v6242
        %7909 = vmatprep.subr.bf16.mxu0 0
        %7910 = vmatpush1.bf16.msra.mxu0 %v6243
        %7911 = vmatprep.subr.bf16.mxu0 0
        %7912 = vmatpush1.bf16.msra.mxu0 %v6244
        %7913 = vmatprep.subr.bf16.mxu0 0
        %7914 = vmatpush1.bf16.msra.mxu0 %v6245
        %7915 = vmatprep.subr.bf16.mxu0 0
        %7916 = vmatpush1.bf16.msra.mxu0 %v6246
        %7917 = vmatprep.subr.bf16.mxu0 0
        %7918 = vmatpush1.bf16.msra.mxu0 %v6247
        %7919 = vmatprep.subr.bf16.mxu0 0
        %7920 = vmatpush1.bf16.msra.mxu0 %v6248
        %7921 = vmatprep.subr.bf16.mxu0 0
        %7922 = vmatpush1.bf16.msra.mxu0 %v6249
        %7923 = vmatprep.subr.bf16.mxu0 0
        %7924 = vmatpush1.bf16.msra.mxu0 %v6250
        %7925 = vmatprep.subr.bf16.mxu0 0
        %7926 = vmatpush1.bf16.msra.mxu0 %v6251
        %7927 = vmatprep.subr.bf16.mxu0 0
        %7928 = vmatpush1.bf16.msra.mxu0 %v6252
        %7929 = vmatprep.subr.bf16.mxu0 0
        %7930 = vmatpush1.bf16.msra.mxu0 %v6253
        %7931 = vmatprep.subr.bf16.mxu0 0
        %7932 = vmatpush1.bf16.msra.mxu0 %v6254
        %7933 = vmatprep.subr.bf16.mxu0 0
        %7934 = vmatpush1.bf16.msra.mxu0 %v6255
        %7935 = vmatprep.subr.bf16.mxu0 0
        %7936 = vmatpush1.bf16.msra.mxu0 %v6256
        %7937 = vmatprep.mubr.bf16.mxu0 %v2419
        %7938 = vmatmul.mubr.bf16.gmra.mrb[0].mxu0 %v2405
        %v7939 = vpop.f32.mrb[0].mxu0
        %v7940 = vadd.f32 %v7900, %v7939
        %v7941 = vpop.f32.mrb[0].mxu0
        %v7942 = vpop.f32.mrb[0].mxu0
        %v7943 = vpop.f32.mrb[0].mxu0
        %7944 = vdwg.mxu0
        %7945 = vmatprep.subr.bf16.mxu0 0
        %7946 = vmatpush1.bf16.msra.mxu0 %v6257
        %7947 = vmatprep.subr.bf16.mxu0 0
        %7948 = vmatpush1.bf16.msra.mxu0 %v6258
        %7949 = vmatprep.subr.bf16.mxu0 0
        %7950 = vmatpush1.bf16.msra.mxu0 %v6259
        %7951 = vmatprep.subr.bf16.mxu0 0
        %7952 = vmatpush1.bf16.msra.mxu0 %v6260
        %7953 = vmatprep.subr.bf16.mxu0 0
        %7954 = vmatpush1.bf16.msra.mxu0 %v6261
        %7955 = vmatprep.subr.bf16.mxu0 0
        %7956 = vmatpush1.bf16.msra.mxu0 %v6262
        %7957 = vmatprep.subr.bf16.mxu0 0
        %7958 = vmatpush1.bf16.msra.mxu0 %v6263
        %7959 = vmatprep.subr.bf16.mxu0 0
        %7960 = vmatpush1.bf16.msra.mxu0 %v6264
        %7961 = vmatprep.subr.bf16.mxu0 0
        %7962 = vmatpush1.bf16.msra.mxu0 %v6265
        %7963 = vmatprep.subr.bf16.mxu0 0
        %7964 = vmatpush1.bf16.msra.mxu0 %v6266
        %7965 = vmatprep.subr.bf16.mxu0 0
        %7966 = vmatpush1.bf16.msra.mxu0 %v6267
        %7967 = vmatprep.subr.bf16.mxu0 0
        %7968 = vmatpush1.bf16.msra.mxu0 %v6268
        %7969 = vmatprep.subr.bf16.mxu0 0
        %7970 = vmatpush1.bf16.msra.mxu0 %v6269
        %7971 = vmatprep.subr.bf16.mxu0 0
        %7972 = vmatpush1.bf16.msra.mxu0 %v6270
        %7973 = vmatprep.subr.bf16.mxu0 0
        %7974 = vmatpush1.bf16.msra.mxu0 %v6271
        %7975 = vmatprep.subr.bf16.mxu0 0
        %7976 = vmatpush1.bf16.msra.mxu0 %v6272
        %7977 = vmatprep.mubr.bf16.mxu0 %v2429
        %7978 = vmatmul.mubr.bf16.gmra.mrb[0].mxu0 %v2427
        %v7979 = vpop.f32.mrb[0].mxu0
        %v7980 = vadd.f32 %v7940, %v7979
        %v7981 = vpop.f32.mrb[0].mxu0
        %v7982 = vpop.f32.mrb[0].mxu0
        %v7983 = vpop.f32.mrb[0].mxu0
        %7984 = vdwg.mxu0
        %7985 = vmatprep.subr.bf16.mxu0 0
        %7986 = vmatpush1.bf16.msra.mxu0 %v6273
        %7987 = vmatprep.subr.bf16.mxu0 0
        %7988 = vmatpush1.bf16.msra.mxu0 %v6274
        %7989 = vmatprep.subr.bf16.mxu0 0
        %7990 = vmatpush1.bf16.msra.mxu0 %v6275
        %7991 = vmatprep.subr.bf16.mxu0 0
        %7992 = vmatpush1.bf16.msra.mxu0 %v6276
        %7993 = vmatprep.subr.bf16.mxu0 0
        %7994 = vmatpush1.bf16.msra.mxu0 %v6277
        %7995 = vmatprep.subr.bf16.mxu0 0
        %7996 = vmatpush1.bf16.msra.mxu0 %v6278
        %7997 = vmatprep.subr.bf16.mxu0 0
        %7998 = vmatpush1.bf16.msra.mxu0 %v6279
        %7999 = vmatprep.subr.bf16.mxu0 0
        %8000 = vmatpush1.bf16.msra.mxu0 %v6280
        %8001 = vmatprep.subr.bf16.mxu0 0
        %8002 = vmatpush1.bf16.msra.mxu0 %v6281
        %8003 = vmatprep.subr.bf16.mxu0 0
        %8004 = vmatpush1.bf16.msra.mxu0 %v6282
        %8005 = vmatprep.subr.bf16.mxu0 0
        %8006 = vmatpush1.bf16.msra.mxu0 %v6283
        %8007 = vmatprep.subr.bf16.mxu0 0
        %8008 = vmatpush1.bf16.msra.mxu0 %v6284
        %8009 = vmatprep.subr.bf16.mxu0 0
        %8010 = vmatpush1.bf16.msra.mxu0 %v6285
        %8011 = vmatprep.subr.bf16.mxu0 0
        %8012 = vmatpush1.bf16.msra.mxu0 %v6286
        %8013 = vmatprep.subr.bf16.mxu0 0
        %8014 = vmatpush1.bf16.msra.mxu0 %v6287
        %8015 = vmatprep.subr.bf16.mxu0 0
        %8016 = vmatpush1.bf16.msra.mxu0 %v6288
        %8017 = vmatprep.mubr.bf16.mxu0 %v2426
        %8018 = vmatmul.mubr.bf16.gmra.mrb[0].mxu0 %v2412
        %v8019 = vpop.f32.mrb[0].mxu0
        %v8020 = vadd.f32 %v7980, %v8019
        %v8021 = vpop.f32.mrb[0].mxu0
        %v8022 = vpop.f32.mrb[0].mxu0
        %v8023 = vpop.f32.mrb[0].mxu0
        %8024 = vdwg.mxu0
        %8025 = vmatprep.subr.bf16.mxu0 0
        %8026 = vmatpush1.bf16.msra.mxu0 %v6289
        %8027 = vmatprep.subr.bf16.mxu0 0
        %8028 = vmatpush1.bf16.msra.mxu0 %v6290
        %8029 = vmatprep.subr.bf16.mxu0 0
        %8030 = vmatpush1.bf16.msra.mxu0 %v6291
        %8031 = vmatprep.subr.bf16.mxu0 0
        %8032 = vmatpush1.bf16.msra.mxu0 %v6292
        %8033 = vmatprep.subr.bf16.mxu0 0
        %8034 = vmatpush1.bf16.msra.mxu0 %v6293
        %8035 = vmatprep.subr.bf16.mxu0 0
        %8036 = vmatpush1.bf16.msra.mxu0 %v6294
        %8037 = vmatprep.subr.bf16.mxu0 0
        %8038 = vmatpush1.bf16.msra.mxu0 %v6295
        %8039 = vmatprep.subr.bf16.mxu0 0
        %8040 = vmatpush1.bf16.msra.mxu0 %v6296
        %8041 = vmatprep.subr.bf16.mxu0 0
        %8042 = vmatpush1.bf16.msra.mxu0 %v6297
        %8043 = vmatprep.subr.bf16.mxu0 0
        %8044 = vmatpush1.bf16.msra.mxu0 %v6298
        %8045 = vmatprep.subr.bf16.mxu0 0
        %8046 = vmatpush1.bf16.msra.mxu0 %v6299
        %8047 = vmatprep.subr.bf16.mxu0 0
        %8048 = vmatpush1.bf16.msra.mxu0 %v6300
        %8049 = vmatprep.subr.bf16.mxu0 0
        %8050 = vmatpush1.bf16.msra.mxu0 %v6301
        %8051 = vmatprep.subr.bf16.mxu0 0
        %8052 = vmatpush1.bf16.msra.mxu0 %v6302
        %8053 = vmatprep.subr.bf16.mxu0 0
        %8054 = vmatpush1.bf16.msra.mxu0 %v6303
        %8055 = vmatprep.subr.bf16.mxu0 0
        %8056 = vmatpush1.bf16.msra.mxu0 %v6304
        %8057 = vmatprep.mubr.bf16.mxu0 %v2430
        %8058 = vmatmul.mubr.bf16.gmra.mrb[0].mxu0 %v2428
        %v8059 = vpop.f32.mrb[0].mxu0
        %v8060 = vadd.f32 %v8020, %v8059
        %v8061 = vpop.f32.mrb[0].mxu0
        %v8062 = vpop.f32.mrb[0].mxu0
        %v8063 = vpop.f32.mrb[0].mxu0
        %8064 = vdwg.mxu0
        %8065 = vmatprep.subr.bf16.mxu0 0
        %8066 = vmatpush1.bf16.msra.mxu0 %v6305
        %8067 = vmatprep.subr.bf16.mxu0 0
        %8068 = vmatpush1.bf16.msra.mxu0 %v6306
        %8069 = vmatprep.subr.bf16.mxu0 0
        %8070 = vmatpush1.bf16.msra.mxu0 %v6307
        %8071 = vmatprep.subr.bf16.mxu0 0
        %8072 = vmatpush1.bf16.msra.mxu0 %v6308
        %8073 = vmatprep.subr.bf16.mxu0 0
        %8074 = vmatpush1.bf16.msra.mxu0 %v6309
        %8075 = vmatprep.subr.bf16.mxu0 0
        %8076 = vmatpush1.bf16.msra.mxu0 %v6310
        %8077 = vmatprep.subr.bf16.mxu0 0
        %8078 = vmatpush1.bf16.msra.mxu0 %v6311
        %8079 = vmatprep.subr.bf16.mxu0 0
        %8080 = vmatpush1.bf16.msra.mxu0 %v6312
        %8081 = vmatprep.subr.bf16.mxu0 0
        %8082 = vmatpush1.bf16.msra.mxu0 %v6313
        %8083 = vmatprep.subr.bf16.mxu0 0
        %8084 = vmatpush1.bf16.msra.mxu0 %v6314
        %8085 = vmatprep.subr.bf16.mxu0 0
        %8086 = vmatpush1.bf16.msra.mxu0 %v6315
        %8087 = vmatprep.subr.bf16.mxu0 0
        %8088 = vmatpush1.bf16.msra.mxu0 %v6316
        %8089 = vmatprep.subr.bf16.mxu0 0
        %8090 = vmatpush1.bf16.msra.mxu0 %v6317
        %8091 = vmatprep.subr.bf16.mxu0 0
        %8092 = vmatpush1.bf16.msra.mxu0 %v6318
        %8093 = vmatprep.subr.bf16.mxu0 0
        %8094 = vmatpush1.bf16.msra.mxu0 %v6319
        %8095 = vmatprep.subr.bf16.mxu0 0
        %8096 = vmatpush1.bf16.msra.mxu0 %v6320
        %8097 = vmatprep.mubr.bf16.mxu0 %v2468
        %8098 = vmatmul.mubr.bf16.gmra.mrb[0].mxu0 %v2454
        %v8099 = vpop.f32.mrb[0].mxu0
        %v8100 = vadd.f32 %v8060, %v8099
        %v8101 = vpop.f32.mrb[0].mxu0
        %v8102 = vpop.f32.mrb[0].mxu0
        %v8103 = vpop.f32.mrb[0].mxu0
        %8104 = vdwg.mxu0
        %8105 = vmatprep.subr.bf16.mxu0 0
        %8106 = vmatpush1.bf16.msra.mxu0 %v6321
        %8107 = vmatprep.subr.bf16.mxu0 0
        %8108 = vmatpush1.bf16.msra.mxu0 %v6322
        %8109 = vmatprep.subr.bf16.mxu0 0
        %8110 = vmatpush1.bf16.msra.mxu0 %v6323
        %8111 = vmatprep.subr.bf16.mxu0 0
        %8112 = vmatpush1.bf16.msra.mxu0 %v6324
        %8113 = vmatprep.subr.bf16.mxu0 0
        %8114 = vmatpush1.bf16.msra.mxu0 %v6325
        %8115 = vmatprep.subr.bf16.mxu0 0
        %8116 = vmatpush1.bf16.msra.mxu0 %v6326
        %8117 = vmatprep.subr.bf16.mxu0 0
        %8118 = vmatpush1.bf16.msra.mxu0 %v6327
        %8119 = vmatprep.subr.bf16.mxu0 0
        %8120 = vmatpush1.bf16.msra.mxu0 %v6328
        %8121 = vmatprep.subr.bf16.mxu0 0
        %8122 = vmatpush1.bf16.msra.mxu0 %v6329
        %8123 = vmatprep.subr.bf16.mxu0 0
        %8124 = vmatpush1.bf16.msra.mxu0 %v6330
        %8125 = vmatprep.subr.bf16.mxu0 0
        %8126 = vmatpush1.bf16.msra.mxu0 %v6331
        %8127 = vmatprep.subr.bf16.mxu0 0
        %8128 = vmatpush1.bf16.msra.mxu0 %v6332
        %8129 = vmatprep.subr.bf16.mxu0 0
        %8130 = vmatpush1.bf16.msra.mxu0 %v6333
        %8131 = vmatprep.subr.bf16.mxu0 0
        %8132 = vmatpush1.bf16.msra.mxu0 %v6334
        %8133 = vmatprep.subr.bf16.mxu0 0
        %8134 = vmatpush1.bf16.msra.mxu0 %v6335
        %8135 = vmatprep.subr.bf16.mxu0 0
        %8136 = vmatpush1.bf16.msra.mxu0 %v6336
        %8137 = vmatprep.mubr.bf16.mxu0 %v2478
        %8138 = vmatmul.mubr.bf16.gmra.mrb[0].mxu0 %v2476
        %v8139 = vpop.f32.mrb[0].mxu0
        %v8140 = vadd.f32 %v8100, %v8139
        %v8141 = vpop.f32.mrb[0].mxu0
        %v8142 = vpop.f32.mrb[0].mxu0
        %v8143 = vpop.f32.mrb[0].mxu0
        %8144 = vdwg.mxu0
        %8145 = vmatprep.subr.bf16.mxu0 0
        %8146 = vmatpush1.bf16.msra.mxu0 %v6337
        %8147 = vmatprep.subr.bf16.mxu0 0
        %8148 = vmatpush1.bf16.msra.mxu0 %v6338
        %8149 = vmatprep.subr.bf16.mxu0 0
        %8150 = vmatpush1.bf16.msra.mxu0 %v6339
        %8151 = vmatprep.subr.bf16.mxu0 0
        %8152 = vmatpush1.bf16.msra.mxu0 %v6340
        %8153 = vmatprep.subr.bf16.mxu0 0
        %8154 = vmatpush1.bf16.msra.mxu0 %v6341
        %8155 = vmatprep.subr.bf16.mxu0 0
        %8156 = vmatpush1.bf16.msra.mxu0 %v6342
        %8157 = vmatprep.subr.bf16.mxu0 0
        %8158 = vmatpush1.bf16.msra.mxu0 %v6343
        %8159 = vmatprep.subr.bf16.mxu0 0
        %8160 = vmatpush1.bf16.msra.mxu0 %v6344
        %8161 = vmatprep.subr.bf16.mxu0 0
        %8162 = vmatpush1.bf16.msra.mxu0 %v6345
        %8163 = vmatprep.subr.bf16.mxu0 0
        %8164 = vmatpush1.bf16.msra.mxu0 %v6346
        %8165 = vmatprep.subr.bf16.mxu0 0
        %8166 = vmatpush1.bf16.msra.mxu0 %v6347
        %8167 = vmatprep.subr.bf16.mxu0 0
        %8168 = vmatpush1.bf16.msra.mxu0 %v6348
        %8169 = vmatprep.subr.bf16.mxu0 0
        %8170 = vmatpush1.bf16.msra.mxu0 %v6349
        %8171 = vmatprep.subr.bf16.mxu0 0
        %8172 = vmatpush1.bf16.msra.mxu0 %v6350
        %8173 = vmatprep.subr.bf16.mxu0 0
        %8174 = vmatpush1.bf16.msra.mxu0 %v6351
        %8175 = vmatprep.subr.bf16.mxu0 0
        %8176 = vmatpush1.bf16.msra.mxu0 %v6352
        %8177 = vmatprep.mubr.bf16.mxu0 %v2475
        %8178 = vmatmul.mubr.bf16.gmra.mrb[0].mxu0 %v2461
        %v8179 = vpop.f32.mrb[0].mxu0
        %v8180 = vadd.f32 %v8140, %v8179
        %v8181 = vpop.f32.mrb[0].mxu0
        %v8182 = vpop.f32.mrb[0].mxu0
        %v8183 = vpop.f32.mrb[0].mxu0
        %8184 = vdwg.mxu0
        %8185 = vmatprep.subr.bf16.mxu0 0
        %8186 = vmatpush1.bf16.msra.mxu0 %v6353
        %8187 = vmatprep.subr.bf16.mxu0 0
        %8188 = vmatpush1.bf16.msra.mxu0 %v6354
        %8189 = vmatprep.subr.bf16.mxu0 0
        %8190 = vmatpush1.bf16.msra.mxu0 %v6355
        %8191 = vmatprep.subr.bf16.mxu0 0
        %8192 = vmatpush1.bf16.msra.mxu0 %v6356
        %8193 = vmatprep.subr.bf16.mxu0 0
        %8194 = vmatpush1.bf16.msra.mxu0 %v6357
        %8195 = vmatprep.subr.bf16.mxu0 0
        %8196 = vmatpush1.bf16.msra.mxu0 %v6358
        %8197 = vmatprep.subr.bf16.mxu0 0
        %8198 = vmatpush1.bf16.msra.mxu0 %v6359
        %8199 = vmatprep.subr.bf16.mxu0 0
        %8200 = vmatpush1.bf16.msra.mxu0 %v6360
        %8201 = vmatprep.subr.bf16.mxu0 0
        %8202 = vmatpush1.bf16.msra.mxu0 %v6361
        %8203 = vmatprep.subr.bf16.mxu0 0
        %8204 = vmatpush1.bf16.msra.mxu0 %v6362
        %8205 = vmatprep.subr.bf16.mxu0 0
        %8206 = vmatpush1.bf16.msra.mxu0 %v6363
        %8207 = vmatprep.subr.bf16.mxu0 0
        %8208 = vmatpush1.bf16.msra.mxu0 %v6364
        %8209 = vmatprep.subr.bf16.mxu0 0
        %8210 = vmatpush1.bf16.msra.mxu0 %v6365
        %8211 = vmatprep.subr.bf16.mxu0 0
        %8212 = vmatpush1.bf16.msra.mxu0 %v6366
        %8213 = vmatprep.subr.bf16.mxu0 0
        %8214 = vmatpush1.bf16.msra.mxu0 %v6367
        %8215 = vmatprep.subr.bf16.mxu0 0
        %8216 = vmatpush1.bf16.msra.mxu0 %v6368
        %8217 = vmatprep.mubr.bf16.mxu0 %v2479
        %8218 = vmatmul.mubr.bf16.gmra.mrb[0].mxu0 %v2477
        %v8219 = vpop.f32.mrb[0].mxu0
        %v8220 = vadd.f32 %v8180, %v8219
        %v8221 = vpop.f32.mrb[0].mxu0
        %v8222 = vpop.f32.mrb[0].mxu0
        %v8223 = vpop.f32.mrb[0].mxu0
        %8224 = vdwg.mxu0
        %8225 = vmatprep.subr.bf16.mxu0 0
        %8226 = vmatpush1.bf16.msra.mxu0 %v6369
        %8227 = vmatprep.subr.bf16.mxu0 0
        %8228 = vmatpush1.bf16.msra.mxu0 %v6370
        %8229 = vmatprep.subr.bf16.mxu0 0
        %8230 = vmatpush1.bf16.msra.mxu0 %v6371
        %8231 = vmatprep.subr.bf16.mxu0 0
        %8232 = vmatpush1.bf16.msra.mxu0 %v6372
        %8233 = vmatprep.subr.bf16.mxu0 0
        %8234 = vmatpush1.bf16.msra.mxu0 %v6373
        %8235 = vmatprep.subr.bf16.mxu0 0
        %8236 = vmatpush1.bf16.msra.mxu0 %v6374
        %8237 = vmatprep.subr.bf16.mxu0 0
        %8238 = vmatpush1.bf16.msra.mxu0 %v6375
        %8239 = vmatprep.subr.bf16.mxu0 0
        %8240 = vmatpush1.bf16.msra.mxu0 %v6376
        %8241 = vmatprep.subr.bf16.mxu0 0
        %8242 = vmatpush1.bf16.msra.mxu0 %v6377
        %8243 = vmatprep.subr.bf16.mxu0 0
        %8244 = vmatpush1.bf16.msra.mxu0 %v6378
        %8245 = vmatprep.subr.bf16.mxu0 0
        %8246 = vmatpush1.bf16.msra.mxu0 %v6379
        %8247 = vmatprep.subr.bf16.mxu0 0
        %8248 = vmatpush1.bf16.msra.mxu0 %v6380
        %8249 = vmatprep.subr.bf16.mxu0 0
        %8250 = vmatpush1.bf16.msra.mxu0 %v6381
        %8251 = vmatprep.subr.bf16.mxu0 0
        %8252 = vmatpush1.bf16.msra.mxu0 %v6382
        %8253 = vmatprep.subr.bf16.mxu0 0
        %8254 = vmatpush1.bf16.msra.mxu0 %v6383
        %8255 = vmatprep.subr.bf16.mxu0 0
        %8256 = vmatpush1.bf16.msra.mxu0 %v6384
        %8257 = vmatprep.mubr.bf16.mxu0 %v2517
        %8258 = vmatmul.mubr.bf16.gmra.mrb[0].mxu0 %v2503
        %v8259 = vpop.f32.mrb[0].mxu0
        %v8260 = vadd.f32 %v8220, %v8259
        %v8261 = vpop.f32.mrb[0].mxu0
        %v8262 = vpop.f32.mrb[0].mxu0
        %v8263 = vpop.f32.mrb[0].mxu0
        %8264 = vdwg.mxu0
        %8265 = vmatprep.subr.bf16.mxu0 0
        %8266 = vmatpush1.bf16.msra.mxu0 %v6385
        %8267 = vmatprep.subr.bf16.mxu0 0
        %8268 = vmatpush1.bf16.msra.mxu0 %v6386
        %8269 = vmatprep.subr.bf16.mxu0 0
        %8270 = vmatpush1.bf16.msra.mxu0 %v6387
        %8271 = vmatprep.subr.bf16.mxu0 0
        %8272 = vmatpush1.bf16.msra.mxu0 %v6388
        %8273 = vmatprep.subr.bf16.mxu0 0
        %8274 = vmatpush1.bf16.msra.mxu0 %v6389
        %8275 = vmatprep.subr.bf16.mxu0 0
        %8276 = vmatpush1.bf16.msra.mxu0 %v6390
        %8277 = vmatprep.subr.bf16.mxu0 0
        %8278 = vmatpush1.bf16.msra.mxu0 %v6391
        %8279 = vmatprep.subr.bf16.mxu0 0
        %8280 = vmatpush1.bf16.msra.mxu0 %v6392
        %8281 = vmatprep.subr.bf16.mxu0 0
        %8282 = vmatpush1.bf16.msra.mxu0 %v6393
        %8283 = vmatprep.subr.bf16.mxu0 0
        %8284 = vmatpush1.bf16.msra.mxu0 %v6394
        %8285 = vmatprep.subr.bf16.mxu0 0
        %8286 = vmatpush1.bf16.msra.mxu0 %v6395
        %8287 = vmatprep.subr.bf16.mxu0 0
        %8288 = vmatpush1.bf16.msra.mxu0 %v6396
        %8289 = vmatprep.subr.bf16.mxu0 0
        %8290 = vmatpush1.bf16.msra.mxu0 %v6397
        %8291 = vmatprep.subr.bf16.mxu0 0
        %8292 = vmatpush1.bf16.msra.mxu0 %v6398
        %8293 = vmatprep.subr.bf16.mxu0 0
        %8294 = vmatpush1.bf16.msra.mxu0 %v6399
        %8295 = vmatprep.subr.bf16.mxu0 0
        %8296 = vmatpush1.bf16.msra.mxu0 %v6400
        %8297 = vmatprep.mubr.bf16.mxu0 %v2527
        %8298 = vmatmul.mubr.bf16.gmra.mrb[0].mxu0 %v2525
        %v8299 = vpop.f32.mrb[0].mxu0
        %v8300 = vadd.f32 %v8260, %v8299
        %v8301 = vpop.f32.mrb[0].mxu0
        %v8302 = vpop.f32.mrb[0].mxu0
        %v8303 = vpop.f32.mrb[0].mxu0
        %8304 = vdwg.mxu0
        %8305 = vmatprep.subr.bf16.mxu0 0
        %8306 = vmatpush1.bf16.msra.mxu0 %v6401
        %8307 = vmatprep.subr.bf16.mxu0 0
        %8308 = vmatpush1.bf16.msra.mxu0 %v6402
        %8309 = vmatprep.subr.bf16.mxu0 0
        %8310 = vmatpush1.bf16.msra.mxu0 %v6403
        %8311 = vmatprep.subr.bf16.mxu0 0
        %8312 = vmatpush1.bf16.msra.mxu0 %v6404
        %8313 = vmatprep.subr.bf16.mxu0 0
        %8314 = vmatpush1.bf16.msra.mxu0 %v6405
        %8315 = vmatprep.subr.bf16.mxu0 0
        %8316 = vmatpush1.bf16.msra.mxu0 %v6406
        %8317 = vmatprep.subr.bf16.mxu0 0
        %8318 = vmatpush1.bf16.msra.mxu0 %v6407
        %8319 = vmatprep.subr.bf16.mxu0 0
        %8320 = vmatpush1.bf16.msra.mxu0 %v6408
        %8321 = vmatprep.subr.bf16.mxu0 0
        %8322 = vmatpush1.bf16.msra.mxu0 %v6409
        %8323 = vmatprep.subr.bf16.mxu0 0
        %8324 = vmatpush1.bf16.msra.mxu0 %v6410
        %8325 = vmatprep.subr.bf16.mxu0 0
        %8326 = vmatpush1.bf16.msra.mxu0 %v6411
        %8327 = vmatprep.subr.bf16.mxu0 0
        %8328 = vmatpush1.bf16.msra.mxu0 %v6412
        %8329 = vmatprep.subr.bf16.mxu0 0
        %8330 = vmatpush1.bf16.msra.mxu0 %v6413
        %8331 = vmatprep.subr.bf16.mxu0 0
        %8332 = vmatpush1.bf16.msra.mxu0 %v6414
        %8333 = vmatprep.subr.bf16.mxu0 0
        %8334 = vmatpush1.bf16.msra.mxu0 %v6415
        %8335 = vmatprep.subr.bf16.mxu0 0
        %8336 = vmatpush1.bf16.msra.mxu0 %v6416
        %8337 = vmatprep.mubr.bf16.mxu0 %v2524
        %8338 = vmatmul.mubr.bf16.gmra.mrb[0].mxu0 %v2510
        %v8339 = vpop.f32.mrb[0].mxu0
        %v8340 = vadd.f32 %v8300, %v8339
        %v8341 = vpop.f32.mrb[0].mxu0
        %v8342 = vpop.f32.mrb[0].mxu0
        %v8343 = vpop.f32.mrb[0].mxu0
        %8344 = vdwg.mxu0
        %8345 = vmatprep.subr.bf16.mxu0 0
        %8346 = vmatpush1.bf16.msra.mxu0 %v6417
        %8347 = vmatprep.subr.bf16.mxu0 0
        %8348 = vmatpush1.bf16.msra.mxu0 %v6418
        %8349 = vmatprep.subr.bf16.mxu0 0
        %8350 = vmatpush1.bf16.msra.mxu0 %v6419
        %8351 = vmatprep.subr.bf16.mxu0 0
        %8352 = vmatpush1.bf16.msra.mxu0 %v6420
        %8353 = vmatprep.subr.bf16.mxu0 0
        %8354 = vmatpush1.bf16.msra.mxu0 %v6421
        %8355 = vmatprep.subr.bf16.mxu0 0
        %8356 = vmatpush1.bf16.msra.mxu0 %v6422
        %8357 = vmatprep.subr.bf16.mxu0 0
        %8358 = vmatpush1.bf16.msra.mxu0 %v6423
        %8359 = vmatprep.subr.bf16.mxu0 0
        %8360 = vmatpush1.bf16.msra.mxu0 %v6424
        %8361 = vmatprep.subr.bf16.mxu0 0
        %8362 = vmatpush1.bf16.msra.mxu0 %v6425
        %8363 = vmatprep.subr.bf16.mxu0 0
        %8364 = vmatpush1.bf16.msra.mxu0 %v6426
        %8365 = vmatprep.subr.bf16.mxu0 0
        %8366 = vmatpush1.bf16.msra.mxu0 %v6427
        %8367 = vmatprep.subr.bf16.mxu0 0
        %8368 = vmatpush1.bf16.msra.mxu0 %v6428
        %8369 = vmatprep.subr.bf16.mxu0 0
        %8370 = vmatpush1.bf16.msra.mxu0 %v6429
        %8371 = vmatprep.subr.bf16.mxu0 0
        %8372 = vmatpush1.bf16.msra.mxu0 %v6430
        %8373 = vmatprep.subr.bf16.mxu0 0
        %8374 = vmatpush1.bf16.msra.mxu0 %v6431
        %8375 = vmatprep.subr.bf16.mxu0 0
        %8376 = vmatpush1.bf16.msra.mxu0 %v6432
        %8377 = vmatprep.mubr.bf16.mxu0 %v2528
        %8378 = vmatmul.mubr.bf16.gmra.mrb[0].mxu0 %v2526
        %v8379 = vpop.f32.mrb[0].mxu0
        %v8380 = vadd.f32 %v8340, %v8379
        %v8381 = vpop.f32.mrb[0].mxu0
        %v8382 = vpop.f32.mrb[0].mxu0
        %v8383 = vpop.f32.mrb[0].mxu0
        %8384 = vdwg.mxu0
        %8385 = vmatprep.subr.bf16.mxu0 0
        %8386 = vmatpush1.bf16.msra.mxu0 %v6433
        %8387 = vmatprep.subr.bf16.mxu0 0
        %8388 = vmatpush1.bf16.msra.mxu0 %v6434
        %8389 = vmatprep.subr.bf16.mxu0 0
        %8390 = vmatpush1.bf16.msra.mxu0 %v6435
        %8391 = vmatprep.subr.bf16.mxu0 0
        %8392 = vmatpush1.bf16.msra.mxu0 %v6436
        %8393 = vmatprep.subr.bf16.mxu0 0
        %8394 = vmatpush1.bf16.msra.mxu0 %v6437
        %8395 = vmatprep.subr.bf16.mxu0 0
        %8396 = vmatpush1.bf16.msra.mxu0 %v6438
        %8397 = vmatprep.subr.bf16.mxu0 0
        %8398 = vmatpush1.bf16.msra.mxu0 %v6439
        %8399 = vmatprep.subr.bf16.mxu0 0
        %8400 = vmatpush1.bf16.msra.mxu0 %v6440
        %8401 = vmatprep.subr.bf16.mxu0 0
        %8402 = vmatpush1.bf16.msra.mxu0 %v6441
        %8403 = vmatprep.subr.bf16.mxu0 0
        %8404 = vmatpush1.bf16.msra.mxu0 %v6442
        %8405 = vmatprep.subr.bf16.mxu0 0
        %8406 = vmatpush1.bf16.msra.mxu0 %v6443
        %8407 = vmatprep.subr.bf16.mxu0 0
        %8408 = vmatpush1.bf16.msra.mxu0 %v6444
        %8409 = vmatprep.subr.bf16.mxu0 0
        %8410 = vmatpush1.bf16.msra.mxu0 %v6445
        %8411 = vmatprep.subr.bf16.mxu0 0
        %8412 = vmatpush1.bf16.msra.mxu0 %v6446
        %8413 = vmatprep.subr.bf16.mxu0 0
        %8414 = vmatpush1.bf16.msra.mxu0 %v6447
        %8415 = vmatprep.subr.bf16.mxu0 0
        %8416 = vmatpush1.bf16.msra.mxu0 %v6448
        %8417 = vmatprep.mubr.bf16.mxu0 %v2566
        %8418 = vmatmul.mubr.bf16.gmra.mrb[0].mxu0 %v2552
        %v8419 = vpop.f32.mrb[0].mxu0
        %v8420 = vadd.f32 %v8380, %v8419
        %v8421 = vpop.f32.mrb[0].mxu0
        %v8422 = vpop.f32.mrb[0].mxu0
        %v8423 = vpop.f32.mrb[0].mxu0
        %8424 = vdwg.mxu0
        %8425 = vmatprep.subr.bf16.mxu0 0
        %8426 = vmatpush1.bf16.msra.mxu0 %v6449
        %8427 = vmatprep.subr.bf16.mxu0 0
        %8428 = vmatpush1.bf16.msra.mxu0 %v6450
        %8429 = vmatprep.subr.bf16.mxu0 0
        %8430 = vmatpush1.bf16.msra.mxu0 %v6451
        %8431 = vmatprep.subr.bf16.mxu0 0
        %8432 = vmatpush1.bf16.msra.mxu0 %v6452
        %8433 = vmatprep.subr.bf16.mxu0 0
        %8434 = vmatpush1.bf16.msra.mxu0 %v6453
        %8435 = vmatprep.subr.bf16.mxu0 0
        %8436 = vmatpush1.bf16.msra.mxu0 %v6454
        %8437 = vmatprep.subr.bf16.mxu0 0
        %8438 = vmatpush1.bf16.msra.mxu0 %v6455
        %8439 = vmatprep.subr.bf16.mxu0 0
        %8440 = vmatpush1.bf16.msra.mxu0 %v6456
        %8441 = vmatprep.subr.bf16.mxu0 0
        %8442 = vmatpush1.bf16.msra.mxu0 %v6457
        %8443 = vmatprep.subr.bf16.mxu0 0
        %8444 = vmatpush1.bf16.msra.mxu0 %v6458
        %8445 = vmatprep.subr.bf16.mxu0 0
        %8446 = vmatpush1.bf16.msra.mxu0 %v6459
        %8447 = vmatprep.subr.bf16.mxu0 0
        %8448 = vmatpush1.bf16.msra.mxu0 %v6460
        %8449 = vmatprep.subr.bf16.mxu0 0
        %8450 = vmatpush1.bf16.msra.mxu0 %v6461
        %8451 = vmatprep.subr.bf16.mxu0 0
        %8452 = vmatpush1.bf16.msra.mxu0 %v6462
        %8453 = vmatprep.subr.bf16.mxu0 0
        %8454 = vmatpush1.bf16.msra.mxu0 %v6463
        %8455 = vmatprep.subr.bf16.mxu0 0
        %8456 = vmatpush1.bf16.msra.mxu0 %v6464
        %8457 = vmatprep.mubr.bf16.mxu0 %v2576
        %8458 = vmatmul.mubr.bf16.gmra.mrb[0].mxu0 %v2574
        %v8459 = vpop.f32.mrb[0].mxu0
        %v8460 = vadd.f32 %v8420, %v8459
        %v8461 = vpop.f32.mrb[0].mxu0
        %v8462 = vpop.f32.mrb[0].mxu0
        %v8463 = vpop.f32.mrb[0].mxu0
        %8464 = vdwg.mxu0
        %8465 = vmatprep.subr.bf16.mxu0 0
        %8466 = vmatpush1.bf16.msra.mxu0 %v6465
        %8467 = vmatprep.subr.bf16.mxu0 0
        %8468 = vmatpush1.bf16.msra.mxu0 %v6466
        %8469 = vmatprep.subr.bf16.mxu0 0
        %8470 = vmatpush1.bf16.msra.mxu0 %v6467
        %8471 = vmatprep.subr.bf16.mxu0 0
        %8472 = vmatpush1.bf16.msra.mxu0 %v6468
        %8473 = vmatprep.subr.bf16.mxu0 0
        %8474 = vmatpush1.bf16.msra.mxu0 %v6469
        %8475 = vmatprep.subr.bf16.mxu0 0
        %8476 = vmatpush1.bf16.msra.mxu0 %v6470
        %8477 = vmatprep.subr.bf16.mxu0 0
        %8478 = vmatpush1.bf16.msra.mxu0 %v6471
        %8479 = vmatprep.subr.bf16.mxu0 0
        %8480 = vmatpush1.bf16.msra.mxu0 %v6472
        %8481 = vmatprep.subr.bf16.mxu0 0
        %8482 = vmatpush1.bf16.msra.mxu0 %v6473
        %8483 = vmatprep.subr.bf16.mxu0 0
        %8484 = vmatpush1.bf16.msra.mxu0 %v6474
        %8485 = vmatprep.subr.bf16.mxu0 0
        %8486 = vmatpush1.bf16.msra.mxu0 %v6475
        %8487 = vmatprep.subr.bf16.mxu0 0
        %8488 = vmatpush1.bf16.msra.mxu0 %v6476
        %8489 = vmatprep.subr.bf16.mxu0 0
        %8490 = vmatpush1.bf16.msra.mxu0 %v6477
        %8491 = vmatprep.subr.bf16.mxu0 0
        %8492 = vmatpush1.bf16.msra.mxu0 %v6478
        %8493 = vmatprep.subr.bf16.mxu0 0
        %8494 = vmatpush1.bf16.msra.mxu0 %v6479
        %8495 = vmatprep.subr.bf16.mxu0 0
        %8496 = vmatpush1.bf16.msra.mxu0 %v6480
        %8497 = vmatprep.mubr.bf16.mxu0 %v2573
        %8498 = vmatmul.mubr.bf16.gmra.mrb[0].mxu0 %v2559
        %v8499 = vpop.f32.mrb[0].mxu0
        %v8500 = vadd.f32 %v8460, %v8499
        %v8501 = vpop.f32.mrb[0].mxu0
        %v8502 = vpop.f32.mrb[0].mxu0
        %v8503 = vpop.f32.mrb[0].mxu0
        %8504 = vdwg.mxu0
        %8505 = vmatprep.subr.bf16.mxu0 0
        %8506 = vmatpush1.bf16.msra.mxu0 %v6481
        %8507 = vmatprep.subr.bf16.mxu0 0
        %8508 = vmatpush1.bf16.msra.mxu0 %v6482
        %8509 = vmatprep.subr.bf16.mxu0 0
        %8510 = vmatpush1.bf16.msra.mxu0 %v6483
        %8511 = vmatprep.subr.bf16.mxu0 0
        %8512 = vmatpush1.bf16.msra.mxu0 %v6484
        %8513 = vmatprep.subr.bf16.mxu0 0
        %8514 = vmatpush1.bf16.msra.mxu0 %v6485
        %8515 = vmatprep.subr.bf16.mxu0 0
        %8516 = vmatpush1.bf16.msra.mxu0 %v6486
        %8517 = vmatprep.subr.bf16.mxu0 0
        %8518 = vmatpush1.bf16.msra.mxu0 %v6487
        %8519 = vmatprep.subr.bf16.mxu0 0
        %8520 = vmatpush1.bf16.msra.mxu0 %v6488
        %8521 = vmatprep.subr.bf16.mxu0 0
        %8522 = vmatpush1.bf16.msra.mxu0 %v6489
        %8523 = vmatprep.subr.bf16.mxu0 0
        %8524 = vmatpush1.bf16.msra.mxu0 %v6490
        %8525 = vmatprep.subr.bf16.mxu0 0
        %8526 = vmatpush1.bf16.msra.mxu0 %v6491
        %8527 = vmatprep.subr.bf16.mxu0 0
        %8528 = vmatpush1.bf16.msra.mxu0 %v6492
        %8529 = vmatprep.subr.bf16.mxu0 0
        %8530 = vmatpush1.bf16.msra.mxu0 %v6493
        %8531 = vmatprep.subr.bf16.mxu0 0
        %8532 = vmatpush1.bf16.msra.mxu0 %v6494
        %8533 = vmatprep.subr.bf16.mxu0 0
        %8534 = vmatpush1.bf16.msra.mxu0 %v6495
        %8535 = vmatprep.subr.bf16.mxu0 0
        %8536 = vmatpush1.bf16.msra.mxu0 %v6496
        %8537 = vmatprep.mubr.bf16.mxu0 %v2577
        %8538 = vmatmul.mubr.bf16.gmra.mrb[0].mxu0 %v2575
        %v8539 = vpop.f32.mrb[0].mxu0
        %v8540 = vadd.f32 %v8500, %v8539
        %v8541 = vpop.f32.mrb[0].mxu0
        %v8542 = vpop.f32.mrb[0].mxu0
        %v8543 = vpop.f32.mrb[0].mxu0
        %8544 = vdwg.mxu0
        %8545 = vmatprep.subr.bf16.mxu0 0
        %8546 = vmatpush1.bf16.msra.mxu0 %v6497
        %8547 = vmatprep.subr.bf16.mxu0 0
        %8548 = vmatpush1.bf16.msra.mxu0 %v6498
        %8549 = vmatprep.subr.bf16.mxu0 0
        %8550 = vmatpush1.bf16.msra.mxu0 %v6499
        %8551 = vmatprep.subr.bf16.mxu0 0
        %8552 = vmatpush1.bf16.msra.mxu0 %v6500
        %8553 = vmatprep.subr.bf16.mxu0 0
        %8554 = vmatpush1.bf16.msra.mxu0 %v6501
        %8555 = vmatprep.subr.bf16.mxu0 0
        %8556 = vmatpush1.bf16.msra.mxu0 %v6502
        %8557 = vmatprep.subr.bf16.mxu0 0
        %8558 = vmatpush1.bf16.msra.mxu0 %v6503
        %8559 = vmatprep.subr.bf16.mxu0 0
        %8560 = vmatpush1.bf16.msra.mxu0 %v6504
        %8561 = vmatprep.subr.bf16.mxu0 0
        %8562 = vmatpush1.bf16.msra.mxu0 %v6505
        %8563 = vmatprep.subr.bf16.mxu0 0
        %8564 = vmatpush1.bf16.msra.mxu0 %v6506
        %8565 = vmatprep.subr.bf16.mxu0 0
        %8566 = vmatpush1.bf16.msra.mxu0 %v6507
        %8567 = vmatprep.subr.bf16.mxu0 0
        %8568 = vmatpush1.bf16.msra.mxu0 %v6508
        %8569 = vmatprep.subr.bf16.mxu0 0
        %8570 = vmatpush1.bf16.msra.mxu0 %v6509
        %8571 = vmatprep.subr.bf16.mxu0 0
        %8572 = vmatpush1.bf16.msra.mxu0 %v6510
        %8573 = vmatprep.subr.bf16.mxu0 0
        %8574 = vmatpush1.bf16.msra.mxu0 %v6511
        %8575 = vmatprep.subr.bf16.mxu0 0
        %8576 = vmatpush1.bf16.msra.mxu0 %v6512
        %8577 = vmatprep.mubr.bf16.mxu0 %v2615
        %8578 = vmatmul.mubr.bf16.gmra.mrb[0].mxu0 %v2601
        %v8579 = vpop.f32.mrb[0].mxu0
        %v8580 = vadd.f32 %v8540, %v8579
        %v8581 = vpop.f32.mrb[0].mxu0
        %v8582 = vpop.f32.mrb[0].mxu0
        %v8583 = vpop.f32.mrb[0].mxu0
        %8584 = vdwg.mxu0
        %8585 = vmatprep.subr.bf16.mxu0 0
        %8586 = vmatpush1.bf16.msra.mxu0 %v6513
        %8587 = vmatprep.subr.bf16.mxu0 0
        %8588 = vmatpush1.bf16.msra.mxu0 %v6514
        %8589 = vmatprep.subr.bf16.mxu0 0
        %8590 = vmatpush1.bf16.msra.mxu0 %v6515
        %8591 = vmatprep.subr.bf16.mxu0 0
        %8592 = vmatpush1.bf16.msra.mxu0 %v6516
        %8593 = vmatprep.subr.bf16.mxu0 0
        %8594 = vmatpush1.bf16.msra.mxu0 %v6517
        %8595 = vmatprep.subr.bf16.mxu0 0
        %8596 = vmatpush1.bf16.msra.mxu0 %v6518
        %8597 = vmatprep.subr.bf16.mxu0 0
        %8598 = vmatpush1.bf16.msra.mxu0 %v6519
        %8599 = vmatprep.subr.bf16.mxu0 0
        %8600 = vmatpush1.bf16.msra.mxu0 %v6520
        %8601 = vmatprep.subr.bf16.mxu0 0
        %8602 = vmatpush1.bf16.msra.mxu0 %v6521
        %8603 = vmatprep.subr.bf16.mxu0 0
        %8604 = vmatpush1.bf16.msra.mxu0 %v6522
        %8605 = vmatprep.subr.bf16.mxu0 0
        %8606 = vmatpush1.bf16.msra.mxu0 %v6523
        %8607 = vmatprep.subr.bf16.mxu0 0
        %8608 = vmatpush1.bf16.msra.mxu0 %v6524
        %8609 = vmatprep.subr.bf16.mxu0 0
        %8610 = vmatpush1.bf16.msra.mxu0 %v6525
        %8611 = vmatprep.subr.bf16.mxu0 0
        %8612 = vmatpush1.bf16.msra.mxu0 %v6526
        %8613 = vmatprep.subr.bf16.mxu0 0
        %8614 = vmatpush1.bf16.msra.mxu0 %v6527
        %8615 = vmatprep.subr.bf16.mxu0 0
        %8616 = vmatpush1.bf16.msra.mxu0 %v6528
        %8617 = vmatprep.mubr.bf16.mxu0 %v2625
        %8618 = vmatmul.mubr.bf16.gmra.mrb[0].mxu0 %v2623
        %v8619 = vpop.f32.mrb[0].mxu0
        %v8620 = vadd.f32 %v8580, %v8619
        %v8621 = vpop.f32.mrb[0].mxu0
        %v8622 = vpop.f32.mrb[0].mxu0
        %v8623 = vpop.f32.mrb[0].mxu0
        %8624 = vdwg.mxu0
        %8625 = vmatprep.subr.bf16.mxu0 0
        %8626 = vmatpush1.bf16.msra.mxu0 %v6529
        %8627 = vmatprep.subr.bf16.mxu0 0
        %8628 = vmatpush1.bf16.msra.mxu0 %v6530
        %8629 = vmatprep.subr.bf16.mxu0 0
        %8630 = vmatpush1.bf16.msra.mxu0 %v6531
        %8631 = vmatprep.subr.bf16.mxu0 0
        %8632 = vmatpush1.bf16.msra.mxu0 %v6532
        %8633 = vmatprep.subr.bf16.mxu0 0
        %8634 = vmatpush1.bf16.msra.mxu0 %v6533
        %8635 = vmatprep.subr.bf16.mxu0 0
        %8636 = vmatpush1.bf16.msra.mxu0 %v6534
        %8637 = vmatprep.subr.bf16.mxu0 0
        %8638 = vmatpush1.bf16.msra.mxu0 %v6535
        %8639 = vmatprep.subr.bf16.mxu0 0
        %8640 = vmatpush1.bf16.msra.mxu0 %v6536
        %8641 = vmatprep.subr.bf16.mxu0 0
        %8642 = vmatpush1.bf16.msra.mxu0 %v6537
        %8643 = vmatprep.subr.bf16.mxu0 0
        %8644 = vmatpush1.bf16.msra.mxu0 %v6538
        %8645 = vmatprep.subr.bf16.mxu0 0
        %8646 = vmatpush1.bf16.msra.mxu0 %v6539
        %8647 = vmatprep.subr.bf16.mxu0 0
        %8648 = vmatpush1.bf16.msra.mxu0 %v6540
        %8649 = vmatprep.subr.bf16.mxu0 0
        %8650 = vmatpush1.bf16.msra.mxu0 %v6541
        %8651 = vmatprep.subr.bf16.mxu0 0
        %8652 = vmatpush1.bf16.msra.mxu0 %v6542
        %8653 = vmatprep.subr.bf16.mxu0 0
        %8654 = vmatpush1.bf16.msra.mxu0 %v6543
        %8655 = vmatprep.subr.bf16.mxu0 0
        %8656 = vmatpush1.bf16.msra.mxu0 %v6544
        %8657 = vmatprep.mubr.bf16.mxu0 %v2622
        %8658 = vmatmul.mubr.bf16.gmra.mrb[0].mxu0 %v2608
        %v8659 = vpop.f32.mrb[0].mxu0
        %v8660 = vadd.f32 %v8620, %v8659
        %v8661 = vpop.f32.mrb[0].mxu0
        %v8662 = vpop.f32.mrb[0].mxu0
        %v8663 = vpop.f32.mrb[0].mxu0
        %8664 = vdwg.mxu0
        %8665 = vmatprep.subr.bf16.mxu0 0
        %8666 = vmatpush1.bf16.msra.mxu0 %v6545
        %8667 = vmatprep.subr.bf16.mxu0 0
        %8668 = vmatpush1.bf16.msra.mxu0 %v6546
        %8669 = vmatprep.subr.bf16.mxu0 0
        %8670 = vmatpush1.bf16.msra.mxu0 %v6547
        %8671 = vmatprep.subr.bf16.mxu0 0
        %8672 = vmatpush1.bf16.msra.mxu0 %v6548
        %8673 = vmatprep.subr.bf16.mxu0 0
        %8674 = vmatpush1.bf16.msra.mxu0 %v6549
        %8675 = vmatprep.subr.bf16.mxu0 0
        %8676 = vmatpush1.bf16.msra.mxu0 %v6550
        %8677 = vmatprep.subr.bf16.mxu0 0
        %8678 = vmatpush1.bf16.msra.mxu0 %v6551
        %8679 = vmatprep.subr.bf16.mxu0 0
        %8680 = vmatpush1.bf16.msra.mxu0 %v6552
        %8681 = vmatprep.subr.bf16.mxu0 0
        %8682 = vmatpush1.bf16.msra.mxu0 %v6553
        %8683 = vmatprep.subr.bf16.mxu0 0
        %8684 = vmatpush1.bf16.msra.mxu0 %v6554
        %8685 = vmatprep.subr.bf16.mxu0 0
        %8686 = vmatpush1.bf16.msra.mxu0 %v6555
        %8687 = vmatprep.subr.bf16.mxu0 0
        %8688 = vmatpush1.bf16.msra.mxu0 %v6556
        %8689 = vmatprep.subr.bf16.mxu0 0
        %8690 = vmatpush1.bf16.msra.mxu0 %v6557
        %8691 = vmatprep.subr.bf16.mxu0 0
        %8692 = vmatpush1.bf16.msra.mxu0 %v6558
        %8693 = vmatprep.subr.bf16.mxu0 0
        %8694 = vmatpush1.bf16.msra.mxu0 %v6559
        %8695 = vmatprep.subr.bf16.mxu0 0
        %8696 = vmatpush1.bf16.msra.mxu0 %v6560
        %8697 = vmatprep.mubr.bf16.mxu0 %v2626
        %8698 = vmatmul.mubr.bf16.gmra.mrb[0].mxu0 %v2624
        %v8699 = vpop.f32.mrb[0].mxu0
        %v8700 = vadd.f32 %v8660, %v8699
        %v8701 = vpop.f32.mrb[0].mxu0
        %v8702 = vpop.f32.mrb[0].mxu0
        %v8703 = vpop.f32.mrb[0].mxu0
        %8704 = vdwg.mxu0
        %8705 = vmatprep.subr.bf16.mxu0 0
        %8706 = vmatpush1.bf16.msra.mxu0 %v6561
        %8707 = vmatprep.subr.bf16.mxu0 0
        %8708 = vmatpush1.bf16.msra.mxu0 %v6562
        %8709 = vmatprep.subr.bf16.mxu0 0
        %8710 = vmatpush1.bf16.msra.mxu0 %v6563
        %8711 = vmatprep.subr.bf16.mxu0 0
        %8712 = vmatpush1.bf16.msra.mxu0 %v6564
        %8713 = vmatprep.subr.bf16.mxu0 0
        %8714 = vmatpush1.bf16.msra.mxu0 %v6565
        %8715 = vmatprep.subr.bf16.mxu0 0
        %8716 = vmatpush1.bf16.msra.mxu0 %v6566
        %8717 = vmatprep.subr.bf16.mxu0 0
        %8718 = vmatpush1.bf16.msra.mxu0 %v6567
        %8719 = vmatprep.subr.bf16.mxu0 0
        %8720 = vmatpush1.bf16.msra.mxu0 %v6568
        %8721 = vmatprep.subr.bf16.mxu0 0
        %8722 = vmatpush1.bf16.msra.mxu0 %v6569
        %8723 = vmatprep.subr.bf16.mxu0 0
        %8724 = vmatpush1.bf16.msra.mxu0 %v6570
        %8725 = vmatprep.subr.bf16.mxu0 0
        %8726 = vmatpush1.bf16.msra.mxu0 %v6571
        %8727 = vmatprep.subr.bf16.mxu0 0
        %8728 = vmatpush1.bf16.msra.mxu0 %v6572
        %8729 = vmatprep.subr.bf16.mxu0 0
        %8730 = vmatpush1.bf16.msra.mxu0 %v6573
        %8731 = vmatprep.subr.bf16.mxu0 0
        %8732 = vmatpush1.bf16.msra.mxu0 %v6574
        %8733 = vmatprep.subr.bf16.mxu0 0
        %8734 = vmatpush1.bf16.msra.mxu0 %v6575
        %8735 = vmatprep.subr.bf16.mxu0 0
        %8736 = vmatpush1.bf16.msra.mxu0 %v6576
        %8737 = vmatprep.mubr.bf16.mxu0 %v2664
        %8738 = vmatmul.mubr.bf16.gmra.mrb[0].mxu0 %v2650
        %v8739 = vpop.f32.mrb[0].mxu0
        %v8740 = vadd.f32 %v8700, %v8739
        %v8741 = vpop.f32.mrb[0].mxu0
        %v8742 = vpop.f32.mrb[0].mxu0
        %v8743 = vpop.f32.mrb[0].mxu0
        %8744 = vdwg.mxu0
        %8745 = vmatprep.subr.bf16.mxu0 0
        %8746 = vmatpush1.bf16.msra.mxu0 %v6577
        %8747 = vmatprep.subr.bf16.mxu0 0
        %8748 = vmatpush1.bf16.msra.mxu0 %v6578
        %8749 = vmatprep.subr.bf16.mxu0 0
        %8750 = vmatpush1.bf16.msra.mxu0 %v6579
        %8751 = vmatprep.subr.bf16.mxu0 0
        %8752 = vmatpush1.bf16.msra.mxu0 %v6580
        %8753 = vmatprep.subr.bf16.mxu0 0
        %8754 = vmatpush1.bf16.msra.mxu0 %v6581
        %8755 = vmatprep.subr.bf16.mxu0 0
        %8756 = vmatpush1.bf16.msra.mxu0 %v6582
        %8757 = vmatprep.subr.bf16.mxu0 0
        %8758 = vmatpush1.bf16.msra.mxu0 %v6583
        %8759 = vmatprep.subr.bf16.mxu0 0
        %8760 = vmatpush1.bf16.msra.mxu0 %v6584
        %8761 = vmatprep.subr.bf16.mxu0 0
        %8762 = vmatpush1.bf16.msra.mxu0 %v6585
        %8763 = vmatprep.subr.bf16.mxu0 0
        %8764 = vmatpush1.bf16.msra.mxu0 %v6586
        %8765 = vmatprep.subr.bf16.mxu0 0
        %8766 = vmatpush1.bf16.msra.mxu0 %v6587
        %8767 = vmatprep.subr.bf16.mxu0 0
        %8768 = vmatpush1.bf16.msra.mxu0 %v6588
        %8769 = vmatprep.subr.bf16.mxu0 0
        %8770 = vmatpush1.bf16.msra.mxu0 %v6589
        %8771 = vmatprep.subr.bf16.mxu0 0
        %8772 = vmatpush1.bf16.msra.mxu0 %v6590
        %8773 = vmatprep.subr.bf16.mxu0 0
        %8774 = vmatpush1.bf16.msra.mxu0 %v6591
        %8775 = vmatprep.subr.bf16.mxu0 0
        %8776 = vmatpush1.bf16.msra.mxu0 %v6592
        %8777 = vmatprep.mubr.bf16.mxu0 %v2674
        %8778 = vmatmul.mubr.bf16.gmra.mrb[0].mxu0 %v2672
        %v8779 = vpop.f32.mrb[0].mxu0
        %v8780 = vadd.f32 %v8740, %v8779
        %v8781 = vpop.f32.mrb[0].mxu0
        %v8782 = vpop.f32.mrb[0].mxu0
        %v8783 = vpop.f32.mrb[0].mxu0
        %8784 = vdwg.mxu0
        %8785 = vmatprep.subr.bf16.mxu0 0
        %8786 = vmatpush1.bf16.msra.mxu0 %v6593
        %8787 = vmatprep.subr.bf16.mxu0 0
        %8788 = vmatpush1.bf16.msra.mxu0 %v6594
        %8789 = vmatprep.subr.bf16.mxu0 0
        %8790 = vmatpush1.bf16.msra.mxu0 %v6595
        %8791 = vmatprep.subr.bf16.mxu0 0
        %8792 = vmatpush1.bf16.msra.mxu0 %v6596
        %8793 = vmatprep.subr.bf16.mxu0 0
        %8794 = vmatpush1.bf16.msra.mxu0 %v6597
        %8795 = vmatprep.subr.bf16.mxu0 0
        %8796 = vmatpush1.bf16.msra.mxu0 %v6598
        %8797 = vmatprep.subr.bf16.mxu0 0
        %8798 = vmatpush1.bf16.msra.mxu0 %v6599
        %8799 = vmatprep.subr.bf16.mxu0 0
        %8800 = vmatpush1.bf16.msra.mxu0 %v6600
        %8801 = vmatprep.subr.bf16.mxu0 0
        %8802 = vmatpush1.bf16.msra.mxu0 %v6601
        %8803 = vmatprep.subr.bf16.mxu0 0
        %8804 = vmatpush1.bf16.msra.mxu0 %v6602
        %8805 = vmatprep.subr.bf16.mxu0 0
        %8806 = vmatpush1.bf16.msra.mxu0 %v6603
        %8807 = vmatprep.subr.bf16.mxu0 0
        %8808 = vmatpush1.bf16.msra.mxu0 %v6604
        %8809 = vmatprep.subr.bf16.mxu0 0
        %8810 = vmatpush1.bf16.msra.mxu0 %v6605
        %8811 = vmatprep.subr.bf16.mxu0 0
        %8812 = vmatpush1.bf16.msra.mxu0 %v6606
        %8813 = vmatprep.subr.bf16.mxu0 0
        %8814 = vmatpush1.bf16.msra.mxu0 %v6607
        %8815 = vmatprep.subr.bf16.mxu0 0
        %8816 = vmatpush1.bf16.msra.mxu0 %v6608
        %8817 = vmatprep.mubr.bf16.mxu0 %v2671
        %8818 = vmatmul.mubr.bf16.gmra.mrb[0].mxu0 %v2657
        %v8819 = vpop.f32.mrb[0].mxu0
        %v8820 = vadd.f32 %v8780, %v8819
        %v8821 = vpop.f32.mrb[0].mxu0
        %v8822 = vpop.f32.mrb[0].mxu0
        %v8823 = vpop.f32.mrb[0].mxu0
        %8824 = vdwg.mxu0
        %8825 = vmatprep.subr.bf16.mxu0 0
        %8826 = vmatpush1.bf16.msra.mxu0 %v6609
        %8827 = vmatprep.subr.bf16.mxu0 0
        %8828 = vmatpush1.bf16.msra.mxu0 %v6610
        %8829 = vmatprep.subr.bf16.mxu0 0
        %8830 = vmatpush1.bf16.msra.mxu0 %v6611
        %8831 = vmatprep.subr.bf16.mxu0 0
        %8832 = vmatpush1.bf16.msra.mxu0 %v6612
        %8833 = vmatprep.subr.bf16.mxu0 0
        %8834 = vmatpush1.bf16.msra.mxu0 %v6613
        %8835 = vmatprep.subr.bf16.mxu0 0
        %8836 = vmatpush1.bf16.msra.mxu0 %v6614
        %8837 = vmatprep.subr.bf16.mxu0 0
        %8838 = vmatpush1.bf16.msra.mxu0 %v6615
        %8839 = vmatprep.subr.bf16.mxu0 0
        %8840 = vmatpush1.bf16.msra.mxu0 %v6616
        %8841 = vmatprep.subr.bf16.mxu0 0
        %8842 = vmatpush1.bf16.msra.mxu0 %v6617
        %8843 = vmatprep.subr.bf16.mxu0 0
        %8844 = vmatpush1.bf16.msra.mxu0 %v6618
        %8845 = vmatprep.subr.bf16.mxu0 0
        %8846 = vmatpush1.bf16.msra.mxu0 %v6619
        %8847 = vmatprep.subr.bf16.mxu0 0
        %8848 = vmatpush1.bf16.msra.mxu0 %v6620
        %8849 = vmatprep.subr.bf16.mxu0 0
        %8850 = vmatpush1.bf16.msra.mxu0 %v6621
        %8851 = vmatprep.subr.bf16.mxu0 0
        %8852 = vmatpush1.bf16.msra.mxu0 %v6622
        %8853 = vmatprep.subr.bf16.mxu0 0
        %8854 = vmatpush1.bf16.msra.mxu0 %v6623
        %8855 = vmatprep.subr.bf16.mxu0 0
        %8856 = vmatpush1.bf16.msra.mxu0 %v6624
        %8857 = vmatprep.mubr.bf16.mxu0 %v2675
        %8858 = vmatmul.mubr.bf16.gmra.mrb[0].mxu0 %v2673
        %v8859 = vpop.f32.mrb[0].mxu0
        %v8860 = vadd.f32 %v8820, %v8859
        %v8861 = vpop.f32.mrb[0].mxu0
        %v8862 = vpop.f32.mrb[0].mxu0
        %v8863 = vpop.f32.mrb[0].mxu0
        %8864 = vdwg.mxu0
        %8865 = vmatprep.subr.bf16.mxu0 0
        %8866 = vmatpush1.bf16.msra.mxu0 %v6625
        %8867 = vmatprep.subr.bf16.mxu0 0
        %8868 = vmatpush1.bf16.msra.mxu0 %v6626
        %8869 = vmatprep.subr.bf16.mxu0 0
        %8870 = vmatpush1.bf16.msra.mxu0 %v6627
        %8871 = vmatprep.subr.bf16.mxu0 0
        %8872 = vmatpush1.bf16.msra.mxu0 %v6628
        %8873 = vmatprep.subr.bf16.mxu0 0
        %8874 = vmatpush1.bf16.msra.mxu0 %v6629
        %8875 = vmatprep.subr.bf16.mxu0 0
        %8876 = vmatpush1.bf16.msra.mxu0 %v6630
        %8877 = vmatprep.subr.bf16.mxu0 0
        %8878 = vmatpush1.bf16.msra.mxu0 %v6631
        %8879 = vmatprep.subr.bf16.mxu0 0
        %8880 = vmatpush1.bf16.msra.mxu0 %v6632
        %8881 = vmatprep.subr.bf16.mxu0 0
        %8882 = vmatpush1.bf16.msra.mxu0 %v6633
        %8883 = vmatprep.subr.bf16.mxu0 0
        %8884 = vmatpush1.bf16.msra.mxu0 %v6634
        %8885 = vmatprep.subr.bf16.mxu0 0
        %8886 = vmatpush1.bf16.msra.mxu0 %v6635
        %8887 = vmatprep.subr.bf16.mxu0 0
        %8888 = vmatpush1.bf16.msra.mxu0 %v6636
        %8889 = vmatprep.subr.bf16.mxu0 0
        %8890 = vmatpush1.bf16.msra.mxu0 %v6637
        %8891 = vmatprep.subr.bf16.mxu0 0
        %8892 = vmatpush1.bf16.msra.mxu0 %v6638
        %8893 = vmatprep.subr.bf16.mxu0 0
        %8894 = vmatpush1.bf16.msra.mxu0 %v6639
        %8895 = vmatprep.subr.bf16.mxu0 0
        %8896 = vmatpush1.bf16.msra.mxu0 %v6640
        %8897 = vmatprep.mubr.bf16.mxu0 %v2713
        %8898 = vmatmul.mubr.bf16.gmra.mrb[0].mxu0 %v2699
        %v8899 = vpop.f32.mrb[0].mxu0
        %v8900 = vadd.f32 %v8860, %v8899
        %v8901 = vpop.f32.mrb[0].mxu0
        %v8902 = vpop.f32.mrb[0].mxu0
        %v8903 = vpop.f32.mrb[0].mxu0
        %8904 = vdwg.mxu0
        %8905 = vmatprep.subr.bf16.mxu0 0
        %8906 = vmatpush1.bf16.msra.mxu0 %v6641
        %8907 = vmatprep.subr.bf16.mxu0 0
        %8908 = vmatpush1.bf16.msra.mxu0 %v6642
        %8909 = vmatprep.subr.bf16.mxu0 0
        %8910 = vmatpush1.bf16.msra.mxu0 %v6643
        %8911 = vmatprep.subr.bf16.mxu0 0
        %8912 = vmatpush1.bf16.msra.mxu0 %v6644
        %8913 = vmatprep.subr.bf16.mxu0 0
        %8914 = vmatpush1.bf16.msra.mxu0 %v6645
        %8915 = vmatprep.subr.bf16.mxu0 0
        %8916 = vmatpush1.bf16.msra.mxu0 %v6646
        %8917 = vmatprep.subr.bf16.mxu0 0
        %8918 = vmatpush1.bf16.msra.mxu0 %v6647
        %8919 = vmatprep.subr.bf16.mxu0 0
        %8920 = vmatpush1.bf16.msra.mxu0 %v6648
        %8921 = vmatprep.subr.bf16.mxu0 0
        %8922 = vmatpush1.bf16.msra.mxu0 %v6649
        %8923 = vmatprep.subr.bf16.mxu0 0
        %8924 = vmatpush1.bf16.msra.mxu0 %v6650
        %8925 = vmatprep.subr.bf16.mxu0 0
        %8926 = vmatpush1.bf16.msra.mxu0 %v6651
        %8927 = vmatprep.subr.bf16.mxu0 0
        %8928 = vmatpush1.bf16.msra.mxu0 %v6652
        %8929 = vmatprep.subr.bf16.mxu0 0
        %8930 = vmatpush1.bf16.msra.mxu0 %v6653
        %8931 = vmatprep.subr.bf16.mxu0 0
        %8932 = vmatpush1.bf16.msra.mxu0 %v6654
        %8933 = vmatprep.subr.bf16.mxu0 0
        %8934 = vmatpush1.bf16.msra.mxu0 %v6655
        %8935 = vmatprep.subr.bf16.mxu0 0
        %8936 = vmatpush1.bf16.msra.mxu0 %v6656
        %8937 = vmatprep.mubr.bf16.mxu0 %v2723
        %8938 = vmatmul.mubr.bf16.gmra.mrb[0].mxu0 %v2721
        %v8939 = vpop.f32.mrb[0].mxu0
        %v8940 = vadd.f32 %v8900, %v8939
        %v8941 = vpop.f32.mrb[0].mxu0
        %v8942 = vpop.f32.mrb[0].mxu0
        %v8943 = vpop.f32.mrb[0].mxu0
        %8944 = vdwg.mxu0
        %8945 = vmatprep.subr.bf16.mxu0 0
        %8946 = vmatpush1.bf16.msra.mxu0 %v6657
        %8947 = vmatprep.subr.bf16.mxu0 0
        %8948 = vmatpush1.bf16.msra.mxu0 %v6658
        %8949 = vmatprep.subr.bf16.mxu0 0
        %8950 = vmatpush1.bf16.msra.mxu0 %v6659
        %8951 = vmatprep.subr.bf16.mxu0 0
        %8952 = vmatpush1.bf16.msra.mxu0 %v6660
        %8953 = vmatprep.subr.bf16.mxu0 0
        %8954 = vmatpush1.bf16.msra.mxu0 %v6661
        %8955 = vmatprep.subr.bf16.mxu0 0
        %8956 = vmatpush1.bf16.msra.mxu0 %v6662
        %8957 = vmatprep.subr.bf16.mxu0 0
        %8958 = vmatpush1.bf16.msra.mxu0 %v6663
        %8959 = vmatprep.subr.bf16.mxu0 0
        %8960 = vmatpush1.bf16.msra.mxu0 %v6664
        %8961 = vmatprep.subr.bf16.mxu0 0
        %8962 = vmatpush1.bf16.msra.mxu0 %v6665
        %8963 = vmatprep.subr.bf16.mxu0 0
        %8964 = vmatpush1.bf16.msra.mxu0 %v6666
        %8965 = vmatprep.subr.bf16.mxu0 0
        %8966 = vmatpush1.bf16.msra.mxu0 %v6667
        %8967 = vmatprep.subr.bf16.mxu0 0
        %8968 = vmatpush1.bf16.msra.mxu0 %v6668
        %8969 = vmatprep.subr.bf16.mxu0 0
        %8970 = vmatpush1.bf16.msra.mxu0 %v6669
        %8971 = vmatprep.subr.bf16.mxu0 0
        %8972 = vmatpush1.bf16.msra.mxu0 %v6670
        %8973 = vmatprep.subr.bf16.mxu0 0
        %8974 = vmatpush1.bf16.msra.mxu0 %v6671
        %8975 = vmatprep.subr.bf16.mxu0 0
        %8976 = vmatpush1.bf16.msra.mxu0 %v6672
        %8977 = vmatprep.mubr.bf16.mxu0 %v2720
        %8978 = vmatmul.mubr.bf16.gmra.mrb[0].mxu0 %v2706
        %v8979 = vpop.f32.mrb[0].mxu0
        %v8980 = vadd.f32 %v8940, %v8979
        %v8981 = vpop.f32.mrb[0].mxu0
        %v8982 = vpop.f32.mrb[0].mxu0
        %v8983 = vpop.f32.mrb[0].mxu0
        %8984 = vdwg.mxu0
        %8985 = vmatprep.subr.bf16.mxu0 0
        %8986 = vmatpush1.bf16.msra.mxu0 %v6673
        %8987 = vmatprep.subr.bf16.mxu0 0
        %8988 = vmatpush1.bf16.msra.mxu0 %v6674
        %8989 = vmatprep.subr.bf16.mxu0 0
        %8990 = vmatpush1.bf16.msra.mxu0 %v6675
        %8991 = vmatprep.subr.bf16.mxu0 0
        %8992 = vmatpush1.bf16.msra.mxu0 %v6676
        %8993 = vmatprep.subr.bf16.mxu0 0
        %8994 = vmatpush1.bf16.msra.mxu0 %v6677
        %8995 = vmatprep.subr.bf16.mxu0 0
        %8996 = vmatpush1.bf16.msra.mxu0 %v6678
        %8997 = vmatprep.subr.bf16.mxu0 0
        %8998 = vmatpush1.bf16.msra.mxu0 %v6679
        %8999 = vmatprep.subr.bf16.mxu0 0
        %9000 = vmatpush1.bf16.msra.mxu0 %v6680
        %9001 = vmatprep.subr.bf16.mxu0 0
        %9002 = vmatpush1.bf16.msra.mxu0 %v6681
        %9003 = vmatprep.subr.bf16.mxu0 0
        %9004 = vmatpush1.bf16.msra.mxu0 %v6682
        %9005 = vmatprep.subr.bf16.mxu0 0
        %9006 = vmatpush1.bf16.msra.mxu0 %v6683
        %9007 = vmatprep.subr.bf16.mxu0 0
        %9008 = vmatpush1.bf16.msra.mxu0 %v6684
        %9009 = vmatprep.subr.bf16.mxu0 0
        %9010 = vmatpush1.bf16.msra.mxu0 %v6685
        %9011 = vmatprep.subr.bf16.mxu0 0
        %9012 = vmatpush1.bf16.msra.mxu0 %v6686
        %9013 = vmatprep.subr.bf16.mxu0 0
        %9014 = vmatpush1.bf16.msra.mxu0 %v6687
        %9015 = vmatprep.subr.bf16.mxu0 0
        %9016 = vmatpush1.bf16.msra.mxu0 %v6688
        %9017 = vmatprep.mubr.bf16.mxu0 %v2724
        %9018 = vmatmul.mubr.bf16.gmra.mrb[0].mxu0 %v2722
        %v9019 = vpop.f32.mrb[0].mxu0
        %v9020 = vadd.f32 %v8980, %v9019
        %v9021 = vpop.f32.mrb[0].mxu0
        %v9022 = vpop.f32.mrb[0].mxu0
        %v9023 = vpop.f32.mrb[0].mxu0
        %9024 = vdwg.mxu0
        %9025 = vmatprep.subr.bf16.mxu0 0
        %9026 = vmatpush1.bf16.msra.mxu0 %v6689
        %9027 = vmatprep.subr.bf16.mxu0 0
        %9028 = vmatpush1.bf16.msra.mxu0 %v6690
        %9029 = vmatprep.subr.bf16.mxu0 0
        %9030 = vmatpush1.bf16.msra.mxu0 %v6691
        %9031 = vmatprep.subr.bf16.mxu0 0
        %9032 = vmatpush1.bf16.msra.mxu0 %v6692
        %9033 = vmatprep.subr.bf16.mxu0 0
        %9034 = vmatpush1.bf16.msra.mxu0 %v6693
        %9035 = vmatprep.subr.bf16.mxu0 0
        %9036 = vmatpush1.bf16.msra.mxu0 %v6694
        %9037 = vmatprep.subr.bf16.mxu0 0
        %9038 = vmatpush1.bf16.msra.mxu0 %v6695
        %9039 = vmatprep.subr.bf16.mxu0 0
        %9040 = vmatpush1.bf16.msra.mxu0 %v6696
        %9041 = vmatprep.subr.bf16.mxu0 0
        %9042 = vmatpush1.bf16.msra.mxu0 %v6697
        %9043 = vmatprep.subr.bf16.mxu0 0
        %9044 = vmatpush1.bf16.msra.mxu0 %v6698
        %9045 = vmatprep.subr.bf16.mxu0 0
        %9046 = vmatpush1.bf16.msra.mxu0 %v6699
        %9047 = vmatprep.subr.bf16.mxu0 0
        %9048 = vmatpush1.bf16.msra.mxu0 %v6700
        %9049 = vmatprep.subr.bf16.mxu0 0
        %9050 = vmatpush1.bf16.msra.mxu0 %v6701
        %9051 = vmatprep.subr.bf16.mxu0 0
        %9052 = vmatpush1.bf16.msra.mxu0 %v6702
        %9053 = vmatprep.subr.bf16.mxu0 0
        %9054 = vmatpush1.bf16.msra.mxu0 %v6703
        %9055 = vmatprep.subr.bf16.mxu0 0
        %9056 = vmatpush1.bf16.msra.mxu0 %v6704
        %9057 = vmatprep.mubr.bf16.mxu0 %v2762
        %9058 = vmatmul.mubr.bf16.gmra.mrb[0].mxu0 %v2748
        %v9059 = vpop.f32.mrb[0].mxu0
        %v9060 = vadd.f32 %v9020, %v9059
        %v9061 = vpop.f32.mrb[0].mxu0
        %v9062 = vpop.f32.mrb[0].mxu0
        %v9063 = vpop.f32.mrb[0].mxu0
        %9064 = vdwg.mxu0
        %9065 = vmatprep.subr.bf16.mxu0 0
        %9066 = vmatpush1.bf16.msra.mxu0 %v6705
        %9067 = vmatprep.subr.bf16.mxu0 0
        %9068 = vmatpush1.bf16.msra.mxu0 %v6706
        %9069 = vmatprep.subr.bf16.mxu0 0
        %9070 = vmatpush1.bf16.msra.mxu0 %v6707
        %9071 = vmatprep.subr.bf16.mxu0 0
        %9072 = vmatpush1.bf16.msra.mxu0 %v6708
        %9073 = vmatprep.subr.bf16.mxu0 0
        %9074 = vmatpush1.bf16.msra.mxu0 %v6709
        %9075 = vmatprep.subr.bf16.mxu0 0
        %9076 = vmatpush1.bf16.msra.mxu0 %v6710
        %9077 = vmatprep.subr.bf16.mxu0 0
        %9078 = vmatpush1.bf16.msra.mxu0 %v6711
        %9079 = vmatprep.subr.bf16.mxu0 0
        %9080 = vmatpush1.bf16.msra.mxu0 %v6712
        %9081 = vmatprep.subr.bf16.mxu0 0
        %9082 = vmatpush1.bf16.msra.mxu0 %v6713
        %9083 = vmatprep.subr.bf16.mxu0 0
        %9084 = vmatpush1.bf16.msra.mxu0 %v6714
        %9085 = vmatprep.subr.bf16.mxu0 0
        %9086 = vmatpush1.bf16.msra.mxu0 %v6715
        %9087 = vmatprep.subr.bf16.mxu0 0
        %9088 = vmatpush1.bf16.msra.mxu0 %v6716
        %9089 = vmatprep.subr.bf16.mxu0 0
        %9090 = vmatpush1.bf16.msra.mxu0 %v6717
        %9091 = vmatprep.subr.bf16.mxu0 0
        %9092 = vmatpush1.bf16.msra.mxu0 %v6718
        %9093 = vmatprep.subr.bf16.mxu0 0
        %9094 = vmatpush1.bf16.msra.mxu0 %v6719
        %9095 = vmatprep.subr.bf16.mxu0 0
        %9096 = vmatpush1.bf16.msra.mxu0 %v6720
        %9097 = vmatprep.mubr.bf16.mxu0 %v2772
        %9098 = vmatmul.mubr.bf16.gmra.mrb[0].mxu0 %v2770
        %v9099 = vpop.f32.mrb[0].mxu0
        %v9100 = vadd.f32 %v9060, %v9099
        %v9101 = vpop.f32.mrb[0].mxu0
        %v9102 = vpop.f32.mrb[0].mxu0
        %v9103 = vpop.f32.mrb[0].mxu0
        %9104 = vdwg.mxu0
        %9105 = vmatprep.subr.bf16.mxu0 0
        %9106 = vmatpush1.bf16.msra.mxu0 %v6721
        %9107 = vmatprep.subr.bf16.mxu0 0
        %9108 = vmatpush1.bf16.msra.mxu0 %v6722
        %9109 = vmatprep.subr.bf16.mxu0 0
        %9110 = vmatpush1.bf16.msra.mxu0 %v6723
        %9111 = vmatprep.subr.bf16.mxu0 0
        %9112 = vmatpush1.bf16.msra.mxu0 %v6724
        %9113 = vmatprep.subr.bf16.mxu0 0
        %9114 = vmatpush1.bf16.msra.mxu0 %v6725
        %9115 = vmatprep.subr.bf16.mxu0 0
        %9116 = vmatpush1.bf16.msra.mxu0 %v6726
        %9117 = vmatprep.subr.bf16.mxu0 0
        %9118 = vmatpush1.bf16.msra.mxu0 %v6727
        %9119 = vmatprep.subr.bf16.mxu0 0
        %9120 = vmatpush1.bf16.msra.mxu0 %v6728
        %9121 = vmatprep.subr.bf16.mxu0 0
        %9122 = vmatpush1.bf16.msra.mxu0 %v6729
        %9123 = vmatprep.subr.bf16.mxu0 0
        %9124 = vmatpush1.bf16.msra.mxu0 %v6730
        %9125 = vmatprep.subr.bf16.mxu0 0
        %9126 = vmatpush1.bf16.msra.mxu0 %v6731
        %9127 = vmatprep.subr.bf16.mxu0 0
        %9128 = vmatpush1.bf16.msra.mxu0 %v6732
        %9129 = vmatprep.subr.bf16.mxu0 0
        %9130 = vmatpush1.bf16.msra.mxu0 %v6733
        %9131 = vmatprep.subr.bf16.mxu0 0
        %9132 = vmatpush1.bf16.msra.mxu0 %v6734
        %9133 = vmatprep.subr.bf16.mxu0 0
        %9134 = vmatpush1.bf16.msra.mxu0 %v6735
        %9135 = vmatprep.subr.bf16.mxu0 0
        %9136 = vmatpush1.bf16.msra.mxu0 %v6736
        %9137 = vmatprep.mubr.bf16.mxu0 %v2769
        %9138 = vmatmul.mubr.bf16.gmra.mrb[0].mxu0 %v2755
        %v9139 = vpop.f32.mrb[0].mxu0
        %v9140 = vadd.f32 %v9100, %v9139
        %v9141 = vpop.f32.mrb[0].mxu0
        %v9142 = vpop.f32.mrb[0].mxu0
        %v9143 = vpop.f32.mrb[0].mxu0
        %9144 = vdwg.mxu0
        %9145 = vmatprep.subr.bf16.mxu0 0
        %9146 = vmatpush1.bf16.msra.mxu0 %v6737
        %9147 = vmatprep.subr.bf16.mxu0 0
        %9148 = vmatpush1.bf16.msra.mxu0 %v6738
        %9149 = vmatprep.subr.bf16.mxu0 0
        %9150 = vmatpush1.bf16.msra.mxu0 %v6739
        %9151 = vmatprep.subr.bf16.mxu0 0
        %9152 = vmatpush1.bf16.msra.mxu0 %v6740
        %9153 = vmatprep.subr.bf16.mxu0 0
        %9154 = vmatpush1.bf16.msra.mxu0 %v6741
        %9155 = vmatprep.subr.bf16.mxu0 0
        %9156 = vmatpush1.bf16.msra.mxu0 %v6742
        %9157 = vmatprep.subr.bf16.mxu0 0
        %9158 = vmatpush1.bf16.msra.mxu0 %v6743
        %9159 = vmatprep.subr.bf16.mxu0 0
        %9160 = vmatpush1.bf16.msra.mxu0 %v6744
        %9161 = vmatprep.subr.bf16.mxu0 0
        %9162 = vmatpush1.bf16.msra.mxu0 %v6745
        %9163 = vmatprep.subr.bf16.mxu0 0
        %9164 = vmatpush1.bf16.msra.mxu0 %v6746
        %9165 = vmatprep.subr.bf16.mxu0 0
        %9166 = vmatpush1.bf16.msra.mxu0 %v6747
        %9167 = vmatprep.subr.bf16.mxu0 0
        %9168 = vmatpush1.bf16.msra.mxu0 %v6748
        %9169 = vmatprep.subr.bf16.mxu0 0
        %9170 = vmatpush1.bf16.msra.mxu0 %v6749
        %9171 = vmatprep.subr.bf16.mxu0 0
        %9172 = vmatpush1.bf16.msra.mxu0 %v6750
        %9173 = vmatprep.subr.bf16.mxu0 0
        %9174 = vmatpush1.bf16.msra.mxu0 %v6751
        %9175 = vmatprep.subr.bf16.mxu0 0
        %9176 = vmatpush1.bf16.msra.mxu0 %v6752
        %9177 = vmatprep.mubr.bf16.mxu0 %v2773
        %9178 = vmatmul.mubr.bf16.gmra.mrb[0].mxu0 %v2771
        %v9179 = vpop.f32.mrb[0].mxu0
        %v9180 = vadd.f32 %v9140, %v9179
        %v9181 = vpop.f32.mrb[0].mxu0
        %v9182 = vpop.f32.mrb[0].mxu0
        %v9183 = vpop.f32.mrb[0].mxu0
        %9184 = vdwg.mxu0
        %9185 = vmatprep.subr.bf16.mxu0 0
        %9186 = vmatpush1.bf16.msra.mxu0 %v6753
        %9187 = vmatprep.subr.bf16.mxu0 0
        %9188 = vmatpush1.bf16.msra.mxu0 %v6754
        %9189 = vmatprep.subr.bf16.mxu0 0
        %9190 = vmatpush1.bf16.msra.mxu0 %v6755
        %9191 = vmatprep.subr.bf16.mxu0 0
        %9192 = vmatpush1.bf16.msra.mxu0 %v6756
        %9193 = vmatprep.subr.bf16.mxu0 0
        %9194 = vmatpush1.bf16.msra.mxu0 %v6757
        %9195 = vmatprep.subr.bf16.mxu0 0
        %9196 = vmatpush1.bf16.msra.mxu0 %v6758
        %9197 = vmatprep.subr.bf16.mxu0 0
        %9198 = vmatpush1.bf16.msra.mxu0 %v6759
        %9199 = vmatprep.subr.bf16.mxu0 0
        %9200 = vmatpush1.bf16.msra.mxu0 %v6760
        %9201 = vmatprep.subr.bf16.mxu0 0
        %9202 = vmatpush1.bf16.msra.mxu0 %v6761
        %9203 = vmatprep.subr.bf16.mxu0 0
        %9204 = vmatpush1.bf16.msra.mxu0 %v6762
        %9205 = vmatprep.subr.bf16.mxu0 0
        %9206 = vmatpush1.bf16.msra.mxu0 %v6763
        %9207 = vmatprep.subr.bf16.mxu0 0
        %9208 = vmatpush1.bf16.msra.mxu0 %v6764
        %9209 = vmatprep.subr.bf16.mxu0 0
        %9210 = vmatpush1.bf16.msra.mxu0 %v6765
        %9211 = vmatprep.subr.bf16.mxu0 0
        %9212 = vmatpush1.bf16.msra.mxu0 %v6766
        %9213 = vmatprep.subr.bf16.mxu0 0
        %9214 = vmatpush1.bf16.msra.mxu0 %v6767
        %9215 = vmatprep.subr.bf16.mxu0 0
        %9216 = vmatpush1.bf16.msra.mxu0 %v6768
        %9217 = vmatprep.mubr.bf16.mxu0 %v2811
        %9218 = vmatmul.mubr.bf16.gmra.mrb[0].mxu0 %v2797
        %v9219 = vpop.f32.mrb[0].mxu0
        %v9220 = vadd.f32 %v9180, %v9219
        %v9221 = vpop.f32.mrb[0].mxu0
        %v9222 = vpop.f32.mrb[0].mxu0
        %v9223 = vpop.f32.mrb[0].mxu0
        %9224 = vdwg.mxu0
        %9225 = vmatprep.subr.bf16.mxu0 0
        %9226 = vmatpush1.bf16.msra.mxu0 %v6769
        %9227 = vmatprep.subr.bf16.mxu0 0
        %9228 = vmatpush1.bf16.msra.mxu0 %v6770
        %9229 = vmatprep.subr.bf16.mxu0 0
        %9230 = vmatpush1.bf16.msra.mxu0 %v6771
        %9231 = vmatprep.subr.bf16.mxu0 0
        %9232 = vmatpush1.bf16.msra.mxu0 %v6772
        %9233 = vmatprep.subr.bf16.mxu0 0
        %9234 = vmatpush1.bf16.msra.mxu0 %v6773
        %9235 = vmatprep.subr.bf16.mxu0 0
        %9236 = vmatpush1.bf16.msra.mxu0 %v6774
        %9237 = vmatprep.subr.bf16.mxu0 0
        %9238 = vmatpush1.bf16.msra.mxu0 %v6775
        %9239 = vmatprep.subr.bf16.mxu0 0
        %9240 = vmatpush1.bf16.msra.mxu0 %v6776
        %9241 = vmatprep.subr.bf16.mxu0 0
        %9242 = vmatpush1.bf16.msra.mxu0 %v6777
        %9243 = vmatprep.subr.bf16.mxu0 0
        %9244 = vmatpush1.bf16.msra.mxu0 %v6778
        %9245 = vmatprep.subr.bf16.mxu0 0
        %9246 = vmatpush1.bf16.msra.mxu0 %v6779
        %9247 = vmatprep.subr.bf16.mxu0 0
        %9248 = vmatpush1.bf16.msra.mxu0 %v6780
        %9249 = vmatprep.subr.bf16.mxu0 0
        %9250 = vmatpush1.bf16.msra.mxu0 %v6781
        %9251 = vmatprep.subr.bf16.mxu0 0
        %9252 = vmatpush1.bf16.msra.mxu0 %v6782
        %9253 = vmatprep.subr.bf16.mxu0 0
        %9254 = vmatpush1.bf16.msra.mxu0 %v6783
        %9255 = vmatprep.subr.bf16.mxu0 0
        %9256 = vmatpush1.bf16.msra.mxu0 %v6784
        %9257 = vmatprep.mubr.bf16.mxu0 %v2821
        %9258 = vmatmul.mubr.bf16.gmra.mrb[0].mxu0 %v2819
        %v9259 = vpop.f32.mrb[0].mxu0
        %v9260 = vadd.f32 %v9220, %v9259
        %v9261 = vpop.f32.mrb[0].mxu0
        %v9262 = vpop.f32.mrb[0].mxu0
        %v9263 = vpop.f32.mrb[0].mxu0
        %9264 = vdwg.mxu0
        %9265 = vmatprep.subr.bf16.mxu0 0
        %9266 = vmatpush1.bf16.msra.mxu0 %v6785
        %9267 = vmatprep.subr.bf16.mxu0 0
        %9268 = vmatpush1.bf16.msra.mxu0 %v6786
        %9269 = vmatprep.subr.bf16.mxu0 0
        %9270 = vmatpush1.bf16.msra.mxu0 %v6787
        %9271 = vmatprep.subr.bf16.mxu0 0
        %9272 = vmatpush1.bf16.msra.mxu0 %v6788
        %9273 = vmatprep.subr.bf16.mxu0 0
        %9274 = vmatpush1.bf16.msra.mxu0 %v6789
        %9275 = vmatprep.subr.bf16.mxu0 0
        %9276 = vmatpush1.bf16.msra.mxu0 %v6790
        %9277 = vmatprep.subr.bf16.mxu0 0
        %9278 = vmatpush1.bf16.msra.mxu0 %v6791
        %9279 = vmatprep.subr.bf16.mxu0 0
        %9280 = vmatpush1.bf16.msra.mxu0 %v6792
        %9281 = vmatprep.subr.bf16.mxu0 0
        %9282 = vmatpush1.bf16.msra.mxu0 %v6793
        %9283 = vmatprep.subr.bf16.mxu0 0
        %9284 = vmatpush1.bf16.msra.mxu0 %v6794
        %9285 = vmatprep.subr.bf16.mxu0 0
        %9286 = vmatpush1.bf16.msra.mxu0 %v6795
        %9287 = vmatprep.subr.bf16.mxu0 0
        %9288 = vmatpush1.bf16.msra.mxu0 %v6796
        %9289 = vmatprep.subr.bf16.mxu0 0
        %9290 = vmatpush1.bf16.msra.mxu0 %v6797
        %9291 = vmatprep.subr.bf16.mxu0 0
        %9292 = vmatpush1.bf16.msra.mxu0 %v6798
        %9293 = vmatprep.subr.bf16.mxu0 0
        %9294 = vmatpush1.bf16.msra.mxu0 %v6799
        %9295 = vmatprep.subr.bf16.mxu0 0
        %9296 = vmatpush1.bf16.msra.mxu0 %v6800
        %9297 = vmatprep.mubr.bf16.mxu0 %v2818
        %9298 = vmatmul.mubr.bf16.gmra.mrb[0].mxu0 %v2804
        %v9299 = vpop.f32.mrb[0].mxu0
        %v9300 = vadd.f32 %v9260, %v9299
        %v9301 = vpop.f32.mrb[0].mxu0
        %v9302 = vpop.f32.mrb[0].mxu0
        %v9303 = vpop.f32.mrb[0].mxu0
        %9304 = vdwg.mxu0
        %9305 = vmatprep.subr.bf16.mxu0 0
        %9306 = vmatpush1.bf16.msra.mxu0 %v6801
        %9307 = vmatprep.subr.bf16.mxu0 0
        %9308 = vmatpush1.bf16.msra.mxu0 %v6802
        %9309 = vmatprep.subr.bf16.mxu0 0
        %9310 = vmatpush1.bf16.msra.mxu0 %v6803
        %9311 = vmatprep.subr.bf16.mxu0 0
        %9312 = vmatpush1.bf16.msra.mxu0 %v6804
        %9313 = vmatprep.subr.bf16.mxu0 0
        %9314 = vmatpush1.bf16.msra.mxu0 %v6805
        %9315 = vmatprep.subr.bf16.mxu0 0
        %9316 = vmatpush1.bf16.msra.mxu0 %v6806
        %9317 = vmatprep.subr.bf16.mxu0 0
        %9318 = vmatpush1.bf16.msra.mxu0 %v6807
        %9319 = vmatprep.subr.bf16.mxu0 0
        %9320 = vmatpush1.bf16.msra.mxu0 %v6808
        %9321 = vmatprep.subr.bf16.mxu0 0
        %9322 = vmatpush1.bf16.msra.mxu0 %v6809
        %9323 = vmatprep.subr.bf16.mxu0 0
        %9324 = vmatpush1.bf16.msra.mxu0 %v6810
        %9325 = vmatprep.subr.bf16.mxu0 0
        %9326 = vmatpush1.bf16.msra.mxu0 %v6811
        %9327 = vmatprep.subr.bf16.mxu0 0
        %9328 = vmatpush1.bf16.msra.mxu0 %v6812
        %9329 = vmatprep.subr.bf16.mxu0 0
        %9330 = vmatpush1.bf16.msra.mxu0 %v6813
        %9331 = vmatprep.subr.bf16.mxu0 0
        %9332 = vmatpush1.bf16.msra.mxu0 %v6814
        %9333 = vmatprep.subr.bf16.mxu0 0
        %9334 = vmatpush1.bf16.msra.mxu0 %v6815
        %9335 = vmatprep.subr.bf16.mxu0 0
        %9336 = vmatpush1.bf16.msra.mxu0 %v6816
        %9337 = vmatprep.mubr.bf16.mxu0 %v2822
        %9338 = vmatmul.mubr.bf16.gmra.mrb[0].mxu0 %v2820
        %v9339 = vpop.f32.mrb[0].mxu0
        %v9340 = vadd.f32 %v9300, %v9339
        %v9341 = vpop.f32.mrb[0].mxu0
        %v9342 = vpop.f32.mrb[0].mxu0
        %v9343 = vpop.f32.mrb[0].mxu0
        %9344 = vdwg.mxu0
        %9345 = vmatprep.subr.bf16.mxu0 0
        %9346 = vmatpush1.bf16.msra.mxu0 %v6817
        %9347 = vmatprep.subr.bf16.mxu0 0
        %9348 = vmatpush1.bf16.msra.mxu0 %v6818
        %9349 = vmatprep.subr.bf16.mxu0 0
        %9350 = vmatpush1.bf16.msra.mxu0 %v6819
        %9351 = vmatprep.subr.bf16.mxu0 0
        %9352 = vmatpush1.bf16.msra.mxu0 %v6820
        %9353 = vmatprep.subr.bf16.mxu0 0
        %9354 = vmatpush1.bf16.msra.mxu0 %v6821
        %9355 = vmatprep.subr.bf16.mxu0 0
        %9356 = vmatpush1.bf16.msra.mxu0 %v6822
        %9357 = vmatprep.subr.bf16.mxu0 0
        %9358 = vmatpush1.bf16.msra.mxu0 %v6823
        %9359 = vmatprep.subr.bf16.mxu0 0
        %9360 = vmatpush1.bf16.msra.mxu0 %v6824
        %9361 = vmatprep.subr.bf16.mxu0 0
        %9362 = vmatpush1.bf16.msra.mxu0 %v6825
        %9363 = vmatprep.subr.bf16.mxu0 0
        %9364 = vmatpush1.bf16.msra.mxu0 %v6826
        %9365 = vmatprep.subr.bf16.mxu0 0
        %9366 = vmatpush1.bf16.msra.mxu0 %v6827
        %9367 = vmatprep.subr.bf16.mxu0 0
        %9368 = vmatpush1.bf16.msra.mxu0 %v6828
        %9369 = vmatprep.subr.bf16.mxu0 0
        %9370 = vmatpush1.bf16.msra.mxu0 %v6829
        %9371 = vmatprep.subr.bf16.mxu0 0
        %9372 = vmatpush1.bf16.msra.mxu0 %v6830
        %9373 = vmatprep.subr.bf16.mxu0 0
        %9374 = vmatpush1.bf16.msra.mxu0 %v6831
        %9375 = vmatprep.subr.bf16.mxu0 0
        %9376 = vmatpush1.bf16.msra.mxu0 %v6832
        %9377 = vmatprep.mubr.bf16.mxu0 %v2860
        %9378 = vmatmul.mubr.bf16.gmra.mrb[0].mxu0 %v2846
        %v9379 = vpop.f32.mrb[0].mxu0
        %v9380 = vadd.f32 %v9340, %v9379
        %v9381 = vpop.f32.mrb[0].mxu0
        %v9382 = vpop.f32.mrb[0].mxu0
        %v9383 = vpop.f32.mrb[0].mxu0
        %9384 = vdwg.mxu0
        %9385 = vmatprep.subr.bf16.mxu0 0
        %9386 = vmatpush1.bf16.msra.mxu0 %v6833
        %9387 = vmatprep.subr.bf16.mxu0 0
        %9388 = vmatpush1.bf16.msra.mxu0 %v6834
        %9389 = vmatprep.subr.bf16.mxu0 0
        %9390 = vmatpush1.bf16.msra.mxu0 %v6835
        %9391 = vmatprep.subr.bf16.mxu0 0
        %9392 = vmatpush1.bf16.msra.mxu0 %v6836
        %9393 = vmatprep.subr.bf16.mxu0 0
        %9394 = vmatpush1.bf16.msra.mxu0 %v6837
        %9395 = vmatprep.subr.bf16.mxu0 0
        %9396 = vmatpush1.bf16.msra.mxu0 %v6838
        %9397 = vmatprep.subr.bf16.mxu0 0
        %9398 = vmatpush1.bf16.msra.mxu0 %v6839
        %9399 = vmatprep.subr.bf16.mxu0 0
        %9400 = vmatpush1.bf16.msra.mxu0 %v6840
        %9401 = vmatprep.subr.bf16.mxu0 0
        %9402 = vmatpush1.bf16.msra.mxu0 %v6841
        %9403 = vmatprep.subr.bf16.mxu0 0
        %9404 = vmatpush1.bf16.msra.mxu0 %v6842
        %9405 = vmatprep.subr.bf16.mxu0 0
        %9406 = vmatpush1.bf16.msra.mxu0 %v6843
        %9407 = vmatprep.subr.bf16.mxu0 0
        %9408 = vmatpush1.bf16.msra.mxu0 %v6844
        %9409 = vmatprep.subr.bf16.mxu0 0
        %9410 = vmatpush1.bf16.msra.mxu0 %v6845
        %9411 = vmatprep.subr.bf16.mxu0 0
        %9412 = vmatpush1.bf16.msra.mxu0 %v6846
        %9413 = vmatprep.subr.bf16.mxu0 0
        %9414 = vmatpush1.bf16.msra.mxu0 %v6847
        %9415 = vmatprep.subr.bf16.mxu0 0
        %9416 = vmatpush1.bf16.msra.mxu0 %v6848
        %9417 = vmatprep.mubr.bf16.mxu0 %v2870
        %9418 = vmatmul.mubr.bf16.gmra.mrb[0].mxu0 %v2868
        %v9419 = vpop.f32.mrb[0].mxu0
        %v9420 = vadd.f32 %v9380, %v9419
        %v9421 = vpop.f32.mrb[0].mxu0
        %v9422 = vpop.f32.mrb[0].mxu0
        %v9423 = vpop.f32.mrb[0].mxu0
        %9424 = vdwg.mxu0
        %9425 = vmatprep.subr.bf16.mxu0 0
        %9426 = vmatpush1.bf16.msra.mxu0 %v6849
        %9427 = vmatprep.subr.bf16.mxu0 0
        %9428 = vmatpush1.bf16.msra.mxu0 %v6850
        %9429 = vmatprep.subr.bf16.mxu0 0
        %9430 = vmatpush1.bf16.msra.mxu0 %v6851
        %9431 = vmatprep.subr.bf16.mxu0 0
        %9432 = vmatpush1.bf16.msra.mxu0 %v6852
        %9433 = vmatprep.subr.bf16.mxu0 0
        %9434 = vmatpush1.bf16.msra.mxu0 %v6853
        %9435 = vmatprep.subr.bf16.mxu0 0
        %9436 = vmatpush1.bf16.msra.mxu0 %v6854
        %9437 = vmatprep.subr.bf16.mxu0 0
        %9438 = vmatpush1.bf16.msra.mxu0 %v6855
        %9439 = vmatprep.subr.bf16.mxu0 0
        %9440 = vmatpush1.bf16.msra.mxu0 %v6856
        %9441 = vmatprep.subr.bf16.mxu0 0
        %9442 = vmatpush1.bf16.msra.mxu0 %v6857
        %9443 = vmatprep.subr.bf16.mxu0 0
        %9444 = vmatpush1.bf16.msra.mxu0 %v6858
        %9445 = vmatprep.subr.bf16.mxu0 0
        %9446 = vmatpush1.bf16.msra.mxu0 %v6859
        %9447 = vmatprep.subr.bf16.mxu0 0
        %9448 = vmatpush1.bf16.msra.mxu0 %v6860
        %9449 = vmatprep.subr.bf16.mxu0 0
        %9450 = vmatpush1.bf16.msra.mxu0 %v6861
        %9451 = vmatprep.subr.bf16.mxu0 0
        %9452 = vmatpush1.bf16.msra.mxu0 %v6862
        %9453 = vmatprep.subr.bf16.mxu0 0
        %9454 = vmatpush1.bf16.msra.mxu0 %v6863
        %9455 = vmatprep.subr.bf16.mxu0 0
        %9456 = vmatpush1.bf16.msra.mxu0 %v6864
        %9457 = vmatprep.mubr.bf16.mxu0 %v2867
        %9458 = vmatmul.mubr.bf16.gmra.mrb[0].mxu0 %v2853
        %v9459 = vpop.f32.mrb[0].mxu0
        %v9460 = vadd.f32 %v9420, %v9459
        %v9461 = vpop.f32.mrb[0].mxu0
        %v9462 = vpop.f32.mrb[0].mxu0
        %v9463 = vpop.f32.mrb[0].mxu0
        %9464 = vdwg.mxu0
        %9465 = vmatprep.subr.bf16.mxu0 0
        %9466 = vmatpush1.bf16.msra.mxu0 %v6865
        %9467 = vmatprep.subr.bf16.mxu0 0
        %9468 = vmatpush1.bf16.msra.mxu0 %v6866
        %9469 = vmatprep.subr.bf16.mxu0 0
        %9470 = vmatpush1.bf16.msra.mxu0 %v6867
        %9471 = vmatprep.subr.bf16.mxu0 0
        %9472 = vmatpush1.bf16.msra.mxu0 %v6868
        %9473 = vmatprep.subr.bf16.mxu0 0
        %9474 = vmatpush1.bf16.msra.mxu0 %v6869
        %9475 = vmatprep.subr.bf16.mxu0 0
        %9476 = vmatpush1.bf16.msra.mxu0 %v6870
        %9477 = vmatprep.subr.bf16.mxu0 0
        %9478 = vmatpush1.bf16.msra.mxu0 %v6871
        %9479 = vmatprep.subr.bf16.mxu0 0
        %9480 = vmatpush1.bf16.msra.mxu0 %v6872
        %9481 = vmatprep.subr.bf16.mxu0 0
        %9482 = vmatpush1.bf16.msra.mxu0 %v6873
        %9483 = vmatprep.subr.bf16.mxu0 0
        %9484 = vmatpush1.bf16.msra.mxu0 %v6874
        %9485 = vmatprep.subr.bf16.mxu0 0
        %9486 = vmatpush1.bf16.msra.mxu0 %v6875
        %9487 = vmatprep.subr.bf16.mxu0 0
        %9488 = vmatpush1.bf16.msra.mxu0 %v6876
        %9489 = vmatprep.subr.bf16.mxu0 0
        %9490 = vmatpush1.bf16.msra.mxu0 %v6877
        %9491 = vmatprep.subr.bf16.mxu0 0
        %9492 = vmatpush1.bf16.msra.mxu0 %v6878
        %9493 = vmatprep.subr.bf16.mxu0 0
        %9494 = vmatpush1.bf16.msra.mxu0 %v6879
        %9495 = vmatprep.subr.bf16.mxu0 0
        %9496 = vmatpush1.bf16.msra.mxu0 %v6880
        %9497 = vmatprep.mubr.bf16.mxu0 %v2871
        %9498 = vmatmul.mubr.bf16.gmra.mrb[0].mxu0 %v2869
        %v9499 = vpop.f32.mrb[0].mxu0
        %v9500 = vadd.f32 %v9460, %v9499
        %v9501 = vpop.f32.mrb[0].mxu0
        %v9502 = vpop.f32.mrb[0].mxu0
        %v9503 = vpop.f32.mrb[0].mxu0
        %9504 = vdwg.mxu0
        %9505 = vmatprep.subr.bf16.mxu0 0
        %9506 = vmatpush1.bf16.msra.mxu0 %v6881
        %9507 = vmatprep.subr.bf16.mxu0 0
        %9508 = vmatpush1.bf16.msra.mxu0 %v6882
        %9509 = vmatprep.subr.bf16.mxu0 0
        %9510 = vmatpush1.bf16.msra.mxu0 %v6883
        %9511 = vmatprep.subr.bf16.mxu0 0
        %9512 = vmatpush1.bf16.msra.mxu0 %v6884
        %9513 = vmatprep.subr.bf16.mxu0 0
        %9514 = vmatpush1.bf16.msra.mxu0 %v6885
        %9515 = vmatprep.subr.bf16.mxu0 0
        %9516 = vmatpush1.bf16.msra.mxu0 %v6886
        %9517 = vmatprep.subr.bf16.mxu0 0
        %9518 = vmatpush1.bf16.msra.mxu0 %v6887
        %9519 = vmatprep.subr.bf16.mxu0 0
        %9520 = vmatpush1.bf16.msra.mxu0 %v6888
        %9521 = vmatprep.subr.bf16.mxu0 0
        %9522 = vmatpush1.bf16.msra.mxu0 %v6889
        %9523 = vmatprep.subr.bf16.mxu0 0
        %9524 = vmatpush1.bf16.msra.mxu0 %v6890
        %9525 = vmatprep.subr.bf16.mxu0 0
        %9526 = vmatpush1.bf16.msra.mxu0 %v6891
        %9527 = vmatprep.subr.bf16.mxu0 0
        %9528 = vmatpush1.bf16.msra.mxu0 %v6892
        %9529 = vmatprep.subr.bf16.mxu0 0
        %9530 = vmatpush1.bf16.msra.mxu0 %v6893
        %9531 = vmatprep.subr.bf16.mxu0 0
        %9532 = vmatpush1.bf16.msra.mxu0 %v6894
        %9533 = vmatprep.subr.bf16.mxu0 0
        %9534 = vmatpush1.bf16.msra.mxu0 %v6895
        %9535 = vmatprep.subr.bf16.mxu0 0
        %9536 = vmatpush1.bf16.msra.mxu0 %v6896
        %9537 = vmatprep.mubr.bf16.mxu0 %v2909
        %9538 = vmatmul.mubr.bf16.gmra.mrb[0].mxu0 %v2895
        %v9539 = vpop.f32.mrb[0].mxu0
        %v9540 = vadd.f32 %v9500, %v9539
        %v9541 = vpop.f32.mrb[0].mxu0
        %v9542 = vpop.f32.mrb[0].mxu0
        %v9543 = vpop.f32.mrb[0].mxu0
        %9544 = vdwg.mxu0
        %9545 = vmatprep.subr.bf16.mxu0 0
        %9546 = vmatpush1.bf16.msra.mxu0 %v6897
        %9547 = vmatprep.subr.bf16.mxu0 0
        %9548 = vmatpush1.bf16.msra.mxu0 %v6898
        %9549 = vmatprep.subr.bf16.mxu0 0
        %9550 = vmatpush1.bf16.msra.mxu0 %v6899
        %9551 = vmatprep.subr.bf16.mxu0 0
        %9552 = vmatpush1.bf16.msra.mxu0 %v6900
        %9553 = vmatprep.subr.bf16.mxu0 0
        %9554 = vmatpush1.bf16.msra.mxu0 %v6901
        %9555 = vmatprep.subr.bf16.mxu0 0
        %9556 = vmatpush1.bf16.msra.mxu0 %v6902
        %9557 = vmatprep.subr.bf16.mxu0 0
        %9558 = vmatpush1.bf16.msra.mxu0 %v6903
        %9559 = vmatprep.subr.bf16.mxu0 0
        %9560 = vmatpush1.bf16.msra.mxu0 %v6904
        %9561 = vmatprep.subr.bf16.mxu0 0
        %9562 = vmatpush1.bf16.msra.mxu0 %v6905
        %9563 = vmatprep.subr.bf16.mxu0 0
        %9564 = vmatpush1.bf16.msra.mxu0 %v6906
        %9565 = vmatprep.subr.bf16.mxu0 0
        %9566 = vmatpush1.bf16.msra.mxu0 %v6907
        %9567 = vmatprep.subr.bf16.mxu0 0
        %9568 = vmatpush1.bf16.msra.mxu0 %v6908
        %9569 = vmatprep.subr.bf16.mxu0 0
        %9570 = vmatpush1.bf16.msra.mxu0 %v6909
        %9571 = vmatprep.subr.bf16.mxu0 0
        %9572 = vmatpush1.bf16.msra.mxu0 %v6910
        %9573 = vmatprep.subr.bf16.mxu0 0
        %9574 = vmatpush1.bf16.msra.mxu0 %v6911
        %9575 = vmatprep.subr.bf16.mxu0 0
        %9576 = vmatpush1.bf16.msra.mxu0 %v6912
        %9577 = vmatprep.mubr.bf16.mxu0 %v2919
        %9578 = vmatmul.mubr.bf16.gmra.mrb[0].mxu0 %v2917
        %v9579 = vpop.f32.mrb[0].mxu0
        %v9580 = vadd.f32 %v9540, %v9579
        %v9581 = vpop.f32.mrb[0].mxu0
        %v9582 = vpop.f32.mrb[0].mxu0
        %v9583 = vpop.f32.mrb[0].mxu0
        %9584 = vdwg.mxu0
        %9585 = vmatprep.subr.bf16.mxu0 0
        %9586 = vmatpush1.bf16.msra.mxu0 %v6913
        %9587 = vmatprep.subr.bf16.mxu0 0
        %9588 = vmatpush1.bf16.msra.mxu0 %v6914
        %9589 = vmatprep.subr.bf16.mxu0 0
        %9590 = vmatpush1.bf16.msra.mxu0 %v6915
        %9591 = vmatprep.subr.bf16.mxu0 0
        %9592 = vmatpush1.bf16.msra.mxu0 %v6916
        %9593 = vmatprep.subr.bf16.mxu0 0
        %9594 = vmatpush1.bf16.msra.mxu0 %v6917
        %9595 = vmatprep.subr.bf16.mxu0 0
        %9596 = vmatpush1.bf16.msra.mxu0 %v6918
        %9597 = vmatprep.subr.bf16.mxu0 0
        %9598 = vmatpush1.bf16.msra.mxu0 %v6919
        %9599 = vmatprep.subr.bf16.mxu0 0
        %9600 = vmatpush1.bf16.msra.mxu0 %v6920
        %9601 = vmatprep.subr.bf16.mxu0 0
        %9602 = vmatpush1.bf16.msra.mxu0 %v6921
        %9603 = vmatprep.subr.bf16.mxu0 0
        %9604 = vmatpush1.bf16.msra.mxu0 %v6922
        %9605 = vmatprep.subr.bf16.mxu0 0
        %9606 = vmatpush1.bf16.msra.mxu0 %v6923
        %9607 = vmatprep.subr.bf16.mxu0 0
        %9608 = vmatpush1.bf16.msra.mxu0 %v6924
        %9609 = vmatprep.subr.bf16.mxu0 0
        %9610 = vmatpush1.bf16.msra.mxu0 %v6925
        %9611 = vmatprep.subr.bf16.mxu0 0
        %9612 = vmatpush1.bf16.msra.mxu0 %v6926
        %9613 = vmatprep.subr.bf16.mxu0 0
        %9614 = vmatpush1.bf16.msra.mxu0 %v6927
        %9615 = vmatprep.subr.bf16.mxu0 0
        %9616 = vmatpush1.bf16.msra.mxu0 %v6928
        %9617 = vmatprep.mubr.bf16.mxu0 %v2916
        %9618 = vmatmul.mubr.bf16.gmra.mrb[0].mxu0 %v2902
        %v9619 = vpop.f32.mrb[0].mxu0
        %v9620 = vadd.f32 %v9580, %v9619
        %v9621 = vpop.f32.mrb[0].mxu0
        %v9622 = vpop.f32.mrb[0].mxu0
        %v9623 = vpop.f32.mrb[0].mxu0
        %9624 = vdwg.mxu0
        %9625 = vmatprep.subr.bf16.mxu0 0
        %9626 = vmatpush1.bf16.msra.mxu0 %v6929
        %9627 = vmatprep.subr.bf16.mxu0 0
        %9628 = vmatpush1.bf16.msra.mxu0 %v6930
        %9629 = vmatprep.subr.bf16.mxu0 0
        %9630 = vmatpush1.bf16.msra.mxu0 %v6931
        %9631 = vmatprep.subr.bf16.mxu0 0
        %9632 = vmatpush1.bf16.msra.mxu0 %v6932
        %9633 = vmatprep.subr.bf16.mxu0 0
        %9634 = vmatpush1.bf16.msra.mxu0 %v6933
        %9635 = vmatprep.subr.bf16.mxu0 0
        %9636 = vmatpush1.bf16.msra.mxu0 %v6934
        %9637 = vmatprep.subr.bf16.mxu0 0
        %9638 = vmatpush1.bf16.msra.mxu0 %v6935
        %9639 = vmatprep.subr.bf16.mxu0 0
        %9640 = vmatpush1.bf16.msra.mxu0 %v6936
        %9641 = vmatprep.subr.bf16.mxu0 0
        %9642 = vmatpush1.bf16.msra.mxu0 %v6937
        %9643 = vmatprep.subr.bf16.mxu0 0
        %9644 = vmatpush1.bf16.msra.mxu0 %v6938
        %9645 = vmatprep.subr.bf16.mxu0 0
        %9646 = vmatpush1.bf16.msra.mxu0 %v6939
        %9647 = vmatprep.subr.bf16.mxu0 0
        %9648 = vmatpush1.bf16.msra.mxu0 %v6940
        %9649 = vmatprep.subr.bf16.mxu0 0
        %9650 = vmatpush1.bf16.msra.mxu0 %v6941
        %9651 = vmatprep.subr.bf16.mxu0 0
        %9652 = vmatpush1.bf16.msra.mxu0 %v6942
        %9653 = vmatprep.subr.bf16.mxu0 0
        %9654 = vmatpush1.bf16.msra.mxu0 %v6943
        %9655 = vmatprep.subr.bf16.mxu0 0
        %9656 = vmatpush1.bf16.msra.mxu0 %v6944
        %9657 = vmatprep.mubr.bf16.mxu0 %v2920
        %9658 = vmatmul.mubr.bf16.gmra.mrb[0].mxu0 %v2918
        %v9659 = vpop.f32.mrb[0].mxu0
        %v9660 = vadd.f32 %v9620, %v9659
        %v9661 = vpop.f32.mrb[0].mxu0
        %v9662 = vpop.f32.mrb[0].mxu0
        %v9663 = vpop.f32.mrb[0].mxu0
        %9664 = vdwg.mxu0
        %9665 = vmatprep.subr.bf16.mxu0 0
        %9666 = vmatpush1.bf16.msra.mxu0 %v6945
        %9667 = vmatprep.subr.bf16.mxu0 0
        %9668 = vmatpush1.bf16.msra.mxu0 %v6946
        %9669 = vmatprep.subr.bf16.mxu0 0
        %9670 = vmatpush1.bf16.msra.mxu0 %v6947
        %9671 = vmatprep.subr.bf16.mxu0 0
        %9672 = vmatpush1.bf16.msra.mxu0 %v6948
        %9673 = vmatprep.subr.bf16.mxu0 0
        %9674 = vmatpush1.bf16.msra.mxu0 %v6949
        %9675 = vmatprep.subr.bf16.mxu0 0
        %9676 = vmatpush1.bf16.msra.mxu0 %v6950
        %9677 = vmatprep.subr.bf16.mxu0 0
        %9678 = vmatpush1.bf16.msra.mxu0 %v6951
        %9679 = vmatprep.subr.bf16.mxu0 0
        %9680 = vmatpush1.bf16.msra.mxu0 %v6952
        %9681 = vmatprep.subr.bf16.mxu0 0
        %9682 = vmatpush1.bf16.msra.mxu0 %v6953
        %9683 = vmatprep.subr.bf16.mxu0 0
        %9684 = vmatpush1.bf16.msra.mxu0 %v6954
        %9685 = vmatprep.subr.bf16.mxu0 0
        %9686 = vmatpush1.bf16.msra.mxu0 %v6955
        %9687 = vmatprep.subr.bf16.mxu0 0
        %9688 = vmatpush1.bf16.msra.mxu0 %v6956
        %9689 = vmatprep.subr.bf16.mxu0 0
        %9690 = vmatpush1.bf16.msra.mxu0 %v6957
        %9691 = vmatprep.subr.bf16.mxu0 0
        %9692 = vmatpush1.bf16.msra.mxu0 %v6958
        %9693 = vmatprep.subr.bf16.mxu0 0
        %9694 = vmatpush1.bf16.msra.mxu0 %v6959
        %9695 = vmatprep.subr.bf16.mxu0 0
        %9696 = vmatpush1.bf16.msra.mxu0 %v6960
        %9697 = vmatprep.mubr.bf16.mxu0 %v2942
        %9698 = vmatmul.mubr.bf16.gmra.mrb[0].mxu0 %v2935
        %v9699 = vpop.f32.mrb[0].mxu0
        %v9700 = vadd.f32 %v9660, %v9699
        %v9701 = vpop.f32.mrb[0].mxu0
        %v9702 = vpop.f32.mrb[0].mxu0
        %v9703 = vpop.f32.mrb[0].mxu0
        %9704 = vdwg.mxu0
        %v9705 = vadd.f32 %v738, %v9700
        %vm9706 = vcmask 517120
        %9707 = vst.msk [vmem:[#allocation2] sm:$0x3] %vm9706, %v9705
        %p9708 = scmp.eq.s32.totalorder %s30, 1
        // Predicated region
        $region73: #{image_net_forward.1} parent=67 // pred_check
          %p9709 = pneg %p9708
        $region74: #{image_net_forward.1} parent=67 // pred_check_branch
          %9711 = sbr.rel (%p9709) target = $region76
        $region75: #{image_net_forward.1} parent=67 // pred_region
          %v9712 = vld [vmem:[#allocation2] sm:$0x3]
          %v9713 = vld [vmem:[%s2] sm:$0x1]
          %v9715 = vlaneseq
          %v9716 = vshrl.u32 %v9715, 7
          %v9717 = vsub.s32 0, %v9716
          %v9718 = vrot.slane %v9713, %v9717
          %v9720 = vadd.f32 %v9712, %v9718
          %v9721 = vld [vmem:[#allocation3] sm:$0x3]
          %9723 = vrot.lane.b32.xlu0 %v9721, 64
          %v9724 = vpop.permute.xlu0 %9723
          %vm9726 = vcmask 523264
          %v9727 = vsel %vm9726, %v9720, %v9724
          %9728 = vst [vmem:[#allocation4] sm:$0x3] %v9727
          %v9729 = vld [vmem:[%s10] sm:$0xff]
          %v9730 = vld [vmem:[%s10 + $0x8] sm:$0xff]
          %v9731 = vld [vmem:[%s10 + $0x10] sm:$0xff]
          %v9732 = vld [vmem:[%s10 + $0x18] sm:$0xff]
          %v9733 = vld [vmem:[%s10 + $0x20] sm:$0xff]
          %v9734 = vld [vmem:[%s10 + $0x28] sm:$0xff]
          %v9735 = vld [vmem:[%s10 + $0x30] sm:$0xff]
          %v9736 = vld [vmem:[%s10 + $0x38] sm:$0xff]
          %v9737 = vld [vmem:[%s10 + $0x40] sm:$0xff]
          %v9738 = vld [vmem:[%s10 + $0x48] sm:$0xff]
          %v9739 = vld [vmem:[%s10 + $0x50] sm:$0xff]
          %v9740 = vld [vmem:[%s10 + $0x58] sm:$0xff]
          %v9741 = vld [vmem:[%s10 + $0x60] sm:$0xff]
          %v9742 = vld [vmem:[%s10 + $0x68] sm:$0xff]
          %v9743 = vld [vmem:[%s10 + $0x70] sm:$0xff]
          %v9744 = vld [vmem:[%s10 + $0x78] sm:$0xff]
          %v9745 = vld [vmem:[%s11] sm:$0x1]
          %v9747 = vlaneseq
          %v9748 = vshrl.u32 %v9747, 7
          %v9749 = vsub.s32 0, %v9748
          %v9750 = vrot.slane %v9745, %v9749
          %9752 = vmatprep.subr.mxu0 0.0
          %9753 = vmatpush1.msra.mxu0 %v9729
          %9754 = vmatprep.subr.mxu0 0.0
          %9755 = vmatpush1.msra.mxu0 %v9730
          %9756 = vmatprep.subr.mxu0 0.0
          %9757 = vmatpush1.msra.mxu0 %v9731
          %9758 = vmatprep.subr.mxu0 0.0
          %9759 = vmatpush1.msra.mxu0 %v9732
          %9760 = vmatprep.subr.mxu0 0.0
          %9761 = vmatpush1.msra.mxu0 %v9733
          %9762 = vmatprep.subr.mxu0 0.0
          %9763 = vmatpush1.msra.mxu0 %v9734
          %9764 = vmatprep.subr.mxu0 0.0
          %9765 = vmatpush1.msra.mxu0 %v9735
          %9766 = vmatprep.subr.mxu0 0.0
          %9767 = vmatpush1.msra.mxu0 %v9736
          %9768 = vmatprep.subr.mxu0 0.0
          %9769 = vmatpush1.msra.mxu0 %v9737
          %9770 = vmatprep.subr.mxu0 0.0
          %9771 = vmatpush1.msra.mxu0 %v9738
          %9772 = vmatprep.subr.mxu0 0.0
          %9773 = vmatpush1.msra.mxu0 %v9739
          %9774 = vmatprep.subr.mxu0 0.0
          %9775 = vmatpush1.msra.mxu0 %v9740
          %9776 = vmatprep.subr.mxu0 0.0
          %9777 = vmatpush1.msra.mxu0 %v9741
          %9778 = vmatprep.subr.mxu0 0.0
          %9779 = vmatpush1.msra.mxu0 %v9742
          %9780 = vmatprep.subr.mxu0 0.0
          %9781 = vmatpush1.msra.mxu0 %v9743
          %9782 = vmatprep.subr.mxu0 0.0
          %9783 = vmatpush1.msra.mxu0 %v9744
          %9784 = vmatprep.subr.mxu0 0.0
          %9785 = vmatpush1.msra.mxu0 0.0
          %9786 = vmatprep.subr.mxu0 0.0
          %9787 = vmatpush1.msra.mxu0 0.0
          %9788 = vmatprep.subr.mxu0 0.0
          %9789 = vmatpush1.msra.mxu0 0.0
          %9790 = vmatprep.subr.mxu0 0.0
          %9791 = vmatpush1.msra.mxu0 0.0
          %9792 = vmatprep.subr.mxu0 0.0
          %9793 = vmatpush1.msra.mxu0 0.0
          %9794 = vmatprep.subr.mxu0 0.0
          %9795 = vmatpush1.msra.mxu0 0.0
          %9796 = vmatprep.subr.mxu0 0.0
          %9797 = vmatpush1.msra.mxu0 0.0
          %9798 = vmatprep.subr.mxu0 0.0
          %9799 = vmatpush1.msra.mxu0 0.0
          %9800 = vmatprep.subr.mxu0 0.0
          %9801 = vmatpush1.msra.mxu0 0.0
          %9802 = vmatprep.subr.mxu0 0.0
          %9803 = vmatpush1.msra.mxu0 0.0
          %9804 = vmatprep.subr.mxu0 0.0
          %9805 = vmatpush1.msra.mxu0 0.0
          %9806 = vmatprep.subr.mxu0 0.0
          %9807 = vmatpush1.msra.mxu0 0.0
          %9808 = vmatprep.subr.mxu0 0.0
          %9809 = vmatpush1.msra.mxu0 0.0
          %9810 = vmatprep.subr.mxu0 0.0
          %9811 = vmatpush1.msra.mxu0 0.0
          %9812 = vmatprep.subr.mxu0 0.0
          %9813 = vmatpush1.msra.mxu0 0.0
          %9814 = vmatprep.subr.mxu0 0.0
          %9815 = vmatpush1.msra.mxu0 0.0
          %9816 = vmatprep.mubr.f32.mxu0 0.0
          %9817 = vmatmul.mubr.f32.gmra.mrb[0].mxu0 %v9727
          %v9818 = vpop.f32.mrb[0].mxu0
          %v9819 = vadd.f32 %v9750, %v9818
          %v9820 = vpop.f32.mrb[0].mxu0
          %9821 = vdwg.mxu0
          %9822 = vst [vmem:[#allocation9] sm:$0x3] %v9819
          %v9823 = vld [vmem:[%s6] sm:$0xff]
          %v9824 = vld [vmem:[%s6 + $0x8] sm:$0xff]
          %v9825 = vld [vmem:[%s6 + $0x10] sm:$0xff]
          %v9826 = vld [vmem:[%s6 + $0x18] sm:$0xff]
          %v9827 = vld [vmem:[%s6 + $0x20] sm:$0xff]
          %v9828 = vld [vmem:[%s6 + $0x28] sm:$0xff]
          %v9829 = vld [vmem:[%s6 + $0x30] sm:$0xff]
          %v9830 = vld [vmem:[%s6 + $0x38] sm:$0xff]
          %v9831 = vld [vmem:[%s6 + $0x40] sm:$0xff]
          %v9832 = vld [vmem:[%s6 + $0x48] sm:$0xff]
          %v9833 = vld [vmem:[%s6 + $0x50] sm:$0xff]
          %v9834 = vld [vmem:[%s6 + $0x58] sm:$0xff]
          %v9835 = vld [vmem:[%s6 + $0x60] sm:$0xff]
          %v9836 = vld [vmem:[%s6 + $0x68] sm:$0xff]
          %v9837 = vld [vmem:[%s6 + $0x70] sm:$0xff]
          %v9838 = vld [vmem:[%s6 + $0x78] sm:$0xff]
          %v9839 = vld [vmem:[%s7] sm:$0x1]
          %v9841 = vlaneseq
          %v9842 = vshrl.u32 %v9841, 7
          %v9843 = vsub.s32 0, %v9842
          %v9844 = vrot.slane %v9839, %v9843
          %9846 = vmatprep.subr.mxu0 0.0
          %9847 = vmatpush1.msra.mxu0 %v9823
          %9848 = vmatprep.subr.mxu0 0.0
          %9849 = vmatpush1.msra.mxu0 %v9824
          %9850 = vmatprep.subr.mxu0 0.0
          %9851 = vmatpush1.msra.mxu0 %v9825
          %9852 = vmatprep.subr.mxu0 0.0
          %9853 = vmatpush1.msra.mxu0 %v9826
          %9854 = vmatprep.subr.mxu0 0.0
          %9855 = vmatpush1.msra.mxu0 %v9827
          %9856 = vmatprep.subr.mxu0 0.0
          %9857 = vmatpush1.msra.mxu0 %v9828
          %9858 = vmatprep.subr.mxu0 0.0
          %9859 = vmatpush1.msra.mxu0 %v9829
          %9860 = vmatprep.subr.mxu0 0.0
          %9861 = vmatpush1.msra.mxu0 %v9830
          %9862 = vmatprep.subr.mxu0 0.0
          %9863 = vmatpush1.msra.mxu0 %v9831
          %9864 = vmatprep.subr.mxu0 0.0
          %9865 = vmatpush1.msra.mxu0 %v9832
          %9866 = vmatprep.subr.mxu0 0.0
          %9867 = vmatpush1.msra.mxu0 %v9833
          %9868 = vmatprep.subr.mxu0 0.0
          %9869 = vmatpush1.msra.mxu0 %v9834
          %9870 = vmatprep.subr.mxu0 0.0
          %9871 = vmatpush1.msra.mxu0 %v9835
          %9872 = vmatprep.subr.mxu0 0.0
          %9873 = vmatpush1.msra.mxu0 %v9836
          %9874 = vmatprep.subr.mxu0 0.0
          %9875 = vmatpush1.msra.mxu0 %v9837
          %9876 = vmatprep.subr.mxu0 0.0
          %9877 = vmatpush1.msra.mxu0 %v9838
          %9878 = vmatprep.subr.mxu0 0.0
          %9879 = vmatpush1.msra.mxu0 0.0
          %9880 = vmatprep.subr.mxu0 0.0
          %9881 = vmatpush1.msra.mxu0 0.0
          %9882 = vmatprep.subr.mxu0 0.0
          %9883 = vmatpush1.msra.mxu0 0.0
          %9884 = vmatprep.subr.mxu0 0.0
          %9885 = vmatpush1.msra.mxu0 0.0
          %9886 = vmatprep.subr.mxu0 0.0
          %9887 = vmatpush1.msra.mxu0 0.0
          %9888 = vmatprep.subr.mxu0 0.0
          %9889 = vmatpush1.msra.mxu0 0.0
          %9890 = vmatprep.subr.mxu0 0.0
          %9891 = vmatpush1.msra.mxu0 0.0
          %9892 = vmatprep.subr.mxu0 0.0
          %9893 = vmatpush1.msra.mxu0 0.0
          %9894 = vmatprep.subr.mxu0 0.0
          %9895 = vmatpush1.msra.mxu0 0.0
          %9896 = vmatprep.subr.mxu0 0.0
          %9897 = vmatpush1.msra.mxu0 0.0
          %9898 = vmatprep.subr.mxu0 0.0
          %9899 = vmatpush1.msra.mxu0 0.0
          %9900 = vmatprep.subr.mxu0 0.0
          %9901 = vmatpush1.msra.mxu0 0.0
          %9902 = vmatprep.subr.mxu0 0.0
          %9903 = vmatpush1.msra.mxu0 0.0
          %9904 = vmatprep.subr.mxu0 0.0
          %9905 = vmatpush1.msra.mxu0 0.0
          %9906 = vmatprep.subr.mxu0 0.0
          %9907 = vmatpush1.msra.mxu0 0.0
          %9908 = vmatprep.subr.mxu0 0.0
          %9909 = vmatpush1.msra.mxu0 0.0
          %9910 = vmatprep.mubr.f32.mxu0 0.0
          %9911 = vmatmul.mubr.f32.gmra.mrb[0].mxu0 %v9727
          %v9912 = vpop.f32.mrb[0].mxu0
          %v9913 = vadd.f32 %v9844, %v9912
          %v9914 = vpop.f32.mrb[0].mxu0
          %9915 = vdwg.mxu0
          %v9916 = vtanh.pop %v9913
          %vm9917 = vcmask 123904
          %9918 = vst.msk [vmem:[#allocation6] sm:$0x3] %vm9917, %v9916
          %v9919 = vld [vmem:[%s8] sm:$0xff]
          %v9920 = vld [vmem:[%s8 + $0x8] sm:$0xff]
          %v9921 = vld [vmem:[%s8 + $0x10] sm:$0xff]
          %v9922 = vld [vmem:[%s8 + $0x18] sm:$0xff]
          %v9923 = vld [vmem:[%s8 + $0x20] sm:$0xff]
          %v9924 = vld [vmem:[%s8 + $0x28] sm:$0xff]
          %v9925 = vld [vmem:[%s8 + $0x30] sm:$0xff]
          %v9926 = vld [vmem:[%s8 + $0x38] sm:$0xff]
          %v9927 = vld [vmem:[%s8 + $0x40] sm:$0xff]
          %v9928 = vld [vmem:[%s8 + $0x48] sm:$0xff]
          %v9929 = vld [vmem:[%s8 + $0x50] sm:$0xff]
          %v9930 = vld [vmem:[%s8 + $0x58] sm:$0xff]
          %v9931 = vld [vmem:[%s8 + $0x60] sm:$0xff]
          %v9932 = vld [vmem:[%s8 + $0x68] sm:$0xff]
          %v9933 = vld [vmem:[%s8 + $0x70] sm:$0xff]
          %v9934 = vld [vmem:[%s8 + $0x78] sm:$0xff]
          %v9935 = vld [vmem:[%s9] sm:$0x1]
          %v9937 = vlaneseq
          %v9938 = vshrl.u32 %v9937, 7
          %v9939 = vsub.s32 0, %v9938
          %v9940 = vrot.slane %v9935, %v9939
          %9942 = vmatprep.subr.mxu0 0.0
          %9943 = vmatpush1.msra.mxu0 %v9919
          %9944 = vmatprep.subr.mxu0 0.0
          %9945 = vmatpush1.msra.mxu0 %v9920
          %9946 = vmatprep.subr.mxu0 0.0
          %9947 = vmatpush1.msra.mxu0 %v9921
          %9948 = vmatprep.subr.mxu0 0.0
          %9949 = vmatpush1.msra.mxu0 %v9922
          %9950 = vmatprep.subr.mxu0 0.0
          %9951 = vmatpush1.msra.mxu0 %v9923
          %9952 = vmatprep.subr.mxu0 0.0
          %9953 = vmatpush1.msra.mxu0 %v9924
          %9954 = vmatprep.subr.mxu0 0.0
          %9955 = vmatpush1.msra.mxu0 %v9925
          %9956 = vmatprep.subr.mxu0 0.0
          %9957 = vmatpush1.msra.mxu0 %v9926
          %9958 = vmatprep.subr.mxu0 0.0
          %9959 = vmatpush1.msra.mxu0 %v9927
          %9960 = vmatprep.subr.mxu0 0.0
          %9961 = vmatpush1.msra.mxu0 %v9928
          %9962 = vmatprep.subr.mxu0 0.0
          %9963 = vmatpush1.msra.mxu0 %v9929
          %9964 = vmatprep.subr.mxu0 0.0
          %9965 = vmatpush1.msra.mxu0 %v9930
          %9966 = vmatprep.subr.mxu0 0.0
          %9967 = vmatpush1.msra.mxu0 %v9931
          %9968 = vmatprep.subr.mxu0 0.0
          %9969 = vmatpush1.msra.mxu0 %v9932
          %9970 = vmatprep.subr.mxu0 0.0
          %9971 = vmatpush1.msra.mxu0 %v9933
          %9972 = vmatprep.subr.mxu0 0.0
          %9973 = vmatpush1.msra.mxu0 %v9934
          %9974 = vmatprep.subr.mxu0 0.0
          %9975 = vmatpush1.msra.mxu0 0.0
          %9976 = vmatprep.subr.mxu0 0.0
          %9977 = vmatpush1.msra.mxu0 0.0
          %9978 = vmatprep.subr.mxu0 0.0
          %9979 = vmatpush1.msra.mxu0 0.0
          %9980 = vmatprep.subr.mxu0 0.0
          %9981 = vmatpush1.msra.mxu0 0.0
          %9982 = vmatprep.subr.mxu0 0.0
          %9983 = vmatpush1.msra.mxu0 0.0
          %9984 = vmatprep.subr.mxu0 0.0
          %9985 = vmatpush1.msra.mxu0 0.0
          %9986 = vmatprep.subr.mxu0 0.0
          %9987 = vmatpush1.msra.mxu0 0.0
          %9988 = vmatprep.subr.mxu0 0.0
          %9989 = vmatpush1.msra.mxu0 0.0
          %9990 = vmatprep.subr.mxu0 0.0
          %9991 = vmatpush1.msra.mxu0 0.0
          %9992 = vmatprep.subr.mxu0 0.0
          %9993 = vmatpush1.msra.mxu0 0.0
          %9994 = vmatprep.subr.mxu0 0.0
          %9995 = vmatpush1.msra.mxu0 0.0
          %9996 = vmatprep.subr.mxu0 0.0
          %9997 = vmatpush1.msra.mxu0 0.0
          %9998 = vmatprep.subr.mxu0 0.0
          %9999 = vmatpush1.msra.mxu0 0.0
          %10000 = vmatprep.subr.mxu0 0.0
          %10001 = vmatpush1.msra.mxu0 0.0
          %10002 = vmatprep.subr.mxu0 0.0
          %10003 = vmatpush1.msra.mxu0 0.0
          %10004 = vmatprep.subr.mxu0 0.0
          %10005 = vmatpush1.msra.mxu0 0.0
          %10006 = vmatprep.mubr.f32.mxu0 0.0
          %10007 = vmatmul.mubr.f32.gmra.mrb[0].mxu0 %v9727
          %v10008 = vpop.f32.mrb[0].mxu0
          %v10009 = vadd.f32 %v9940, %v10008
          %v10010 = vpop.f32.mrb[0].mxu0
          %10011 = vdwg.mxu0
          %v10012 = vxor.u32 %v10009, 2147483648
          %v10013 = vmul.f32 %v10012, 1.442695
          %v10014 = vpow.pop %v10013
          %v10015 = vadd.f32 %v10014, 1.0
          %v10016 = vrcp.pop %v10015
          %v10017 = vmul.f32 1.0, %v10016
          %vm10018 = vcmask 58368
          %10019 = vst.msk [vmem:[#allocation8] sm:$0x3] %vm10018, %v10017
        $region76: #{image_net_forward.1} parent=67 // pred_fallthru
          _
        // Predicated region
        $region77: #{image_net_forward.1} parent=67 // pred_check
          %p10020 = pneg %p305
        $region78: #{image_net_forward.1} parent=67 // pred_check_branch
          %10022 = sbr.rel (%p10020) target = $region80
        $region79: #{image_net_forward.1} parent=67 // pred_region
          %s10024 = ssub.s32 32, 32
          %10025 = vsyncadd [#allocation5], %s10024
          %s10027 = sshll.u32 [#allocation4], 4
          %s10028 = int_to_ptr.vmem [resolvable:$true] %s10027
          %10030 = dma.vmem_to_hbm [thread:$0]  %s10028, 32, %s12, [#allocation5]
        $region80: #{image_net_forward.1} parent=67 // pred_fallthru
          _
        // Predicated region
        $region81: #{image_net_forward.1} parent=67 // pred_check
          %p10031 = pneg %p326
        $region82: #{image_net_forward.1} parent=67 // pred_check_branch
          %10033 = sbr.rel (%p10031) target = $region84
        $region83: #{image_net_forward.1} parent=67 // pred_region
          %s10035 = ssub.s32 32, 32
          %10036 = vsyncadd [#allocation7], %s10035
          %s10038 = sshll.u32 [#allocation6], 4
          %s10039 = int_to_ptr.vmem [resolvable:$true] %s10038
          %10041 = dma.vmem_to_hbm [thread:$0]  %s10039, 32, %s13, [#allocation7]
        $region84: #{image_net_forward.1} parent=67 // pred_fallthru
          _
        // Predicated region
        $region85: #{image_net_forward.1} parent=67 // pred_check
          %p10042 = pneg %p347
        $region86: #{image_net_forward.1} parent=67 // pred_check_branch
          %10044 = sbr.rel (%p10042) target = $region88
        $region87: #{image_net_forward.1} parent=67 // pred_region
          %s10046 = ssub.s32 32, 32
          %10047 = vsyncadd [#allocation7], %s10046
          %s10049 = sshll.u32 [#allocation8], 4
          %s10050 = int_to_ptr.vmem [resolvable:$true] %s10049
          %10052 = dma.vmem_to_hbm [thread:$0]  %s10050, 32, %s14, [#allocation7]
        $region88: #{image_net_forward.1} parent=67 // pred_fallthru
          _
        // Predicated region
        $region89: #{image_net_forward.1} parent=67 // pred_check
          %p10053 = pneg %p368
        $region90: #{image_net_forward.1} parent=67 // pred_check_branch
          %10055 = sbr.rel (%p10053) target = $region92
        $region91: #{image_net_forward.1} parent=67 // pred_region
          %s10057 = ssub.s32 32, 32
          %10058 = vsyncadd [#allocation10], %s10057
          %s10060 = sshll.u32 [#allocation9], 4
          %s10061 = int_to_ptr.vmem [resolvable:$true] %s10060
          %10063 = dma.vmem_to_hbm [thread:$0]  %s10061, 32, %s15, [#allocation10]
        $region92: #{image_net_forward.1} parent=67 // pred_fallthru
          _
        // Predicated region
        $region93: #{image_net_forward.1} parent=67 // pred_check
          %p10064 = pneg %p305
        $region94: #{image_net_forward.1} parent=67 // pred_check_branch
          %10066 = sbr.rel (%p10064) target = $region96
        $region95: #{image_net_forward.1} parent=67 // pred_region
          %10067 = dma.done [#allocation5], 32
        $region96: #{image_net_forward.1} parent=67 // pred_fallthru
          _
        // Predicated region
        $region97: #{image_net_forward.1} parent=67 // pred_check
          %p10068 = pneg %p326
        $region98: #{image_net_forward.1} parent=67 // pred_check_branch
          %10070 = sbr.rel (%p10068) target = $region100
        $region99: #{image_net_forward.1} parent=67 // pred_region
          %10071 = dma.done [#allocation7], 32
        $region100: #{image_net_forward.1} parent=67 // pred_fallthru
          _
        // Predicated region
        $region101: #{image_net_forward.1} parent=67 // pred_check
          %p10072 = pneg %p347
        $region102: #{image_net_forward.1} parent=67 // pred_check_branch
          %10074 = sbr.rel (%p10072) target = $region104
        $region103: #{image_net_forward.1} parent=67 // pred_region
          %10075 = dma.done [#allocation7], 32
        $region104: #{image_net_forward.1} parent=67 // pred_fallthru
          _
        // Predicated region
        $region105: #{image_net_forward.1} parent=67 // pred_check
          %p10076 = pneg %p368
        $region106: #{image_net_forward.1} parent=67 // pred_check_branch
          %10078 = sbr.rel (%p10076) target = $region108
        $region107: #{image_net_forward.1} parent=67 // pred_region
          %10079 = dma.done [#allocation10], 32
        $region108: #{image_net_forward.1} parent=67 // pred_fallthru
          _
      $region68: #{image_net_forward.1} parent=5 // pred_fallthru
        _
      %p10080 = scmp.le.s32.totalorder 2, %s25
      // Predicated region
      $region109: #{image_net_forward.1} parent=5 // pred_check
        %p10081 = pneg %p10080
      $region110: #{image_net_forward.1} parent=5 // pred_check_branch
        %10083 = sbr.rel (%p10081) target = $region112
      $region111: #{image_net_forward.1} parent=5 // pred_region
        %s10084 = ssub.s32 %s25, 2
      $region112: #{image_net_forward.1} parent=5 // pred_fallthru
        _
    $region6: #{image_net_forward.1} parent=1 // loop_footer
      %s29 = sadd.s32 1, %s25
    $region7: #{image_net_forward.1} parent=1 // loop_footer_branch
      %24 = sbr.rel target = $region3
    $region8: #{image_net_forward.1} parent=1 // loop_exit
      _
    %10085 = vsyncpa [#allocation5], 1
    %s10086 = scalar_lea.sflag [#allocation5], 1
    %10087 = vsyncpa %s10086, 1
    %10088 = vsyncpa [#allocation7], 1
    %10089 = vsyncpa [#allocation10], 1

</llo_original>
